<compile_context>
chip_gen: v6e
topology: v6e:2x2x1
jax: 0.10.0
libtpu: 0.0.40
codegen_flags: <defaults>
</compile_context>

<pallas_src>
import math
import functools

import jax
import jax.numpy as jnp
from jax.experimental import pallas as pl
from jax.experimental.pallas import tpu as pltpu


def _layernorm(x, g, b, eps=1e-5):
    mu = jnp.mean(x, axis=-1, keepdims=True)
    var = jnp.mean((x - mu) ** 2, axis=-1, keepdims=True)
    return (x - mu) * jax.lax.rsqrt(var + eps) * g + b


def _mm(a, w_ref):
    # MXU matmul: cast the activation to the (possibly bf16) weight dtype,
    # accumulate in f32.
    return jnp.dot(a.astype(w_ref.dtype), w_ref[...],
                   preferred_element_type=jnp.float32)


# --------------------------- fused forward kernel ----------------------------
def _encoder_kernel(x_ref, pe_ref, pw_ref, pb_ref,
                    g1_ref, b1_ref, wqkv_ref, bqkv_ref, wo_ref, bo_ref,
                    g2_ref, b2_ref, w1_ref, bf1_ref, w2_ref, bf2_ref,
                    cg_ref, cb_ref, cw_ref, cbc_ref,
                    o_ref, act_ref,
                    *, num_layers, nhead, seq_len, block_b):
    # x_ref:   (Bb, T, F)      pe_ref: (T, D)      pw_ref: (F, D)
    # wqkv_ref:(D, 3D)         wo_ref: (D, D)      w1/w2: (D,Fdim)/(Fdim,D)
    # cw_ref:  (D, Cpad)       o_ref: (Bb, Cpad)   act_ref: (Bb*T, D) scratch
    l = pl.program_id(1)
    T = seq_len
    Bb = block_b
    D = pw_ref.shape[1]
    H = nhead
    hd = D // H
    scale = 1.0 / math.sqrt(hd)

    # ---- stage 0 (first layer step): input projection + positional encoding ----
    @pl.when(l == 0)
    def _():
        xin = x_ref[...].reshape(Bb * T, x_ref.shape[-1])           # (Bb*T, F)
        proj = _mm(xin, pw_ref) + pb_ref[...]                       # (Bb*T, D)
        act_ref[...] = (proj.reshape(Bb, T, D)
                        + pe_ref[...][None]).reshape(Bb * T, D)

    x = act_ref[...]                                                 # (Bb*T, D) f32

    # ---- self-attention sub-block: x + SA(LN(x))  (norm_first) ----
    h1 = _layernorm(x, g1_ref[...], b1_ref[...])
    qkv = _mm(h1, wqkv_ref) + bqkv_ref[...]                          # (Bb*T, 3D)

    ctx_heads = []
    for h in range(H):                                               # small static H
        qh = qkv[:, h * hd:(h + 1) * hd].reshape(Bb, T, hd)
        kh = qkv[:, D + h * hd:D + (h + 1) * hd].reshape(Bb, T, hd)
        vh = qkv[:, 2 * D + h * hd:2 * D + (h + 1) * hd].reshape(Bb, T, hd)
        s = jnp.einsum('bqd,bkd->bqk', qh, kh,
                       preferred_element_type=jnp.float32) * scale   # (Bb, T, T)
        s = s - jnp.max(s, axis=-1, keepdims=True)
        p = jnp.exp(s)
        p = p / jnp.sum(p, axis=-1, keepdims=True)                   # exact softmax
        ch = jnp.einsum('bqk,bkd->bqd', p, vh,
                        preferred_element_type=jnp.float32)          # (Bb, T, hd)
        ctx_heads.append(ch.reshape(Bb * T, hd))
    ctx = jnp.concatenate(ctx_heads, axis=-1)                        # (Bb*T, D)

    x = x + _mm(ctx, wo_ref) + bo_ref[...]

    # ---- feed-forward sub-block: x + FF(LN(x)), ReLU ----
    h2 = _layernorm(x, g2_ref[...], b2_ref[...])
    ff = jnp.maximum(_mm(h2, w1_ref) + bf1_ref[...], 0.0)
    x = x + _mm(ff, w2_ref) + bf2_ref[...]
    act_ref[...] = x

    # ---- last layer step: mean-pool over time + classifier LN/Linear ----
    @pl.when(l == num_layers - 1)
    def _():
        pooled = jnp.mean(x.reshape(Bb, T, D), axis=1)               # (Bb, D)
        hc = _layernorm(pooled, cg_ref[...], cb_ref[...])
        o_ref[...] = _mm(hc, cw_ref) + cbc_ref[...]                  # (Bb, Cpad)


# --------------------------------- wrapper ------------------------------------
def sign_language_transformer(x, params, pe, nhead, *, block_b=None,
                              matmul_dtype=jnp.float32):
    # x: (B, T, J, C) -> features on lanes
    B, T = x.shape[0], x.shape[1]
    xf = x.reshape(B, T, -1).astype(jnp.float32)
    F = xf.shape[-1]
    D = params["proj_w"].shape[1]
    H = nhead
    L = params["wqkv"].shape[0]
    Fdim = params["w1"].shape[-1]
    C = params["cls_w"].shape[1]
    CP = pl.cdiv(C, 128) * 128                      # lane-dense classifier output

    mmd = jnp.dtype(matmul_dtype)
    proj_w = params["proj_w"].astype(mmd)
    wqkv = params["wqkv"].astype(mmd)
    wo = params["wo"].astype(mmd)
    w1 = params["w1"].astype(mmd)
    w2 = params["w2"].astype(mmd)
    cw = jnp.pad(params["cls_w"], ((0, 0), (0, CP - C))).astype(mmd)
    cbc = jnp.pad(params["cls_bc"], ((0, 0), (0, CP - C)))

    # batch blocking: as many batch elements per step as keeps Bb*T modest
    if block_b is None:
        block_b = 1
        for cand in range(B, 0, -1):
            if B % cand == 0 and cand * T <= 512:
                block_b = cand
                break
    assert B % block_b == 0
    nB = B // block_b

    # ---- VMEM budget (2 streamed layers + constants + activation + IO) ----
    wb = mmd.itemsize
    per_layer_bytes = (wb * (D * 3 * D + D * D + 2 * D * Fdim)
                       + 4 * (3 * D + 6 * D + Fdim))
    const_bytes = wb * (F * D + D * CP) + 4 * (T * D + 4 * D + CP)
    io_bytes = 4 * (block_b * T * F + block_b * CP)
    scratch_bytes = 4 * block_b * T * D
    est = 2 * per_layer_bytes + 2 * const_bytes + 2 * io_bytes + scratch_bytes
    vmem_limit = int(min(64 << 20, max(16 << 20, 2 * est)))

    # ---- cost estimate for the surrounding XLA scheduler ----
    flops = (2 * B * T * F * D
             + L * B * T * (6 * D * D + 2 * D * D + 4 * D * Fdim)
             + L * B * H * T * T * 4 * (D // H)
             + 2 * B * D * CP)
    transcendentals = L * B * H * T * T
    bytes_accessed = (int(xf.size) * 4 + B * CP * 4
                      + sum(int(v.size) * jnp.dtype(v.dtype).itemsize
                            for v in params.values()))
    cost = pl.CostEstimate(flops=int(flops),
                           transcendentals=int(transcendentals),
                           bytes_accessed=int(bytes_accessed))

    def const2(shape):
        return pl.BlockSpec(shape, lambda b, l: (0, 0))

    def per_layer(shape):
        # weights stacked on a leading L axis, streamed along grid axis 1
        return pl.BlockSpec((None,) + shape, lambda b, l: (l, 0, 0))

    out = pl.pallas_call(
        functools.partial(_encoder_kernel, num_layers=L, nhead=H,
                          seq_len=T, block_b=block_b),
        out_shape=jax.ShapeDtypeStruct((nB, block_b, CP), jnp.float32),
        grid=(nB, L),
        in_specs=[
            pl.BlockSpec((block_b, T, F), lambda b, l: (b, 0, 0)),  # x (per block)
            const2((T, D)),                                         # pos-enc
            const2((F, D)), const2((1, D)),                         # input proj
            per_layer((1, D)), per_layer((1, D)),                   # LN1 g/b
            per_layer((D, 3 * D)), per_layer((1, 3 * D)),           # fused QKV W/b
            per_layer((D, D)), per_layer((1, D)),                   # out-proj W/b
            per_layer((1, D)), per_layer((1, D)),                   # LN2 g/b
            per_layer((D, Fdim)), per_layer((1, Fdim)),             # FF1 W/b
            per_layer((Fdim, D)), per_layer((1, D)),                # FF2 W/b
            const2((1, D)), const2((1, D)),                         # classifier LN
            const2((D, CP)), const2((1, CP)),                       # classifier W/b
        ],
        out_specs=pl.BlockSpec((None, block_b, CP), lambda b, l: (b, 0, 0)),
        scratch_shapes=[pltpu.VMEM((block_b * T, D), jnp.float32)],
        compiler_params=pltpu.CompilerParams(
            dimension_semantics=("parallel", "arbitrary"),
            vmem_limit_bytes=vmem_limit),
        cost_estimate=cost,
    )(xf, pe[:T], proj_w, params["proj_b"],
      params["g1"], params["b1"], wqkv, params["bqkv"], wo, params["bo"],
      params["g2"], params["b2"], w1, params["bf1"], w2, params["bf2"],
      params["cls_g"], params["cls_b"], cw, cbc)

    # nn.Dropout is identity at inference.
    # TODO(synk): training-mode dropout (PRNG masking) not implemented.
    return out.reshape(B, CP)[:, :C]


# ---------------------------- params / pos-enc --------------------------------
def make_positional_encoding(max_len, d_model):
    pos = jnp.arange(max_len, dtype=jnp.float32)[:, None]
    div = jnp.exp(jnp.arange(0, d_model, 2, dtype=jnp.float32)
                  * (-math.log(10000.0) / d_model))
    pe = jnp.zeros((max_len, d_model), jnp.float32)
    pe = pe.at[:, 0::2].set(jnp.sin(pos * div))
    pe = pe.at[:, 1::2].set(jnp.cos(pos * div))
    return pe


def init_params(key, input_dim, d_model, nhead, num_layers, num_classes, dim_ff):
    def uniform(k, shape, fan_in):
        bound = 1.0 / math.sqrt(fan_in)
        return jax.random.uniform(k, shape, jnp.float32, -bound, bound)

    keys = jax.random.split(key, num_layers + 2)
    params = {}
    kpw, kpb = jax.random.split(keys[0])
    params["proj_w"] = uniform(kpw, (input_dim, d_model), input_dim)
    params["proj_b"] = uniform(kpb, (1, d_model), input_dim)

    names = ["g1", "b1", "wqkv", "bqkv", "wo", "bo",
             "g2", "b2", "w1", "bf1", "w2", "bf2"]
    stacks = {n: [] for n in names}
    for l in range(num_layers):
        ks = jax.random.split(keys[1 + l], 8)
        stacks["g1"].append(jnp.ones((1, d_model), jnp.float32))
        stacks["b1"].append(jnp.zeros((1, d_model), jnp.float32))
        # fused QKV weight, [K=d_model, N=3*d_model] = [q | k | v] lanes,
        # each D block head-major (h0..hH-1) -> matches PyTorch in_proj_weight.T
        stacks["wqkv"].append(uniform(ks[0], (d_model, 3 * d_model), d_model))
        stacks["bqkv"].append(uniform(ks[1], (1, 3 * d_model), d_model))
        stacks["wo"].append(uniform(ks[2], (d_model, d_model), d_model))
        stacks["bo"].append(uniform(ks[3], (1, d_model), d_model))
        stacks["g2"].append(jnp.ones((1, d_model), jnp.float32))
        stacks["b2"].append(jnp.zeros((1, d_model), jnp.float32))
        stacks["w1"].append(uniform(ks[4], (d_model, dim_ff), d_model))
        stacks["bf1"].append(uniform(ks[5], (1, dim_ff), d_model))
        stacks["w2"].append(uniform(ks[6], (dim_ff, d_model), dim_ff))
        stacks["bf2"].append(uniform(ks[7], (1, d_model), dim_ff))
    for n in names:
        params[n] = jnp.stack(stacks[n], axis=0)

    kcw, kcb = jax.random.split(keys[-1])
    params["cls_g"] = jnp.ones((1, d_model), jnp.float32)
    params["cls_b"] = jnp.zeros((1, d_model), jnp.float32)
    params["cls_w"] = uniform(kcw, (d_model, num_classes), d_model)
    params["cls_bc"] = uniform(kcb, (1, num_classes), d_model)
    return params


if __name__ == "__main__":
    # Small demo shapes consistent with the module (lane-dense d_model=128).
    B, T, J, C = 4, 32, 8, 4                    # input_dim = J*C = 32
    d_model, nhead, num_layers = 128, 4, 2
    num_classes, dim_ff, max_len = 100, 256, 500

    key = jax.random.PRNGKey(0)
    kx, kp = jax.random.split(key)
    x = jax.random.normal(kx, (B, T, J, C), jnp.float32)
    params = init_params(kp, J * C, d_model, nhead, num_layers, num_classes, dim_ff)
    pe = make_positional_encoding(max_len, d_model)

    out = sign_language_transformer(x, params, pe, nhead)
    out = jax.block_until_ready(out)
    assert out.shape == (B, num_classes) and out.dtype == jnp.float32
    print("KERNEL_OK")
</pallas_src>

<mosaic_0001>
module attributes {stable_mosaic.version = 11 : i64} {
  func.func @_encoder_kernel(%arg0: i32, %arg1: i32, %arg2: memref<4x32x32xf32, #tpu.memory_space<vmem>>, %arg3: memref<32x128xf32, #tpu.memory_space<vmem>>, %arg4: memref<32x128xf32, #tpu.memory_space<vmem>>, %arg5: memref<1x128xf32, #tpu.memory_space<vmem>>, %arg6: memref<1x1x128xf32, #tpu.memory_space<vmem>>, %arg7: memref<1x1x128xf32, #tpu.memory_space<vmem>>, %arg8: memref<1x128x384xf32, #tpu.memory_space<vmem>>, %arg9: memref<1x1x384xf32, #tpu.memory_space<vmem>>, %arg10: memref<1x128x128xf32, #tpu.memory_space<vmem>>, %arg11: memref<1x1x128xf32, #tpu.memory_space<vmem>>, %arg12: memref<1x1x128xf32, #tpu.memory_space<vmem>>, %arg13: memref<1x1x128xf32, #tpu.memory_space<vmem>>, %arg14: memref<1x128x256xf32, #tpu.memory_space<vmem>>, %arg15: memref<1x1x256xf32, #tpu.memory_space<vmem>>, %arg16: memref<1x256x128xf32, #tpu.memory_space<vmem>>, %arg17: memref<1x1x128xf32, #tpu.memory_space<vmem>>, %arg18: memref<1x128xf32, #tpu.memory_space<vmem>>, %arg19: memref<1x128xf32, #tpu.memory_space<vmem>>, %arg20: memref<128x128xf32, #tpu.memory_space<vmem>>, %arg21: memref<1x128xf32, #tpu.memory_space<vmem>>, %arg22: memref<1x4x128xf32, #tpu.memory_space<vmem>>, %arg23: memref<128x128xf32, #tpu.memory_space<vmem>>) attributes {dimension_semantics = [#tpu.dimension_semantics<parallel>, #tpu.dimension_semantics<arbitrary>], iteration_bounds = array<i64: 1, 2>, scalar_prefetch = 0 : i64, scratch_operands = 1 : i64, tpu.core_type = #tpu.core_type<tc>, window_params = [{transform_indices = @transform_0, window_bounds = array<i64: 4, 32, 32>}, {pipeline_mode = #tpu.pipeline_mode<synchronous>, transform_indices = @transform_1, window_bounds = array<i64: 32, 128>}, {pipeline_mode = #tpu.pipeline_mode<synchronous>, transform_indices = @transform_2, window_bounds = array<i64: 32, 128>}, {pipeline_mode = #tpu.pipeline_mode<synchronous>, transform_indices = @transform_3, window_bounds = array<i64: 1, 128>}, {transform_indices = @transform_4, window_bounds = array<i64: 1, 1, 128>}, {transform_indices = @transform_5, window_bounds = array<i64: 1, 1, 128>}, {transform_indices = @transform_6, window_bounds = array<i64: 1, 128, 384>}, {transform_indices = @transform_7, window_bounds = array<i64: 1, 1, 384>}, {transform_indices = @transform_8, window_bounds = array<i64: 1, 128, 128>}, {transform_indices = @transform_9, window_bounds = array<i64: 1, 1, 128>}, {transform_indices = @transform_10, window_bounds = array<i64: 1, 1, 128>}, {transform_indices = @transform_11, window_bounds = array<i64: 1, 1, 128>}, {transform_indices = @transform_12, window_bounds = array<i64: 1, 128, 256>}, {transform_indices = @transform_13, window_bounds = array<i64: 1, 1, 256>}, {transform_indices = @transform_14, window_bounds = array<i64: 1, 256, 128>}, {transform_indices = @transform_15, window_bounds = array<i64: 1, 1, 128>}, {pipeline_mode = #tpu.pipeline_mode<synchronous>, transform_indices = @transform_16, window_bounds = array<i64: 1, 128>}, {pipeline_mode = #tpu.pipeline_mode<synchronous>, transform_indices = @transform_17, window_bounds = array<i64: 1, 128>}, {pipeline_mode = #tpu.pipeline_mode<synchronous>, transform_indices = @transform_18, window_bounds = array<i64: 128, 128>}, {pipeline_mode = #tpu.pipeline_mode<synchronous>, transform_indices = @transform_19, window_bounds = array<i64: 1, 128>}, {transform_indices = @transform_20, window_bounds = array<i64: 1, 4, 128>}]} {
    %c0_i32 = arith.constant 0 : i32
    %0 = arith.cmpi eq, %arg1, %c0_i32 : i32
    %1 = arith.extui %0 : i1 to i32
    %c0_i32_0 = arith.constant 0 : i32
    %2 = arith.cmpi ne, %1, %c0_i32_0 : i32
    scf.if %2 {
      %c0_75 = arith.constant 0 : index
      %c0_76 = arith.constant 0 : index
      %c0_77 = arith.constant 0 : index
      %173 = vector.load %arg2[%c0_75, %c0_76, %c0_77] : memref<4x32x32xf32, #tpu.memory_space<vmem>>, vector<4x32x32xf32>
      %174 = vector.shape_cast %173 : vector<4x32x32xf32> to vector<128x32xf32>
      %c0_78 = arith.constant 0 : index
      %c0_79 = arith.constant 0 : index
      %175 = vector.load %arg4[%c0_78, %c0_79] : memref<32x128xf32, #tpu.memory_space<vmem>>, vector<32x128xf32>
      %cst_80 = arith.constant dense<0.000000e+00> : vector<128x128xf32>
      %176 = tpu.matmul %174, %175, %cst_80 {dimension_numbers = #tpu.dot_dimension_numbers<[1], [0], [0], [1], [0, 0, 1, 1], [], []>} : vector<128x32xf32>, vector<32x128xf32>, vector<128x128xf32> -> vector<128x128xf32>
      %c0_81 = arith.constant 0 : index
      %c0_82 = arith.constant 0 : index
      %177 = vector.load %arg5[%c0_81, %c0_82] : memref<1x128xf32, #tpu.memory_space<vmem>>, vector<1x128xf32>
      %178 = vector.broadcast %177 : vector<1x128xf32> to vector<128x128xf32>
      %179 = arith.addf %176, %178 : vector<128x128xf32>
      %180 = vector.shape_cast %179 : vector<128x128xf32> to vector<4x32x128xf32>
      %c0_83 = arith.constant 0 : index
      %c0_84 = arith.constant 0 : index
      %181 = vector.load %arg3[%c0_83, %c0_84] : memref<32x128xf32, #tpu.memory_space<vmem>>, vector<32x128xf32>
      %182 = vector.shape_cast %181 : vector<32x128xf32> to vector<1x32x128xf32>
      %183 = vector.broadcast %182 : vector<1x32x128xf32> to vector<4x32x128xf32>
      %184 = arith.addf %180, %183 : vector<4x32x128xf32>
      %185 = vector.shape_cast %184 : vector<4x32x128xf32> to vector<128x128xf32>
      %c0_85 = arith.constant 0 : index
      %c0_86 = arith.constant 0 : index
      %186 = vector.load %arg23[%c0_85, %c0_86] : memref<128x128xf32, #tpu.memory_space<vmem>>, vector<128x128xf32>
      tpu.vector_store %arg23[%c0_85, %c0_86], %185 {strides = array<i32>} : memref<128x128xf32, #tpu.memory_space<vmem>>, vector<128x128xf32>,
    } else {
    }
    %c0 = arith.constant 0 : index
    %c0_1 = arith.constant 0 : index
    %3 = vector.load %arg23[%c0, %c0_1] : memref<128x128xf32, #tpu.memory_space<vmem>>, vector<128x128xf32>
    %c0_2 = arith.constant 0 : index
    %c0_3 = arith.constant 0 : index
    %c0_4 = arith.constant 0 : index
    %4 = vector.load %arg6[%c0_2, %c0_3, %c0_4] : memref<1x1x128xf32, #tpu.memory_space<vmem>>, vector<1x1x128xf32>
    %5 = vector.shape_cast %4 : vector<1x1x128xf32> to vector<1x128xf32>
    %c0_5 = arith.constant 0 : index
    %c0_6 = arith.constant 0 : index
    %c0_7 = arith.constant 0 : index
    %6 = vector.load %arg7[%c0_5, %c0_6, %c0_7] : memref<1x1x128xf32, #tpu.memory_space<vmem>>, vector<1x1x128xf32>
    %7 = vector.shape_cast %6 : vector<1x1x128xf32> to vector<1x128xf32>
    %cst = arith.constant dense<0.000000e+00> : vector<128xf32>
    %8 = vector.multi_reduction <add>, %3, %cst [1] : vector<128x128xf32> to vector<128xf32>
    %9 = vector.shape_cast %8 : vector<128xf32> to vector<128x1xf32>
    %cst_8 = arith.constant 1.280000e+02 : f32
    %10 = vector.broadcast %cst_8 : f32 to vector<128x1xf32>
    %11 = arith.divf %9, %10 : vector<128x1xf32>
    %12 = vector.broadcast %11 : vector<128x1xf32> to vector<128x128xf32>
    %13 = arith.subf %3, %12 : vector<128x128xf32>
    %14 = arith.mulf %13, %13 : vector<128x128xf32>
    %cst_9 = arith.constant dense<0.000000e+00> : vector<128xf32>
    %15 = vector.multi_reduction <add>, %14, %cst_9 [1] : vector<128x128xf32> to vector<128xf32>
    %16 = vector.shape_cast %15 : vector<128xf32> to vector<128x1xf32>
    %cst_10 = arith.constant 1.280000e+02 : f32
    %17 = vector.broadcast %cst_10 : f32 to vector<128x1xf32>
    %18 = arith.divf %16, %17 : vector<128x1xf32>
    %19 = vector.broadcast %11 : vector<128x1xf32> to vector<128x128xf32>
    %20 = arith.subf %3, %19 : vector<128x128xf32>
    %cst_11 = arith.constant 9.99999974E-6 : f32
    %21 = vector.broadcast %cst_11 : f32 to vector<128x1xf32>
    %22 = arith.addf %18, %21 : vector<128x1xf32>
    %23 = math.rsqrt %22 : vector<128x1xf32>
    %24 = vector.broadcast %23 : vector<128x1xf32> to vector<128x128xf32>
    %25 = arith.mulf %20, %24 : vector<128x128xf32>
    %26 = vector.broadcast %5 : vector<1x128xf32> to vector<128x128xf32>
    %27 = arith.mulf %25, %26 : vector<128x128xf32>
    %28 = vector.broadcast %7 : vector<1x128xf32> to vector<128x128xf32>
    %29 = arith.addf %27, %28 : vector<128x128xf32>
    %c0_12 = arith.constant 0 : index
    %c0_13 = arith.constant 0 : index
    %c0_14 = arith.constant 0 : index
    %30 = vector.load %arg8[%c0_12, %c0_13, %c0_14] : memref<1x128x384xf32, #tpu.memory_space<vmem>>, vector<1x128x384xf32>
    %31 = vector.shape_cast %30 : vector<1x128x384xf32> to vector<128x384xf32>
    %cst_15 = arith.constant dense<0.000000e+00> : vector<128x384xf32>
    %32 = tpu.matmul %29, %31, %cst_15 {dimension_numbers = #tpu.dot_dimension_numbers<[1], [0], [0], [1], [0, 0, 1, 1], [], []>} : vector<128x128xf32>, vector<128x384xf32>, vector<128x384xf32> -> vector<128x384xf32>
    %c0_16 = arith.constant 0 : index
    %c0_17 = arith.constant 0 : index
    %c0_18 = arith.constant 0 : index
    %33 = vector.load %arg9[%c0_16, %c0_17, %c0_18] : memref<1x1x384xf32, #tpu.memory_space<vmem>>, vector<1x1x384xf32>
    %34 = vector.shape_cast %33 : vector<1x1x384xf32> to vector<1x384xf32>
    %35 = vector.broadcast %34 : vector<1x384xf32> to vector<128x384xf32>
    %36 = arith.addf %32, %35 : vector<128x384xf32>
    %37 = vector.extract_strided_slice %36 {offsets = [0, 0], sizes = [128, 32], strides = [1, 1]} : vector<128x384xf32> to vector<128x32xf32>
    %38 = vector.shape_cast %37 : vector<128x32xf32> to vector<4x32x32xf32>
    %39 = vector.extract_strided_slice %36 {offsets = [0, 128], sizes = [128, 32], strides = [1, 1]} : vector<128x384xf32> to vector<128x32xf32>
    %40 = vector.shape_cast %39 : vector<128x32xf32> to vector<4x32x32xf32>
    %41 = vector.extract_strided_slice %36 {offsets = [0, 256], sizes = [128, 32], strides = [1, 1]} : vector<128x384xf32> to vector<128x32xf32>
    %42 = vector.shape_cast %41 : vector<128x32xf32> to vector<4x32x32xf32>
    "tpu.trace_start"() <{level = 10 : i32, message = "bqd,bkd->bqk"}> : () -> ()
    %cst_19 = arith.constant dense<0.000000e+00> : vector<4x32x32xf32>
    %43 = tpu.matmul %38, %40, %cst_19 {dimension_numbers = #tpu.dot_dimension_numbers<[2], [2], [1], [1], [0, 0, 0, 1, 1, 1], [0], [0]>} : vector<4x32x32xf32>, vector<4x32x32xf32>, vector<4x32x32xf32> -> vector<4x32x32xf32>
    "tpu.trace_stop"() : () -> ()
    %cst_20 = arith.constant 0.176776692 : f32
    %44 = vector.broadcast %cst_20 : f32 to vector<4x32x32xf32>
    %45 = arith.mulf %43, %44 : vector<4x32x32xf32>
    %cst_21 = arith.constant dense<0xFF800000> : vector<4x32xf32>
    %46 = vector.multi_reduction <maximumf>, %45, %cst_21 [2] : vector<4x32x32xf32> to vector<4x32xf32>
    %47 = vector.shape_cast %46 : vector<4x32xf32> to vector<4x32x1xf32>
    %48 = vector.broadcast %47 : vector<4x32x1xf32> to vector<4x32x32xf32>
    %49 = arith.subf %45, %48 : vector<4x32x32xf32>
    %50 = math.exp %49 : vector<4x32x32xf32>
    %cst_22 = arith.constant dense<0.000000e+00> : vector<4x32xf32>
    %51 = vector.multi_reduction <add>, %50, %cst_22 [2] : vector<4x32x32xf32> to vector<4x32xf32>
    %52 = vector.shape_cast %51 : vector<4x32xf32> to vector<4x32x1xf32>
    %53 = vector.broadcast %52 : vector<4x32x1xf32> to vector<4x32x32xf32>
    %54 = arith.divf %50, %53 : vector<4x32x32xf32>
    "tpu.trace_start"() <{level = 10 : i32, message = "bqk,bkd->bqd"}> : () -> ()
    %cst_23 = arith.constant dense<0.000000e+00> : vector<4x32x32xf32>
    %55 = tpu.matmul %54, %42, %cst_23 {dimension_numbers = #tpu.dot_dimension_numbers<[2], [1], [1], [2], [0, 0, 0, 1, 1, 2], [0], [0]>} : vector<4x32x32xf32>, vector<4x32x32xf32>, vector<4x32x32xf32> -> vector<4x32x32xf32>
    "tpu.trace_stop"() : () -> ()
    %56 = vector.shape_cast %55 : vector<4x32x32xf32> to vector<128x32xf32>
    %57 = vector.extract_strided_slice %36 {offsets = [0, 32], sizes = [128, 32], strides = [1, 1]} : vector<128x384xf32> to vector<128x32xf32>
    %58 = vector.shape_cast %57 : vector<128x32xf32> to vector<4x32x32xf32>
    %59 = vector.extract_strided_slice %36 {offsets = [0, 160], sizes = [128, 32], strides = [1, 1]} : vector<128x384xf32> to vector<128x32xf32>
    %60 = vector.shape_cast %59 : vector<128x32xf32> to vector<4x32x32xf32>
    %61 = vector.extract_strided_slice %36 {offsets = [0, 288], sizes = [128, 32], strides = [1, 1]} : vector<128x384xf32> to vector<128x32xf32>
    %62 = vector.shape_cast %61 : vector<128x32xf32> to vector<4x32x32xf32>
    "tpu.trace_start"() <{level = 10 : i32, message = "bqd,bkd->bqk"}> : () -> ()
    %cst_24 = arith.constant dense<0.000000e+00> : vector<4x32x32xf32>
    %63 = tpu.matmul %58, %60, %cst_24 {dimension_numbers = #tpu.dot_dimension_numbers<[2], [2], [1], [1], [0, 0, 0, 1, 1, 1], [0], [0]>} : vector<4x32x32xf32>, vector<4x32x32xf32>, vector<4x32x32xf32> -> vector<4x32x32xf32>
    "tpu.trace_stop"() : () -> ()
    %cst_25 = arith.constant 0.176776692 : f32
    %64 = vector.broadcast %cst_25 : f32 to vector<4x32x32xf32>
    %65 = arith.mulf %63, %64 : vector<4x32x32xf32>
    %cst_26 = arith.constant dense<0xFF800000> : vector<4x32xf32>
    %66 = vector.multi_reduction <maximumf>, %65, %cst_26 [2] : vector<4x32x32xf32> to vector<4x32xf32>
    %67 = vector.shape_cast %66 : vector<4x32xf32> to vector<4x32x1xf32>
    %68 = vector.broadcast %67 : vector<4x32x1xf32> to vector<4x32x32xf32>
    %69 = arith.subf %65, %68 : vector<4x32x32xf32>
    %70 = math.exp %69 : vector<4x32x32xf32>
    %cst_27 = arith.constant dense<0.000000e+00> : vector<4x32xf32>
    %71 = vector.multi_reduction <add>, %70, %cst_27 [2] : vector<4x32x32xf32> to vector<4x32xf32>
    %72 = vector.shape_cast %71 : vector<4x32xf32> to vector<4x32x1xf32>
    %73 = vector.broadcast %72 : vector<4x32x1xf32> to vector<4x32x32xf32>
    %74 = arith.divf %70, %73 : vector<4x32x32xf32>
    "tpu.trace_start"() <{level = 10 : i32, message = "bqk,bkd->bqd"}> : () -> ()
    %cst_28 = arith.constant dense<0.000000e+00> : vector<4x32x32xf32>
    %75 = tpu.matmul %74, %62, %cst_28 {dimension_numbers = #tpu.dot_dimension_numbers<[2], [1], [1], [2], [0, 0, 0, 1, 1, 2], [0], [0]>} : vector<4x32x32xf32>, vector<4x32x32xf32>, vector<4x32x32xf32> -> vector<4x32x32xf32>
    "tpu.trace_stop"() : () -> ()
    %76 = vector.shape_cast %75 : vector<4x32x32xf32> to vector<128x32xf32>
    %77 = vector.extract_strided_slice %36 {offsets = [0, 64], sizes = [128, 32], strides = [1, 1]} : vector<128x384xf32> to vector<128x32xf32>
    %78 = vector.shape_cast %77 : vector<128x32xf32> to vector<4x32x32xf32>
    %79 = vector.extract_strided_slice %36 {offsets = [0, 192], sizes = [128, 32], strides = [1, 1]} : vector<128x384xf32> to vector<128x32xf32>
    %80 = vector.shape_cast %79 : vector<128x32xf32> to vector<4x32x32xf32>
    %81 = vector.extract_strided_slice %36 {offsets = [0, 320], sizes = [128, 32], strides = [1, 1]} : vector<128x384xf32> to vector<128x32xf32>
    %82 = vector.shape_cast %81 : vector<128x32xf32> to vector<4x32x32xf32>
    "tpu.trace_start"() <{level = 10 : i32, message = "bqd,bkd->bqk"}> : () -> ()
    %cst_29 = arith.constant dense<0.000000e+00> : vector<4x32x32xf32>
    %83 = tpu.matmul %78, %80, %cst_29 {dimension_numbers = #tpu.dot_dimension_numbers<[2], [2], [1], [1], [0, 0, 0, 1, 1, 1], [0], [0]>} : vector<4x32x32xf32>, vector<4x32x32xf32>, vector<4x32x32xf32> -> vector<4x32x32xf32>
    "tpu.trace_stop"() : () -> ()
    %cst_30 = arith.constant 0.176776692 : f32
    %84 = vector.broadcast %cst_30 : f32 to vector<4x32x32xf32>
    %85 = arith.mulf %83, %84 : vector<4x32x32xf32>
    %cst_31 = arith.constant dense<0xFF800000> : vector<4x32xf32>
    %86 = vector.multi_reduction <maximumf>, %85, %cst_31 [2] : vector<4x32x32xf32> to vector<4x32xf32>
    %87 = vector.shape_cast %86 : vector<4x32xf32> to vector<4x32x1xf32>
    %88 = vector.broadcast %87 : vector<4x32x1xf32> to vector<4x32x32xf32>
    %89 = arith.subf %85, %88 : vector<4x32x32xf32>
    %90 = math.exp %89 : vector<4x32x32xf32>
    %cst_32 = arith.constant dense<0.000000e+00> : vector<4x32xf32>
    %91 = vector.multi_reduction <add>, %90, %cst_32 [2] : vector<4x32x32xf32> to vector<4x32xf32>
    %92 = vector.shape_cast %91 : vector<4x32xf32> to vector<4x32x1xf32>
    %93 = vector.broadcast %92 : vector<4x32x1xf32> to vector<4x32x32xf32>
    %94 = arith.divf %90, %93 : vector<4x32x32xf32>
    "tpu.trace_start"() <{level = 10 : i32, message = "bqk,bkd->bqd"}> : () -> ()
    %cst_33 = arith.constant dense<0.000000e+00> : vector<4x32x32xf32>
    %95 = tpu.matmul %94, %82, %cst_33 {dimension_numbers = #tpu.dot_dimension_numbers<[2], [1], [1], [2], [0, 0, 0, 1, 1, 2], [0], [0]>} : vector<4x32x32xf32>, vector<4x32x32xf32>, vector<4x32x32xf32> -> vector<4x32x32xf32>
    "tpu.trace_stop"() : () -> ()
    %96 = vector.shape_cast %95 : vector<4x32x32xf32> to vector<128x32xf32>
    %97 = vector.extract_strided_slice %36 {offsets = [0, 96], sizes = [128, 32], strides = [1, 1]} : vector<128x384xf32> to vector<128x32xf32>
    %98 = vector.shape_cast %97 : vector<128x32xf32> to vector<4x32x32xf32>
    %99 = vector.extract_strided_slice %36 {offsets = [0, 224], sizes = [128, 32], strides = [1, 1]} : vector<128x384xf32> to vector<128x32xf32>
    %100 = vector.shape_cast %99 : vector<128x32xf32> to vector<4x32x32xf32>
    %101 = vector.extract_strided_slice %36 {offsets = [0, 352], sizes = [128, 32], strides = [1, 1]} : vector<128x384xf32> to vector<128x32xf32>
    %102 = vector.shape_cast %101 : vector<128x32xf32> to vector<4x32x32xf32>
    "tpu.trace_start"() <{level = 10 : i32, message = "bqd,bkd->bqk"}> : () -> ()
    %cst_34 = arith.constant dense<0.000000e+00> : vector<4x32x32xf32>
    %103 = tpu.matmul %98, %100, %cst_34 {dimension_numbers = #tpu.dot_dimension_numbers<[2], [2], [1], [1], [0, 0, 0, 1, 1, 1], [0], [0]>} : vector<4x32x32xf32>, vector<4x32x32xf32>, vector<4x32x32xf32> -> vector<4x32x32xf32>
    "tpu.trace_stop"() : () -> ()
    %cst_35 = arith.constant 0.176776692 : f32
    %104 = vector.broadcast %cst_35 : f32 to vector<4x32x32xf32>
    %105 = arith.mulf %103, %104 : vector<4x32x32xf32>
    %cst_36 = arith.constant dense<0xFF800000> : vector<4x32xf32>
    %106 = vector.multi_reduction <maximumf>, %105, %cst_36 [2] : vector<4x32x32xf32> to vector<4x32xf32>
    %107 = vector.shape_cast %106 : vector<4x32xf32> to vector<4x32x1xf32>
    %108 = vector.broadcast %107 : vector<4x32x1xf32> to vector<4x32x32xf32>
    %109 = arith.subf %105, %108 : vector<4x32x32xf32>
    %110 = math.exp %109 : vector<4x32x32xf32>
    %cst_37 = arith.constant dense<0.000000e+00> : vector<4x32xf32>
    %111 = vector.multi_reduction <add>, %110, %cst_37 [2] : vector<4x32x32xf32> to vector<4x32xf32>
    %112 = vector.shape_cast %111 : vector<4x32xf32> to vector<4x32x1xf32>
    %113 = vector.broadcast %112 : vector<4x32x1xf32> to vector<4x32x32xf32>
    %114 = arith.divf %110, %113 : vector<4x32x32xf32>
    "tpu.trace_start"() <{level = 10 : i32, message = "bqk,bkd->bqd"}> : () -> ()
    %cst_38 = arith.constant dense<0.000000e+00> : vector<4x32x32xf32>
    %115 = tpu.matmul %114, %102, %cst_38 {dimension_numbers = #tpu.dot_dimension_numbers<[2], [1], [1], [2], [0, 0, 0, 1, 1, 2], [0], [0]>} : vector<4x32x32xf32>, vector<4x32x32xf32>, vector<4x32x32xf32> -> vector<4x32x32xf32>
    "tpu.trace_stop"() : () -> ()
    %116 = vector.shape_cast %115 : vector<4x32x32xf32> to vector<128x32xf32>
    %117 = tpu.concatenate %56, %76, %96, %116 in 1 : vector<128x32xf32>, vector<128x32xf32>, vector<128x32xf32>, vector<128x32xf32> -> vector<128x128xf32>
    %c0_39 = arith.constant 0 : index
    %c0_40 = arith.constant 0 : index
    %c0_41 = arith.constant 0 : index
    %118 = vector.load %arg10[%c0_39, %c0_40, %c0_41] : memref<1x128x128xf32, #tpu.memory_space<vmem>>, vector<1x128x128xf32>
    %119 = vector.shape_cast %118 : vector<1x128x128xf32> to vector<128x128xf32>
    %cst_42 = arith.constant dense<0.000000e+00> : vector<128x128xf32>
    %120 = tpu.matmul %117, %119, %cst_42 {dimension_numbers = #tpu.dot_dimension_numbers<[1], [0], [0], [1], [0, 0, 1, 1], [], []>} : vector<128x128xf32>, vector<128x128xf32>, vector<128x128xf32> -> vector<128x128xf32>
    %121 = arith.addf %3, %120 : vector<128x128xf32>
    %c0_43 = arith.constant 0 : index
    %c0_44 = arith.constant 0 : index
    %c0_45 = arith.constant 0 : index
    %122 = vector.load %arg11[%c0_43, %c0_44, %c0_45] : memref<1x1x128xf32, #tpu.memory_space<vmem>>, vector<1x1x128xf32>
    %123 = vector.shape_cast %122 : vector<1x1x128xf32> to vector<1x128xf32>
    %124 = vector.broadcast %123 : vector<1x128xf32> to vector<128x128xf32>
    %125 = arith.addf %121, %124 : vector<128x128xf32>
    %c0_46 = arith.constant 0 : index
    %c0_47 = arith.constant 0 : index
    %c0_48 = arith.constant 0 : index
    %126 = vector.load %arg12[%c0_46, %c0_47, %c0_48] : memref<1x1x128xf32, #tpu.memory_space<vmem>>, vector<1x1x128xf32>
    %127 = vector.shape_cast %126 : vector<1x1x128xf32> to vector<1x128xf32>
    %c0_49 = arith.constant 0 : index
    %c0_50 = arith.constant 0 : index
    %c0_51 = arith.constant 0 : index
    %128 = vector.load %arg13[%c0_49, %c0_50, %c0_51] : memref<1x1x128xf32, #tpu.memory_space<vmem>>, vector<1x1x128xf32>
    %129 = vector.shape_cast %128 : vector<1x1x128xf32> to vector<1x128xf32>
    %cst_52 = arith.constant dense<0.000000e+00> : vector<128xf32>
    %130 = vector.multi_reduction <add>, %125, %cst_52 [1] : vector<128x128xf32> to vector<128xf32>
    %131 = vector.shape_cast %130 : vector<128xf32> to vector<128x1xf32>
    %cst_53 = arith.constant 1.280000e+02 : f32
    %132 = vector.broadcast %cst_53 : f32 to vector<128x1xf32>
    %133 = arith.divf %131, %132 : vector<128x1xf32>
    %134 = vector.broadcast %133 : vector<128x1xf32> to vector<128x128xf32>
    %135 = arith.subf %125, %134 : vector<128x128xf32>
    %136 = arith.mulf %135, %135 : vector<128x128xf32>
    %cst_54 = arith.constant dense<0.000000e+00> : vector<128xf32>
    %137 = vector.multi_reduction <add>, %136, %cst_54 [1] : vector<128x128xf32> to vector<128xf32>
    %138 = vector.shape_cast %137 : vector<128xf32> to vector<128x1xf32>
    %cst_55 = arith.constant 1.280000e+02 : f32
    %139 = vector.broadcast %cst_55 : f32 to vector<128x1xf32>
    %140 = arith.divf %138, %139 : vector<128x1xf32>
    %141 = vector.broadcast %133 : vector<128x1xf32> to vector<128x128xf32>
    %142 = arith.subf %125, %141 : vector<128x128xf32>
    %cst_56 = arith.constant 9.99999974E-6 : f32
    %143 = vector.broadcast %cst_56 : f32 to vector<128x1xf32>
    %144 = arith.addf %140, %143 : vector<128x1xf32>
    %145 = math.rsqrt %144 : vector<128x1xf32>
    %146 = vector.broadcast %145 : vector<128x1xf32> to vector<128x128xf32>
    %147 = arith.mulf %142, %146 : vector<128x128xf32>
    %148 = vector.broadcast %127 : vector<1x128xf32> to vector<128x128xf32>
    %149 = arith.mulf %147, %148 : vector<128x128xf32>
    %150 = vector.broadcast %129 : vector<1x128xf32> to vector<128x128xf32>
    %151 = arith.addf %149, %150 : vector<128x128xf32>
    %c0_57 = arith.constant 0 : index
    %c0_58 = arith.constant 0 : index
    %c0_59 = arith.constant 0 : index
    %152 = vector.load %arg14[%c0_57, %c0_58, %c0_59] : memref<1x128x256xf32, #tpu.memory_space<vmem>>, vector<1x128x256xf32>
    %153 = vector.shape_cast %152 : vector<1x128x256xf32> to vector<128x256xf32>
    %cst_60 = arith.constant dense<0.000000e+00> : vector<128x256xf32>
    %154 = tpu.matmul %151, %153, %cst_60 {dimension_numbers = #tpu.dot_dimension_numbers<[1], [0], [0], [1], [0, 0, 1, 1], [], []>} : vector<128x128xf32>, vector<128x256xf32>, vector<128x256xf32> -> vector<128x256xf32>
    %c0_61 = arith.constant 0 : index
    %c0_62 = arith.constant 0 : index
    %c0_63 = arith.constant 0 : index
    %155 = vector.load %arg15[%c0_61, %c0_62, %c0_63] : memref<1x1x256xf32, #tpu.memory_space<vmem>>, vector<1x1x256xf32>
    %156 = vector.shape_cast %155 : vector<1x1x256xf32> to vector<1x256xf32>
    %157 = vector.broadcast %156 : vector<1x256xf32> to vector<128x256xf32>
    %158 = arith.addf %154, %157 : vector<128x256xf32>
    %cst_64 = arith.constant 0.000000e+00 : f32
    %159 = vector.broadcast %cst_64 : f32 to vector<128x256xf32>
    %160 = arith.maximumf %158, %159 : vector<128x256xf32>
    %c0_65 = arith.constant 0 : index
    %c0_66 = arith.constant 0 : index
    %c0_67 = arith.constant 0 : index
    %161 = vector.load %arg16[%c0_65, %c0_66, %c0_67] : memref<1x256x128xf32, #tpu.memory_space<vmem>>, vector<1x256x128xf32>
    %162 = vector.shape_cast %161 : vector<1x256x128xf32> to vector<256x128xf32>
    %cst_68 = arith.constant dense<0.000000e+00> : vector<128x128xf32>
    %163 = tpu.matmul %160, %162, %cst_68 {dimension_numbers = #tpu.dot_dimension_numbers<[1], [0], [0], [1], [0, 0, 1, 1], [], []>} : vector<128x256xf32>, vector<256x128xf32>, vector<128x128xf32> -> vector<128x128xf32>
    %164 = arith.addf %125, %163 : vector<128x128xf32>
    %c0_69 = arith.constant 0 : index
    %c0_70 = arith.constant 0 : index
    %c0_71 = arith.constant 0 : index
    %165 = vector.load %arg17[%c0_69, %c0_70, %c0_71] : memref<1x1x128xf32, #tpu.memory_space<vmem>>, vector<1x1x128xf32>
    %166 = vector.shape_cast %165 : vector<1x1x128xf32> to vector<1x128xf32>
    %167 = vector.broadcast %166 : vector<1x128xf32> to vector<128x128xf32>
    %168 = arith.addf %164, %167 : vector<128x128xf32>
    %c0_72 = arith.constant 0 : index
    %c0_73 = arith.constant 0 : index
    %169 = vector.load %arg23[%c0_72, %c0_73] : memref<128x128xf32, #tpu.memory_space<vmem>>, vector<128x128xf32>
    tpu.vector_store %arg23[%c0_72, %c0_73], %168 {strides = array<i32>} : memref<128x128xf32, #tpu.memory_space<vmem>>, vector<128x128xf32>,
    %c1_i32 = arith.constant 1 : i32
    %170 = arith.cmpi eq, %arg1, %c1_i32 : i32
    %171 = arith.extui %170 : i1 to i32
    %c0_i32_74 = arith.constant 0 : i32
    %172 = arith.cmpi ne, %171, %c0_i32_74 : i32
    scf.if %172 {
      %173 = vector.shape_cast %168 : vector<128x128xf32> to vector<4x32x128xf32>
      %cst_75 = arith.constant dense<0.000000e+00> : vector<4x128xf32>
      %174 = vector.multi_reduction <add>, %173, %cst_75 [1] : vector<4x32x128xf32> to vector<4x128xf32>
      %cst_76 = arith.constant 3.200000e+01 : f32
      %175 = vector.broadcast %cst_76 : f32 to vector<4x128xf32>
      %176 = arith.divf %174, %175 : vector<4x128xf32>
      %c0_77 = arith.constant 0 : index
      %c0_78 = arith.constant 0 : index
      %177 = vector.load %arg18[%c0_77, %c0_78] : memref<1x128xf32, #tpu.memory_space<vmem>>, vector<1x128xf32>
      %c0_79 = arith.constant 0 : index
      %c0_80 = arith.constant 0 : index
      %178 = vector.load %arg19[%c0_79, %c0_80] : memref<1x128xf32, #tpu.memory_space<vmem>>, vector<1x128xf32>
      %cst_81 = arith.constant dense<0.000000e+00> : vector<4xf32>
      %179 = vector.multi_reduction <add>, %176, %cst_81 [1] : vector<4x128xf32> to vector<4xf32>
      %180 = vector.shape_cast %179 : vector<4xf32> to vector<4x1xf32>
      %cst_82 = arith.constant 1.280000e+02 : f32
      %181 = vector.broadcast %cst_82 : f32 to vector<4x1xf32>
      %182 = arith.divf %180, %181 : vector<4x1xf32>
      %183 = vector.broadcast %182 : vector<4x1xf32> to vector<4x128xf32>
      %184 = arith.subf %176, %183 : vector<4x128xf32>
      %185 = arith.mulf %184, %184 : vector<4x128xf32>
      %cst_83 = arith.constant dense<0.000000e+00> : vector<4xf32>
      %186 = vector.multi_reduction <add>, %185, %cst_83 [1] : vector<4x128xf32> to vector<4xf32>
      %187 = vector.shape_cast %186 : vector<4xf32> to vector<4x1xf32>
      %cst_84 = arith.constant 1.280000e+02 : f32
      %188 = vector.broadcast %cst_84 : f32 to vector<4x1xf32>
      %189 = arith.divf %187, %188 : vector<4x1xf32>
      %190 = vector.broadcast %182 : vector<4x1xf32> to vector<4x128xf32>
      %191 = arith.subf %176, %190 : vector<4x128xf32>
      %cst_85 = arith.constant 9.99999974E-6 : f32
      %192 = vector.broadcast %cst_85 : f32 to vector<4x1xf32>
      %193 = arith.addf %189, %192 : vector<4x1xf32>
      %194 = math.rsqrt %193 : vector<4x1xf32>
      %195 = vector.broadcast %194 : vector<4x1xf32> to vector<4x128xf32>
      %196 = arith.mulf %191, %195 : vector<4x128xf32>
      %197 = vector.broadcast %177 : vector<1x128xf32> to vector<4x128xf32>
      %198 = arith.mulf %196, %197 : vector<4x128xf32>
      %199 = vector.broadcast %178 : vector<1x128xf32> to vector<4x128xf32>
      %200 = arith.addf %198, %199 : vector<4x128xf32>
      %c0_86 = arith.constant 0 : index
      %c0_87 = arith.constant 0 : index
      %201 = vector.load %arg20[%c0_86, %c0_87] : memref<128x128xf32, #tpu.memory_space<vmem>>, vector<128x128xf32>
      %cst_88 = arith.constant dense<0.000000e+00> : vector<4x128xf32>
      %202 = tpu.matmul %200, %201, %cst_88 {dimension_numbers = #tpu.dot_dimension_numbers<[1], [0], [0], [1], [0, 0, 1, 1], [], []>} : vector<4x128xf32>, vector<128x128xf32>, vector<4x128xf32> -> vector<4x128xf32>
      %c0_89 = arith.constant 0 : index
      %c0_90 = arith.constant 0 : index
      %203 = vector.load %arg21[%c0_89, %c0_90] : memref<1x128xf32, #tpu.memory_space<vmem>>, vector<1x128xf32>
      %204 = vector.broadcast %203 : vector<1x128xf32> to vector<4x128xf32>
      %205 = arith.addf %202, %204 : vector<4x128xf32>
      %c0_91 = arith.constant 0 : index
      %c0_92 = arith.constant 0 : index
      %c0_93 = arith.constant 0 : index
      %206 = vector.load %arg22[%c0_91, %c0_92, %c0_93] : memref<1x4x128xf32, #tpu.memory_space<vmem>>, vector<1x4x128xf32>
      %207 = vector.shape_cast %206 : vector<1x4x128xf32> to vector<4x128xf32>
      %208 = vector.shape_cast %205 : vector<4x128xf32> to vector<1x4x128xf32>
      tpu.vector_store %arg22[%c0_91, %c0_92, %c0_93], %208 {strides = array<i32>} : memref<1x4x128xf32, #tpu.memory_space<vmem>>, vector<1x4x128xf32>,
    } else {
    }
    return
  }
  func.func @transform_0(%arg0: i32, %arg1: i32) -> (i32, i32, i32) {
    %c0_i32 = arith.constant 0 : i32
    %c0_i32_0 = arith.constant 0 : i32
    %c0_i32_1 = arith.constant 0 : i32
    return %arg0, %c0_i32, %c0_i32_0 : i32, i32, i32
  }
  func.func @transform_1(%arg0: i32, %arg1: i32) -> (i32, i32) {
    %c0_i32 = arith.constant 0 : i32
    %c0_i32_0 = arith.constant 0 : i32
    %c0_i32_1 = arith.constant 0 : i32
    return %c0_i32, %c0_i32_0 : i32, i32
  }
  func.func @transform_2(%arg0: i32, %arg1: i32) -> (i32, i32) {
    %c0_i32 = arith.constant 0 : i32
    %c0_i32_0 = arith.constant 0 : i32
    %c0_i32_1 = arith.constant 0 : i32
    return %c0_i32, %c0_i32_0 : i32, i32
  }
  func.func @transform_3(%arg0: i32, %arg1: i32) -> (i32, i32) {
    %c0_i32 = arith.constant 0 : i32
    %c0_i32_0 = arith.constant 0 : i32
    %c0_i32_1 = arith.constant 0 : i32
    return %c0_i32, %c0_i32_0 : i32, i32
  }
  func.func @transform_4(%arg0: i32, %arg1: i32) -> (i32, i32, i32) {
    %c0_i32 = arith.constant 0 : i32
    %c0_i32_0 = arith.constant 0 : i32
    %c0_i32_1 = arith.constant 0 : i32
    return %arg1, %c0_i32, %c0_i32_0 : i32, i32, i32
  }
  func.func @transform_5(%arg0: i32, %arg1: i32) -> (i32, i32, i32) {
    %c0_i32 = arith.constant 0 : i32
    %c0_i32_0 = arith.constant 0 : i32
    %c0_i32_1 = arith.constant 0 : i32
    return %arg1, %c0_i32, %c0_i32_0 : i32, i32, i32
  }
  func.func @transform_6(%arg0: i32, %arg1: i32) -> (i32, i32, i32) {
    %c0_i32 = arith.constant 0 : i32
    %c0_i32_0 = arith.constant 0 : i32
    %c0_i32_1 = arith.constant 0 : i32
    return %arg1, %c0_i32, %c0_i32_0 : i32, i32, i32
  }
  func.func @transform_7(%arg0: i32, %arg1: i32) -> (i32, i32, i32) {
    %c0_i32 = arith.constant 0 : i32
    %c0_i32_0 = arith.constant 0 : i32
    %c0_i32_1 = arith.constant 0 : i32
    return %arg1, %c0_i32, %c0_i32_0 : i32, i32, i32
  }
  func.func @transform_8(%arg0: i32, %arg1: i32) -> (i32, i32, i32) {
    %c0_i32 = arith.constant 0 : i32
    %c0_i32_0 = arith.constant 0 : i32
    %c0_i32_1 = arith.constant 0 : i32
    return %arg1, %c0_i32, %c0_i32_0 : i32, i32, i32
  }
  func.func @transform_9(%arg0: i32, %arg1: i32) -> (i32, i32, i32) {
    %c0_i32 = arith.constant 0 : i32
    %c0_i32_0 = arith.constant 0 : i32
    %c0_i32_1 = arith.constant 0 : i32
    return %arg1, %c0_i32, %c0_i32_0 : i32, i32, i32
  }
  func.func @transform_10(%arg0: i32, %arg1: i32) -> (i32, i32, i32) {
    %c0_i32 = arith.constant 0 : i32
    %c0_i32_0 = arith.constant 0 : i32
    %c0_i32_1 = arith.constant 0 : i32
    return %arg1, %c0_i32, %c0_i32_0 : i32, i32, i32
  }
  func.func @transform_11(%arg0: i32, %arg1: i32) -> (i32, i32, i32) {
    %c0_i32 = arith.constant 0 : i32
    %c0_i32_0 = arith.constant 0 : i32
    %c0_i32_1 = arith.constant 0 : i32
    return %arg1, %c0_i32, %c0_i32_0 : i32, i32, i32
  }
  func.func @transform_12(%arg0: i32, %arg1: i32) -> (i32, i32, i32) {
    %c0_i32 = arith.constant 0 : i32
    %c0_i32_0 = arith.constant 0 : i32
    %c0_i32_1 = arith.constant 0 : i32
    return %arg1, %c0_i32, %c0_i32_0 : i32, i32, i32
  }
  func.func @transform_13(%arg0: i32, %arg1: i32) -> (i32, i32, i32) {
    %c0_i32 = arith.constant 0 : i32
    %c0_i32_0 = arith.constant 0 : i32
    %c0_i32_1 = arith.constant 0 : i32
    return %arg1, %c0_i32, %c0_i32_0 : i32, i32, i32
  }
  func.func @transform_14(%arg0: i32, %arg1: i32) -> (i32, i32, i32) {
    %c0_i32 = arith.constant 0 : i32
    %c0_i32_0 = arith.constant 0 : i32
    %c0_i32_1 = arith.constant 0 : i32
    return %arg1, %c0_i32, %c0_i32_0 : i32, i32, i32
  }
  func.func @transform_15(%arg0: i32, %arg1: i32) -> (i32, i32, i32) {
    %c0_i32 = arith.constant 0 : i32
    %c0_i32_0 = arith.constant 0 : i32
    %c0_i32_1 = arith.constant 0 : i32
    return %arg1, %c0_i32, %c0_i32_0 : i32, i32, i32
  }
  func.func @transform_16(%arg0: i32, %arg1: i32) -> (i32, i32) {
    %c0_i32 = arith.constant 0 : i32
    %c0_i32_0 = arith.constant 0 : i32
    %c0_i32_1 = arith.constant 0 : i32
    return %c0_i32, %c0_i32_0 : i32, i32
  }
  func.func @transform_17(%arg0: i32, %arg1: i32) -> (i32, i32) {
    %c0_i32 = arith.constant 0 : i32
    %c0_i32_0 = arith.constant 0 : i32
    %c0_i32_1 = arith.constant 0 : i32
    return %c0_i32, %c0_i32_0 : i32, i32
  }
  func.func @transform_18(%arg0: i32, %arg1: i32) -> (i32, i32) {
    %c0_i32 = arith.constant 0 : i32
    %c0_i32_0 = arith.constant 0 : i32
    %c0_i32_1 = arith.constant 0 : i32
    return %c0_i32, %c0_i32_0 : i32, i32
  }
  func.func @transform_19(%arg0: i32, %arg1: i32) -> (i32, i32) {
    %c0_i32 = arith.constant 0 : i32
    %c0_i32_0 = arith.constant 0 : i32
    %c0_i32_1 = arith.constant 0 : i32
    return %c0_i32, %c0_i32_0 : i32, i32
  }
  func.func @transform_20(%arg0: i32, %arg1: i32) -> (i32, i32, i32) {
    %c0_i32 = arith.constant 0 : i32
    %c0_i32_0 = arith.constant 0 : i32
    %c0_i32_1 = arith.constant 0 : i32
    return %arg0, %c0_i32, %c0_i32_0 : i32, i32, i32
  }
}

</mosaic_0001>

<llo_original>
// kernel: tpu_custom_call.1
$region0: #{tpu_custom_call.1}
  #allocation0 [shape = 'u32[]', space=smem, size = 0x4, offset = 0x4, fixed_abs, tag = 'smem constant byte address 0x4 - core index']
  #allocation1 [shape = 'u32[144,128]{1,0:T(1,128)}', space=vmem, size = 0x12000, scoped, tag = 'internal scratch']
  #allocation2 [shape = 'f32[128,128]{1,0:T(8,128)}', space=vmem, size = 0x10000, scoped, tag = 'scratch operand']
  %s0 = inlined_call_operand.hbm [shape: f32[4,32,32], index: 0, kind: input, shape index: {}]
  %s1 = inlined_call_operand.hbm [shape: f32[32,128], index: 1, kind: input, shape index: {}]
  %s2 = inlined_call_operand.hbm [shape: f32[32,128], index: 2, kind: input, shape index: {}]
  %s3 = inlined_call_operand.hbm [shape: f32[1,128], index: 3, kind: input, shape index: {}]
  %s4 = inlined_call_operand.vmem [shape: f32[2,1,128], index: 4, kind: input, shape index: {}]
  %s5 = inlined_call_operand.hbm [shape: f32[2,1,128], index: 5, kind: input, shape index: {}]
  %s6 = inlined_call_operand.hbm [shape: f32[2,128,384], index: 6, kind: input, shape index: {}]
  %s7 = inlined_call_operand.vmem [shape: f32[2,1,384], index: 7, kind: input, shape index: {}]
  %s8 = inlined_call_operand.hbm [shape: f32[2,128,128], index: 8, kind: input, shape index: {}]
  %s9 = inlined_call_operand.vmem [shape: f32[2,1,128], index: 9, kind: input, shape index: {}]
  %s10 = inlined_call_operand.vmem [shape: f32[2,1,128], index: 10, kind: input, shape index: {}]
  %s11 = inlined_call_operand.vmem [shape: f32[2,1,128], index: 11, kind: input, shape index: {}]
  %s12 = inlined_call_operand.hbm [shape: f32[2,128,256], index: 12, kind: input, shape index: {}]
  %s13 = inlined_call_operand.vmem [shape: f32[2,1,256], index: 13, kind: input, shape index: {}]
  %s14 = inlined_call_operand.hbm [shape: f32[2,256,128], index: 14, kind: input, shape index: {}]
  %s15 = inlined_call_operand.vmem [shape: f32[2,1,128], index: 15, kind: input, shape index: {}]
  %s16 = inlined_call_operand.vmem [shape: f32[1,128], index: 16, kind: input, shape index: {}]
  %s17 = inlined_call_operand.vmem [shape: f32[1,128], index: 17, kind: input, shape index: {}]
  %s18 = inlined_call_operand.hbm [shape: f32[128,128], index: 18, kind: input, shape index: {}]
  %s19 = inlined_call_operand.vmem [shape: f32[1,128], index: 19, kind: input, shape index: {}]
  %s20 = inlined_call_operand.hbm [shape: f32[1,4,128], index: 20, kind: output, shape index: {}]
  %s21 = sld [smem:[#allocation0]]
  $region161: #{tpu_custom_call.1} parent=0
    _
  %s23 = ssub.s32 1, %s21
  %s24 = scalar_select 0, %s23, %s21
  $region1: #{tpu_custom_call.1} parent=0
    #allocation3 [shape = 'u8[65536]{0}', space=vmem, size = 0x10000, scoped, tag = 'input window, operand 0, single buffered']
    #allocation4 [shape = 's32[2]{0}', space=sflag, size = 0x8, scoped, tag = 'scoped memory for tpu_custom_call.1']
    #allocation5 [shape = 's32[2]{0}', space=sflag, size = 0x8, scoped, tag = 'scoped memory for tpu_custom_call.1']
    #allocation6 [shape = 'u8[16384]{0}', space=vmem, size = 0x4000, scoped, tag = 'input window, operand 1, single buffered']
    #allocation7 [shape = 's32[1]{0}', space=sflag, size = 0x4, scoped, tag = 'scoped memory for tpu_custom_call.1']
    #allocation8 [shape = 'u8[16384]{0}', space=vmem, size = 0x4000, scoped, tag = 'input window, operand 2, single buffered']
    #allocation9 [shape = 'u8[512]{0}', space=vmem, size = 0x400, scoped, tag = 'input window, operand 3, single buffered']
    #allocation10 [shape = 's32[1]{0}', space=sflag, size = 0x4, scoped, tag = 'scoped memory for tpu_custom_call.1']
    #allocation11 [shape = 'u8[1024]{0}', space=vmem, size = 0x400, scoped, tag = 'input window, operand 5']
    #allocation12 [shape = 'u8[393216]{0}', space=vmem, size = 0x60000, scoped, tag = 'input window, operand 6']
    #allocation13 [shape = 'u8[131072]{0}', space=vmem, size = 0x20000, scoped, tag = 'input window, operand 8']
    #allocation14 [shape = 'u8[262144]{0}', space=vmem, size = 0x40000, scoped, tag = 'input window, operand 12']
    #allocation15 [shape = 'u8[262144]{0}', space=vmem, size = 0x40000, scoped, tag = 'input window, operand 14']
    #allocation16 [shape = 'u8[65536]{0}', space=vmem, size = 0x10000, scoped, tag = 'input window, operand 18, single buffered']
    #allocation17 [shape = 'u8[2048]{0}', space=vmem, size = 0x800, scoped, tag = 'output window, operand 0, single buffered']
    %25 = vsyncpa [#allocation4], 0
    %26 = vsyncpa [#allocation7], 0
    %27 = vsyncpa [#allocation10], 0
    %28 = vsyncpa [#allocation5], 0
    loop: start=0, step=1, limit=4
    $region2: #{tpu_custom_call.1} parent=1 // loop_pre_header
      _
    $region3: #{tpu_custom_call.1} parent=1 // loop_header
      %s30 = sphi 0, %s34
      %p31 = scmp.ge.s32.totalorder %s30, 4
      %s37 = sphi 0, %s49
      %s38 = sphi 0, %s45
      %s39 = sphi 0, %s37
      %s40 = sphi 0, %s38
      %s41 = sphi 0, %s39
      %s42 = sphi 0, %s40
      %s52 = sphi 0, %s54
      %s55 = sphi 0, %s52
      %s56 = sphi 0, %s55
      %s72 = sphi 0, %s56
      %s76 = sphi 0, %s76
      %s78 = sphi 0, %s76
      %s79 = sphi 0, %s78
      %s93 = sphi 0, %s79
      %s97 = sphi 0, %s97
      %s99 = sphi 0, %s97
      %s100 = sphi 0, %s99
      %s114 = sphi 0, %s100
      %s118 = sphi 0, %s118
      %s120 = sphi 0, %s118
      %s121 = sphi 0, %s120
      %s135 = sphi 0, %s121
      %s141 = sphi 0, %s143
      %s144 = sphi 0, %s141
      %s145 = sphi 0, %s144
      %s161 = sphi 0, %s145
      %s167 = sphi 0, %s169
      %s170 = sphi 0, %s167
      %s171 = sphi 0, %s170
      %s187 = sphi 0, %s171
      %s193 = sphi 0, %s195
      %s196 = sphi 0, %s193
      %s197 = sphi 0, %s196
      %s213 = sphi 0, %s197
      %s219 = sphi 0, %s221
      %s222 = sphi 0, %s219
      %s223 = sphi 0, %s222
      %s239 = sphi 0, %s223
      %s245 = sphi 0, %s247
      %s248 = sphi 0, %s245
      %s249 = sphi 0, %s248
      %s265 = sphi 0, %s249
      %s271 = sphi 0, %s273
      %s274 = sphi 0, %s271
      %s275 = sphi 0, %s274
      %s291 = sphi 0, %s275
      %s297 = sphi 0, %s299
      %s300 = sphi 0, %s297
      %s301 = sphi 0, %s300
      %s317 = sphi 0, %s301
      %s323 = sphi 0, %s325
      %s326 = sphi 0, %s323
      %s327 = sphi 0, %s326
      %s343 = sphi 0, %s327
      %s349 = sphi 0, %s351
      %s352 = sphi 0, %s349
      %s353 = sphi 0, %s352
      %s369 = sphi 0, %s353
      %s375 = sphi 0, %s377
      %s378 = sphi 0, %s375
      %s379 = sphi 0, %s378
      %s395 = sphi 0, %s379
      %s401 = sphi 0, %s403
      %s404 = sphi 0, %s401
      %s405 = sphi 0, %s404
      %s421 = sphi 0, %s405
      %s427 = sphi 0, %s429
      %s430 = sphi 0, %s427
      %s431 = sphi 0, %s430
      %s447 = sphi 0, %s431
      %s451 = sphi 0, %s451
      %s453 = sphi 0, %s451
      %s454 = sphi 0, %s453
      %s468 = sphi 0, %s454
      %s472 = sphi 0, %s472
      %s474 = sphi 0, %s472
      %s475 = sphi 0, %s474
      %s489 = sphi 0, %s475
      %s493 = sphi 0, %s493
      %s495 = sphi 0, %s493
      %s496 = sphi 0, %s495
      %s510 = sphi 0, %s496
      %s514 = sphi 0, %s514
      %s516 = sphi 0, %s514
      %s517 = sphi 0, %s516
      %s531 = sphi 0, %s517
      %s537 = sphi 0, %s539
      %s540 = sphi 0, %s537
      %s541 = sphi 0, %s540
      %s557 = sphi 0, %s541
    $region4: #{tpu_custom_call.1} parent=1 // loop_header_branch
      %33 = sbr.rel (%p31) target = $region8
    $region5: #{tpu_custom_call.1} parent=1 // loop_body
      %s35 = ssub.s32 %s30, 1
      %s36 = ssub.s32 %s30, 2
      %s43 = sadd.s32 1, %s38
      %p44 = scmp.ge.s32.totalorder %s43, 2
      %s45 = scalar_select %p44, 0, %s43
      %s46 = sadd.s32 1, %s37
      %s47 = scalar_select %p44, %s46, %s37
      %p48 = scmp.ge.s32.totalorder %s47, 1
      %s49 = scalar_select %p48, 0, %s47
      %s50 = ssub.s32 %s37, %s49
      %p51 = scmp.eq.s32.totalorder %s50, 0
      %s53 = sadd.s32 %s52, 1
      %s54 = scalar_select %p51, %s52, %s53
      %p57 = pneg %p51
      %p58 = scmp.eq.s32.totalorder %s30, 1
      %p59 = por %p57, %p58
      %p60 = scmp.ne.s32.totalorder %s52, %s55
      %p61 = scmp.eq.s32.totalorder %s30, 0
      %p62 = por %p60, %p61
      %p63 = scmp.ne.s32.totalorder %s52, %s55
      %p64 = scmp.eq.s32.totalorder %s35, 1
      %p65 = por %p63, %p64
      %p66 = scmp.ne.s32.totalorder %s55, %s56
      %p67 = scmp.eq.s32.totalorder %s35, 0
      %p68 = por %p66, %p67
      %p69 = scmp.ne.s32.totalorder %s55, %s56
      %p70 = scmp.eq.s32.totalorder %s36, 1
      %p71 = por %p69, %p70
      %p73 = scmp.ne.s32.totalorder %s56, %s72
      %p74 = scmp.eq.s32.totalorder %s36, 0
      %p75 = por %p73, %p74
      %s77 = sadd.s32 %s76, 1
      %p80 = scmp.eq.s32.totalorder %s30, 1
      %p81 = scmp.ne.s32.totalorder %s76, %s78
      %p82 = scmp.eq.s32.totalorder %s30, 0
      %p83 = por %p81, %p82
      %p84 = scmp.ne.s32.totalorder %s76, %s78
      %p85 = scmp.eq.s32.totalorder %s35, 1
      %p86 = por %p84, %p85
      %p87 = scmp.ne.s32.totalorder %s78, %s79
      %p88 = scmp.eq.s32.totalorder %s35, 0
      %p89 = por %p87, %p88
      %p90 = scmp.ne.s32.totalorder %s78, %s79
      %p91 = scmp.eq.s32.totalorder %s36, 1
      %p92 = por %p90, %p91
      %p94 = scmp.ne.s32.totalorder %s79, %s93
      %p95 = scmp.eq.s32.totalorder %s36, 0
      %p96 = por %p94, %p95
      %s98 = sadd.s32 %s97, 1
      %p101 = scmp.eq.s32.totalorder %s30, 1
      %p102 = scmp.ne.s32.totalorder %s97, %s99
      %p103 = scmp.eq.s32.totalorder %s30, 0
      %p104 = por %p102, %p103
      %p105 = scmp.ne.s32.totalorder %s97, %s99
      %p106 = scmp.eq.s32.totalorder %s35, 1
      %p107 = por %p105, %p106
      %p108 = scmp.ne.s32.totalorder %s99, %s100
      %p109 = scmp.eq.s32.totalorder %s35, 0
      %p110 = por %p108, %p109
      %p111 = scmp.ne.s32.totalorder %s99, %s100
      %p112 = scmp.eq.s32.totalorder %s36, 1
      %p113 = por %p111, %p112
      %p115 = scmp.ne.s32.totalorder %s100, %s114
      %p116 = scmp.eq.s32.totalorder %s36, 0
      %p117 = por %p115, %p116
      %s119 = sadd.s32 %s118, 1
      %p122 = scmp.eq.s32.totalorder %s30, 1
      %p123 = scmp.ne.s32.totalorder %s118, %s120
      %p124 = scmp.eq.s32.totalorder %s30, 0
      %p125 = por %p123, %p124
      %p126 = scmp.ne.s32.totalorder %s118, %s120
      %p127 = scmp.eq.s32.totalorder %s35, 1
      %p128 = por %p126, %p127
      %p129 = scmp.ne.s32.totalorder %s120, %s121
      %p130 = scmp.eq.s32.totalorder %s35, 0
      %p131 = por %p129, %p130
      %p132 = scmp.ne.s32.totalorder %s120, %s121
      %p133 = scmp.eq.s32.totalorder %s36, 1
      %p134 = por %p132, %p133
      %p136 = scmp.ne.s32.totalorder %s121, %s135
      %p137 = scmp.eq.s32.totalorder %s36, 0
      %p138 = por %p136, %p137
      %s139 = ssub.s32 %s38, %s45
      %p140 = scmp.eq.s32.totalorder %s139, 0
      %s142 = sadd.s32 %s141, 1
      %s143 = scalar_select %p140, %s141, %s142
      %p146 = pneg %p140
      %p147 = scmp.eq.s32.totalorder %s30, 1
      %p148 = por %p146, %p147
      %p149 = scmp.ne.s32.totalorder %s141, %s144
      %p150 = scmp.eq.s32.totalorder %s30, 0
      %p151 = por %p149, %p150
      %p152 = scmp.ne.s32.totalorder %s141, %s144
      %p153 = scmp.eq.s32.totalorder %s35, 1
      %p154 = por %p152, %p153
      %p155 = scmp.ne.s32.totalorder %s144, %s145
      %p156 = scmp.eq.s32.totalorder %s35, 0
      %p157 = por %p155, %p156
      %p158 = scmp.ne.s32.totalorder %s144, %s145
      %p159 = scmp.eq.s32.totalorder %s36, 1
      %p160 = por %p158, %p159
      %p162 = scmp.ne.s32.totalorder %s145, %s161
      %p163 = scmp.eq.s32.totalorder %s36, 0
      %p164 = por %p162, %p163
      %s165 = ssub.s32 %s38, %s45
      %p166 = scmp.eq.s32.totalorder %s165, 0
      %s168 = sadd.s32 %s167, 1
      %s169 = scalar_select %p166, %s167, %s168
      %p172 = pneg %p166
      %p173 = scmp.eq.s32.totalorder %s30, 1
      %p174 = por %p172, %p173
      %p175 = scmp.ne.s32.totalorder %s167, %s170
      %p176 = scmp.eq.s32.totalorder %s30, 0
      %p177 = por %p175, %p176
      %p178 = scmp.ne.s32.totalorder %s167, %s170
      %p179 = scmp.eq.s32.totalorder %s35, 1
      %p180 = por %p178, %p179
      %p181 = scmp.ne.s32.totalorder %s170, %s171
      %p182 = scmp.eq.s32.totalorder %s35, 0
      %p183 = por %p181, %p182
      %p184 = scmp.ne.s32.totalorder %s170, %s171
      %p185 = scmp.eq.s32.totalorder %s36, 1
      %p186 = por %p184, %p185
      %p188 = scmp.ne.s32.totalorder %s171, %s187
      %p189 = scmp.eq.s32.totalorder %s36, 0
      %p190 = por %p188, %p189
      %s191 = ssub.s32 %s38, %s45
      %p192 = scmp.eq.s32.totalorder %s191, 0
      %s194 = sadd.s32 %s193, 1
      %s195 = scalar_select %p192, %s193, %s194
      %p198 = pneg %p192
      %p199 = scmp.eq.s32.totalorder %s30, 1
      %p200 = por %p198, %p199
      %p201 = scmp.ne.s32.totalorder %s193, %s196
      %p202 = scmp.eq.s32.totalorder %s30, 0
      %p203 = por %p201, %p202
      %p204 = scmp.ne.s32.totalorder %s193, %s196
      %p205 = scmp.eq.s32.totalorder %s35, 1
      %p206 = por %p204, %p205
      %p207 = scmp.ne.s32.totalorder %s196, %s197
      %p208 = scmp.eq.s32.totalorder %s35, 0
      %p209 = por %p207, %p208
      %p210 = scmp.ne.s32.totalorder %s196, %s197
      %p211 = scmp.eq.s32.totalorder %s36, 1
      %p212 = por %p210, %p211
      %p214 = scmp.ne.s32.totalorder %s197, %s213
      %p215 = scmp.eq.s32.totalorder %s36, 0
      %p216 = por %p214, %p215
      %s217 = ssub.s32 %s38, %s45
      %p218 = scmp.eq.s32.totalorder %s217, 0
      %s220 = sadd.s32 %s219, 1
      %s221 = scalar_select %p218, %s219, %s220
      %p224 = pneg %p218
      %p225 = scmp.eq.s32.totalorder %s30, 1
      %p226 = por %p224, %p225
      %p227 = scmp.ne.s32.totalorder %s219, %s222
      %p228 = scmp.eq.s32.totalorder %s30, 0
      %p229 = por %p227, %p228
      %p230 = scmp.ne.s32.totalorder %s219, %s222
      %p231 = scmp.eq.s32.totalorder %s35, 1
      %p232 = por %p230, %p231
      %p233 = scmp.ne.s32.totalorder %s222, %s223
      %p234 = scmp.eq.s32.totalorder %s35, 0
      %p235 = por %p233, %p234
      %p236 = scmp.ne.s32.totalorder %s222, %s223
      %p237 = scmp.eq.s32.totalorder %s36, 1
      %p238 = por %p236, %p237
      %p240 = scmp.ne.s32.totalorder %s223, %s239
      %p241 = scmp.eq.s32.totalorder %s36, 0
      %p242 = por %p240, %p241
      %s243 = ssub.s32 %s38, %s45
      %p244 = scmp.eq.s32.totalorder %s243, 0
      %s246 = sadd.s32 %s245, 1
      %s247 = scalar_select %p244, %s245, %s246
      %p250 = pneg %p244
      %p251 = scmp.eq.s32.totalorder %s30, 1
      %p252 = por %p250, %p251
      %p253 = scmp.ne.s32.totalorder %s245, %s248
      %p254 = scmp.eq.s32.totalorder %s30, 0
      %p255 = por %p253, %p254
      %p256 = scmp.ne.s32.totalorder %s245, %s248
      %p257 = scmp.eq.s32.totalorder %s35, 1
      %p258 = por %p256, %p257
      %p259 = scmp.ne.s32.totalorder %s248, %s249
      %p260 = scmp.eq.s32.totalorder %s35, 0
      %p261 = por %p259, %p260
      %p262 = scmp.ne.s32.totalorder %s248, %s249
      %p263 = scmp.eq.s32.totalorder %s36, 1
      %p264 = por %p262, %p263
      %p266 = scmp.ne.s32.totalorder %s249, %s265
      %p267 = scmp.eq.s32.totalorder %s36, 0
      %p268 = por %p266, %p267
      %s269 = ssub.s32 %s38, %s45
      %p270 = scmp.eq.s32.totalorder %s269, 0
      %s272 = sadd.s32 %s271, 1
      %s273 = scalar_select %p270, %s271, %s272
      %p276 = pneg %p270
      %p277 = scmp.eq.s32.totalorder %s30, 1
      %p278 = por %p276, %p277
      %p279 = scmp.ne.s32.totalorder %s271, %s274
      %p280 = scmp.eq.s32.totalorder %s30, 0
      %p281 = por %p279, %p280
      %p282 = scmp.ne.s32.totalorder %s271, %s274
      %p283 = scmp.eq.s32.totalorder %s35, 1
      %p284 = por %p282, %p283
      %p285 = scmp.ne.s32.totalorder %s274, %s275
      %p286 = scmp.eq.s32.totalorder %s35, 0
      %p287 = por %p285, %p286
      %p288 = scmp.ne.s32.totalorder %s274, %s275
      %p289 = scmp.eq.s32.totalorder %s36, 1
      %p290 = por %p288, %p289
      %p292 = scmp.ne.s32.totalorder %s275, %s291
      %p293 = scmp.eq.s32.totalorder %s36, 0
      %p294 = por %p292, %p293
      %s295 = ssub.s32 %s38, %s45
      %p296 = scmp.eq.s32.totalorder %s295, 0
      %s298 = sadd.s32 %s297, 1
      %s299 = scalar_select %p296, %s297, %s298
      %p302 = pneg %p296
      %p303 = scmp.eq.s32.totalorder %s30, 1
      %p304 = por %p302, %p303
      %p305 = scmp.ne.s32.totalorder %s297, %s300
      %p306 = scmp.eq.s32.totalorder %s30, 0
      %p307 = por %p305, %p306
      %p308 = scmp.ne.s32.totalorder %s297, %s300
      %p309 = scmp.eq.s32.totalorder %s35, 1
      %p310 = por %p308, %p309
      %p311 = scmp.ne.s32.totalorder %s300, %s301
      %p312 = scmp.eq.s32.totalorder %s35, 0
      %p313 = por %p311, %p312
      %p314 = scmp.ne.s32.totalorder %s300, %s301
      %p315 = scmp.eq.s32.totalorder %s36, 1
      %p316 = por %p314, %p315
      %p318 = scmp.ne.s32.totalorder %s301, %s317
      %p319 = scmp.eq.s32.totalorder %s36, 0
      %p320 = por %p318, %p319
      %s321 = ssub.s32 %s38, %s45
      %p322 = scmp.eq.s32.totalorder %s321, 0
      %s324 = sadd.s32 %s323, 1
      %s325 = scalar_select %p322, %s323, %s324
      %p328 = pneg %p322
      %p329 = scmp.eq.s32.totalorder %s30, 1
      %p330 = por %p328, %p329
      %p331 = scmp.ne.s32.totalorder %s323, %s326
      %p332 = scmp.eq.s32.totalorder %s30, 0
      %p333 = por %p331, %p332
      %p334 = scmp.ne.s32.totalorder %s323, %s326
      %p335 = scmp.eq.s32.totalorder %s35, 1
      %p336 = por %p334, %p335
      %p337 = scmp.ne.s32.totalorder %s326, %s327
      %p338 = scmp.eq.s32.totalorder %s35, 0
      %p339 = por %p337, %p338
      %p340 = scmp.ne.s32.totalorder %s326, %s327
      %p341 = scmp.eq.s32.totalorder %s36, 1
      %p342 = por %p340, %p341
      %p344 = scmp.ne.s32.totalorder %s327, %s343
      %p345 = scmp.eq.s32.totalorder %s36, 0
      %p346 = por %p344, %p345
      %s347 = ssub.s32 %s38, %s45
      %p348 = scmp.eq.s32.totalorder %s347, 0
      %s350 = sadd.s32 %s349, 1
      %s351 = scalar_select %p348, %s349, %s350
      %p354 = pneg %p348
      %p355 = scmp.eq.s32.totalorder %s30, 1
      %p356 = por %p354, %p355
      %p357 = scmp.ne.s32.totalorder %s349, %s352
      %p358 = scmp.eq.s32.totalorder %s30, 0
      %p359 = por %p357, %p358
      %p360 = scmp.ne.s32.totalorder %s349, %s352
      %p361 = scmp.eq.s32.totalorder %s35, 1
      %p362 = por %p360, %p361
      %p363 = scmp.ne.s32.totalorder %s352, %s353
      %p364 = scmp.eq.s32.totalorder %s35, 0
      %p365 = por %p363, %p364
      %p366 = scmp.ne.s32.totalorder %s352, %s353
      %p367 = scmp.eq.s32.totalorder %s36, 1
      %p368 = por %p366, %p367
      %p370 = scmp.ne.s32.totalorder %s353, %s369
      %p371 = scmp.eq.s32.totalorder %s36, 0
      %p372 = por %p370, %p371
      %s373 = ssub.s32 %s38, %s45
      %p374 = scmp.eq.s32.totalorder %s373, 0
      %s376 = sadd.s32 %s375, 1
      %s377 = scalar_select %p374, %s375, %s376
      %p380 = pneg %p374
      %p381 = scmp.eq.s32.totalorder %s30, 1
      %p382 = por %p380, %p381
      %p383 = scmp.ne.s32.totalorder %s375, %s378
      %p384 = scmp.eq.s32.totalorder %s30, 0
      %p385 = por %p383, %p384
      %p386 = scmp.ne.s32.totalorder %s375, %s378
      %p387 = scmp.eq.s32.totalorder %s35, 1
      %p388 = por %p386, %p387
      %p389 = scmp.ne.s32.totalorder %s378, %s379
      %p390 = scmp.eq.s32.totalorder %s35, 0
      %p391 = por %p389, %p390
      %p392 = scmp.ne.s32.totalorder %s378, %s379
      %p393 = scmp.eq.s32.totalorder %s36, 1
      %p394 = por %p392, %p393
      %p396 = scmp.ne.s32.totalorder %s379, %s395
      %p397 = scmp.eq.s32.totalorder %s36, 0
      %p398 = por %p396, %p397
      %s399 = ssub.s32 %s38, %s45
      %p400 = scmp.eq.s32.totalorder %s399, 0
      %s402 = sadd.s32 %s401, 1
      %s403 = scalar_select %p400, %s401, %s402
      %p406 = pneg %p400
      %p407 = scmp.eq.s32.totalorder %s30, 1
      %p408 = por %p406, %p407
      %p409 = scmp.ne.s32.totalorder %s401, %s404
      %p410 = scmp.eq.s32.totalorder %s30, 0
      %p411 = por %p409, %p410
      %p412 = scmp.ne.s32.totalorder %s401, %s404
      %p413 = scmp.eq.s32.totalorder %s35, 1
      %p414 = por %p412, %p413
      %p415 = scmp.ne.s32.totalorder %s404, %s405
      %p416 = scmp.eq.s32.totalorder %s35, 0
      %p417 = por %p415, %p416
      %p418 = scmp.ne.s32.totalorder %s404, %s405
      %p419 = scmp.eq.s32.totalorder %s36, 1
      %p420 = por %p418, %p419
      %p422 = scmp.ne.s32.totalorder %s405, %s421
      %p423 = scmp.eq.s32.totalorder %s36, 0
      %p424 = por %p422, %p423
      %s425 = ssub.s32 %s38, %s45
      %p426 = scmp.eq.s32.totalorder %s425, 0
      %s428 = sadd.s32 %s427, 1
      %s429 = scalar_select %p426, %s427, %s428
      %p432 = pneg %p426
      %p433 = scmp.eq.s32.totalorder %s30, 1
      %p434 = por %p432, %p433
      %p435 = scmp.ne.s32.totalorder %s427, %s430
      %p436 = scmp.eq.s32.totalorder %s30, 0
      %p437 = por %p435, %p436
      %p438 = scmp.ne.s32.totalorder %s427, %s430
      %p439 = scmp.eq.s32.totalorder %s35, 1
      %p440 = por %p438, %p439
      %p441 = scmp.ne.s32.totalorder %s430, %s431
      %p442 = scmp.eq.s32.totalorder %s35, 0
      %p443 = por %p441, %p442
      %p444 = scmp.ne.s32.totalorder %s430, %s431
      %p445 = scmp.eq.s32.totalorder %s36, 1
      %p446 = por %p444, %p445
      %p448 = scmp.ne.s32.totalorder %s431, %s447
      %p449 = scmp.eq.s32.totalorder %s36, 0
      %p450 = por %p448, %p449
      %s452 = sadd.s32 %s451, 1
      %p455 = scmp.eq.s32.totalorder %s30, 1
      %p456 = scmp.ne.s32.totalorder %s451, %s453
      %p457 = scmp.eq.s32.totalorder %s30, 0
      %p458 = por %p456, %p457
      %p459 = scmp.ne.s32.totalorder %s451, %s453
      %p460 = scmp.eq.s32.totalorder %s35, 1
      %p461 = por %p459, %p460
      %p462 = scmp.ne.s32.totalorder %s453, %s454
      %p463 = scmp.eq.s32.totalorder %s35, 0
      %p464 = por %p462, %p463
      %p465 = scmp.ne.s32.totalorder %s453, %s454
      %p466 = scmp.eq.s32.totalorder %s36, 1
      %p467 = por %p465, %p466
      %p469 = scmp.ne.s32.totalorder %s454, %s468
      %p470 = scmp.eq.s32.totalorder %s36, 0
      %p471 = por %p469, %p470
      %s473 = sadd.s32 %s472, 1
      %p476 = scmp.eq.s32.totalorder %s30, 1
      %p477 = scmp.ne.s32.totalorder %s472, %s474
      %p478 = scmp.eq.s32.totalorder %s30, 0
      %p479 = por %p477, %p478
      %p480 = scmp.ne.s32.totalorder %s472, %s474
      %p481 = scmp.eq.s32.totalorder %s35, 1
      %p482 = por %p480, %p481
      %p483 = scmp.ne.s32.totalorder %s474, %s475
      %p484 = scmp.eq.s32.totalorder %s35, 0
      %p485 = por %p483, %p484
      %p486 = scmp.ne.s32.totalorder %s474, %s475
      %p487 = scmp.eq.s32.totalorder %s36, 1
      %p488 = por %p486, %p487
      %p490 = scmp.ne.s32.totalorder %s475, %s489
      %p491 = scmp.eq.s32.totalorder %s36, 0
      %p492 = por %p490, %p491
      %s494 = sadd.s32 %s493, 1
      %p497 = scmp.eq.s32.totalorder %s30, 1
      %p498 = scmp.ne.s32.totalorder %s493, %s495
      %p499 = scmp.eq.s32.totalorder %s30, 0
      %p500 = por %p498, %p499
      %p501 = scmp.ne.s32.totalorder %s493, %s495
      %p502 = scmp.eq.s32.totalorder %s35, 1
      %p503 = por %p501, %p502
      %p504 = scmp.ne.s32.totalorder %s495, %s496
      %p505 = scmp.eq.s32.totalorder %s35, 0
      %p506 = por %p504, %p505
      %p507 = scmp.ne.s32.totalorder %s495, %s496
      %p508 = scmp.eq.s32.totalorder %s36, 1
      %p509 = por %p507, %p508
      %p511 = scmp.ne.s32.totalorder %s496, %s510
      %p512 = scmp.eq.s32.totalorder %s36, 0
      %p513 = por %p511, %p512
      %s515 = sadd.s32 %s514, 1
      %p518 = scmp.eq.s32.totalorder %s30, 1
      %p519 = scmp.ne.s32.totalorder %s514, %s516
      %p520 = scmp.eq.s32.totalorder %s30, 0
      %p521 = por %p519, %p520
      %p522 = scmp.ne.s32.totalorder %s514, %s516
      %p523 = scmp.eq.s32.totalorder %s35, 1
      %p524 = por %p522, %p523
      %p525 = scmp.ne.s32.totalorder %s516, %s517
      %p526 = scmp.eq.s32.totalorder %s35, 0
      %p527 = por %p525, %p526
      %p528 = scmp.ne.s32.totalorder %s516, %s517
      %p529 = scmp.eq.s32.totalorder %s36, 1
      %p530 = por %p528, %p529
      %p532 = scmp.ne.s32.totalorder %s517, %s531
      %p533 = scmp.eq.s32.totalorder %s36, 0
      %p534 = por %p532, %p533
      %s535 = ssub.s32 %s37, %s49
      %p536 = scmp.eq.s32.totalorder %s535, 0
      %s538 = sadd.s32 %s537, 1
      %s539 = scalar_select %p536, %s537, %s538
      %p542 = pneg %p536
      %p543 = scmp.eq.s32.totalorder %s30, 1
      %p544 = por %p542, %p543
      %p545 = scmp.ne.s32.totalorder %s537, %s540
      %p546 = scmp.eq.s32.totalorder %s30, 0
      %p547 = por %p545, %p546
      %p548 = scmp.ne.s32.totalorder %s537, %s540
      %p549 = scmp.eq.s32.totalorder %s35, 1
      %p550 = por %p548, %p549
      %p551 = scmp.ne.s32.totalorder %s540, %s541
      %p552 = scmp.eq.s32.totalorder %s35, 0
      %p553 = por %p551, %p552
      %p554 = scmp.ne.s32.totalorder %s540, %s541
      %p555 = scmp.eq.s32.totalorder %s36, 1
      %p556 = por %p554, %p555
      %p558 = scmp.ne.s32.totalorder %s541, %s557
      %p559 = scmp.eq.s32.totalorder %s36, 0
      %p560 = por %p558, %p559
      %p561 = scmp.le.s32.totalorder 1, %s30
      %p562 = scmp.lt.s32.totalorder %s30, 3
      %p563 = pnand %p561, %p562
      %p564 = pneg %p563
      // Predicated region
      $region9: #{tpu_custom_call.1} parent=5 // pred_check
        _
      $region10: #{tpu_custom_call.1} parent=5 // pred_check_branch
        %566 = sbr.rel (%p563) target = $region12
      $region11: #{tpu_custom_call.1} parent=5 // pred_region
        %s567 = ssub.s32 %s30, 1
        // Predicated region
        $region13: #{tpu_custom_call.1} parent=11 // pred_check
          %p568 = pneg %p68
        $region14: #{tpu_custom_call.1} parent=11 // pred_check_branch
          %570 = sbr.rel (%p568) target = $region16
        $region15: #{tpu_custom_call.1} parent=11 // pred_region
          %s571 = smul.u32 4, %s39
          %s573 = ssub.s32 2048, 2048
          %574 = vsyncadd [#allocation4], %s573
          %s575 = smul.addr %s571, 4
          %s576 = smul.addr %s575, 128
          %s577 = scalar_lea.hbm %s0, %s576
          %s578 = sshll.u32 [#allocation3], 4
          %s579 = int_to_ptr.vmem [resolvable:$true] %s578
          %584 = dma.hbm_to_vmem [thread:$0]  %s577, 2048, %s579, [#allocation4], 128, 128, 8
        $region16: #{tpu_custom_call.1} parent=11 // pred_fallthru
          _
        // Predicated region
        $region17: #{tpu_custom_call.1} parent=11 // pred_check
          %p585 = pneg %p89
        $region18: #{tpu_custom_call.1} parent=11 // pred_check_branch
          %587 = sbr.rel (%p585) target = $region20
        $region19: #{tpu_custom_call.1} parent=11 // pred_region
          %s589 = ssub.s32 512, 512
          %590 = vsyncadd [#allocation7], %s589
          %s591 = sshll.u32 [#allocation6], 4
          %s592 = int_to_ptr.vmem [resolvable:$true] %s591
          %597 = dma.hbm_to_vmem [thread:$0]  %s1, 512, %s592, [#allocation7], 128, 128, 8
        $region20: #{tpu_custom_call.1} parent=11 // pred_fallthru
          _
        // Predicated region
        $region21: #{tpu_custom_call.1} parent=11 // pred_check
          %p598 = pneg %p110
        $region22: #{tpu_custom_call.1} parent=11 // pred_check_branch
          %600 = sbr.rel (%p598) target = $region24
        $region23: #{tpu_custom_call.1} parent=11 // pred_region
          %s602 = ssub.s32 512, 512
          %603 = vsyncadd [#allocation7], %s602
          %s604 = sshll.u32 [#allocation8], 4
          %s605 = int_to_ptr.vmem [resolvable:$true] %s604
          %610 = dma.hbm_to_vmem [thread:$0]  %s2, 512, %s605, [#allocation7], 128, 128, 8
        $region24: #{tpu_custom_call.1} parent=11 // pred_fallthru
          _
        // Predicated region
        $region25: #{tpu_custom_call.1} parent=11 // pred_check
          %p611 = pneg %p131
        $region26: #{tpu_custom_call.1} parent=11 // pred_check_branch
          %613 = sbr.rel (%p611) target = $region28
        $region27: #{tpu_custom_call.1} parent=11 // pred_region
          %s615 = ssub.s32 16, 16
          %616 = vsyncadd [#allocation10], %s615
          %s618 = sshll.u32 [#allocation9], 4
          %s619 = int_to_ptr.vmem [resolvable:$true] %s618
          %621 = dma.hbm_to_vmem [thread:$0]  %s3, 16, %s619, [#allocation10]
        $region28: #{tpu_custom_call.1} parent=11 // pred_fallthru
          _
        // Predicated region
        $region29: #{tpu_custom_call.1} parent=11 // pred_check
          %p622 = pneg %p464
        $region30: #{tpu_custom_call.1} parent=11 // pred_check_branch
          %624 = sbr.rel (%p622) target = $region32
        $region31: #{tpu_custom_call.1} parent=11 // pred_region
          _
        $region32: #{tpu_custom_call.1} parent=11 // pred_fallthru
          _
        // Predicated region
        $region33: #{tpu_custom_call.1} parent=11 // pred_check
          %p625 = pneg %p485
        $region34: #{tpu_custom_call.1} parent=11 // pred_check_branch
          %627 = sbr.rel (%p625) target = $region36
        $region35: #{tpu_custom_call.1} parent=11 // pred_region
          _
        $region36: #{tpu_custom_call.1} parent=11 // pred_fallthru
          _
        // Predicated region
        $region37: #{tpu_custom_call.1} parent=11 // pred_check
          %p628 = pneg %p506
        $region38: #{tpu_custom_call.1} parent=11 // pred_check_branch
          %630 = sbr.rel (%p628) target = $region40
        $region39: #{tpu_custom_call.1} parent=11 // pred_region
          %s632 = ssub.s32 2048, 2048
          %633 = vsyncadd [#allocation7], %s632
          %s634 = sshll.u32 [#allocation16], 4
          %s635 = int_to_ptr.vmem [resolvable:$true] %s634
          %640 = dma.hbm_to_vmem [thread:$0]  %s18, 2048, %s635, [#allocation7], 128, 128, 8
        $region40: #{tpu_custom_call.1} parent=11 // pred_fallthru
          _
        // Predicated region
        $region41: #{tpu_custom_call.1} parent=11 // pred_check
          %p641 = pneg %p527
        $region42: #{tpu_custom_call.1} parent=11 // pred_check_branch
          %643 = sbr.rel (%p641) target = $region44
        $region43: #{tpu_custom_call.1} parent=11 // pred_region
          _
        $region44: #{tpu_custom_call.1} parent=11 // pred_fallthru
          _
      $region12: #{tpu_custom_call.1} parent=5 // pred_fallthru
        _
      %p644 = scmp.lt.s32.totalorder %s30, 2
      // Predicated region
      $region45: #{tpu_custom_call.1} parent=5 // pred_check
        %p645 = pneg %p644
      $region46: #{tpu_custom_call.1} parent=5 // pred_check_branch
        %647 = sbr.rel (%p645) target = $region48
      $region47: #{tpu_custom_call.1} parent=5 // pred_region
        // Predicated region
        $region49: #{tpu_custom_call.1} parent=47 // pred_check
          %p648 = pneg %p151
        $region50: #{tpu_custom_call.1} parent=47 // pred_check_branch
          %650 = sbr.rel (%p648) target = $region52
        $region51: #{tpu_custom_call.1} parent=47 // pred_region
          %p651 = scmp.lt.s32.totalorder %s38, 1
          %s652 = scalar_select %p651, %s38, 1
          %s653 = scalar_lea.vmem %s4, %s652
        $region52: #{tpu_custom_call.1} parent=47 // pred_fallthru
          _
        // Predicated region
        $region53: #{tpu_custom_call.1} parent=47 // pred_check
          %p654 = pneg %p177
        $region54: #{tpu_custom_call.1} parent=47 // pred_check_branch
          %656 = sbr.rel (%p654) target = $region56
        $region55: #{tpu_custom_call.1} parent=47 // pred_region
          %s657 = sand.u32 %s30, 1
          %s658 = scalar_lea.sflag [#allocation4], %s657
          %s659 = sand.u32 %s167, 1
          %s660 = scalar_lea.vmem [#allocation11], %s659
          %s662 = ssub.s32 16, 16
          %663 = vsyncadd %s658, %s662
          %s664 = smul.addr %s38, 16
          %s665 = scalar_lea.hbm %s5, %s664
          %s667 = sshll.u32 %s660, 4
          %s668 = int_to_ptr.vmem [resolvable:$true] %s667
          %670 = dma.hbm_to_vmem [thread:$0]  %s665, 16, %s668, %s658
        $region56: #{tpu_custom_call.1} parent=47 // pred_fallthru
          _
        // Predicated region
        $region57: #{tpu_custom_call.1} parent=47 // pred_check
          %p671 = pneg %p203
        $region58: #{tpu_custom_call.1} parent=47 // pred_check_branch
          %673 = sbr.rel (%p671) target = $region60
        $region59: #{tpu_custom_call.1} parent=47 // pred_region
          %s674 = sand.u32 %s30, 1
          %s675 = scalar_lea.sflag [#allocation4], %s674
          %s676 = sand.u32 %s193, 1
          %s677 = smul.addr %s676, 384
          %s678 = scalar_lea.vmem [#allocation12], %s677
          %s680 = ssub.s32 6144, 6144
          %681 = vsyncadd %s675, %s680
          %s682 = smul.addr %s38, 48
          %s683 = smul.addr %s682, 128
          %s684 = scalar_lea.hbm %s6, %s683
          %s685 = sshll.u32 %s678, 4
          %s686 = int_to_ptr.vmem [resolvable:$true] %s685
          %691 = dma.hbm_to_vmem [thread:$0]  %s684, 6144, %s686, %s675, 384, 384, 24
        $region60: #{tpu_custom_call.1} parent=47 // pred_fallthru
          _
        // Predicated region
        $region61: #{tpu_custom_call.1} parent=47 // pred_check
          %p692 = pneg %p229
        $region62: #{tpu_custom_call.1} parent=47 // pred_check_branch
          %694 = sbr.rel (%p692) target = $region64
        $region63: #{tpu_custom_call.1} parent=47 // pred_region
          %p695 = scmp.lt.s32.totalorder %s38, 1
          %s696 = scalar_select %p695, %s38, 1
          %s697 = smul.addr %s696, 3
          %s698 = scalar_lea.vmem %s7, %s697
        $region64: #{tpu_custom_call.1} parent=47 // pred_fallthru
          _
        // Predicated region
        $region65: #{tpu_custom_call.1} parent=47 // pred_check
          %p699 = pneg %p255
        $region66: #{tpu_custom_call.1} parent=47 // pred_check_branch
          %701 = sbr.rel (%p699) target = $region68
        $region67: #{tpu_custom_call.1} parent=47 // pred_region
          %s702 = sand.u32 %s30, 1
          %s703 = scalar_lea.sflag [#allocation4], %s702
          %s704 = sand.u32 %s245, 1
          %s705 = smul.addr %s704, 128
          %s706 = scalar_lea.vmem [#allocation13], %s705
          %s708 = ssub.s32 2048, 2048
          %709 = vsyncadd %s703, %s708
          %s710 = smul.addr %s38, 16
          %s711 = smul.addr %s710, 128
          %s712 = scalar_lea.hbm %s8, %s711
          %s713 = sshll.u32 %s706, 4
          %s714 = int_to_ptr.vmem [resolvable:$true] %s713
          %719 = dma.hbm_to_vmem [thread:$0]  %s712, 2048, %s714, %s703, 128, 128, 8
        $region68: #{tpu_custom_call.1} parent=47 // pred_fallthru
          _
        // Predicated region
        $region69: #{tpu_custom_call.1} parent=47 // pred_check
          %p720 = pneg %p281
        $region70: #{tpu_custom_call.1} parent=47 // pred_check_branch
          %722 = sbr.rel (%p720) target = $region72
        $region71: #{tpu_custom_call.1} parent=47 // pred_region
          %p723 = scmp.lt.s32.totalorder %s38, 1
          %s724 = scalar_select %p723, %s38, 1
          %s725 = scalar_lea.vmem %s9, %s724
        $region72: #{tpu_custom_call.1} parent=47 // pred_fallthru
          _
        // Predicated region
        $region73: #{tpu_custom_call.1} parent=47 // pred_check
          %p726 = pneg %p307
        $region74: #{tpu_custom_call.1} parent=47 // pred_check_branch
          %728 = sbr.rel (%p726) target = $region76
        $region75: #{tpu_custom_call.1} parent=47 // pred_region
          %p729 = scmp.lt.s32.totalorder %s38, 1
          %s730 = scalar_select %p729, %s38, 1
          %s731 = scalar_lea.vmem %s10, %s730
        $region76: #{tpu_custom_call.1} parent=47 // pred_fallthru
          _
        // Predicated region
        $region77: #{tpu_custom_call.1} parent=47 // pred_check
          %p732 = pneg %p333
        $region78: #{tpu_custom_call.1} parent=47 // pred_check_branch
          %734 = sbr.rel (%p732) target = $region80
        $region79: #{tpu_custom_call.1} parent=47 // pred_region
          %p735 = scmp.lt.s32.totalorder %s38, 1
          %s736 = scalar_select %p735, %s38, 1
          %s737 = scalar_lea.vmem %s11, %s736
        $region80: #{tpu_custom_call.1} parent=47 // pred_fallthru
          _
        // Predicated region
        $region81: #{tpu_custom_call.1} parent=47 // pred_check
          %p738 = pneg %p359
        $region82: #{tpu_custom_call.1} parent=47 // pred_check_branch
          %740 = sbr.rel (%p738) target = $region84
        $region83: #{tpu_custom_call.1} parent=47 // pred_region
          %s741 = sand.u32 %s30, 1
          %s742 = scalar_lea.sflag [#allocation4], %s741
          %s743 = sand.u32 %s349, 1
          %s744 = smul.addr %s743, 256
          %s745 = scalar_lea.vmem [#allocation14], %s744
          %s747 = ssub.s32 4096, 4096
          %748 = vsyncadd %s742, %s747
          %s749 = smul.addr %s38, 32
          %s750 = smul.addr %s749, 128
          %s751 = scalar_lea.hbm %s12, %s750
          %s752 = sshll.u32 %s745, 4
          %s753 = int_to_ptr.vmem [resolvable:$true] %s752
          %758 = dma.hbm_to_vmem [thread:$0]  %s751, 4096, %s753, %s742, 256, 256, 16
        $region84: #{tpu_custom_call.1} parent=47 // pred_fallthru
          _
        // Predicated region
        $region85: #{tpu_custom_call.1} parent=47 // pred_check
          %p759 = pneg %p385
        $region86: #{tpu_custom_call.1} parent=47 // pred_check_branch
          %761 = sbr.rel (%p759) target = $region88
        $region87: #{tpu_custom_call.1} parent=47 // pred_region
          %p762 = scmp.lt.s32.totalorder %s38, 1
          %s763 = scalar_select %p762, %s38, 1
          %s764 = smul.addr %s763, 2
          %s765 = scalar_lea.vmem %s13, %s764
        $region88: #{tpu_custom_call.1} parent=47 // pred_fallthru
          _
        // Predicated region
        $region89: #{tpu_custom_call.1} parent=47 // pred_check
          %p766 = pneg %p411
        $region90: #{tpu_custom_call.1} parent=47 // pred_check_branch
          %768 = sbr.rel (%p766) target = $region92
        $region91: #{tpu_custom_call.1} parent=47 // pred_region
          %s769 = sand.u32 %s30, 1
          %s770 = scalar_lea.sflag [#allocation4], %s769
          %s771 = sand.u32 %s401, 1
          %s772 = smul.addr %s771, 256
          %s773 = scalar_lea.vmem [#allocation15], %s772
          %s775 = ssub.s32 4096, 4096
          %776 = vsyncadd %s770, %s775
          %s777 = smul.addr %s38, 32
          %s778 = smul.addr %s777, 128
          %s779 = scalar_lea.hbm %s14, %s778
          %s780 = sshll.u32 %s773, 4
          %s781 = int_to_ptr.vmem [resolvable:$true] %s780
          %786 = dma.hbm_to_vmem [thread:$0]  %s779, 4096, %s781, %s770, 128, 128, 8
        $region92: #{tpu_custom_call.1} parent=47 // pred_fallthru
          _
        // Predicated region
        $region93: #{tpu_custom_call.1} parent=47 // pred_check
          %p787 = pneg %p437
        $region94: #{tpu_custom_call.1} parent=47 // pred_check_branch
          %789 = sbr.rel (%p787) target = $region96
        $region95: #{tpu_custom_call.1} parent=47 // pred_region
          %p790 = scmp.lt.s32.totalorder %s38, 1
          %s791 = scalar_select %p790, %s38, 1
          %s792 = scalar_lea.vmem %s15, %s791
        $region96: #{tpu_custom_call.1} parent=47 // pred_fallthru
          _
      $region48: #{tpu_custom_call.1} parent=5 // pred_fallthru
        _
      %p793 = scmp.le.s32.totalorder 1, %s30
      %p794 = scmp.lt.s32.totalorder %s30, 3
      %p795 = pnand %p793, %p794
      %p796 = pneg %p795
      // Predicated region
      $region97: #{tpu_custom_call.1} parent=5 // pred_check
        _
      $region98: #{tpu_custom_call.1} parent=5 // pred_check_branch
        %798 = sbr.rel (%p795) target = $region100
      $region99: #{tpu_custom_call.1} parent=5 // pred_region
        %s799 = ssub.s32 %s30, 1
        // Predicated region
        $region101: #{tpu_custom_call.1} parent=99 // pred_check
          %p800 = pneg %p68
        $region102: #{tpu_custom_call.1} parent=99 // pred_check_branch
          %802 = sbr.rel (%p800) target = $region104
        $region103: #{tpu_custom_call.1} parent=99 // pred_region
          %803 = dma.done [#allocation4], 2048
        $region104: #{tpu_custom_call.1} parent=99 // pred_fallthru
          _
        // Predicated region
        $region105: #{tpu_custom_call.1} parent=99 // pred_check
          %p804 = pneg %p89
        $region106: #{tpu_custom_call.1} parent=99 // pred_check_branch
          %806 = sbr.rel (%p804) target = $region108
        $region107: #{tpu_custom_call.1} parent=99 // pred_region
          %807 = dma.done [#allocation7], 512
        $region108: #{tpu_custom_call.1} parent=99 // pred_fallthru
          _
        // Predicated region
        $region109: #{tpu_custom_call.1} parent=99 // pred_check
          %p808 = pneg %p110
        $region110: #{tpu_custom_call.1} parent=99 // pred_check_branch
          %810 = sbr.rel (%p808) target = $region112
        $region111: #{tpu_custom_call.1} parent=99 // pred_region
          %811 = dma.done [#allocation7], 512
        $region112: #{tpu_custom_call.1} parent=99 // pred_fallthru
          _
        // Predicated region
        $region113: #{tpu_custom_call.1} parent=99 // pred_check
          %p812 = pneg %p131
        $region114: #{tpu_custom_call.1} parent=99 // pred_check_branch
          %814 = sbr.rel (%p812) target = $region116
        $region115: #{tpu_custom_call.1} parent=99 // pred_region
          %815 = dma.done [#allocation10], 16
        $region116: #{tpu_custom_call.1} parent=99 // pred_fallthru
          _
        %s816 = sand.u32 %s35, 1
        %s817 = scalar_lea.sflag [#allocation4], %s816
        %s818 = sand.u32 %s170, 1
        %s819 = scalar_lea.vmem [#allocation11], %s818
        // Predicated region
        $region117: #{tpu_custom_call.1} parent=99 // pred_check
          %p820 = pneg %p183
        $region118: #{tpu_custom_call.1} parent=99 // pred_check_branch
          %822 = sbr.rel (%p820) target = $region120
        $region119: #{tpu_custom_call.1} parent=99 // pred_region
          %823 = dma.done %s817, 16
        $region120: #{tpu_custom_call.1} parent=99 // pred_fallthru
          _
        %s824 = sand.u32 %s35, 1
        %s825 = scalar_lea.sflag [#allocation4], %s824
        %s826 = sand.u32 %s196, 1
        %s827 = smul.addr %s826, 384
        %s828 = scalar_lea.vmem [#allocation12], %s827
        // Predicated region
        $region121: #{tpu_custom_call.1} parent=99 // pred_check
          %p829 = pneg %p209
        $region122: #{tpu_custom_call.1} parent=99 // pred_check_branch
          %831 = sbr.rel (%p829) target = $region124
        $region123: #{tpu_custom_call.1} parent=99 // pred_region
          %832 = dma.done %s825, 6144
        $region124: #{tpu_custom_call.1} parent=99 // pred_fallthru
          _
        %s833 = sand.u32 %s35, 1
        %s834 = scalar_lea.sflag [#allocation4], %s833
        %s835 = sand.u32 %s248, 1
        %s836 = smul.addr %s835, 128
        %s837 = scalar_lea.vmem [#allocation13], %s836
        // Predicated region
        $region125: #{tpu_custom_call.1} parent=99 // pred_check
          %p838 = pneg %p261
        $region126: #{tpu_custom_call.1} parent=99 // pred_check_branch
          %840 = sbr.rel (%p838) target = $region128
        $region127: #{tpu_custom_call.1} parent=99 // pred_region
          %841 = dma.done %s834, 2048
        $region128: #{tpu_custom_call.1} parent=99 // pred_fallthru
          _
        %s842 = sand.u32 %s35, 1
        %s843 = scalar_lea.sflag [#allocation4], %s842
        %s844 = sand.u32 %s352, 1
        %s845 = smul.addr %s844, 256
        %s846 = scalar_lea.vmem [#allocation14], %s845
        // Predicated region
        $region129: #{tpu_custom_call.1} parent=99 // pred_check
          %p847 = pneg %p365
        $region130: #{tpu_custom_call.1} parent=99 // pred_check_branch
          %849 = sbr.rel (%p847) target = $region132
        $region131: #{tpu_custom_call.1} parent=99 // pred_region
          %850 = dma.done %s843, 4096
        $region132: #{tpu_custom_call.1} parent=99 // pred_fallthru
          _
        %s851 = sand.u32 %s35, 1
        %s852 = scalar_lea.sflag [#allocation4], %s851
        %s853 = sand.u32 %s404, 1
        %s854 = smul.addr %s853, 256
        %s855 = scalar_lea.vmem [#allocation15], %s854
        // Predicated region
        $region133: #{tpu_custom_call.1} parent=99 // pred_check
          %p856 = pneg %p417
        $region134: #{tpu_custom_call.1} parent=99 // pred_check_branch
          %858 = sbr.rel (%p856) target = $region136
        $region135: #{tpu_custom_call.1} parent=99 // pred_region
          %859 = dma.done %s852, 4096
        $region136: #{tpu_custom_call.1} parent=99 // pred_fallthru
          _
        // Predicated region
        $region137: #{tpu_custom_call.1} parent=99 // pred_check
          %p860 = pneg %p506
        $region138: #{tpu_custom_call.1} parent=99 // pred_check_branch
          %862 = sbr.rel (%p860) target = $region140
        $region139: #{tpu_custom_call.1} parent=99 // pred_region
          %863 = dma.done [#allocation7], 2048
        $region140: #{tpu_custom_call.1} parent=99 // pred_fallthru
          _
        %p864 = pneg %p68
        %p865 = pneg %p65
        %p866 = pneg %p89
        %p867 = pneg %p86
        %p868 = pneg %p110
        %p869 = pneg %p107
        %p870 = pneg %p131
        %p871 = pneg %p128
        %p872 = scmp.lt.s32.totalorder %s40, 1
        %s873 = scalar_select %p872, %s40, 1
        %s874 = scalar_lea.vmem %s4, %s873
        %p875 = pneg %p157
        %p876 = pneg %p154
        %s877 = sand.u32 %s35, 1
        %s878 = scalar_lea.sflag [#allocation4], %s877
        %s879 = sand.u32 %s170, 1
        %s880 = scalar_lea.vmem [#allocation11], %s879
        %p881 = pneg %p183
        %p882 = pneg %p180
        %s883 = sand.u32 %s35, 1
        %s884 = scalar_lea.sflag [#allocation4], %s883
        %s885 = sand.u32 %s196, 1
        %s886 = smul.addr %s885, 384
        %s887 = scalar_lea.vmem [#allocation12], %s886
        %p888 = pneg %p209
        %p889 = pneg %p206
        %p890 = scmp.lt.s32.totalorder %s40, 1
        %s891 = scalar_select %p890, %s40, 1
        %s892 = smul.addr %s891, 3
        %s893 = scalar_lea.vmem %s7, %s892
        %p894 = pneg %p235
        %p895 = pneg %p232
        %s896 = sand.u32 %s35, 1
        %s897 = scalar_lea.sflag [#allocation4], %s896
        %s898 = sand.u32 %s248, 1
        %s899 = smul.addr %s898, 128
        %s900 = scalar_lea.vmem [#allocation13], %s899
        %p901 = pneg %p261
        %p902 = pneg %p258
        %p903 = scmp.lt.s32.totalorder %s40, 1
        %s904 = scalar_select %p903, %s40, 1
        %s905 = scalar_lea.vmem %s9, %s904
        %p906 = pneg %p287
        %p907 = pneg %p284
        %p908 = scmp.lt.s32.totalorder %s40, 1
        %s909 = scalar_select %p908, %s40, 1
        %s910 = scalar_lea.vmem %s10, %s909
        %p911 = pneg %p313
        %p912 = pneg %p310
        %p913 = scmp.lt.s32.totalorder %s40, 1
        %s914 = scalar_select %p913, %s40, 1
        %s915 = scalar_lea.vmem %s11, %s914
        %p916 = pneg %p339
        %p917 = pneg %p336
        %s918 = sand.u32 %s35, 1
        %s919 = scalar_lea.sflag [#allocation4], %s918
        %s920 = sand.u32 %s352, 1
        %s921 = smul.addr %s920, 256
        %s922 = scalar_lea.vmem [#allocation14], %s921
        %p923 = pneg %p365
        %p924 = pneg %p362
        %p925 = scmp.lt.s32.totalorder %s40, 1
        %s926 = scalar_select %p925, %s40, 1
        %s927 = smul.addr %s926, 2
        %s928 = scalar_lea.vmem %s13, %s927
        %p929 = pneg %p391
        %p930 = pneg %p388
        %s931 = sand.u32 %s35, 1
        %s932 = scalar_lea.sflag [#allocation4], %s931
        %s933 = sand.u32 %s404, 1
        %s934 = smul.addr %s933, 256
        %s935 = scalar_lea.vmem [#allocation15], %s934
        %p936 = pneg %p417
        %p937 = pneg %p414
        %p938 = scmp.lt.s32.totalorder %s40, 1
        %s939 = scalar_select %p938, %s40, 1
        %s940 = scalar_lea.vmem %s15, %s939
        %p941 = pneg %p443
        %p942 = pneg %p440
        %p943 = pneg %p464
        %p944 = pneg %p461
        %p945 = pneg %p485
        %p946 = pneg %p482
        %p947 = pneg %p506
        %p948 = pneg %p503
        %p949 = pneg %p527
        %p950 = pneg %p524
        %p951 = pneg %p553
        %p952 = pneg %p550
        %s953 = smul.u32 4, %s39
        %p954 = scmp.lt.s32.totalorder %s40, 1
        %s955 = scalar_select %p954, %s40, 1
        %s956 = scalar_lea.vmem %s4, %s955
        %p957 = scmp.lt.s32.totalorder %s40, 1
        %s958 = scalar_select %p957, %s40, 1
        %s959 = smul.addr %s958, 3
        %s960 = scalar_lea.vmem %s7, %s959
        %p961 = scmp.lt.s32.totalorder %s40, 1
        %s962 = scalar_select %p961, %s40, 1
        %s963 = scalar_lea.vmem %s9, %s962
        %p964 = scmp.lt.s32.totalorder %s40, 1
        %s965 = scalar_select %p964, %s40, 1
        %s966 = scalar_lea.vmem %s10, %s965
        %p967 = scmp.lt.s32.totalorder %s40, 1
        %s968 = scalar_select %p967, %s40, 1
        %s969 = scalar_lea.vmem %s11, %s968
        %p970 = scmp.lt.s32.totalorder %s40, 1
        %s971 = scalar_select %p970, %s40, 1
        %s972 = smul.addr %s971, 2
        %s973 = scalar_lea.vmem %s13, %s972
        %p974 = scmp.lt.s32.totalorder %s40, 1
        %s975 = scalar_select %p974, %s40, 1
        %s976 = scalar_lea.vmem %s15, %s975
        %p977 = scmp.eq.s32.totalorder %s40, 0
        // Predicated region
        $region141: #{tpu_custom_call.1} parent=99 // pred_check
          %p978 = pneg %p977
        $region142: #{tpu_custom_call.1} parent=99 // pred_check_branch
          %980 = sbr.rel (%p978) target = $region144
        $region143: #{tpu_custom_call.1} parent=99 // pred_region
          %v981 = vld [vmem:[#allocation3] sm:$0xff]
          %v982 = vld [vmem:[#allocation3 + $0x8] sm:$0xff]
          %v983 = vld [vmem:[#allocation3 + $0x10] sm:$0xff]
          %v984 = vld [vmem:[#allocation3 + $0x18] sm:$0xff]
          %v985 = vld [vmem:[#allocation3 + $0x20] sm:$0xff]
          %v986 = vld [vmem:[#allocation3 + $0x28] sm:$0xff]
          %v987 = vld [vmem:[#allocation3 + $0x30] sm:$0xff]
          %v988 = vld [vmem:[#allocation3 + $0x38] sm:$0xff]
          %v989 = vld [vmem:[#allocation3 + $0x40] sm:$0xff]
          %v990 = vld [vmem:[#allocation3 + $0x48] sm:$0xff]
          %v991 = vld [vmem:[#allocation3 + $0x50] sm:$0xff]
          %v992 = vld [vmem:[#allocation3 + $0x58] sm:$0xff]
          %v993 = vld [vmem:[#allocation3 + $0x60] sm:$0xff]
          %v994 = vld [vmem:[#allocation3 + $0x68] sm:$0xff]
          %v995 = vld [vmem:[#allocation3 + $0x70] sm:$0xff]
          %v996 = vld [vmem:[#allocation3 + $0x78] sm:$0xff]
          %v997 = vld [vmem:[#allocation8] sm:$0xff]
          %v998 = vld [vmem:[#allocation8 + $0x8] sm:$0xff]
          %v999 = vld [vmem:[#allocation8 + $0x10] sm:$0xff]
          %v1000 = vld [vmem:[#allocation8 + $0x18] sm:$0xff]
          %v1001 = vld [vmem:[#allocation9] sm:$0x1]
          %v1003 = vlaneseq
          %v1004 = vshrl.u32 %v1003, 7
          %v1005 = vsub.s32 0, %v1004
          %v1006 = vrot.slane %v1001, %v1005
          %vm1008 = vcmask 261120
          %v1010 = vsel %vm1008, %v981, 0
          %v1013 = vsel %vm1008, %v982, 0
          %v1016 = vsel %vm1008, %v983, 0
          %v1019 = vsel %vm1008, %v984, 0
          %v1022 = vsel %vm1008, %v985, 0
          %v1025 = vsel %vm1008, %v986, 0
          %v1028 = vsel %vm1008, %v987, 0
          %v1031 = vsel %vm1008, %v988, 0
          %v1034 = vsel %vm1008, %v989, 0
          %v1037 = vsel %vm1008, %v990, 0
          %v1040 = vsel %vm1008, %v991, 0
          %v1043 = vsel %vm1008, %v992, 0
          %v1046 = vsel %vm1008, %v993, 0
          %v1049 = vsel %vm1008, %v994, 0
          %v1052 = vsel %vm1008, %v995, 0
          %v1055 = vsel %vm1008, %v996, 0
          %1057 = vmatprep.subr.mxu0 0.0
          %1058 = vmatpush1.msra.mxu0 0.0
          %1059 = vmatprep.subr.mxu0 0.0
          %1060 = vmatpush1.msra.mxu0 0.0
          %1061 = vmatprep.subr.mxu0 0.0
          %1062 = vmatpush1.msra.mxu0 0.0
          %1063 = vmatprep.subr.mxu0 0.0
          %1064 = vmatpush1.msra.mxu0 0.0
          %1065 = vmatprep.subr.mxu0 0.0
          %1066 = vmatpush1.msra.mxu0 0.0
          %1067 = vmatprep.subr.mxu0 0.0
          %1068 = vmatpush1.msra.mxu0 0.0
          %1069 = vmatprep.subr.mxu0 0.0
          %1070 = vmatpush1.msra.mxu0 0.0
          %1071 = vmatprep.subr.mxu0 0.0
          %1072 = vmatpush1.msra.mxu0 0.0
          %1073 = vmatprep.subr.mxu0 0.0
          %1074 = vmatpush1.msra.mxu0 0.0
          %1075 = vmatprep.subr.mxu0 0.0
          %1076 = vmatpush1.msra.mxu0 0.0
          %1077 = vmatprep.subr.mxu0 0.0
          %1078 = vmatpush1.msra.mxu0 0.0
          %1079 = vmatprep.subr.mxu0 0.0
          %1080 = vmatpush1.msra.mxu0 0.0
          %1081 = vmatprep.subr.mxu0 0.0
          %1082 = vmatpush1.msra.mxu0 %v1000
          %1083 = vmatprep.subr.mxu0 0.0
          %1084 = vmatpush1.msra.mxu0 %v999
          %1085 = vmatprep.subr.mxu0 0.0
          %1086 = vmatpush1.msra.mxu0 %v998
          %1087 = vmatprep.subr.mxu0 0.0
          %1088 = vmatpush1.msra.mxu0 %v997
          %1089 = vmatprep.subr.mxu0 0.0
          %1090 = vmatpush2.msra.mxu0 0.0
          %1091 = vmatprep.subr.mxu0 0.0
          %1092 = vmatpush2.msra.mxu0 0.0
          %1093 = vmatprep.subr.mxu0 0.0
          %1094 = vmatpush2.msra.mxu0 0.0
          %1095 = vmatprep.subr.mxu0 0.0
          %1096 = vmatpush2.msra.mxu0 0.0
          %1097 = vmatprep.subr.mxu0 0.0
          %1098 = vmatpush2.msra.mxu0 0.0
          %1099 = vmatprep.subr.mxu0 0.0
          %1100 = vmatpush2.msra.mxu0 0.0
          %1101 = vmatprep.subr.mxu0 0.0
          %1102 = vmatpush2.msra.mxu0 0.0
          %1103 = vmatprep.subr.mxu0 0.0
          %1104 = vmatpush2.msra.mxu0 0.0
          %1105 = vmatprep.subr.mxu0 0.0
          %1106 = vmatpush2.msra.mxu0 0.0
          %1107 = vmatprep.subr.mxu0 0.0
          %1108 = vmatpush2.msra.mxu0 0.0
          %1109 = vmatprep.subr.mxu0 0.0
          %1110 = vmatpush2.msra.mxu0 0.0
          %1111 = vmatprep.subr.mxu0 0.0
          %1112 = vmatpush2.msra.mxu0 0.0
          %1113 = vmatprep.subr.mxu0 0.0
          %1114 = vmatpush2.msra.mxu0 0.0
          %1115 = vmatprep.subr.mxu0 0.0
          %1116 = vmatpush2.msra.mxu0 0.0
          %1117 = vmatprep.subr.mxu0 0.0
          %1118 = vmatpush2.msra.mxu0 0.0
          %1119 = vmatprep.subr.mxu0 0.0
          %1120 = vmatpush2.msra.mxu0 0.0
          %1121 = vmatprep.mubr.f32.mxu0 0.0
          %1122 = vmatmul.mubr.f32.gmra.mxu0 %v1010
          %v1123 = vpop.f32.mrf.mxu0
          %v1124 = vadd.f32 %v1006, %v1123
          %v1125 = vpop.f32.mrf.mxu0
          %1126 = vmatprep.mubr.f32.mxu0 0.0
          %1127 = vmatmul.mubr.f32.gmra.mxu0 %v1013
          %v1128 = vpop.f32.mrf.mxu0
          %v1129 = vadd.f32 %v1006, %v1128
          %v1130 = vpop.f32.mrf.mxu0
          %1131 = vmatprep.mubr.f32.mxu0 0.0
          %1132 = vmatmul.mubr.f32.gmra.mxu0 %v1016
          %v1133 = vpop.f32.mrf.mxu0
          %v1134 = vadd.f32 %v1006, %v1133
          %v1135 = vpop.f32.mrf.mxu0
          %1136 = vmatprep.mubr.f32.mxu0 0.0
          %1137 = vmatmul.mubr.f32.gmra.mxu0 %v1019
          %v1138 = vpop.f32.mrf.mxu0
          %v1139 = vadd.f32 %v1006, %v1138
          %v1140 = vpop.f32.mrf.mxu0
          %1141 = vmatprep.mubr.f32.mxu0 0.0
          %1142 = vmatmul.mubr.f32.gmra.mxu0 %v1022
          %v1143 = vpop.f32.mrf.mxu0
          %v1144 = vadd.f32 %v1006, %v1143
          %v1145 = vpop.f32.mrf.mxu0
          %1146 = vmatprep.mubr.f32.mxu0 0.0
          %1147 = vmatmul.mubr.f32.gmra.mxu0 %v1025
          %v1148 = vpop.f32.mrf.mxu0
          %v1149 = vadd.f32 %v1006, %v1148
          %v1150 = vpop.f32.mrf.mxu0
          %1151 = vmatprep.mubr.f32.mxu0 0.0
          %1152 = vmatmul.mubr.f32.gmra.mxu0 %v1028
          %v1153 = vpop.f32.mrf.mxu0
          %v1154 = vadd.f32 %v1006, %v1153
          %v1155 = vpop.f32.mrf.mxu0
          %1156 = vmatprep.mubr.f32.mxu0 0.0
          %1157 = vmatmul.mubr.f32.gmra.mxu0 %v1031
          %v1158 = vpop.f32.mrf.mxu0
          %v1159 = vadd.f32 %v1006, %v1158
          %v1160 = vpop.f32.mrf.mxu0
          %1161 = vmatprep.mubr.f32.mxu0 0.0
          %1162 = vmatmul.mubr.f32.gmra.mxu0 %v1034
          %v1163 = vpop.f32.mrf.mxu0
          %v1164 = vadd.f32 %v1006, %v1163
          %v1165 = vpop.f32.mrf.mxu0
          %1166 = vmatprep.mubr.f32.mxu0 0.0
          %1167 = vmatmul.mubr.f32.gmra.mxu0 %v1037
          %v1168 = vpop.f32.mrf.mxu0
          %v1169 = vadd.f32 %v1006, %v1168
          %v1170 = vpop.f32.mrf.mxu0
          %1171 = vmatprep.mubr.f32.mxu0 0.0
          %1172 = vmatmul.mubr.f32.gmra.mxu0 %v1040
          %v1173 = vpop.f32.mrf.mxu0
          %v1174 = vadd.f32 %v1006, %v1173
          %v1175 = vpop.f32.mrf.mxu0
          %1176 = vmatprep.mubr.f32.mxu0 0.0
          %1177 = vmatmul.mubr.f32.gmra.mxu0 %v1043
          %v1178 = vpop.f32.mrf.mxu0
          %v1179 = vadd.f32 %v1006, %v1178
          %v1180 = vpop.f32.mrf.mxu0
          %1181 = vmatprep.mubr.f32.mxu0 0.0
          %1182 = vmatmul.mubr.f32.gmra.mxu0 %v1046
          %v1183 = vpop.f32.mrf.mxu0
          %v1184 = vadd.f32 %v1006, %v1183
          %v1185 = vpop.f32.mrf.mxu0
          %1186 = vmatprep.mubr.f32.mxu0 0.0
          %1187 = vmatmul.mubr.f32.gmra.mxu0 %v1049
          %v1188 = vpop.f32.mrf.mxu0
          %v1189 = vadd.f32 %v1006, %v1188
          %v1190 = vpop.f32.mrf.mxu0
          %1191 = vmatprep.mubr.f32.mxu0 0.0
          %1192 = vmatmul.mubr.f32.gmra.mxu0 %v1052
          %v1193 = vpop.f32.mrf.mxu0
          %v1194 = vadd.f32 %v1006, %v1193
          %v1195 = vpop.f32.mrf.mxu0
          %1196 = vmatprep.mubr.f32.mxu0 0.0
          %1197 = vmatmul.mubr.f32.gmra.mxu0 %v1055
          %v1198 = vpop.f32.mrf.mxu0
          %v1199 = vadd.f32 %v1006, %v1198
          %v1200 = vpop.f32.mrf.mxu0
          %1201 = vdwg.mxu0
          %v1202 = vld [vmem:[#allocation6] sm:$0xff]
          %v1203 = vld [vmem:[#allocation6 + $0x8] sm:$0xff]
          %v1204 = vld [vmem:[#allocation6 + $0x10] sm:$0xff]
          %v1205 = vld [vmem:[#allocation6 + $0x18] sm:$0xff]
          %v1206 = vadd.f32 %v1124, %v1202
          %v1207 = vadd.f32 %v1129, %v1203
          %v1208 = vadd.f32 %v1134, %v1204
          %v1209 = vadd.f32 %v1139, %v1205
          %v1210 = vadd.f32 %v1144, %v1202
          %v1211 = vadd.f32 %v1149, %v1203
          %v1212 = vadd.f32 %v1154, %v1204
          %v1213 = vadd.f32 %v1159, %v1205
          %v1214 = vadd.f32 %v1164, %v1202
          %v1215 = vadd.f32 %v1169, %v1203
          %v1216 = vadd.f32 %v1174, %v1204
          %v1217 = vadd.f32 %v1179, %v1205
          %v1218 = vadd.f32 %v1184, %v1202
          %v1219 = vadd.f32 %v1189, %v1203
          %v1220 = vadd.f32 %v1194, %v1204
          %v1221 = vadd.f32 %v1199, %v1205
          %1222 = vst [vmem:[#allocation2] sm:$0xff] %v1206
          %1223 = vst [vmem:[#allocation2 + $0x8] sm:$0xff] %v1207
          %1224 = vst [vmem:[#allocation2 + $0x10] sm:$0xff] %v1208
          %1225 = vst [vmem:[#allocation2 + $0x18] sm:$0xff] %v1209
          %1226 = vst [vmem:[#allocation2 + $0x20] sm:$0xff] %v1210
          %1227 = vst [vmem:[#allocation2 + $0x28] sm:$0xff] %v1211
          %1228 = vst [vmem:[#allocation2 + $0x30] sm:$0xff] %v1212
          %1229 = vst [vmem:[#allocation2 + $0x38] sm:$0xff] %v1213
          %1230 = vst [vmem:[#allocation2 + $0x40] sm:$0xff] %v1214
          %1231 = vst [vmem:[#allocation2 + $0x48] sm:$0xff] %v1215
          %1232 = vst [vmem:[#allocation2 + $0x50] sm:$0xff] %v1216
          %1233 = vst [vmem:[#allocation2 + $0x58] sm:$0xff] %v1217
          %1234 = vst [vmem:[#allocation2 + $0x60] sm:$0xff] %v1218
          %1235 = vst [vmem:[#allocation2 + $0x68] sm:$0xff] %v1219
          %1236 = vst [vmem:[#allocation2 + $0x70] sm:$0xff] %v1220
          %1237 = vst [vmem:[#allocation2 + $0x78] sm:$0xff] %v1221
        $region144: #{tpu_custom_call.1} parent=99 // pred_fallthru
          _
        %v1238 = vld [vmem:[#allocation2] sm:$0xff]
        %v1239 = vld [vmem:[#allocation2 + $0x8] sm:$0xff]
        %v1240 = vld [vmem:[#allocation2 + $0x10] sm:$0xff]
        %v1241 = vld [vmem:[#allocation2 + $0x18] sm:$0xff]
        %v1242 = vld [vmem:[#allocation2 + $0x20] sm:$0xff]
        %v1243 = vld [vmem:[#allocation2 + $0x28] sm:$0xff]
        %v1244 = vld [vmem:[#allocation2 + $0x30] sm:$0xff]
        %v1245 = vld [vmem:[#allocation2 + $0x38] sm:$0xff]
        %v1246 = vld [vmem:[#allocation2 + $0x40] sm:$0xff]
        %v1247 = vld [vmem:[#allocation2 + $0x48] sm:$0xff]
        %v1248 = vld [vmem:[#allocation2 + $0x50] sm:$0xff]
        %v1249 = vld [vmem:[#allocation2 + $0x58] sm:$0xff]
        %v1250 = vld [vmem:[#allocation2 + $0x60] sm:$0xff]
        %v1251 = vld [vmem:[#allocation2 + $0x68] sm:$0xff]
        %v1252 = vld [vmem:[#allocation2 + $0x70] sm:$0xff]
        %v1253 = vld [vmem:[#allocation2 + $0x78] sm:$0xff]
        %v1254 = vld [vmem:[%s956] sm:$0x1]
        %v1255 = vld [vmem:[%s819] sm:$0x1]
        %1256 = vadd.xlane.f32.xlu0 %v1238
        %v1257 = vpop.xlane.xlu0 %1256
        %1258 = vadd.xlane.f32.xlu0 %v1239
        %v1259 = vpop.xlane.xlu0 %1258
        %1260 = vadd.xlane.f32.xlu0 %v1240
        %v1261 = vpop.xlane.xlu0 %1260
        %1262 = vadd.xlane.f32.xlu0 %v1241
        %v1263 = vpop.xlane.xlu0 %1262
        %1264 = vadd.xlane.f32.xlu0 %v1242
        %v1265 = vpop.xlane.xlu0 %1264
        %1266 = vadd.xlane.f32.xlu0 %v1243
        %v1267 = vpop.xlane.xlu0 %1266
        %1268 = vadd.xlane.f32.xlu0 %v1244
        %v1269 = vpop.xlane.xlu0 %1268
        %1270 = vadd.xlane.f32.xlu0 %v1245
        %v1271 = vpop.xlane.xlu0 %1270
        %1272 = vadd.xlane.f32.xlu0 %v1246
        %v1273 = vpop.xlane.xlu0 %1272
        %1274 = vadd.xlane.f32.xlu0 %v1247
        %v1275 = vpop.xlane.xlu0 %1274
        %1276 = vadd.xlane.f32.xlu0 %v1248
        %v1277 = vpop.xlane.xlu0 %1276
        %1278 = vadd.xlane.f32.xlu0 %v1249
        %v1279 = vpop.xlane.xlu0 %1278
        %1280 = vadd.xlane.f32.xlu0 %v1250
        %v1281 = vpop.xlane.xlu0 %1280
        %1282 = vadd.xlane.f32.xlu0 %v1251
        %v1283 = vpop.xlane.xlu0 %1282
        %1284 = vadd.xlane.f32.xlu0 %v1252
        %v1285 = vpop.xlane.xlu0 %1284
        %1286 = vadd.xlane.f32.xlu0 %v1253
        %v1287 = vpop.xlane.xlu0 %1286
        %v1288 = vrcp.pop 128.0
        %v1289 = vmul.f32 %v1257, %v1288
        %v1290 = vmul.f32 %v1259, %v1288
        %v1291 = vmul.f32 %v1261, %v1288
        %v1292 = vmul.f32 %v1263, %v1288
        %v1293 = vmul.f32 %v1265, %v1288
        %v1294 = vmul.f32 %v1267, %v1288
        %v1295 = vmul.f32 %v1269, %v1288
        %v1296 = vmul.f32 %v1271, %v1288
        %v1297 = vmul.f32 %v1273, %v1288
        %v1298 = vmul.f32 %v1275, %v1288
        %v1299 = vmul.f32 %v1277, %v1288
        %v1300 = vmul.f32 %v1279, %v1288
        %v1301 = vmul.f32 %v1281, %v1288
        %v1302 = vmul.f32 %v1283, %v1288
        %v1303 = vmul.f32 %v1285, %v1288
        %v1304 = vmul.f32 %v1287, %v1288
        %v1305 = vsub.f32 %v1238, %v1289
        %v1306 = vsub.f32 %v1239, %v1290
        %v1307 = vsub.f32 %v1240, %v1291
        %v1308 = vsub.f32 %v1241, %v1292
        %v1309 = vsub.f32 %v1242, %v1293
        %v1310 = vsub.f32 %v1243, %v1294
        %v1311 = vsub.f32 %v1244, %v1295
        %v1312 = vsub.f32 %v1245, %v1296
        %v1313 = vsub.f32 %v1246, %v1297
        %v1314 = vsub.f32 %v1247, %v1298
        %v1315 = vsub.f32 %v1248, %v1299
        %v1316 = vsub.f32 %v1249, %v1300
        %v1317 = vsub.f32 %v1250, %v1301
        %v1318 = vsub.f32 %v1251, %v1302
        %v1319 = vsub.f32 %v1252, %v1303
        %v1320 = vsub.f32 %v1253, %v1304
        %v1321 = vmul.f32 %v1305, %v1305
        %v1322 = vmul.f32 %v1306, %v1306
        %v1323 = vmul.f32 %v1307, %v1307
        %v1324 = vmul.f32 %v1308, %v1308
        %v1325 = vmul.f32 %v1309, %v1309
        %v1326 = vmul.f32 %v1310, %v1310
        %v1327 = vmul.f32 %v1311, %v1311
        %v1328 = vmul.f32 %v1312, %v1312
        %v1329 = vmul.f32 %v1313, %v1313
        %v1330 = vmul.f32 %v1314, %v1314
        %v1331 = vmul.f32 %v1315, %v1315
        %v1332 = vmul.f32 %v1316, %v1316
        %v1333 = vmul.f32 %v1317, %v1317
        %v1334 = vmul.f32 %v1318, %v1318
        %v1335 = vmul.f32 %v1319, %v1319
        %v1336 = vmul.f32 %v1320, %v1320
        %1337 = vadd.xlane.f32.xlu0 %v1321
        %v1338 = vpop.xlane.xlu0 %1337
        %1339 = vadd.xlane.f32.xlu0 %v1322
        %v1340 = vpop.xlane.xlu0 %1339
        %1341 = vadd.xlane.f32.xlu0 %v1323
        %v1342 = vpop.xlane.xlu0 %1341
        %1343 = vadd.xlane.f32.xlu0 %v1324
        %v1344 = vpop.xlane.xlu0 %1343
        %1345 = vadd.xlane.f32.xlu0 %v1325
        %v1346 = vpop.xlane.xlu0 %1345
        %1347 = vadd.xlane.f32.xlu0 %v1326
        %v1348 = vpop.xlane.xlu0 %1347
        %1349 = vadd.xlane.f32.xlu0 %v1327
        %v1350 = vpop.xlane.xlu0 %1349
        %1351 = vadd.xlane.f32.xlu0 %v1328
        %v1352 = vpop.xlane.xlu0 %1351
        %1353 = vadd.xlane.f32.xlu0 %v1329
        %v1354 = vpop.xlane.xlu0 %1353
        %1355 = vadd.xlane.f32.xlu0 %v1330
        %v1356 = vpop.xlane.xlu0 %1355
        %1357 = vadd.xlane.f32.xlu0 %v1331
        %v1358 = vpop.xlane.xlu0 %1357
        %1359 = vadd.xlane.f32.xlu0 %v1332
        %v1360 = vpop.xlane.xlu0 %1359
        %1361 = vadd.xlane.f32.xlu0 %v1333
        %v1362 = vpop.xlane.xlu0 %1361
        %1363 = vadd.xlane.f32.xlu0 %v1334
        %v1364 = vpop.xlane.xlu0 %1363
        %1365 = vadd.xlane.f32.xlu0 %v1335
        %v1366 = vpop.xlane.xlu0 %1365
        %1367 = vadd.xlane.f32.xlu0 %v1336
        %v1368 = vpop.xlane.xlu0 %1367
        %v1369 = vmul.f32 %v1338, %v1288
        %v1370 = vmul.f32 %v1340, %v1288
        %v1371 = vmul.f32 %v1342, %v1288
        %v1372 = vmul.f32 %v1344, %v1288
        %v1373 = vmul.f32 %v1346, %v1288
        %v1374 = vmul.f32 %v1348, %v1288
        %v1375 = vmul.f32 %v1350, %v1288
        %v1376 = vmul.f32 %v1352, %v1288
        %v1377 = vmul.f32 %v1354, %v1288
        %v1378 = vmul.f32 %v1356, %v1288
        %v1379 = vmul.f32 %v1358, %v1288
        %v1380 = vmul.f32 %v1360, %v1288
        %v1381 = vmul.f32 %v1362, %v1288
        %v1382 = vmul.f32 %v1364, %v1288
        %v1383 = vmul.f32 %v1366, %v1288
        %v1384 = vmul.f32 %v1368, %v1288
        %v1385 = vadd.f32 %v1369, 1e-05
        %v1386 = vadd.f32 %v1370, 1e-05
        %v1387 = vadd.f32 %v1371, 1e-05
        %v1388 = vadd.f32 %v1372, 1e-05
        %v1389 = vadd.f32 %v1373, 1e-05
        %v1390 = vadd.f32 %v1374, 1e-05
        %v1391 = vadd.f32 %v1375, 1e-05
        %v1392 = vadd.f32 %v1376, 1e-05
        %v1393 = vadd.f32 %v1377, 1e-05
        %v1394 = vadd.f32 %v1378, 1e-05
        %v1395 = vadd.f32 %v1379, 1e-05
        %v1396 = vadd.f32 %v1380, 1e-05
        %v1397 = vadd.f32 %v1381, 1e-05
        %v1398 = vadd.f32 %v1382, 1e-05
        %v1399 = vadd.f32 %v1383, 1e-05
        %v1400 = vadd.f32 %v1384, 1e-05
        %v1401 = vrsqrt.pop %v1385
        %v1402 = vrsqrt.pop %v1386
        %v1403 = vrsqrt.pop %v1387
        %v1404 = vrsqrt.pop %v1388
        %v1405 = vrsqrt.pop %v1389
        %v1406 = vrsqrt.pop %v1390
        %v1407 = vrsqrt.pop %v1391
        %v1408 = vrsqrt.pop %v1392
        %v1409 = vrsqrt.pop %v1393
        %v1410 = vrsqrt.pop %v1394
        %v1411 = vrsqrt.pop %v1395
        %v1412 = vrsqrt.pop %v1396
        %v1413 = vrsqrt.pop %v1397
        %v1414 = vrsqrt.pop %v1398
        %v1415 = vrsqrt.pop %v1399
        %v1416 = vrsqrt.pop %v1400
        %v1417 = vmul.f32 %v1305, %v1401
        %v1418 = vmul.f32 %v1306, %v1402
        %v1419 = vmul.f32 %v1307, %v1403
        %v1420 = vmul.f32 %v1308, %v1404
        %v1421 = vmul.f32 %v1309, %v1405
        %v1422 = vmul.f32 %v1310, %v1406
        %v1423 = vmul.f32 %v1311, %v1407
        %v1424 = vmul.f32 %v1312, %v1408
        %v1425 = vmul.f32 %v1313, %v1409
        %v1426 = vmul.f32 %v1314, %v1410
        %v1427 = vmul.f32 %v1315, %v1411
        %v1428 = vmul.f32 %v1316, %v1412
        %v1429 = vmul.f32 %v1317, %v1413
        %v1430 = vmul.f32 %v1318, %v1414
        %v1431 = vmul.f32 %v1319, %v1415
        %v1432 = vmul.f32 %v1320, %v1416
        %v1434 = vlaneseq
        %v1435 = vshrl.u32 %v1434, 7
        %v1436 = vsub.s32 0, %v1435
        %v1437 = vrot.slane %v1254, %v1436
        %v1439 = vmul.f32 %v1417, %v1437
        %v1440 = vmul.f32 %v1418, %v1437
        %v1441 = vmul.f32 %v1419, %v1437
        %v1442 = vmul.f32 %v1420, %v1437
        %v1443 = vmul.f32 %v1421, %v1437
        %v1444 = vmul.f32 %v1422, %v1437
        %v1445 = vmul.f32 %v1423, %v1437
        %v1446 = vmul.f32 %v1424, %v1437
        %v1447 = vmul.f32 %v1425, %v1437
        %v1448 = vmul.f32 %v1426, %v1437
        %v1449 = vmul.f32 %v1427, %v1437
        %v1450 = vmul.f32 %v1428, %v1437
        %v1451 = vmul.f32 %v1429, %v1437
        %v1452 = vmul.f32 %v1430, %v1437
        %v1453 = vmul.f32 %v1431, %v1437
        %v1454 = vmul.f32 %v1432, %v1437
        %v1456 = vlaneseq
        %v1457 = vshrl.u32 %v1456, 7
        %v1458 = vsub.s32 0, %v1457
        %v1459 = vrot.slane %v1255, %v1458
        %v1461 = vadd.f32 %v1439, %v1459
        %v1462 = vadd.f32 %v1440, %v1459
        %v1463 = vadd.f32 %v1441, %v1459
        %v1464 = vadd.f32 %v1442, %v1459
        %v1465 = vadd.f32 %v1443, %v1459
        %v1466 = vadd.f32 %v1444, %v1459
        %v1467 = vadd.f32 %v1445, %v1459
        %v1468 = vadd.f32 %v1446, %v1459
        %v1469 = vadd.f32 %v1447, %v1459
        %v1470 = vadd.f32 %v1448, %v1459
        %v1471 = vadd.f32 %v1449, %v1459
        %v1472 = vadd.f32 %v1450, %v1459
        %v1473 = vadd.f32 %v1451, %v1459
        %v1474 = vadd.f32 %v1452, %v1459
        %v1475 = vadd.f32 %v1453, %v1459
        %v1476 = vadd.f32 %v1454, %v1459
        %v1477 = vld [vmem:[%s828] sm:$0xff]
        %v1478 = vld [vmem:[%s828 + $0x8] sm:$0xff]
        %v1479 = vld [vmem:[%s828 + $0x10] sm:$0xff]
        %v1480 = vld [vmem:[%s828 + $0x18] sm:$0xff]
        %v1481 = vld [vmem:[%s828 + $0x20] sm:$0xff]
        %v1482 = vld [vmem:[%s828 + $0x28] sm:$0xff]
        %v1483 = vld [vmem:[%s828 + $0x30] sm:$0xff]
        %v1484 = vld [vmem:[%s828 + $0x38] sm:$0xff]
        %v1485 = vld [vmem:[%s828 + $0x40] sm:$0xff]
        %v1486 = vld [vmem:[%s828 + $0x48] sm:$0xff]
        %v1487 = vld [vmem:[%s828 + $0x50] sm:$0xff]
        %v1488 = vld [vmem:[%s828 + $0x58] sm:$0xff]
        %v1489 = vld [vmem:[%s828 + $0x60] sm:$0xff]
        %v1490 = vld [vmem:[%s828 + $0x68] sm:$0xff]
        %v1491 = vld [vmem:[%s828 + $0x70] sm:$0xff]
        %v1492 = vld [vmem:[%s828 + $0x78] sm:$0xff]
        %v1493 = vld [vmem:[%s828 + $0x80] sm:$0xff]
        %v1494 = vld [vmem:[%s828 + $0x88] sm:$0xff]
        %v1495 = vld [vmem:[%s828 + $0x90] sm:$0xff]
        %v1496 = vld [vmem:[%s828 + $0x98] sm:$0xff]
        %v1497 = vld [vmem:[%s828 + $0xa0] sm:$0xff]
        %v1498 = vld [vmem:[%s828 + $0xa8] sm:$0xff]
        %v1499 = vld [vmem:[%s828 + $0xb0] sm:$0xff]
        %v1500 = vld [vmem:[%s828 + $0xb8] sm:$0xff]
        %v1501 = vld [vmem:[%s828 + $0xc0] sm:$0xff]
        %v1502 = vld [vmem:[%s828 + $0xc8] sm:$0xff]
        %v1503 = vld [vmem:[%s828 + $0xd0] sm:$0xff]
        %v1504 = vld [vmem:[%s828 + $0xd8] sm:$0xff]
        %v1505 = vld [vmem:[%s828 + $0xe0] sm:$0xff]
        %v1506 = vld [vmem:[%s828 + $0xe8] sm:$0xff]
        %v1507 = vld [vmem:[%s828 + $0xf0] sm:$0xff]
        %v1508 = vld [vmem:[%s828 + $0xf8] sm:$0xff]
        %v1509 = vld [vmem:[%s828 + $0x100] sm:$0xff]
        %v1510 = vld [vmem:[%s828 + $0x108] sm:$0xff]
        %v1511 = vld [vmem:[%s828 + $0x110] sm:$0xff]
        %v1512 = vld [vmem:[%s828 + $0x118] sm:$0xff]
        %v1513 = vld [vmem:[%s828 + $0x120] sm:$0xff]
        %v1514 = vld [vmem:[%s828 + $0x128] sm:$0xff]
        %v1515 = vld [vmem:[%s828 + $0x130] sm:$0xff]
        %v1516 = vld [vmem:[%s828 + $0x138] sm:$0xff]
        %v1517 = vld [vmem:[%s828 + $0x140] sm:$0xff]
        %v1518 = vld [vmem:[%s828 + $0x148] sm:$0xff]
        %v1519 = vld [vmem:[%s828 + $0x150] sm:$0xff]
        %v1520 = vld [vmem:[%s828 + $0x158] sm:$0xff]
        %v1521 = vld [vmem:[%s828 + $0x160] sm:$0xff]
        %v1522 = vld [vmem:[%s828 + $0x168] sm:$0xff]
        %v1523 = vld [vmem:[%s828 + $0x170] sm:$0xff]
        %v1524 = vld [vmem:[%s828 + $0x178] sm:$0xff]
        %v1525 = vld [vmem:[%s960] sm:$0x7]
        %v1527 = vlaneseq
        %v1528 = vshrl.u32 %v1527, 7
        %v1529 = vsub.s32 0, %v1528
        %v1530 = vrot.slane %v1525, %v1529
        %v1531 = vlaneseq
        %v1532 = vshrl.u32 %v1531, 7
        %v1533 = vsub.s32 1, %v1532
        %v1534 = vrot.slane %v1525, %v1533
        %v1535 = vlaneseq
        %v1536 = vshrl.u32 %v1535, 7
        %v1537 = vsub.s32 2, %v1536
        %v1538 = vrot.slane %v1525, %v1537
        %1542 = vmatprep.subr.mxu0 %v1523
        %1543 = vmatpush1.msra.mxu0 %v1522
        %1544 = vmatprep.subr.mxu0 %v1520
        %1545 = vmatpush1.msra.mxu0 %v1519
        %1546 = vmatprep.subr.mxu0 %v1517
        %1547 = vmatpush1.msra.mxu0 %v1516
        %1548 = vmatprep.subr.mxu0 %v1514
        %1549 = vmatpush1.msra.mxu0 %v1513
        %1550 = vmatprep.subr.mxu0 %v1511
        %1551 = vmatpush1.msra.mxu0 %v1510
        %1552 = vmatprep.subr.mxu0 %v1508
        %1553 = vmatpush1.msra.mxu0 %v1507
        %1554 = vmatprep.subr.mxu0 %v1505
        %1555 = vmatpush1.msra.mxu0 %v1504
        %1556 = vmatprep.subr.mxu0 %v1502
        %1557 = vmatpush1.msra.mxu0 %v1501
        %1558 = vmatprep.subr.mxu0 %v1499
        %1559 = vmatpush1.msra.mxu0 %v1498
        %1560 = vmatprep.subr.mxu0 %v1496
        %1561 = vmatpush1.msra.mxu0 %v1495
        %1562 = vmatprep.subr.mxu0 %v1493
        %1563 = vmatpush1.msra.mxu0 %v1492
        %1564 = vmatprep.subr.mxu0 %v1490
        %1565 = vmatpush1.msra.mxu0 %v1489
        %1566 = vmatprep.subr.mxu0 %v1487
        %1567 = vmatpush1.msra.mxu0 %v1486
        %1568 = vmatprep.subr.mxu0 %v1484
        %1569 = vmatpush1.msra.mxu0 %v1483
        %1570 = vmatprep.subr.mxu0 %v1481
        %1571 = vmatpush1.msra.mxu0 %v1480
        %1572 = vmatprep.subr.mxu0 %v1478
        %1573 = vmatpush1.msra.mxu0 %v1477
        %1574 = vmatprep.subr.mxu0 0.0
        %1575 = vmatpush2.msra.mxu0 0.0
        %1576 = vmatprep.subr.mxu0 0.0
        %1577 = vmatpush2.msra.mxu0 0.0
        %1578 = vmatprep.subr.mxu0 0.0
        %1579 = vmatpush2.msra.mxu0 0.0
        %1580 = vmatprep.subr.mxu0 0.0
        %1581 = vmatpush2.msra.mxu0 0.0
        %1582 = vmatprep.subr.mxu0 0.0
        %1583 = vmatpush2.msra.mxu0 0.0
        %1584 = vmatprep.subr.mxu0 0.0
        %1585 = vmatpush2.msra.mxu0 0.0
        %1586 = vmatprep.subr.mxu0 0.0
        %1587 = vmatpush2.msra.mxu0 0.0
        %1588 = vmatprep.subr.mxu0 0.0
        %1589 = vmatpush2.msra.mxu0 0.0
        %1590 = vmatprep.subr.mxu0 0.0
        %1591 = vmatpush2.msra.mxu0 0.0
        %1592 = vmatprep.subr.mxu0 0.0
        %1593 = vmatpush2.msra.mxu0 0.0
        %1594 = vmatprep.subr.mxu0 0.0
        %1595 = vmatpush2.msra.mxu0 0.0
        %1596 = vmatprep.subr.mxu0 0.0
        %1597 = vmatpush2.msra.mxu0 0.0
        %1598 = vmatprep.subr.mxu0 0.0
        %1599 = vmatpush2.msra.mxu0 0.0
        %1600 = vmatprep.subr.mxu0 0.0
        %1601 = vmatpush2.msra.mxu0 0.0
        %1602 = vmatprep.subr.mxu0 0.0
        %1603 = vmatpush2.msra.mxu0 0.0
        %1604 = vmatprep.subr.mxu0 0.0
        %1605 = vmatpush2.msra.mxu0 0.0
        %1606 = vmatprep.mubr.f32.mxu0 0.0
        %1607 = vmatmul.mubr.f32.gmra.mxu0 %v1461
        %v1608 = vpop.f32.mrf.mxu0
        %v1609 = vadd.f32 %v1530, %v1608
        %v1610 = vpop.f32.mrf.mxu0
        %v1611 = vadd.f32 %v1534, %v1610
        %1612 = vmatprep.mubr.f32.mxu0 0.0
        %1613 = vmatmul.mubr.f32.gmra.mxu0 %v1462
        %v1614 = vpop.f32.mrf.mxu0
        %v1615 = vadd.f32 %v1530, %v1614
        %v1616 = vpop.f32.mrf.mxu0
        %v1617 = vadd.f32 %v1534, %v1616
        %1618 = vmatprep.mubr.f32.mxu0 0.0
        %1619 = vmatmul.mubr.f32.gmra.mxu0 %v1463
        %v1620 = vpop.f32.mrf.mxu0
        %v1621 = vadd.f32 %v1530, %v1620
        %v1622 = vpop.f32.mrf.mxu0
        %v1623 = vadd.f32 %v1534, %v1622
        %1624 = vmatprep.mubr.f32.mxu0 0.0
        %1625 = vmatmul.mubr.f32.gmra.mxu0 %v1464
        %v1626 = vpop.f32.mrf.mxu0
        %v1627 = vadd.f32 %v1530, %v1626
        %v1628 = vpop.f32.mrf.mxu0
        %v1629 = vadd.f32 %v1534, %v1628
        %1630 = vmatprep.mubr.f32.mxu0 0.0
        %1631 = vmatmul.mubr.f32.gmra.mxu0 %v1465
        %v1632 = vpop.f32.mrf.mxu0
        %v1633 = vadd.f32 %v1530, %v1632
        %v1634 = vpop.f32.mrf.mxu0
        %v1635 = vadd.f32 %v1534, %v1634
        %1636 = vmatprep.mubr.f32.mxu0 0.0
        %1637 = vmatmul.mubr.f32.gmra.mxu0 %v1466
        %v1638 = vpop.f32.mrf.mxu0
        %v1639 = vadd.f32 %v1530, %v1638
        %v1640 = vpop.f32.mrf.mxu0
        %v1641 = vadd.f32 %v1534, %v1640
        %1642 = vmatprep.mubr.f32.mxu0 0.0
        %1643 = vmatmul.mubr.f32.gmra.mxu0 %v1467
        %v1644 = vpop.f32.mrf.mxu0
        %v1645 = vadd.f32 %v1530, %v1644
        %v1646 = vpop.f32.mrf.mxu0
        %v1647 = vadd.f32 %v1534, %v1646
        %1648 = vmatprep.mubr.f32.mxu0 0.0
        %1649 = vmatmul.mubr.f32.gmra.mxu0 %v1468
        %v1650 = vpop.f32.mrf.mxu0
        %v1651 = vadd.f32 %v1530, %v1650
        %v1652 = vpop.f32.mrf.mxu0
        %v1653 = vadd.f32 %v1534, %v1652
        %1654 = vmatprep.mubr.f32.mxu0 0.0
        %1655 = vmatmul.mubr.f32.gmra.mxu0 %v1469
        %v1656 = vpop.f32.mrf.mxu0
        %v1657 = vadd.f32 %v1530, %v1656
        %v1658 = vpop.f32.mrf.mxu0
        %v1659 = vadd.f32 %v1534, %v1658
        %1660 = vmatprep.mubr.f32.mxu0 0.0
        %1661 = vmatmul.mubr.f32.gmra.mxu0 %v1470
        %v1662 = vpop.f32.mrf.mxu0
        %v1663 = vadd.f32 %v1530, %v1662
        %v1664 = vpop.f32.mrf.mxu0
        %v1665 = vadd.f32 %v1534, %v1664
        %1666 = vmatprep.mubr.f32.mxu0 0.0
        %1667 = vmatmul.mubr.f32.gmra.mxu0 %v1471
        %v1668 = vpop.f32.mrf.mxu0
        %v1669 = vadd.f32 %v1530, %v1668
        %v1670 = vpop.f32.mrf.mxu0
        %v1671 = vadd.f32 %v1534, %v1670
        %1672 = vmatprep.mubr.f32.mxu0 0.0
        %1673 = vmatmul.mubr.f32.gmra.mxu0 %v1472
        %v1674 = vpop.f32.mrf.mxu0
        %v1675 = vadd.f32 %v1530, %v1674
        %v1676 = vpop.f32.mrf.mxu0
        %v1677 = vadd.f32 %v1534, %v1676
        %1678 = vmatprep.mubr.f32.mxu0 0.0
        %1679 = vmatmul.mubr.f32.gmra.mxu0 %v1473
        %v1680 = vpop.f32.mrf.mxu0
        %v1681 = vadd.f32 %v1530, %v1680
        %v1682 = vpop.f32.mrf.mxu0
        %v1683 = vadd.f32 %v1534, %v1682
        %1684 = vmatprep.mubr.f32.mxu0 0.0
        %1685 = vmatmul.mubr.f32.gmra.mxu0 %v1474
        %v1686 = vpop.f32.mrf.mxu0
        %v1687 = vadd.f32 %v1530, %v1686
        %v1688 = vpop.f32.mrf.mxu0
        %v1689 = vadd.f32 %v1534, %v1688
        %1690 = vmatprep.mubr.f32.mxu0 0.0
        %1691 = vmatmul.mubr.f32.gmra.mxu0 %v1475
        %v1692 = vpop.f32.mrf.mxu0
        %v1693 = vadd.f32 %v1530, %v1692
        %v1694 = vpop.f32.mrf.mxu0
        %v1695 = vadd.f32 %v1534, %v1694
        %1696 = vmatprep.mubr.f32.mxu0 0.0
        %1697 = vmatmul.mubr.f32.gmra.mxu0 %v1476
        %v1698 = vpop.f32.mrf.mxu0
        %v1699 = vadd.f32 %v1530, %v1698
        %v1700 = vpop.f32.mrf.mxu0
        %v1701 = vadd.f32 %v1534, %v1700
        %1702 = vdwg.mxu0
        %1703 = vmatprep.subr.mxu0 0.0
        %1704 = vmatpush1.msra.mxu0 %v1524
        %1705 = vmatprep.subr.mxu0 0.0
        %1706 = vmatpush1.msra.mxu0 %v1521
        %1707 = vmatprep.subr.mxu0 0.0
        %1708 = vmatpush1.msra.mxu0 %v1518
        %1709 = vmatprep.subr.mxu0 0.0
        %1710 = vmatpush1.msra.mxu0 %v1515
        %1711 = vmatprep.subr.mxu0 0.0
        %1712 = vmatpush1.msra.mxu0 %v1512
        %1713 = vmatprep.subr.mxu0 0.0
        %1714 = vmatpush1.msra.mxu0 %v1509
        %1715 = vmatprep.subr.mxu0 0.0
        %1716 = vmatpush1.msra.mxu0 %v1506
        %1717 = vmatprep.subr.mxu0 0.0
        %1718 = vmatpush1.msra.mxu0 %v1503
        %1719 = vmatprep.subr.mxu0 0.0
        %1720 = vmatpush1.msra.mxu0 %v1500
        %1721 = vmatprep.subr.mxu0 0.0
        %1722 = vmatpush1.msra.mxu0 %v1497
        %1723 = vmatprep.subr.mxu0 0.0
        %1724 = vmatpush1.msra.mxu0 %v1494
        %1725 = vmatprep.subr.mxu0 0.0
        %1726 = vmatpush1.msra.mxu0 %v1491
        %1727 = vmatprep.subr.mxu0 0.0
        %1728 = vmatpush1.msra.mxu0 %v1488
        %1729 = vmatprep.subr.mxu0 0.0
        %1730 = vmatpush1.msra.mxu0 %v1485
        %1731 = vmatprep.subr.mxu0 0.0
        %1732 = vmatpush1.msra.mxu0 %v1482
        %1733 = vmatprep.subr.mxu0 0.0
        %1734 = vmatpush1.msra.mxu0 %v1479
        %1735 = vmatprep.subr.mxu0 0.0
        %1736 = vmatpush2.msra.mxu0 0.0
        %1737 = vmatprep.subr.mxu0 0.0
        %1738 = vmatpush2.msra.mxu0 0.0
        %1739 = vmatprep.subr.mxu0 0.0
        %1740 = vmatpush2.msra.mxu0 0.0
        %1741 = vmatprep.subr.mxu0 0.0
        %1742 = vmatpush2.msra.mxu0 0.0
        %1743 = vmatprep.subr.mxu0 0.0
        %1744 = vmatpush2.msra.mxu0 0.0
        %1745 = vmatprep.subr.mxu0 0.0
        %1746 = vmatpush2.msra.mxu0 0.0
        %1747 = vmatprep.subr.mxu0 0.0
        %1748 = vmatpush2.msra.mxu0 0.0
        %1749 = vmatprep.subr.mxu0 0.0
        %1750 = vmatpush2.msra.mxu0 0.0
        %1751 = vmatprep.subr.mxu0 0.0
        %1752 = vmatpush2.msra.mxu0 0.0
        %1753 = vmatprep.subr.mxu0 0.0
        %1754 = vmatpush2.msra.mxu0 0.0
        %1755 = vmatprep.subr.mxu0 0.0
        %1756 = vmatpush2.msra.mxu0 0.0
        %1757 = vmatprep.subr.mxu0 0.0
        %1758 = vmatpush2.msra.mxu0 0.0
        %1759 = vmatprep.subr.mxu0 0.0
        %1760 = vmatpush2.msra.mxu0 0.0
        %1761 = vmatprep.subr.mxu0 0.0
        %1762 = vmatpush2.msra.mxu0 0.0
        %1763 = vmatprep.subr.mxu0 0.0
        %1764 = vmatpush2.msra.mxu0 0.0
        %1765 = vmatprep.subr.mxu0 0.0
        %1766 = vmatpush2.msra.mxu0 0.0
        %1767 = vmatprep.mubr.f32.mxu0 0.0
        %1768 = vmatmul.mubr.f32.gmra.mxu0 %v1461
        %v1769 = vpop.f32.mrf.mxu0
        %v1770 = vadd.f32 %v1538, %v1769
        %v1771 = vpop.f32.mrf.mxu0
        %1772 = vmatprep.mubr.f32.mxu0 0.0
        %1773 = vmatmul.mubr.f32.gmra.mxu0 %v1462
        %v1774 = vpop.f32.mrf.mxu0
        %v1775 = vadd.f32 %v1538, %v1774
        %v1776 = vpop.f32.mrf.mxu0
        %1777 = vmatprep.mubr.f32.mxu0 0.0
        %1778 = vmatmul.mubr.f32.gmra.mxu0 %v1463
        %v1779 = vpop.f32.mrf.mxu0
        %v1780 = vadd.f32 %v1538, %v1779
        %v1781 = vpop.f32.mrf.mxu0
        %1782 = vmatprep.mubr.f32.mxu0 0.0
        %1783 = vmatmul.mubr.f32.gmra.mxu0 %v1464
        %v1784 = vpop.f32.mrf.mxu0
        %v1785 = vadd.f32 %v1538, %v1784
        %v1786 = vpop.f32.mrf.mxu0
        %1787 = vmatprep.mubr.f32.mxu0 0.0
        %1788 = vmatmul.mubr.f32.gmra.mxu0 %v1465
        %v1789 = vpop.f32.mrf.mxu0
        %v1790 = vadd.f32 %v1538, %v1789
        %v1791 = vpop.f32.mrf.mxu0
        %1792 = vmatprep.mubr.f32.mxu0 0.0
        %1793 = vmatmul.mubr.f32.gmra.mxu0 %v1466
        %v1794 = vpop.f32.mrf.mxu0
        %v1795 = vadd.f32 %v1538, %v1794
        %v1796 = vpop.f32.mrf.mxu0
        %1797 = vmatprep.mubr.f32.mxu0 0.0
        %1798 = vmatmul.mubr.f32.gmra.mxu0 %v1467
        %v1799 = vpop.f32.mrf.mxu0
        %v1800 = vadd.f32 %v1538, %v1799
        %v1801 = vpop.f32.mrf.mxu0
        %1802 = vmatprep.mubr.f32.mxu0 0.0
        %1803 = vmatmul.mubr.f32.gmra.mxu0 %v1468
        %v1804 = vpop.f32.mrf.mxu0
        %v1805 = vadd.f32 %v1538, %v1804
        %v1806 = vpop.f32.mrf.mxu0
        %1807 = vmatprep.mubr.f32.mxu0 0.0
        %1808 = vmatmul.mubr.f32.gmra.mxu0 %v1469
        %v1809 = vpop.f32.mrf.mxu0
        %v1810 = vadd.f32 %v1538, %v1809
        %v1811 = vpop.f32.mrf.mxu0
        %1812 = vmatprep.mubr.f32.mxu0 0.0
        %1813 = vmatmul.mubr.f32.gmra.mxu0 %v1470
        %v1814 = vpop.f32.mrf.mxu0
        %v1815 = vadd.f32 %v1538, %v1814
        %v1816 = vpop.f32.mrf.mxu0
        %1817 = vmatprep.mubr.f32.mxu0 0.0
        %1818 = vmatmul.mubr.f32.gmra.mxu0 %v1471
        %v1819 = vpop.f32.mrf.mxu0
        %v1820 = vadd.f32 %v1538, %v1819
        %v1821 = vpop.f32.mrf.mxu0
        %1822 = vmatprep.mubr.f32.mxu0 0.0
        %1823 = vmatmul.mubr.f32.gmra.mxu0 %v1472
        %v1824 = vpop.f32.mrf.mxu0
        %v1825 = vadd.f32 %v1538, %v1824
        %v1826 = vpop.f32.mrf.mxu0
        %1827 = vmatprep.mubr.f32.mxu0 0.0
        %1828 = vmatmul.mubr.f32.gmra.mxu0 %v1473
        %v1829 = vpop.f32.mrf.mxu0
        %v1830 = vadd.f32 %v1538, %v1829
        %v1831 = vpop.f32.mrf.mxu0
        %1832 = vmatprep.mubr.f32.mxu0 0.0
        %1833 = vmatmul.mubr.f32.gmra.mxu0 %v1474
        %v1834 = vpop.f32.mrf.mxu0
        %v1835 = vadd.f32 %v1538, %v1834
        %v1836 = vpop.f32.mrf.mxu0
        %1837 = vmatprep.mubr.f32.mxu0 0.0
        %1838 = vmatmul.mubr.f32.gmra.mxu0 %v1475
        %v1839 = vpop.f32.mrf.mxu0
        %v1840 = vadd.f32 %v1538, %v1839
        %v1841 = vpop.f32.mrf.mxu0
        %1842 = vmatprep.mubr.f32.mxu0 0.0
        %1843 = vmatmul.mubr.f32.gmra.mxu0 %v1476
        %v1844 = vpop.f32.mrf.mxu0
        %v1845 = vadd.f32 %v1538, %v1844
        %v1846 = vpop.f32.mrf.mxu0
        %1847 = vdwg.mxu0
        %vm1848 = vcmask 261120
        %v1850 = vsel %vm1848, %v1609, 0
        %v1853 = vsel %vm1848, %v1615, 0
        %v1856 = vsel %vm1848, %v1621, 0
        %v1859 = vsel %vm1848, %v1627, 0
        %v1862 = vsel %vm1848, %v1611, 0
        %v1865 = vsel %vm1848, %v1617, 0
        %v1868 = vsel %vm1848, %v1623, 0
        %v1871 = vsel %vm1848, %v1629, 0
        %1873 = vmatprep.subr.mxu0 0.0
        %1874 = vmatpush1.xpose.msra.mxu0 0.0
        %1875 = vmatprep.subr.mxu0 0.0
        %1876 = vmatpush1.xpose.msra.mxu0 0.0
        %1877 = vmatprep.subr.mxu0 0.0
        %1878 = vmatpush1.xpose.msra.mxu0 0.0
        %1879 = vmatprep.subr.mxu0 0.0
        %1880 = vmatpush1.xpose.msra.mxu0 0.0
        %1881 = vmatprep.subr.mxu0 0.0
        %1882 = vmatpush1.xpose.msra.mxu0 0.0
        %1883 = vmatprep.subr.mxu0 0.0
        %1884 = vmatpush1.xpose.msra.mxu0 0.0
        %1885 = vmatprep.subr.mxu0 0.0
        %1886 = vmatpush1.xpose.msra.mxu0 0.0
        %1887 = vmatprep.subr.mxu0 0.0
        %1888 = vmatpush1.xpose.msra.mxu0 0.0
        %1889 = vmatprep.subr.mxu0 0.0
        %1890 = vmatpush1.xpose.msra.mxu0 0.0
        %1891 = vmatprep.subr.mxu0 0.0
        %1892 = vmatpush1.xpose.msra.mxu0 0.0
        %1893 = vmatprep.subr.mxu0 0.0
        %1894 = vmatpush1.xpose.msra.mxu0 0.0
        %1895 = vmatprep.subr.mxu0 0.0
        %1896 = vmatpush1.xpose.msra.mxu0 0.0
        %1897 = vmatprep.subr.mxu0 0.0
        %1898 = vmatpush1.xpose.msra.mxu0 %v1871
        %1899 = vmatprep.subr.mxu0 0.0
        %1900 = vmatpush1.xpose.msra.mxu0 %v1868
        %1901 = vmatprep.subr.mxu0 0.0
        %1902 = vmatpush1.xpose.msra.mxu0 %v1865
        %1903 = vmatprep.subr.mxu0 0.0
        %1904 = vmatpush1.xpose.msra.mxu0 %v1862
        %1905 = vmatprep.subr.mxu0 0.0
        %1906 = vmatpush2.xpose.msra.mxu0 0.0
        %1907 = vmatprep.subr.mxu0 0.0
        %1908 = vmatpush2.xpose.msra.mxu0 0.0
        %1909 = vmatprep.subr.mxu0 0.0
        %1910 = vmatpush2.xpose.msra.mxu0 0.0
        %1911 = vmatprep.subr.mxu0 0.0
        %1912 = vmatpush2.xpose.msra.mxu0 0.0
        %1913 = vmatprep.subr.mxu0 0.0
        %1914 = vmatpush2.xpose.msra.mxu0 0.0
        %1915 = vmatprep.subr.mxu0 0.0
        %1916 = vmatpush2.xpose.msra.mxu0 0.0
        %1917 = vmatprep.subr.mxu0 0.0
        %1918 = vmatpush2.xpose.msra.mxu0 0.0
        %1919 = vmatprep.subr.mxu0 0.0
        %1920 = vmatpush2.xpose.msra.mxu0 0.0
        %1921 = vmatprep.subr.mxu0 0.0
        %1922 = vmatpush2.xpose.msra.mxu0 0.0
        %1923 = vmatprep.subr.mxu0 0.0
        %1924 = vmatpush2.xpose.msra.mxu0 0.0
        %1925 = vmatprep.subr.mxu0 0.0
        %1926 = vmatpush2.xpose.msra.mxu0 0.0
        %1927 = vmatprep.subr.mxu0 0.0
        %1928 = vmatpush2.xpose.msra.mxu0 0.0
        %1929 = vmatprep.subr.mxu0 0.0
        %1930 = vmatpush2.xpose.msra.mxu0 0.0
        %1931 = vmatprep.subr.mxu0 0.0
        %1932 = vmatpush2.xpose.msra.mxu0 0.0
        %1933 = vmatprep.subr.mxu0 0.0
        %1934 = vmatpush2.xpose.msra.mxu0 0.0
        %1935 = vmatprep.subr.mxu0 0.0
        %1936 = vmatpush2.xpose.msra.mxu0 0.0
        %1937 = vmatprep.mubr.f32.mxu0 0.0
        %1938 = vmatmul.mubr.f32.gmra.mxu0 %v1850
        %v1939 = vpop.f32.mrf.mxu0
        %v1940 = vadd.f32 0.0, %v1939
        %v1941 = vpop.f32.mrf.mxu0
        %1942 = vmatprep.mubr.f32.mxu0 0.0
        %1943 = vmatmul.mubr.f32.gmra.mxu0 %v1853
        %v1944 = vpop.f32.mrf.mxu0
        %v1945 = vadd.f32 0.0, %v1944
        %v1946 = vpop.f32.mrf.mxu0
        %1947 = vmatprep.mubr.f32.mxu0 0.0
        %1948 = vmatmul.mubr.f32.gmra.mxu0 %v1856
        %v1949 = vpop.f32.mrf.mxu0
        %v1950 = vadd.f32 0.0, %v1949
        %v1951 = vpop.f32.mrf.mxu0
        %1952 = vmatprep.mubr.f32.mxu0 0.0
        %1953 = vmatmul.mubr.f32.gmra.mxu0 %v1859
        %v1954 = vpop.f32.mrf.mxu0
        %v1955 = vadd.f32 0.0, %v1954
        %v1956 = vpop.f32.mrf.mxu0
        %1957 = vdwg.mxu0
        %v1959 = vsel %vm1848, %v1633, 0
        %v1962 = vsel %vm1848, %v1639, 0
        %v1965 = vsel %vm1848, %v1645, 0
        %v1968 = vsel %vm1848, %v1651, 0
        %v1971 = vsel %vm1848, %v1635, 0
        %v1974 = vsel %vm1848, %v1641, 0
        %v1977 = vsel %vm1848, %v1647, 0
        %v1980 = vsel %vm1848, %v1653, 0
        %1982 = vmatprep.subr.mxu0 0.0
        %1983 = vmatpush1.xpose.msra.mxu0 0.0
        %1984 = vmatprep.subr.mxu0 0.0
        %1985 = vmatpush1.xpose.msra.mxu0 0.0
        %1986 = vmatprep.subr.mxu0 0.0
        %1987 = vmatpush1.xpose.msra.mxu0 0.0
        %1988 = vmatprep.subr.mxu0 0.0
        %1989 = vmatpush1.xpose.msra.mxu0 0.0
        %1990 = vmatprep.subr.mxu0 0.0
        %1991 = vmatpush1.xpose.msra.mxu0 0.0
        %1992 = vmatprep.subr.mxu0 0.0
        %1993 = vmatpush1.xpose.msra.mxu0 0.0
        %1994 = vmatprep.subr.mxu0 0.0
        %1995 = vmatpush1.xpose.msra.mxu0 0.0
        %1996 = vmatprep.subr.mxu0 0.0
        %1997 = vmatpush1.xpose.msra.mxu0 0.0
        %1998 = vmatprep.subr.mxu0 0.0
        %1999 = vmatpush1.xpose.msra.mxu0 0.0
        %2000 = vmatprep.subr.mxu0 0.0
        %2001 = vmatpush1.xpose.msra.mxu0 0.0
        %2002 = vmatprep.subr.mxu0 0.0
        %2003 = vmatpush1.xpose.msra.mxu0 0.0
        %2004 = vmatprep.subr.mxu0 0.0
        %2005 = vmatpush1.xpose.msra.mxu0 0.0
        %2006 = vmatprep.subr.mxu0 0.0
        %2007 = vmatpush1.xpose.msra.mxu0 %v1980
        %2008 = vmatprep.subr.mxu0 0.0
        %2009 = vmatpush1.xpose.msra.mxu0 %v1977
        %2010 = vmatprep.subr.mxu0 0.0
        %2011 = vmatpush1.xpose.msra.mxu0 %v1974
        %2012 = vmatprep.subr.mxu0 0.0
        %2013 = vmatpush1.xpose.msra.mxu0 %v1971
        %2014 = vmatprep.subr.mxu0 0.0
        %2015 = vmatpush2.xpose.msra.mxu0 0.0
        %2016 = vmatprep.subr.mxu0 0.0
        %2017 = vmatpush2.xpose.msra.mxu0 0.0
        %2018 = vmatprep.subr.mxu0 0.0
        %2019 = vmatpush2.xpose.msra.mxu0 0.0
        %2020 = vmatprep.subr.mxu0 0.0
        %2021 = vmatpush2.xpose.msra.mxu0 0.0
        %2022 = vmatprep.subr.mxu0 0.0
        %2023 = vmatpush2.xpose.msra.mxu0 0.0
        %2024 = vmatprep.subr.mxu0 0.0
        %2025 = vmatpush2.xpose.msra.mxu0 0.0
        %2026 = vmatprep.subr.mxu0 0.0
        %2027 = vmatpush2.xpose.msra.mxu0 0.0
        %2028 = vmatprep.subr.mxu0 0.0
        %2029 = vmatpush2.xpose.msra.mxu0 0.0
        %2030 = vmatprep.subr.mxu0 0.0
        %2031 = vmatpush2.xpose.msra.mxu0 0.0
        %2032 = vmatprep.subr.mxu0 0.0
        %2033 = vmatpush2.xpose.msra.mxu0 0.0
        %2034 = vmatprep.subr.mxu0 0.0
        %2035 = vmatpush2.xpose.msra.mxu0 0.0
        %2036 = vmatprep.subr.mxu0 0.0
        %2037 = vmatpush2.xpose.msra.mxu0 0.0
        %2038 = vmatprep.subr.mxu0 0.0
        %2039 = vmatpush2.xpose.msra.mxu0 0.0
        %2040 = vmatprep.subr.mxu0 0.0
        %2041 = vmatpush2.xpose.msra.mxu0 0.0
        %2042 = vmatprep.subr.mxu0 0.0
        %2043 = vmatpush2.xpose.msra.mxu0 0.0
        %2044 = vmatprep.subr.mxu0 0.0
        %2045 = vmatpush2.xpose.msra.mxu0 0.0
        %2046 = vmatprep.mubr.f32.mxu0 0.0
        %2047 = vmatmul.mubr.f32.gmra.mxu0 %v1959
        %v2048 = vpop.f32.mrf.mxu0
        %v2049 = vadd.f32 0.0, %v2048
        %v2050 = vpop.f32.mrf.mxu0
        %2051 = vmatprep.mubr.f32.mxu0 0.0
        %2052 = vmatmul.mubr.f32.gmra.mxu0 %v1962
        %v2053 = vpop.f32.mrf.mxu0
        %v2054 = vadd.f32 0.0, %v2053
        %v2055 = vpop.f32.mrf.mxu0
        %2056 = vmatprep.mubr.f32.mxu0 0.0
        %2057 = vmatmul.mubr.f32.gmra.mxu0 %v1965
        %v2058 = vpop.f32.mrf.mxu0
        %v2059 = vadd.f32 0.0, %v2058
        %v2060 = vpop.f32.mrf.mxu0
        %2061 = vmatprep.mubr.f32.mxu0 0.0
        %2062 = vmatmul.mubr.f32.gmra.mxu0 %v1968
        %v2063 = vpop.f32.mrf.mxu0
        %v2064 = vadd.f32 0.0, %v2063
        %v2065 = vpop.f32.mrf.mxu0
        %2066 = vdwg.mxu0
        %v2068 = vsel %vm1848, %v1657, 0
        %v2071 = vsel %vm1848, %v1663, 0
        %v2074 = vsel %vm1848, %v1669, 0
        %v2077 = vsel %vm1848, %v1675, 0
        %v2080 = vsel %vm1848, %v1659, 0
        %v2083 = vsel %vm1848, %v1665, 0
        %v2086 = vsel %vm1848, %v1671, 0
        %v2089 = vsel %vm1848, %v1677, 0
        %2091 = vmatprep.subr.mxu0 0.0
        %2092 = vmatpush1.xpose.msra.mxu0 0.0
        %2093 = vmatprep.subr.mxu0 0.0
        %2094 = vmatpush1.xpose.msra.mxu0 0.0
        %2095 = vmatprep.subr.mxu0 0.0
        %2096 = vmatpush1.xpose.msra.mxu0 0.0
        %2097 = vmatprep.subr.mxu0 0.0
        %2098 = vmatpush1.xpose.msra.mxu0 0.0
        %2099 = vmatprep.subr.mxu0 0.0
        %2100 = vmatpush1.xpose.msra.mxu0 0.0
        %2101 = vmatprep.subr.mxu0 0.0
        %2102 = vmatpush1.xpose.msra.mxu0 0.0
        %2103 = vmatprep.subr.mxu0 0.0
        %2104 = vmatpush1.xpose.msra.mxu0 0.0
        %2105 = vmatprep.subr.mxu0 0.0
        %2106 = vmatpush1.xpose.msra.mxu0 0.0
        %2107 = vmatprep.subr.mxu0 0.0
        %2108 = vmatpush1.xpose.msra.mxu0 0.0
        %2109 = vmatprep.subr.mxu0 0.0
        %2110 = vmatpush1.xpose.msra.mxu0 0.0
        %2111 = vmatprep.subr.mxu0 0.0
        %2112 = vmatpush1.xpose.msra.mxu0 0.0
        %2113 = vmatprep.subr.mxu0 0.0
        %2114 = vmatpush1.xpose.msra.mxu0 0.0
        %2115 = vmatprep.subr.mxu0 0.0
        %2116 = vmatpush1.xpose.msra.mxu0 %v2089
        %2117 = vmatprep.subr.mxu0 0.0
        %2118 = vmatpush1.xpose.msra.mxu0 %v2086
        %2119 = vmatprep.subr.mxu0 0.0
        %2120 = vmatpush1.xpose.msra.mxu0 %v2083
        %2121 = vmatprep.subr.mxu0 0.0
        %2122 = vmatpush1.xpose.msra.mxu0 %v2080
        %2123 = vmatprep.subr.mxu0 0.0
        %2124 = vmatpush2.xpose.msra.mxu0 0.0
        %2125 = vmatprep.subr.mxu0 0.0
        %2126 = vmatpush2.xpose.msra.mxu0 0.0
        %2127 = vmatprep.subr.mxu0 0.0
        %2128 = vmatpush2.xpose.msra.mxu0 0.0
        %2129 = vmatprep.subr.mxu0 0.0
        %2130 = vmatpush2.xpose.msra.mxu0 0.0
        %2131 = vmatprep.subr.mxu0 0.0
        %2132 = vmatpush2.xpose.msra.mxu0 0.0
        %2133 = vmatprep.subr.mxu0 0.0
        %2134 = vmatpush2.xpose.msra.mxu0 0.0
        %2135 = vmatprep.subr.mxu0 0.0
        %2136 = vmatpush2.xpose.msra.mxu0 0.0
        %2137 = vmatprep.subr.mxu0 0.0
        %2138 = vmatpush2.xpose.msra.mxu0 0.0
        %2139 = vmatprep.subr.mxu0 0.0
        %2140 = vmatpush2.xpose.msra.mxu0 0.0
        %2141 = vmatprep.subr.mxu0 0.0
        %2142 = vmatpush2.xpose.msra.mxu0 0.0
        %2143 = vmatprep.subr.mxu0 0.0
        %2144 = vmatpush2.xpose.msra.mxu0 0.0
        %2145 = vmatprep.subr.mxu0 0.0
        %2146 = vmatpush2.xpose.msra.mxu0 0.0
        %2147 = vmatprep.subr.mxu0 0.0
        %2148 = vmatpush2.xpose.msra.mxu0 0.0
        %2149 = vmatprep.subr.mxu0 0.0
        %2150 = vmatpush2.xpose.msra.mxu0 0.0
        %2151 = vmatprep.subr.mxu0 0.0
        %2152 = vmatpush2.xpose.msra.mxu0 0.0
        %2153 = vmatprep.subr.mxu0 0.0
        %2154 = vmatpush2.xpose.msra.mxu0 0.0
        %2155 = vmatprep.mubr.f32.mxu0 0.0
        %2156 = vmatmul.mubr.f32.gmra.mxu0 %v2068
        %v2157 = vpop.f32.mrf.mxu0
        %v2158 = vadd.f32 0.0, %v2157
        %v2159 = vpop.f32.mrf.mxu0
        %2160 = vmatprep.mubr.f32.mxu0 0.0
        %2161 = vmatmul.mubr.f32.gmra.mxu0 %v2071
        %v2162 = vpop.f32.mrf.mxu0
        %v2163 = vadd.f32 0.0, %v2162
        %v2164 = vpop.f32.mrf.mxu0
        %2165 = vmatprep.mubr.f32.mxu0 0.0
        %2166 = vmatmul.mubr.f32.gmra.mxu0 %v2074
        %v2167 = vpop.f32.mrf.mxu0
        %v2168 = vadd.f32 0.0, %v2167
        %v2169 = vpop.f32.mrf.mxu0
        %2170 = vmatprep.mubr.f32.mxu0 0.0
        %2171 = vmatmul.mubr.f32.gmra.mxu0 %v2077
        %v2172 = vpop.f32.mrf.mxu0
        %v2173 = vadd.f32 0.0, %v2172
        %v2174 = vpop.f32.mrf.mxu0
        %2175 = vdwg.mxu0
        %v2177 = vsel %vm1848, %v1681, 0
        %v2180 = vsel %vm1848, %v1687, 0
        %v2183 = vsel %vm1848, %v1693, 0
        %v2186 = vsel %vm1848, %v1699, 0
        %v2189 = vsel %vm1848, %v1683, 0
        %v2192 = vsel %vm1848, %v1689, 0
        %v2195 = vsel %vm1848, %v1695, 0
        %v2198 = vsel %vm1848, %v1701, 0
        %2200 = vmatprep.subr.mxu0 0.0
        %2201 = vmatpush1.xpose.msra.mxu0 0.0
        %2202 = vmatprep.subr.mxu0 0.0
        %2203 = vmatpush1.xpose.msra.mxu0 0.0
        %2204 = vmatprep.subr.mxu0 0.0
        %2205 = vmatpush1.xpose.msra.mxu0 0.0
        %2206 = vmatprep.subr.mxu0 0.0
        %2207 = vmatpush1.xpose.msra.mxu0 0.0
        %2208 = vmatprep.subr.mxu0 0.0
        %2209 = vmatpush1.xpose.msra.mxu0 0.0
        %2210 = vmatprep.subr.mxu0 0.0
        %2211 = vmatpush1.xpose.msra.mxu0 0.0
        %2212 = vmatprep.subr.mxu0 0.0
        %2213 = vmatpush1.xpose.msra.mxu0 0.0
        %2214 = vmatprep.subr.mxu0 0.0
        %2215 = vmatpush1.xpose.msra.mxu0 0.0
        %2216 = vmatprep.subr.mxu0 0.0
        %2217 = vmatpush1.xpose.msra.mxu0 0.0
        %2218 = vmatprep.subr.mxu0 0.0
        %2219 = vmatpush1.xpose.msra.mxu0 0.0
        %2220 = vmatprep.subr.mxu0 0.0
        %2221 = vmatpush1.xpose.msra.mxu0 0.0
        %2222 = vmatprep.subr.mxu0 0.0
        %2223 = vmatpush1.xpose.msra.mxu0 0.0
        %2224 = vmatprep.subr.mxu0 0.0
        %2225 = vmatpush1.xpose.msra.mxu0 %v2198
        %2226 = vmatprep.subr.mxu0 0.0
        %2227 = vmatpush1.xpose.msra.mxu0 %v2195
        %2228 = vmatprep.subr.mxu0 0.0
        %2229 = vmatpush1.xpose.msra.mxu0 %v2192
        %2230 = vmatprep.subr.mxu0 0.0
        %2231 = vmatpush1.xpose.msra.mxu0 %v2189
        %2232 = vmatprep.subr.mxu0 0.0
        %2233 = vmatpush2.xpose.msra.mxu0 0.0
        %2234 = vmatprep.subr.mxu0 0.0
        %2235 = vmatpush2.xpose.msra.mxu0 0.0
        %2236 = vmatprep.subr.mxu0 0.0
        %2237 = vmatpush2.xpose.msra.mxu0 0.0
        %2238 = vmatprep.subr.mxu0 0.0
        %2239 = vmatpush2.xpose.msra.mxu0 0.0
        %2240 = vmatprep.subr.mxu0 0.0
        %2241 = vmatpush2.xpose.msra.mxu0 0.0
        %2242 = vmatprep.subr.mxu0 0.0
        %2243 = vmatpush2.xpose.msra.mxu0 0.0
        %2244 = vmatprep.subr.mxu0 0.0
        %2245 = vmatpush2.xpose.msra.mxu0 0.0
        %2246 = vmatprep.subr.mxu0 0.0
        %2247 = vmatpush2.xpose.msra.mxu0 0.0
        %2248 = vmatprep.subr.mxu0 0.0
        %2249 = vmatpush2.xpose.msra.mxu0 0.0
        %2250 = vmatprep.subr.mxu0 0.0
        %2251 = vmatpush2.xpose.msra.mxu0 0.0
        %2252 = vmatprep.subr.mxu0 0.0
        %2253 = vmatpush2.xpose.msra.mxu0 0.0
        %2254 = vmatprep.subr.mxu0 0.0
        %2255 = vmatpush2.xpose.msra.mxu0 0.0
        %2256 = vmatprep.subr.mxu0 0.0
        %2257 = vmatpush2.xpose.msra.mxu0 0.0
        %2258 = vmatprep.subr.mxu0 0.0
        %2259 = vmatpush2.xpose.msra.mxu0 0.0
        %2260 = vmatprep.subr.mxu0 0.0
        %2261 = vmatpush2.xpose.msra.mxu0 0.0
        %2262 = vmatprep.subr.mxu0 0.0
        %2263 = vmatpush2.xpose.msra.mxu0 0.0
        %2264 = vmatprep.mubr.f32.mxu0 0.0
        %2265 = vmatmul.mubr.f32.gmra.mxu0 %v2177
        %v2266 = vpop.f32.mrf.mxu0
        %v2267 = vadd.f32 0.0, %v2266
        %v2268 = vpop.f32.mrf.mxu0
        %2269 = vmatprep.mubr.f32.mxu0 0.0
        %2270 = vmatmul.mubr.f32.gmra.mxu0 %v2180
        %v2271 = vpop.f32.mrf.mxu0
        %v2272 = vadd.f32 0.0, %v2271
        %v2273 = vpop.f32.mrf.mxu0
        %2274 = vmatprep.mubr.f32.mxu0 0.0
        %2275 = vmatmul.mubr.f32.gmra.mxu0 %v2183
        %v2276 = vpop.f32.mrf.mxu0
        %v2277 = vadd.f32 0.0, %v2276
        %v2278 = vpop.f32.mrf.mxu0
        %2279 = vmatprep.mubr.f32.mxu0 0.0
        %2280 = vmatmul.mubr.f32.gmra.mxu0 %v2186
        %v2281 = vpop.f32.mrf.mxu0
        %v2282 = vadd.f32 0.0, %v2281
        %v2283 = vpop.f32.mrf.mxu0
        %2284 = vdwg.mxu0
        %v2285 = vmul.f32 %v1940, 0.17677669
        %v2286 = vmul.f32 %v1945, 0.17677669
        %v2287 = vmul.f32 %v1950, 0.17677669
        %v2288 = vmul.f32 %v1955, 0.17677669
        %v2289 = vmul.f32 %v2049, 0.17677669
        %v2290 = vmul.f32 %v2054, 0.17677669
        %v2291 = vmul.f32 %v2059, 0.17677669
        %v2292 = vmul.f32 %v2064, 0.17677669
        %v2293 = vmul.f32 %v2158, 0.17677669
        %v2294 = vmul.f32 %v2163, 0.17677669
        %v2295 = vmul.f32 %v2168, 0.17677669
        %v2296 = vmul.f32 %v2173, 0.17677669
        %v2297 = vmul.f32 %v2267, 0.17677669
        %v2298 = vmul.f32 %v2272, 0.17677669
        %v2299 = vmul.f32 %v2277, 0.17677669
        %v2300 = vmul.f32 %v2282, 0.17677669
        %v2301 = vsel %vm1848, %v2285, -inf
        %2302 = vmax.xlane.f32.xlu0 %v2301
        %v2303 = vpop.xlane.xlu0 %2302
        %v2304 = vsel %vm1848, %v2286, -inf
        %2305 = vmax.xlane.f32.xlu0 %v2304
        %v2306 = vpop.xlane.xlu0 %2305
        %v2307 = vsel %vm1848, %v2287, -inf
        %2308 = vmax.xlane.f32.xlu0 %v2307
        %v2309 = vpop.xlane.xlu0 %2308
        %v2310 = vsel %vm1848, %v2288, -inf
        %2311 = vmax.xlane.f32.xlu0 %v2310
        %v2312 = vpop.xlane.xlu0 %2311
        %v2313 = vsel %vm1848, %v2289, -inf
        %2314 = vmax.xlane.f32.xlu0 %v2313
        %v2315 = vpop.xlane.xlu0 %2314
        %v2316 = vsel %vm1848, %v2290, -inf
        %2317 = vmax.xlane.f32.xlu0 %v2316
        %v2318 = vpop.xlane.xlu0 %2317
        %v2319 = vsel %vm1848, %v2291, -inf
        %2320 = vmax.xlane.f32.xlu0 %v2319
        %v2321 = vpop.xlane.xlu0 %2320
        %v2322 = vsel %vm1848, %v2292, -inf
        %2323 = vmax.xlane.f32.xlu0 %v2322
        %v2324 = vpop.xlane.xlu0 %2323
        %v2325 = vsel %vm1848, %v2293, -inf
        %2326 = vmax.xlane.f32.xlu0 %v2325
        %v2327 = vpop.xlane.xlu0 %2326
        %v2328 = vsel %vm1848, %v2294, -inf
        %2329 = vmax.xlane.f32.xlu0 %v2328
        %v2330 = vpop.xlane.xlu0 %2329
        %v2331 = vsel %vm1848, %v2295, -inf
        %2332 = vmax.xlane.f32.xlu0 %v2331
        %v2333 = vpop.xlane.xlu0 %2332
        %v2334 = vsel %vm1848, %v2296, -inf
        %2335 = vmax.xlane.f32.xlu0 %v2334
        %v2336 = vpop.xlane.xlu0 %2335
        %v2337 = vsel %vm1848, %v2297, -inf
        %2338 = vmax.xlane.f32.xlu0 %v2337
        %v2339 = vpop.xlane.xlu0 %2338
        %v2340 = vsel %vm1848, %v2298, -inf
        %2341 = vmax.xlane.f32.xlu0 %v2340
        %v2342 = vpop.xlane.xlu0 %2341
        %v2343 = vsel %vm1848, %v2299, -inf
        %2344 = vmax.xlane.f32.xlu0 %v2343
        %v2345 = vpop.xlane.xlu0 %2344
        %v2346 = vsel %vm1848, %v2300, -inf
        %2347 = vmax.xlane.f32.xlu0 %v2346
        %v2348 = vpop.xlane.xlu0 %2347
        %v2349 = vsub.f32 %v2285, %v2303
        %v2350 = vsub.f32 %v2286, %v2306
        %v2351 = vsub.f32 %v2287, %v2309
        %v2352 = vsub.f32 %v2288, %v2312
        %v2353 = vsub.f32 %v2289, %v2315
        %v2354 = vsub.f32 %v2290, %v2318
        %v2355 = vsub.f32 %v2291, %v2321
        %v2356 = vsub.f32 %v2292, %v2324
        %v2357 = vsub.f32 %v2293, %v2327
        %v2358 = vsub.f32 %v2294, %v2330
        %v2359 = vsub.f32 %v2295, %v2333
        %v2360 = vsub.f32 %v2296, %v2336
        %v2361 = vsub.f32 %v2297, %v2339
        %v2362 = vsub.f32 %v2298, %v2342
        %v2363 = vsub.f32 %v2299, %v2345
        %v2364 = vsub.f32 %v2300, %v2348
        %v2365 = vmul.f32 %v2349, 1.442695
        %v2366 = vpow.pop %v2365
        %v2367 = vmul.f32 %v2350, 1.442695
        %v2368 = vpow.pop %v2367
        %v2369 = vmul.f32 %v2351, 1.442695
        %v2370 = vpow.pop %v2369
        %v2371 = vmul.f32 %v2352, 1.442695
        %v2372 = vpow.pop %v2371
        %v2373 = vmul.f32 %v2353, 1.442695
        %v2374 = vpow.pop %v2373
        %v2375 = vmul.f32 %v2354, 1.442695
        %v2376 = vpow.pop %v2375
        %v2377 = vmul.f32 %v2355, 1.442695
        %v2378 = vpow.pop %v2377
        %v2379 = vmul.f32 %v2356, 1.442695
        %v2380 = vpow.pop %v2379
        %v2381 = vmul.f32 %v2357, 1.442695
        %v2382 = vpow.pop %v2381
        %v2383 = vmul.f32 %v2358, 1.442695
        %v2384 = vpow.pop %v2383
        %v2385 = vmul.f32 %v2359, 1.442695
        %v2386 = vpow.pop %v2385
        %v2387 = vmul.f32 %v2360, 1.442695
        %v2388 = vpow.pop %v2387
        %v2389 = vmul.f32 %v2361, 1.442695
        %v2390 = vpow.pop %v2389
        %v2391 = vmul.f32 %v2362, 1.442695
        %v2392 = vpow.pop %v2391
        %v2393 = vmul.f32 %v2363, 1.442695
        %v2394 = vpow.pop %v2393
        %v2395 = vmul.f32 %v2364, 1.442695
        %v2396 = vpow.pop %v2395
        %v2397 = vsel %vm1848, %v2366, 0.0
        %2398 = vadd.xlane.f32.xlu0 %v2397
        %v2399 = vpop.xlane.xlu0 %2398
        %v2400 = vsel %vm1848, %v2368, 0.0
        %2401 = vadd.xlane.f32.xlu0 %v2400
        %v2402 = vpop.xlane.xlu0 %2401
        %v2403 = vsel %vm1848, %v2370, 0.0
        %2404 = vadd.xlane.f32.xlu0 %v2403
        %v2405 = vpop.xlane.xlu0 %2404
        %v2406 = vsel %vm1848, %v2372, 0.0
        %2407 = vadd.xlane.f32.xlu0 %v2406
        %v2408 = vpop.xlane.xlu0 %2407
        %v2409 = vsel %vm1848, %v2374, 0.0
        %2410 = vadd.xlane.f32.xlu0 %v2409
        %v2411 = vpop.xlane.xlu0 %2410
        %v2412 = vsel %vm1848, %v2376, 0.0
        %2413 = vadd.xlane.f32.xlu0 %v2412
        %v2414 = vpop.xlane.xlu0 %2413
        %v2415 = vsel %vm1848, %v2378, 0.0
        %2416 = vadd.xlane.f32.xlu0 %v2415
        %v2417 = vpop.xlane.xlu0 %2416
        %v2418 = vsel %vm1848, %v2380, 0.0
        %2419 = vadd.xlane.f32.xlu0 %v2418
        %v2420 = vpop.xlane.xlu0 %2419
        %v2421 = vsel %vm1848, %v2382, 0.0
        %2422 = vadd.xlane.f32.xlu0 %v2421
        %v2423 = vpop.xlane.xlu0 %2422
        %v2424 = vsel %vm1848, %v2384, 0.0
        %2425 = vadd.xlane.f32.xlu0 %v2424
        %v2426 = vpop.xlane.xlu0 %2425
        %v2427 = vsel %vm1848, %v2386, 0.0
        %2428 = vadd.xlane.f32.xlu0 %v2427
        %v2429 = vpop.xlane.xlu0 %2428
        %v2430 = vsel %vm1848, %v2388, 0.0
        %2431 = vadd.xlane.f32.xlu0 %v2430
        %v2432 = vpop.xlane.xlu0 %2431
        %v2433 = vsel %vm1848, %v2390, 0.0
        %2434 = vadd.xlane.f32.xlu0 %v2433
        %v2435 = vpop.xlane.xlu0 %2434
        %v2436 = vsel %vm1848, %v2392, 0.0
        %2437 = vadd.xlane.f32.xlu0 %v2436
        %v2438 = vpop.xlane.xlu0 %2437
        %v2439 = vsel %vm1848, %v2394, 0.0
        %2440 = vadd.xlane.f32.xlu0 %v2439
        %v2441 = vpop.xlane.xlu0 %2440
        %v2442 = vsel %vm1848, %v2396, 0.0
        %2443 = vadd.xlane.f32.xlu0 %v2442
        %v2444 = vpop.xlane.xlu0 %2443
        %v2445 = vrcp.pop %v2399
        %v2446 = vmul.f32 %v2366, %v2445
        %v2447 = vrcp.pop %v2402
        %v2448 = vmul.f32 %v2368, %v2447
        %v2449 = vrcp.pop %v2405
        %v2450 = vmul.f32 %v2370, %v2449
        %v2451 = vrcp.pop %v2408
        %v2452 = vmul.f32 %v2372, %v2451
        %v2453 = vrcp.pop %v2411
        %v2454 = vmul.f32 %v2374, %v2453
        %v2455 = vrcp.pop %v2414
        %v2456 = vmul.f32 %v2376, %v2455
        %v2457 = vrcp.pop %v2417
        %v2458 = vmul.f32 %v2378, %v2457
        %v2459 = vrcp.pop %v2420
        %v2460 = vmul.f32 %v2380, %v2459
        %v2461 = vrcp.pop %v2423
        %v2462 = vmul.f32 %v2382, %v2461
        %v2463 = vrcp.pop %v2426
        %v2464 = vmul.f32 %v2384, %v2463
        %v2465 = vrcp.pop %v2429
        %v2466 = vmul.f32 %v2386, %v2465
        %v2467 = vrcp.pop %v2432
        %v2468 = vmul.f32 %v2388, %v2467
        %v2469 = vrcp.pop %v2435
        %v2470 = vmul.f32 %v2390, %v2469
        %v2471 = vrcp.pop %v2438
        %v2472 = vmul.f32 %v2392, %v2471
        %v2473 = vrcp.pop %v2441
        %v2474 = vmul.f32 %v2394, %v2473
        %v2475 = vrcp.pop %v2444
        %v2476 = vmul.f32 %v2396, %v2475
        %v2478 = vsel %vm1848, %v2446, 0
        %v2481 = vsel %vm1848, %v2448, 0
        %v2484 = vsel %vm1848, %v2450, 0
        %v2487 = vsel %vm1848, %v2452, 0
        %2489 = vmatprep.subr.mxu0 0.0
        %2490 = vmatpush1.msra.mxu0 0.0
        %2491 = vmatprep.subr.mxu0 0.0
        %2492 = vmatpush1.msra.mxu0 0.0
        %2493 = vmatprep.subr.mxu0 0.0
        %2494 = vmatpush1.msra.mxu0 0.0
        %2495 = vmatprep.subr.mxu0 0.0
        %2496 = vmatpush1.msra.mxu0 0.0
        %2497 = vmatprep.subr.mxu0 0.0
        %2498 = vmatpush1.msra.mxu0 0.0
        %2499 = vmatprep.subr.mxu0 0.0
        %2500 = vmatpush1.msra.mxu0 0.0
        %2501 = vmatprep.subr.mxu0 0.0
        %2502 = vmatpush1.msra.mxu0 0.0
        %2503 = vmatprep.subr.mxu0 0.0
        %2504 = vmatpush1.msra.mxu0 0.0
        %2505 = vmatprep.subr.mxu0 0.0
        %2506 = vmatpush1.msra.mxu0 0.0
        %2507 = vmatprep.subr.mxu0 0.0
        %2508 = vmatpush1.msra.mxu0 0.0
        %2509 = vmatprep.subr.mxu0 0.0
        %2510 = vmatpush1.msra.mxu0 0.0
        %2511 = vmatprep.subr.mxu0 0.0
        %2512 = vmatpush1.msra.mxu0 0.0
        %2513 = vmatprep.subr.mxu0 0.0
        %2514 = vmatpush1.msra.mxu0 %v1785
        %2515 = vmatprep.subr.mxu0 0.0
        %2516 = vmatpush1.msra.mxu0 %v1780
        %2517 = vmatprep.subr.mxu0 0.0
        %2518 = vmatpush1.msra.mxu0 %v1775
        %2519 = vmatprep.subr.mxu0 0.0
        %2520 = vmatpush1.msra.mxu0 %v1770
        %2521 = vmatprep.subr.mxu0 0.0
        %2522 = vmatpush2.msra.mxu0 0.0
        %2523 = vmatprep.subr.mxu0 0.0
        %2524 = vmatpush2.msra.mxu0 0.0
        %2525 = vmatprep.subr.mxu0 0.0
        %2526 = vmatpush2.msra.mxu0 0.0
        %2527 = vmatprep.subr.mxu0 0.0
        %2528 = vmatpush2.msra.mxu0 0.0
        %2529 = vmatprep.subr.mxu0 0.0
        %2530 = vmatpush2.msra.mxu0 0.0
        %2531 = vmatprep.subr.mxu0 0.0
        %2532 = vmatpush2.msra.mxu0 0.0
        %2533 = vmatprep.subr.mxu0 0.0
        %2534 = vmatpush2.msra.mxu0 0.0
        %2535 = vmatprep.subr.mxu0 0.0
        %2536 = vmatpush2.msra.mxu0 0.0
        %2537 = vmatprep.subr.mxu0 0.0
        %2538 = vmatpush2.msra.mxu0 0.0
        %2539 = vmatprep.subr.mxu0 0.0
        %2540 = vmatpush2.msra.mxu0 0.0
        %2541 = vmatprep.subr.mxu0 0.0
        %2542 = vmatpush2.msra.mxu0 0.0
        %2543 = vmatprep.subr.mxu0 0.0
        %2544 = vmatpush2.msra.mxu0 0.0
        %2545 = vmatprep.subr.mxu0 0.0
        %2546 = vmatpush2.msra.mxu0 0.0
        %2547 = vmatprep.subr.mxu0 0.0
        %2548 = vmatpush2.msra.mxu0 0.0
        %2549 = vmatprep.subr.mxu0 0.0
        %2550 = vmatpush2.msra.mxu0 0.0
        %2551 = vmatprep.subr.mxu0 0.0
        %2552 = vmatpush2.msra.mxu0 0.0
        %2553 = vmatprep.mubr.f32.mxu0 0.0
        %2554 = vmatmul.mubr.f32.gmra.mxu0 %v2478
        %v2555 = vpop.f32.mrf.mxu0
        %v2556 = vadd.f32 0.0, %v2555
        %v2557 = vpop.f32.mrf.mxu0
        %2558 = vmatprep.mubr.f32.mxu0 0.0
        %2559 = vmatmul.mubr.f32.gmra.mxu0 %v2481
        %v2560 = vpop.f32.mrf.mxu0
        %v2561 = vadd.f32 0.0, %v2560
        %v2562 = vpop.f32.mrf.mxu0
        %2563 = vmatprep.mubr.f32.mxu0 0.0
        %2564 = vmatmul.mubr.f32.gmra.mxu0 %v2484
        %v2565 = vpop.f32.mrf.mxu0
        %v2566 = vadd.f32 0.0, %v2565
        %v2567 = vpop.f32.mrf.mxu0
        %2568 = vmatprep.mubr.f32.mxu0 0.0
        %2569 = vmatmul.mubr.f32.gmra.mxu0 %v2487
        %v2570 = vpop.f32.mrf.mxu0
        %v2571 = vadd.f32 0.0, %v2570
        %v2572 = vpop.f32.mrf.mxu0
        %2573 = vdwg.mxu0
        %v2575 = vsel %vm1848, %v2454, 0
        %v2578 = vsel %vm1848, %v2456, 0
        %v2581 = vsel %vm1848, %v2458, 0
        %v2584 = vsel %vm1848, %v2460, 0
        %2586 = vmatprep.subr.mxu0 0.0
        %2587 = vmatpush1.msra.mxu0 0.0
        %2588 = vmatprep.subr.mxu0 0.0
        %2589 = vmatpush1.msra.mxu0 0.0
        %2590 = vmatprep.subr.mxu0 0.0
        %2591 = vmatpush1.msra.mxu0 0.0
        %2592 = vmatprep.subr.mxu0 0.0
        %2593 = vmatpush1.msra.mxu0 0.0
        %2594 = vmatprep.subr.mxu0 0.0
        %2595 = vmatpush1.msra.mxu0 0.0
        %2596 = vmatprep.subr.mxu0 0.0
        %2597 = vmatpush1.msra.mxu0 0.0
        %2598 = vmatprep.subr.mxu0 0.0
        %2599 = vmatpush1.msra.mxu0 0.0
        %2600 = vmatprep.subr.mxu0 0.0
        %2601 = vmatpush1.msra.mxu0 0.0
        %2602 = vmatprep.subr.mxu0 0.0
        %2603 = vmatpush1.msra.mxu0 0.0
        %2604 = vmatprep.subr.mxu0 0.0
        %2605 = vmatpush1.msra.mxu0 0.0
        %2606 = vmatprep.subr.mxu0 0.0
        %2607 = vmatpush1.msra.mxu0 0.0
        %2608 = vmatprep.subr.mxu0 0.0
        %2609 = vmatpush1.msra.mxu0 0.0
        %2610 = vmatprep.subr.mxu0 0.0
        %2611 = vmatpush1.msra.mxu0 %v1805
        %2612 = vmatprep.subr.mxu0 0.0
        %2613 = vmatpush1.msra.mxu0 %v1800
        %2614 = vmatprep.subr.mxu0 0.0
        %2615 = vmatpush1.msra.mxu0 %v1795
        %2616 = vmatprep.subr.mxu0 0.0
        %2617 = vmatpush1.msra.mxu0 %v1790
        %2618 = vmatprep.subr.mxu0 0.0
        %2619 = vmatpush2.msra.mxu0 0.0
        %2620 = vmatprep.subr.mxu0 0.0
        %2621 = vmatpush2.msra.mxu0 0.0
        %2622 = vmatprep.subr.mxu0 0.0
        %2623 = vmatpush2.msra.mxu0 0.0
        %2624 = vmatprep.subr.mxu0 0.0
        %2625 = vmatpush2.msra.mxu0 0.0
        %2626 = vmatprep.subr.mxu0 0.0
        %2627 = vmatpush2.msra.mxu0 0.0
        %2628 = vmatprep.subr.mxu0 0.0
        %2629 = vmatpush2.msra.mxu0 0.0
        %2630 = vmatprep.subr.mxu0 0.0
        %2631 = vmatpush2.msra.mxu0 0.0
        %2632 = vmatprep.subr.mxu0 0.0
        %2633 = vmatpush2.msra.mxu0 0.0
        %2634 = vmatprep.subr.mxu0 0.0
        %2635 = vmatpush2.msra.mxu0 0.0
        %2636 = vmatprep.subr.mxu0 0.0
        %2637 = vmatpush2.msra.mxu0 0.0
        %2638 = vmatprep.subr.mxu0 0.0
        %2639 = vmatpush2.msra.mxu0 0.0
        %2640 = vmatprep.subr.mxu0 0.0
        %2641 = vmatpush2.msra.mxu0 0.0
        %2642 = vmatprep.subr.mxu0 0.0
        %2643 = vmatpush2.msra.mxu0 0.0
        %2644 = vmatprep.subr.mxu0 0.0
        %2645 = vmatpush2.msra.mxu0 0.0
        %2646 = vmatprep.subr.mxu0 0.0
        %2647 = vmatpush2.msra.mxu0 0.0
        %2648 = vmatprep.subr.mxu0 0.0
        %2649 = vmatpush2.msra.mxu0 0.0
        %2650 = vmatprep.mubr.f32.mxu0 0.0
        %2651 = vmatmul.mubr.f32.gmra.mxu0 %v2575
        %v2652 = vpop.f32.mrf.mxu0
        %v2653 = vadd.f32 0.0, %v2652
        %v2654 = vpop.f32.mrf.mxu0
        %2655 = vmatprep.mubr.f32.mxu0 0.0
        %2656 = vmatmul.mubr.f32.gmra.mxu0 %v2578
        %v2657 = vpop.f32.mrf.mxu0
        %v2658 = vadd.f32 0.0, %v2657
        %v2659 = vpop.f32.mrf.mxu0
        %2660 = vmatprep.mubr.f32.mxu0 0.0
        %2661 = vmatmul.mubr.f32.gmra.mxu0 %v2581
        %v2662 = vpop.f32.mrf.mxu0
        %v2663 = vadd.f32 0.0, %v2662
        %v2664 = vpop.f32.mrf.mxu0
        %2665 = vmatprep.mubr.f32.mxu0 0.0
        %2666 = vmatmul.mubr.f32.gmra.mxu0 %v2584
        %v2667 = vpop.f32.mrf.mxu0
        %v2668 = vadd.f32 0.0, %v2667
        %v2669 = vpop.f32.mrf.mxu0
        %2670 = vdwg.mxu0
        %v2672 = vsel %vm1848, %v2462, 0
        %v2675 = vsel %vm1848, %v2464, 0
        %v2678 = vsel %vm1848, %v2466, 0
        %v2681 = vsel %vm1848, %v2468, 0
        %2683 = vmatprep.subr.mxu0 0.0
        %2684 = vmatpush1.msra.mxu0 0.0
        %2685 = vmatprep.subr.mxu0 0.0
        %2686 = vmatpush1.msra.mxu0 0.0
        %2687 = vmatprep.subr.mxu0 0.0
        %2688 = vmatpush1.msra.mxu0 0.0
        %2689 = vmatprep.subr.mxu0 0.0
        %2690 = vmatpush1.msra.mxu0 0.0
        %2691 = vmatprep.subr.mxu0 0.0
        %2692 = vmatpush1.msra.mxu0 0.0
        %2693 = vmatprep.subr.mxu0 0.0
        %2694 = vmatpush1.msra.mxu0 0.0
        %2695 = vmatprep.subr.mxu0 0.0
        %2696 = vmatpush1.msra.mxu0 0.0
        %2697 = vmatprep.subr.mxu0 0.0
        %2698 = vmatpush1.msra.mxu0 0.0
        %2699 = vmatprep.subr.mxu0 0.0
        %2700 = vmatpush1.msra.mxu0 0.0
        %2701 = vmatprep.subr.mxu0 0.0
        %2702 = vmatpush1.msra.mxu0 0.0
        %2703 = vmatprep.subr.mxu0 0.0
        %2704 = vmatpush1.msra.mxu0 0.0
        %2705 = vmatprep.subr.mxu0 0.0
        %2706 = vmatpush1.msra.mxu0 0.0
        %2707 = vmatprep.subr.mxu0 0.0
        %2708 = vmatpush1.msra.mxu0 %v1825
        %2709 = vmatprep.subr.mxu0 0.0
        %2710 = vmatpush1.msra.mxu0 %v1820
        %2711 = vmatprep.subr.mxu0 0.0
        %2712 = vmatpush1.msra.mxu0 %v1815
        %2713 = vmatprep.subr.mxu0 0.0
        %2714 = vmatpush1.msra.mxu0 %v1810
        %2715 = vmatprep.subr.mxu0 0.0
        %2716 = vmatpush2.msra.mxu0 0.0
        %2717 = vmatprep.subr.mxu0 0.0
        %2718 = vmatpush2.msra.mxu0 0.0
        %2719 = vmatprep.subr.mxu0 0.0
        %2720 = vmatpush2.msra.mxu0 0.0
        %2721 = vmatprep.subr.mxu0 0.0
        %2722 = vmatpush2.msra.mxu0 0.0
        %2723 = vmatprep.subr.mxu0 0.0
        %2724 = vmatpush2.msra.mxu0 0.0
        %2725 = vmatprep.subr.mxu0 0.0
        %2726 = vmatpush2.msra.mxu0 0.0
        %2727 = vmatprep.subr.mxu0 0.0
        %2728 = vmatpush2.msra.mxu0 0.0
        %2729 = vmatprep.subr.mxu0 0.0
        %2730 = vmatpush2.msra.mxu0 0.0
        %2731 = vmatprep.subr.mxu0 0.0
        %2732 = vmatpush2.msra.mxu0 0.0
        %2733 = vmatprep.subr.mxu0 0.0
        %2734 = vmatpush2.msra.mxu0 0.0
        %2735 = vmatprep.subr.mxu0 0.0
        %2736 = vmatpush2.msra.mxu0 0.0
        %2737 = vmatprep.subr.mxu0 0.0
        %2738 = vmatpush2.msra.mxu0 0.0
        %2739 = vmatprep.subr.mxu0 0.0
        %2740 = vmatpush2.msra.mxu0 0.0
        %2741 = vmatprep.subr.mxu0 0.0
        %2742 = vmatpush2.msra.mxu0 0.0
        %2743 = vmatprep.subr.mxu0 0.0
        %2744 = vmatpush2.msra.mxu0 0.0
        %2745 = vmatprep.subr.mxu0 0.0
        %2746 = vmatpush2.msra.mxu0 0.0
        %2747 = vmatprep.mubr.f32.mxu0 0.0
        %2748 = vmatmul.mubr.f32.gmra.mxu0 %v2672
        %v2749 = vpop.f32.mrf.mxu0
        %v2750 = vadd.f32 0.0, %v2749
        %v2751 = vpop.f32.mrf.mxu0
        %2752 = vmatprep.mubr.f32.mxu0 0.0
        %2753 = vmatmul.mubr.f32.gmra.mxu0 %v2675
        %v2754 = vpop.f32.mrf.mxu0
        %v2755 = vadd.f32 0.0, %v2754
        %v2756 = vpop.f32.mrf.mxu0
        %2757 = vmatprep.mubr.f32.mxu0 0.0
        %2758 = vmatmul.mubr.f32.gmra.mxu0 %v2678
        %v2759 = vpop.f32.mrf.mxu0
        %v2760 = vadd.f32 0.0, %v2759
        %v2761 = vpop.f32.mrf.mxu0
        %2762 = vmatprep.mubr.f32.mxu0 0.0
        %2763 = vmatmul.mubr.f32.gmra.mxu0 %v2681
        %v2764 = vpop.f32.mrf.mxu0
        %v2765 = vadd.f32 0.0, %v2764
        %v2766 = vpop.f32.mrf.mxu0
        %2767 = vdwg.mxu0
        %v2769 = vsel %vm1848, %v2470, 0
        %v2772 = vsel %vm1848, %v2472, 0
        %v2775 = vsel %vm1848, %v2474, 0
        %v2778 = vsel %vm1848, %v2476, 0
        %2780 = vmatprep.subr.mxu0 0.0
        %2781 = vmatpush1.msra.mxu0 0.0
        %2782 = vmatprep.subr.mxu0 0.0
        %2783 = vmatpush1.msra.mxu0 0.0
        %2784 = vmatprep.subr.mxu0 0.0
        %2785 = vmatpush1.msra.mxu0 0.0
        %2786 = vmatprep.subr.mxu0 0.0
        %2787 = vmatpush1.msra.mxu0 0.0
        %2788 = vmatprep.subr.mxu0 0.0
        %2789 = vmatpush1.msra.mxu0 0.0
        %2790 = vmatprep.subr.mxu0 0.0
        %2791 = vmatpush1.msra.mxu0 0.0
        %2792 = vmatprep.subr.mxu0 0.0
        %2793 = vmatpush1.msra.mxu0 0.0
        %2794 = vmatprep.subr.mxu0 0.0
        %2795 = vmatpush1.msra.mxu0 0.0
        %2796 = vmatprep.subr.mxu0 0.0
        %2797 = vmatpush1.msra.mxu0 0.0
        %2798 = vmatprep.subr.mxu0 0.0
        %2799 = vmatpush1.msra.mxu0 0.0
        %2800 = vmatprep.subr.mxu0 0.0
        %2801 = vmatpush1.msra.mxu0 0.0
        %2802 = vmatprep.subr.mxu0 0.0
        %2803 = vmatpush1.msra.mxu0 0.0
        %2804 = vmatprep.subr.mxu0 0.0
        %2805 = vmatpush1.msra.mxu0 %v1845
        %2806 = vmatprep.subr.mxu0 0.0
        %2807 = vmatpush1.msra.mxu0 %v1840
        %2808 = vmatprep.subr.mxu0 0.0
        %2809 = vmatpush1.msra.mxu0 %v1835
        %2810 = vmatprep.subr.mxu0 0.0
        %2811 = vmatpush1.msra.mxu0 %v1830
        %2812 = vmatprep.subr.mxu0 0.0
        %2813 = vmatpush2.msra.mxu0 0.0
        %2814 = vmatprep.subr.mxu0 0.0
        %2815 = vmatpush2.msra.mxu0 0.0
        %2816 = vmatprep.subr.mxu0 0.0
        %2817 = vmatpush2.msra.mxu0 0.0
        %2818 = vmatprep.subr.mxu0 0.0
        %2819 = vmatpush2.msra.mxu0 0.0
        %2820 = vmatprep.subr.mxu0 0.0
        %2821 = vmatpush2.msra.mxu0 0.0
        %2822 = vmatprep.subr.mxu0 0.0
        %2823 = vmatpush2.msra.mxu0 0.0
        %2824 = vmatprep.subr.mxu0 0.0
        %2825 = vmatpush2.msra.mxu0 0.0
        %2826 = vmatprep.subr.mxu0 0.0
        %2827 = vmatpush2.msra.mxu0 0.0
        %2828 = vmatprep.subr.mxu0 0.0
        %2829 = vmatpush2.msra.mxu0 0.0
        %2830 = vmatprep.subr.mxu0 0.0
        %2831 = vmatpush2.msra.mxu0 0.0
        %2832 = vmatprep.subr.mxu0 0.0
        %2833 = vmatpush2.msra.mxu0 0.0
        %2834 = vmatprep.subr.mxu0 0.0
        %2835 = vmatpush2.msra.mxu0 0.0
        %2836 = vmatprep.subr.mxu0 0.0
        %2837 = vmatpush2.msra.mxu0 0.0
        %2838 = vmatprep.subr.mxu0 0.0
        %2839 = vmatpush2.msra.mxu0 0.0
        %2840 = vmatprep.subr.mxu0 0.0
        %2841 = vmatpush2.msra.mxu0 0.0
        %2842 = vmatprep.subr.mxu0 0.0
        %2843 = vmatpush2.msra.mxu0 0.0
        %2844 = vmatprep.mubr.f32.mxu0 0.0
        %2845 = vmatmul.mubr.f32.gmra.mxu0 %v2769
        %v2846 = vpop.f32.mrf.mxu0
        %v2847 = vadd.f32 0.0, %v2846
        %v2848 = vpop.f32.mrf.mxu0
        %2849 = vmatprep.mubr.f32.mxu0 0.0
        %2850 = vmatmul.mubr.f32.gmra.mxu0 %v2772
        %v2851 = vpop.f32.mrf.mxu0
        %v2852 = vadd.f32 0.0, %v2851
        %v2853 = vpop.f32.mrf.mxu0
        %2854 = vmatprep.mubr.f32.mxu0 0.0
        %2855 = vmatmul.mubr.f32.gmra.mxu0 %v2775
        %v2856 = vpop.f32.mrf.mxu0
        %v2857 = vadd.f32 0.0, %v2856
        %v2858 = vpop.f32.mrf.mxu0
        %2859 = vmatprep.mubr.f32.mxu0 0.0
        %2860 = vmatmul.mubr.f32.gmra.mxu0 %v2778
        %v2861 = vpop.f32.mrf.mxu0
        %v2862 = vadd.f32 0.0, %v2861
        %v2863 = vpop.f32.mrf.mxu0
        %2864 = vdwg.mxu0
        %2865 = vrot.lane.b32.xlu0 %v1609, 96
        %v2866 = vpop.permute.xlu0 %2865
        %2867 = vrot.lane.b32.xlu0 %v1615, 96
        %v2868 = vpop.permute.xlu0 %2867
        %2869 = vrot.lane.b32.xlu0 %v1621, 96
        %v2870 = vpop.permute.xlu0 %2869
        %2871 = vrot.lane.b32.xlu0 %v1627, 96
        %v2872 = vpop.permute.xlu0 %2871
        %2873 = vrot.lane.b32.xlu0 %v1611, 96
        %v2874 = vpop.permute.xlu0 %2873
        %2875 = vrot.lane.b32.xlu0 %v1617, 96
        %v2876 = vpop.permute.xlu0 %2875
        %2877 = vrot.lane.b32.xlu0 %v1623, 96
        %v2878 = vpop.permute.xlu0 %2877
        %2879 = vrot.lane.b32.xlu0 %v1629, 96
        %v2880 = vpop.permute.xlu0 %2879
        %v2881 = vsel %vm1848, %v2866, 0
        %v2883 = vsel %vm1848, %v2868, 0
        %v2885 = vsel %vm1848, %v2870, 0
        %v2887 = vsel %vm1848, %v2872, 0
        %v2889 = vsel %vm1848, %v2874, 0
        %v2891 = vsel %vm1848, %v2876, 0
        %v2893 = vsel %vm1848, %v2878, 0
        %v2895 = vsel %vm1848, %v2880, 0
        %2897 = vmatprep.subr.mxu0 0.0
        %2898 = vmatpush1.xpose.msra.mxu0 0.0
        %2899 = vmatprep.subr.mxu0 0.0
        %2900 = vmatpush1.xpose.msra.mxu0 0.0
        %2901 = vmatprep.subr.mxu0 0.0
        %2902 = vmatpush1.xpose.msra.mxu0 0.0
        %2903 = vmatprep.subr.mxu0 0.0
        %2904 = vmatpush1.xpose.msra.mxu0 0.0
        %2905 = vmatprep.subr.mxu0 0.0
        %2906 = vmatpush1.xpose.msra.mxu0 0.0
        %2907 = vmatprep.subr.mxu0 0.0
        %2908 = vmatpush1.xpose.msra.mxu0 0.0
        %2909 = vmatprep.subr.mxu0 0.0
        %2910 = vmatpush1.xpose.msra.mxu0 0.0
        %2911 = vmatprep.subr.mxu0 0.0
        %2912 = vmatpush1.xpose.msra.mxu0 0.0
        %2913 = vmatprep.subr.mxu0 0.0
        %2914 = vmatpush1.xpose.msra.mxu0 0.0
        %2915 = vmatprep.subr.mxu0 0.0
        %2916 = vmatpush1.xpose.msra.mxu0 0.0
        %2917 = vmatprep.subr.mxu0 0.0
        %2918 = vmatpush1.xpose.msra.mxu0 0.0
        %2919 = vmatprep.subr.mxu0 0.0
        %2920 = vmatpush1.xpose.msra.mxu0 0.0
        %2921 = vmatprep.subr.mxu0 0.0
        %2922 = vmatpush1.xpose.msra.mxu0 %v2895
        %2923 = vmatprep.subr.mxu0 0.0
        %2924 = vmatpush1.xpose.msra.mxu0 %v2893
        %2925 = vmatprep.subr.mxu0 0.0
        %2926 = vmatpush1.xpose.msra.mxu0 %v2891
        %2927 = vmatprep.subr.mxu0 0.0
        %2928 = vmatpush1.xpose.msra.mxu0 %v2889
        %2929 = vmatprep.subr.mxu0 0.0
        %2930 = vmatpush2.xpose.msra.mxu0 0.0
        %2931 = vmatprep.subr.mxu0 0.0
        %2932 = vmatpush2.xpose.msra.mxu0 0.0
        %2933 = vmatprep.subr.mxu0 0.0
        %2934 = vmatpush2.xpose.msra.mxu0 0.0
        %2935 = vmatprep.subr.mxu0 0.0
        %2936 = vmatpush2.xpose.msra.mxu0 0.0
        %2937 = vmatprep.subr.mxu0 0.0
        %2938 = vmatpush2.xpose.msra.mxu0 0.0
        %2939 = vmatprep.subr.mxu0 0.0
        %2940 = vmatpush2.xpose.msra.mxu0 0.0
        %2941 = vmatprep.subr.mxu0 0.0
        %2942 = vmatpush2.xpose.msra.mxu0 0.0
        %2943 = vmatprep.subr.mxu0 0.0
        %2944 = vmatpush2.xpose.msra.mxu0 0.0
        %2945 = vmatprep.subr.mxu0 0.0
        %2946 = vmatpush2.xpose.msra.mxu0 0.0
        %2947 = vmatprep.subr.mxu0 0.0
        %2948 = vmatpush2.xpose.msra.mxu0 0.0
        %2949 = vmatprep.subr.mxu0 0.0
        %2950 = vmatpush2.xpose.msra.mxu0 0.0
        %2951 = vmatprep.subr.mxu0 0.0
        %2952 = vmatpush2.xpose.msra.mxu0 0.0
        %2953 = vmatprep.subr.mxu0 0.0
        %2954 = vmatpush2.xpose.msra.mxu0 0.0
        %2955 = vmatprep.subr.mxu0 0.0
        %2956 = vmatpush2.xpose.msra.mxu0 0.0
        %2957 = vmatprep.subr.mxu0 0.0
        %2958 = vmatpush2.xpose.msra.mxu0 0.0
        %2959 = vmatprep.subr.mxu0 0.0
        %2960 = vmatpush2.xpose.msra.mxu0 0.0
        %2961 = vmatprep.mubr.f32.mxu0 0.0
        %2962 = vmatmul.mubr.f32.gmra.mxu0 %v2881
        %v2963 = vpop.f32.mrf.mxu0
        %v2964 = vadd.f32 0.0, %v2963
        %v2965 = vpop.f32.mrf.mxu0
        %2966 = vmatprep.mubr.f32.mxu0 0.0
        %2967 = vmatmul.mubr.f32.gmra.mxu0 %v2883
        %v2968 = vpop.f32.mrf.mxu0
        %v2969 = vadd.f32 0.0, %v2968
        %v2970 = vpop.f32.mrf.mxu0
        %2971 = vmatprep.mubr.f32.mxu0 0.0
        %2972 = vmatmul.mubr.f32.gmra.mxu0 %v2885
        %v2973 = vpop.f32.mrf.mxu0
        %v2974 = vadd.f32 0.0, %v2973
        %v2975 = vpop.f32.mrf.mxu0
        %2976 = vmatprep.mubr.f32.mxu0 0.0
        %2977 = vmatmul.mubr.f32.gmra.mxu0 %v2887
        %v2978 = vpop.f32.mrf.mxu0
        %v2979 = vadd.f32 0.0, %v2978
        %v2980 = vpop.f32.mrf.mxu0
        %2981 = vdwg.mxu0
        %2982 = vrot.lane.b32.xlu0 %v1633, 96
        %v2983 = vpop.permute.xlu0 %2982
        %2984 = vrot.lane.b32.xlu0 %v1639, 96
        %v2985 = vpop.permute.xlu0 %2984
        %2986 = vrot.lane.b32.xlu0 %v1645, 96
        %v2987 = vpop.permute.xlu0 %2986
        %2988 = vrot.lane.b32.xlu0 %v1651, 96
        %v2989 = vpop.permute.xlu0 %2988
        %2990 = vrot.lane.b32.xlu0 %v1635, 96
        %v2991 = vpop.permute.xlu0 %2990
        %2992 = vrot.lane.b32.xlu0 %v1641, 96
        %v2993 = vpop.permute.xlu0 %2992
        %2994 = vrot.lane.b32.xlu0 %v1647, 96
        %v2995 = vpop.permute.xlu0 %2994
        %2996 = vrot.lane.b32.xlu0 %v1653, 96
        %v2997 = vpop.permute.xlu0 %2996
        %v2998 = vsel %vm1848, %v2983, 0
        %v3000 = vsel %vm1848, %v2985, 0
        %v3002 = vsel %vm1848, %v2987, 0
        %v3004 = vsel %vm1848, %v2989, 0
        %v3006 = vsel %vm1848, %v2991, 0
        %v3008 = vsel %vm1848, %v2993, 0
        %v3010 = vsel %vm1848, %v2995, 0
        %v3012 = vsel %vm1848, %v2997, 0
        %3014 = vmatprep.subr.mxu0 0.0
        %3015 = vmatpush1.xpose.msra.mxu0 0.0
        %3016 = vmatprep.subr.mxu0 0.0
        %3017 = vmatpush1.xpose.msra.mxu0 0.0
        %3018 = vmatprep.subr.mxu0 0.0
        %3019 = vmatpush1.xpose.msra.mxu0 0.0
        %3020 = vmatprep.subr.mxu0 0.0
        %3021 = vmatpush1.xpose.msra.mxu0 0.0
        %3022 = vmatprep.subr.mxu0 0.0
        %3023 = vmatpush1.xpose.msra.mxu0 0.0
        %3024 = vmatprep.subr.mxu0 0.0
        %3025 = vmatpush1.xpose.msra.mxu0 0.0
        %3026 = vmatprep.subr.mxu0 0.0
        %3027 = vmatpush1.xpose.msra.mxu0 0.0
        %3028 = vmatprep.subr.mxu0 0.0
        %3029 = vmatpush1.xpose.msra.mxu0 0.0
        %3030 = vmatprep.subr.mxu0 0.0
        %3031 = vmatpush1.xpose.msra.mxu0 0.0
        %3032 = vmatprep.subr.mxu0 0.0
        %3033 = vmatpush1.xpose.msra.mxu0 0.0
        %3034 = vmatprep.subr.mxu0 0.0
        %3035 = vmatpush1.xpose.msra.mxu0 0.0
        %3036 = vmatprep.subr.mxu0 0.0
        %3037 = vmatpush1.xpose.msra.mxu0 0.0
        %3038 = vmatprep.subr.mxu0 0.0
        %3039 = vmatpush1.xpose.msra.mxu0 %v3012
        %3040 = vmatprep.subr.mxu0 0.0
        %3041 = vmatpush1.xpose.msra.mxu0 %v3010
        %3042 = vmatprep.subr.mxu0 0.0
        %3043 = vmatpush1.xpose.msra.mxu0 %v3008
        %3044 = vmatprep.subr.mxu0 0.0
        %3045 = vmatpush1.xpose.msra.mxu0 %v3006
        %3046 = vmatprep.subr.mxu0 0.0
        %3047 = vmatpush2.xpose.msra.mxu0 0.0
        %3048 = vmatprep.subr.mxu0 0.0
        %3049 = vmatpush2.xpose.msra.mxu0 0.0
        %3050 = vmatprep.subr.mxu0 0.0
        %3051 = vmatpush2.xpose.msra.mxu0 0.0
        %3052 = vmatprep.subr.mxu0 0.0
        %3053 = vmatpush2.xpose.msra.mxu0 0.0
        %3054 = vmatprep.subr.mxu0 0.0
        %3055 = vmatpush2.xpose.msra.mxu0 0.0
        %3056 = vmatprep.subr.mxu0 0.0
        %3057 = vmatpush2.xpose.msra.mxu0 0.0
        %3058 = vmatprep.subr.mxu0 0.0
        %3059 = vmatpush2.xpose.msra.mxu0 0.0
        %3060 = vmatprep.subr.mxu0 0.0
        %3061 = vmatpush2.xpose.msra.mxu0 0.0
        %3062 = vmatprep.subr.mxu0 0.0
        %3063 = vmatpush2.xpose.msra.mxu0 0.0
        %3064 = vmatprep.subr.mxu0 0.0
        %3065 = vmatpush2.xpose.msra.mxu0 0.0
        %3066 = vmatprep.subr.mxu0 0.0
        %3067 = vmatpush2.xpose.msra.mxu0 0.0
        %3068 = vmatprep.subr.mxu0 0.0
        %3069 = vmatpush2.xpose.msra.mxu0 0.0
        %3070 = vmatprep.subr.mxu0 0.0
        %3071 = vmatpush2.xpose.msra.mxu0 0.0
        %3072 = vmatprep.subr.mxu0 0.0
        %3073 = vmatpush2.xpose.msra.mxu0 0.0
        %3074 = vmatprep.subr.mxu0 0.0
        %3075 = vmatpush2.xpose.msra.mxu0 0.0
        %3076 = vmatprep.subr.mxu0 0.0
        %3077 = vmatpush2.xpose.msra.mxu0 0.0
        %3078 = vmatprep.mubr.f32.mxu0 0.0
        %3079 = vmatmul.mubr.f32.gmra.mxu0 %v2998
        %v3080 = vpop.f32.mrf.mxu0
        %v3081 = vadd.f32 0.0, %v3080
        %v3082 = vpop.f32.mrf.mxu0
        %3083 = vmatprep.mubr.f32.mxu0 0.0
        %3084 = vmatmul.mubr.f32.gmra.mxu0 %v3000
        %v3085 = vpop.f32.mrf.mxu0
        %v3086 = vadd.f32 0.0, %v3085
        %v3087 = vpop.f32.mrf.mxu0
        %3088 = vmatprep.mubr.f32.mxu0 0.0
        %3089 = vmatmul.mubr.f32.gmra.mxu0 %v3002
        %v3090 = vpop.f32.mrf.mxu0
        %v3091 = vadd.f32 0.0, %v3090
        %v3092 = vpop.f32.mrf.mxu0
        %3093 = vmatprep.mubr.f32.mxu0 0.0
        %3094 = vmatmul.mubr.f32.gmra.mxu0 %v3004
        %v3095 = vpop.f32.mrf.mxu0
        %v3096 = vadd.f32 0.0, %v3095
        %v3097 = vpop.f32.mrf.mxu0
        %3098 = vdwg.mxu0
        %3099 = vrot.lane.b32.xlu0 %v1657, 96
        %v3100 = vpop.permute.xlu0 %3099
        %3101 = vrot.lane.b32.xlu0 %v1663, 96
        %v3102 = vpop.permute.xlu0 %3101
        %3103 = vrot.lane.b32.xlu0 %v1669, 96
        %v3104 = vpop.permute.xlu0 %3103
        %3105 = vrot.lane.b32.xlu0 %v1675, 96
        %v3106 = vpop.permute.xlu0 %3105
        %3107 = vrot.lane.b32.xlu0 %v1659, 96
        %v3108 = vpop.permute.xlu0 %3107
        %3109 = vrot.lane.b32.xlu0 %v1665, 96
        %v3110 = vpop.permute.xlu0 %3109
        %3111 = vrot.lane.b32.xlu0 %v1671, 96
        %v3112 = vpop.permute.xlu0 %3111
        %3113 = vrot.lane.b32.xlu0 %v1677, 96
        %v3114 = vpop.permute.xlu0 %3113
        %v3115 = vsel %vm1848, %v3100, 0
        %v3117 = vsel %vm1848, %v3102, 0
        %v3119 = vsel %vm1848, %v3104, 0
        %v3121 = vsel %vm1848, %v3106, 0
        %v3123 = vsel %vm1848, %v3108, 0
        %v3125 = vsel %vm1848, %v3110, 0
        %v3127 = vsel %vm1848, %v3112, 0
        %v3129 = vsel %vm1848, %v3114, 0
        %3131 = vmatprep.subr.mxu0 0.0
        %3132 = vmatpush1.xpose.msra.mxu0 0.0
        %3133 = vmatprep.subr.mxu0 0.0
        %3134 = vmatpush1.xpose.msra.mxu0 0.0
        %3135 = vmatprep.subr.mxu0 0.0
        %3136 = vmatpush1.xpose.msra.mxu0 0.0
        %3137 = vmatprep.subr.mxu0 0.0
        %3138 = vmatpush1.xpose.msra.mxu0 0.0
        %3139 = vmatprep.subr.mxu0 0.0
        %3140 = vmatpush1.xpose.msra.mxu0 0.0
        %3141 = vmatprep.subr.mxu0 0.0
        %3142 = vmatpush1.xpose.msra.mxu0 0.0
        %3143 = vmatprep.subr.mxu0 0.0
        %3144 = vmatpush1.xpose.msra.mxu0 0.0
        %3145 = vmatprep.subr.mxu0 0.0
        %3146 = vmatpush1.xpose.msra.mxu0 0.0
        %3147 = vmatprep.subr.mxu0 0.0
        %3148 = vmatpush1.xpose.msra.mxu0 0.0
        %3149 = vmatprep.subr.mxu0 0.0
        %3150 = vmatpush1.xpose.msra.mxu0 0.0
        %3151 = vmatprep.subr.mxu0 0.0
        %3152 = vmatpush1.xpose.msra.mxu0 0.0
        %3153 = vmatprep.subr.mxu0 0.0
        %3154 = vmatpush1.xpose.msra.mxu0 0.0
        %3155 = vmatprep.subr.mxu0 0.0
        %3156 = vmatpush1.xpose.msra.mxu0 %v3129
        %3157 = vmatprep.subr.mxu0 0.0
        %3158 = vmatpush1.xpose.msra.mxu0 %v3127
        %3159 = vmatprep.subr.mxu0 0.0
        %3160 = vmatpush1.xpose.msra.mxu0 %v3125
        %3161 = vmatprep.subr.mxu0 0.0
        %3162 = vmatpush1.xpose.msra.mxu0 %v3123
        %3163 = vmatprep.subr.mxu0 0.0
        %3164 = vmatpush2.xpose.msra.mxu0 0.0
        %3165 = vmatprep.subr.mxu0 0.0
        %3166 = vmatpush2.xpose.msra.mxu0 0.0
        %3167 = vmatprep.subr.mxu0 0.0
        %3168 = vmatpush2.xpose.msra.mxu0 0.0
        %3169 = vmatprep.subr.mxu0 0.0
        %3170 = vmatpush2.xpose.msra.mxu0 0.0
        %3171 = vmatprep.subr.mxu0 0.0
        %3172 = vmatpush2.xpose.msra.mxu0 0.0
        %3173 = vmatprep.subr.mxu0 0.0
        %3174 = vmatpush2.xpose.msra.mxu0 0.0
        %3175 = vmatprep.subr.mxu0 0.0
        %3176 = vmatpush2.xpose.msra.mxu0 0.0
        %3177 = vmatprep.subr.mxu0 0.0
        %3178 = vmatpush2.xpose.msra.mxu0 0.0
        %3179 = vmatprep.subr.mxu0 0.0
        %3180 = vmatpush2.xpose.msra.mxu0 0.0
        %3181 = vmatprep.subr.mxu0 0.0
        %3182 = vmatpush2.xpose.msra.mxu0 0.0
        %3183 = vmatprep.subr.mxu0 0.0
        %3184 = vmatpush2.xpose.msra.mxu0 0.0
        %3185 = vmatprep.subr.mxu0 0.0
        %3186 = vmatpush2.xpose.msra.mxu0 0.0
        %3187 = vmatprep.subr.mxu0 0.0
        %3188 = vmatpush2.xpose.msra.mxu0 0.0
        %3189 = vmatprep.subr.mxu0 0.0
        %3190 = vmatpush2.xpose.msra.mxu0 0.0
        %3191 = vmatprep.subr.mxu0 0.0
        %3192 = vmatpush2.xpose.msra.mxu0 0.0
        %3193 = vmatprep.subr.mxu0 0.0
        %3194 = vmatpush2.xpose.msra.mxu0 0.0
        %3195 = vmatprep.mubr.f32.mxu0 0.0
        %3196 = vmatmul.mubr.f32.gmra.mxu0 %v3115
        %v3197 = vpop.f32.mrf.mxu0
        %v3198 = vadd.f32 0.0, %v3197
        %v3199 = vpop.f32.mrf.mxu0
        %3200 = vmatprep.mubr.f32.mxu0 0.0
        %3201 = vmatmul.mubr.f32.gmra.mxu0 %v3117
        %v3202 = vpop.f32.mrf.mxu0
        %v3203 = vadd.f32 0.0, %v3202
        %v3204 = vpop.f32.mrf.mxu0
        %3205 = vmatprep.mubr.f32.mxu0 0.0
        %3206 = vmatmul.mubr.f32.gmra.mxu0 %v3119
        %v3207 = vpop.f32.mrf.mxu0
        %v3208 = vadd.f32 0.0, %v3207
        %v3209 = vpop.f32.mrf.mxu0
        %3210 = vmatprep.mubr.f32.mxu0 0.0
        %3211 = vmatmul.mubr.f32.gmra.mxu0 %v3121
        %v3212 = vpop.f32.mrf.mxu0
        %v3213 = vadd.f32 0.0, %v3212
        %v3214 = vpop.f32.mrf.mxu0
        %3215 = vdwg.mxu0
        %3216 = vrot.lane.b32.xlu0 %v1681, 96
        %v3217 = vpop.permute.xlu0 %3216
        %3218 = vrot.lane.b32.xlu0 %v1687, 96
        %v3219 = vpop.permute.xlu0 %3218
        %3220 = vrot.lane.b32.xlu0 %v1693, 96
        %v3221 = vpop.permute.xlu0 %3220
        %3222 = vrot.lane.b32.xlu0 %v1699, 96
        %v3223 = vpop.permute.xlu0 %3222
        %3224 = vrot.lane.b32.xlu0 %v1683, 96
        %v3225 = vpop.permute.xlu0 %3224
        %3226 = vrot.lane.b32.xlu0 %v1689, 96
        %v3227 = vpop.permute.xlu0 %3226
        %3228 = vrot.lane.b32.xlu0 %v1695, 96
        %v3229 = vpop.permute.xlu0 %3228
        %3230 = vrot.lane.b32.xlu0 %v1701, 96
        %v3231 = vpop.permute.xlu0 %3230
        %v3232 = vsel %vm1848, %v3217, 0
        %v3234 = vsel %vm1848, %v3219, 0
        %v3236 = vsel %vm1848, %v3221, 0
        %v3238 = vsel %vm1848, %v3223, 0
        %v3240 = vsel %vm1848, %v3225, 0
        %v3242 = vsel %vm1848, %v3227, 0
        %v3244 = vsel %vm1848, %v3229, 0
        %v3246 = vsel %vm1848, %v3231, 0
        %3248 = vmatprep.subr.mxu0 0.0
        %3249 = vmatpush1.xpose.msra.mxu0 0.0
        %3250 = vmatprep.subr.mxu0 0.0
        %3251 = vmatpush1.xpose.msra.mxu0 0.0
        %3252 = vmatprep.subr.mxu0 0.0
        %3253 = vmatpush1.xpose.msra.mxu0 0.0
        %3254 = vmatprep.subr.mxu0 0.0
        %3255 = vmatpush1.xpose.msra.mxu0 0.0
        %3256 = vmatprep.subr.mxu0 0.0
        %3257 = vmatpush1.xpose.msra.mxu0 0.0
        %3258 = vmatprep.subr.mxu0 0.0
        %3259 = vmatpush1.xpose.msra.mxu0 0.0
        %3260 = vmatprep.subr.mxu0 0.0
        %3261 = vmatpush1.xpose.msra.mxu0 0.0
        %3262 = vmatprep.subr.mxu0 0.0
        %3263 = vmatpush1.xpose.msra.mxu0 0.0
        %3264 = vmatprep.subr.mxu0 0.0
        %3265 = vmatpush1.xpose.msra.mxu0 0.0
        %3266 = vmatprep.subr.mxu0 0.0
        %3267 = vmatpush1.xpose.msra.mxu0 0.0
        %3268 = vmatprep.subr.mxu0 0.0
        %3269 = vmatpush1.xpose.msra.mxu0 0.0
        %3270 = vmatprep.subr.mxu0 0.0
        %3271 = vmatpush1.xpose.msra.mxu0 0.0
        %3272 = vmatprep.subr.mxu0 0.0
        %3273 = vmatpush1.xpose.msra.mxu0 %v3246
        %3274 = vmatprep.subr.mxu0 0.0
        %3275 = vmatpush1.xpose.msra.mxu0 %v3244
        %3276 = vmatprep.subr.mxu0 0.0
        %3277 = vmatpush1.xpose.msra.mxu0 %v3242
        %3278 = vmatprep.subr.mxu0 0.0
        %3279 = vmatpush1.xpose.msra.mxu0 %v3240
        %3280 = vmatprep.subr.mxu0 0.0
        %3281 = vmatpush2.xpose.msra.mxu0 0.0
        %3282 = vmatprep.subr.mxu0 0.0
        %3283 = vmatpush2.xpose.msra.mxu0 0.0
        %3284 = vmatprep.subr.mxu0 0.0
        %3285 = vmatpush2.xpose.msra.mxu0 0.0
        %3286 = vmatprep.subr.mxu0 0.0
        %3287 = vmatpush2.xpose.msra.mxu0 0.0
        %3288 = vmatprep.subr.mxu0 0.0
        %3289 = vmatpush2.xpose.msra.mxu0 0.0
        %3290 = vmatprep.subr.mxu0 0.0
        %3291 = vmatpush2.xpose.msra.mxu0 0.0
        %3292 = vmatprep.subr.mxu0 0.0
        %3293 = vmatpush2.xpose.msra.mxu0 0.0
        %3294 = vmatprep.subr.mxu0 0.0
        %3295 = vmatpush2.xpose.msra.mxu0 0.0
        %3296 = vmatprep.subr.mxu0 0.0
        %3297 = vmatpush2.xpose.msra.mxu0 0.0
        %3298 = vmatprep.subr.mxu0 0.0
        %3299 = vmatpush2.xpose.msra.mxu0 0.0
        %3300 = vmatprep.subr.mxu0 0.0
        %3301 = vmatpush2.xpose.msra.mxu0 0.0
        %3302 = vmatprep.subr.mxu0 0.0
        %3303 = vmatpush2.xpose.msra.mxu0 0.0
        %3304 = vmatprep.subr.mxu0 0.0
        %3305 = vmatpush2.xpose.msra.mxu0 0.0
        %3306 = vmatprep.subr.mxu0 0.0
        %3307 = vmatpush2.xpose.msra.mxu0 0.0
        %3308 = vmatprep.subr.mxu0 0.0
        %3309 = vmatpush2.xpose.msra.mxu0 0.0
        %3310 = vmatprep.subr.mxu0 0.0
        %3311 = vmatpush2.xpose.msra.mxu0 0.0
        %3312 = vmatprep.mubr.f32.mxu0 0.0
        %3313 = vmatmul.mubr.f32.gmra.mxu0 %v3232
        %v3314 = vpop.f32.mrf.mxu0
        %v3315 = vadd.f32 0.0, %v3314
        %v3316 = vpop.f32.mrf.mxu0
        %3317 = vmatprep.mubr.f32.mxu0 0.0
        %3318 = vmatmul.mubr.f32.gmra.mxu0 %v3234
        %v3319 = vpop.f32.mrf.mxu0
        %v3320 = vadd.f32 0.0, %v3319
        %v3321 = vpop.f32.mrf.mxu0
        %3322 = vmatprep.mubr.f32.mxu0 0.0
        %3323 = vmatmul.mubr.f32.gmra.mxu0 %v3236
        %v3324 = vpop.f32.mrf.mxu0
        %v3325 = vadd.f32 0.0, %v3324
        %v3326 = vpop.f32.mrf.mxu0
        %3327 = vmatprep.mubr.f32.mxu0 0.0
        %3328 = vmatmul.mubr.f32.gmra.mxu0 %v3238
        %v3329 = vpop.f32.mrf.mxu0
        %v3330 = vadd.f32 0.0, %v3329
        %v3331 = vpop.f32.mrf.mxu0
        %3332 = vdwg.mxu0
        %v3333 = vmul.f32 %v2964, 0.17677669
        %v3334 = vmul.f32 %v2969, 0.17677669
        %v3335 = vmul.f32 %v2974, 0.17677669
        %v3336 = vmul.f32 %v2979, 0.17677669
        %v3337 = vmul.f32 %v3081, 0.17677669
        %v3338 = vmul.f32 %v3086, 0.17677669
        %v3339 = vmul.f32 %v3091, 0.17677669
        %v3340 = vmul.f32 %v3096, 0.17677669
        %v3341 = vmul.f32 %v3198, 0.17677669
        %v3342 = vmul.f32 %v3203, 0.17677669
        %v3343 = vmul.f32 %v3208, 0.17677669
        %v3344 = vmul.f32 %v3213, 0.17677669
        %v3345 = vmul.f32 %v3315, 0.17677669
        %v3346 = vmul.f32 %v3320, 0.17677669
        %v3347 = vmul.f32 %v3325, 0.17677669
        %v3348 = vmul.f32 %v3330, 0.17677669
        %v3349 = vsel %vm1848, %v3333, -inf
        %3350 = vmax.xlane.f32.xlu0 %v3349
        %v3351 = vpop.xlane.xlu0 %3350
        %v3352 = vsel %vm1848, %v3334, -inf
        %3353 = vmax.xlane.f32.xlu0 %v3352
        %v3354 = vpop.xlane.xlu0 %3353
        %v3355 = vsel %vm1848, %v3335, -inf
        %3356 = vmax.xlane.f32.xlu0 %v3355
        %v3357 = vpop.xlane.xlu0 %3356
        %v3358 = vsel %vm1848, %v3336, -inf
        %3359 = vmax.xlane.f32.xlu0 %v3358
        %v3360 = vpop.xlane.xlu0 %3359
        %v3361 = vsel %vm1848, %v3337, -inf
        %3362 = vmax.xlane.f32.xlu0 %v3361
        %v3363 = vpop.xlane.xlu0 %3362
        %v3364 = vsel %vm1848, %v3338, -inf
        %3365 = vmax.xlane.f32.xlu0 %v3364
        %v3366 = vpop.xlane.xlu0 %3365
        %v3367 = vsel %vm1848, %v3339, -inf
        %3368 = vmax.xlane.f32.xlu0 %v3367
        %v3369 = vpop.xlane.xlu0 %3368
        %v3370 = vsel %vm1848, %v3340, -inf
        %3371 = vmax.xlane.f32.xlu0 %v3370
        %v3372 = vpop.xlane.xlu0 %3371
        %v3373 = vsel %vm1848, %v3341, -inf
        %3374 = vmax.xlane.f32.xlu0 %v3373
        %v3375 = vpop.xlane.xlu0 %3374
        %v3376 = vsel %vm1848, %v3342, -inf
        %3377 = vmax.xlane.f32.xlu0 %v3376
        %v3378 = vpop.xlane.xlu0 %3377
        %v3379 = vsel %vm1848, %v3343, -inf
        %3380 = vmax.xlane.f32.xlu0 %v3379
        %v3381 = vpop.xlane.xlu0 %3380
        %v3382 = vsel %vm1848, %v3344, -inf
        %3383 = vmax.xlane.f32.xlu0 %v3382
        %v3384 = vpop.xlane.xlu0 %3383
        %v3385 = vsel %vm1848, %v3345, -inf
        %3386 = vmax.xlane.f32.xlu0 %v3385
        %v3387 = vpop.xlane.xlu0 %3386
        %v3388 = vsel %vm1848, %v3346, -inf
        %3389 = vmax.xlane.f32.xlu0 %v3388
        %v3390 = vpop.xlane.xlu0 %3389
        %v3391 = vsel %vm1848, %v3347, -inf
        %3392 = vmax.xlane.f32.xlu0 %v3391
        %v3393 = vpop.xlane.xlu0 %3392
        %v3394 = vsel %vm1848, %v3348, -inf
        %3395 = vmax.xlane.f32.xlu0 %v3394
        %v3396 = vpop.xlane.xlu0 %3395
        %v3397 = vsub.f32 %v3333, %v3351
        %v3398 = vsub.f32 %v3334, %v3354
        %v3399 = vsub.f32 %v3335, %v3357
        %v3400 = vsub.f32 %v3336, %v3360
        %v3401 = vsub.f32 %v3337, %v3363
        %v3402 = vsub.f32 %v3338, %v3366
        %v3403 = vsub.f32 %v3339, %v3369
        %v3404 = vsub.f32 %v3340, %v3372
        %v3405 = vsub.f32 %v3341, %v3375
        %v3406 = vsub.f32 %v3342, %v3378
        %v3407 = vsub.f32 %v3343, %v3381
        %v3408 = vsub.f32 %v3344, %v3384
        %v3409 = vsub.f32 %v3345, %v3387
        %v3410 = vsub.f32 %v3346, %v3390
        %v3411 = vsub.f32 %v3347, %v3393
        %v3412 = vsub.f32 %v3348, %v3396
        %v3413 = vmul.f32 %v3397, 1.442695
        %v3414 = vpow.pop %v3413
        %v3415 = vmul.f32 %v3398, 1.442695
        %v3416 = vpow.pop %v3415
        %v3417 = vmul.f32 %v3399, 1.442695
        %v3418 = vpow.pop %v3417
        %v3419 = vmul.f32 %v3400, 1.442695
        %v3420 = vpow.pop %v3419
        %v3421 = vmul.f32 %v3401, 1.442695
        %v3422 = vpow.pop %v3421
        %v3423 = vmul.f32 %v3402, 1.442695
        %v3424 = vpow.pop %v3423
        %v3425 = vmul.f32 %v3403, 1.442695
        %v3426 = vpow.pop %v3425
        %v3427 = vmul.f32 %v3404, 1.442695
        %v3428 = vpow.pop %v3427
        %v3429 = vmul.f32 %v3405, 1.442695
        %v3430 = vpow.pop %v3429
        %v3431 = vmul.f32 %v3406, 1.442695
        %v3432 = vpow.pop %v3431
        %v3433 = vmul.f32 %v3407, 1.442695
        %v3434 = vpow.pop %v3433
        %v3435 = vmul.f32 %v3408, 1.442695
        %v3436 = vpow.pop %v3435
        %v3437 = vmul.f32 %v3409, 1.442695
        %v3438 = vpow.pop %v3437
        %v3439 = vmul.f32 %v3410, 1.442695
        %v3440 = vpow.pop %v3439
        %v3441 = vmul.f32 %v3411, 1.442695
        %v3442 = vpow.pop %v3441
        %v3443 = vmul.f32 %v3412, 1.442695
        %v3444 = vpow.pop %v3443
        %v3445 = vsel %vm1848, %v3414, 0.0
        %3446 = vadd.xlane.f32.xlu0 %v3445
        %v3447 = vpop.xlane.xlu0 %3446
        %v3448 = vsel %vm1848, %v3416, 0.0
        %3449 = vadd.xlane.f32.xlu0 %v3448
        %v3450 = vpop.xlane.xlu0 %3449
        %v3451 = vsel %vm1848, %v3418, 0.0
        %3452 = vadd.xlane.f32.xlu0 %v3451
        %v3453 = vpop.xlane.xlu0 %3452
        %v3454 = vsel %vm1848, %v3420, 0.0
        %3455 = vadd.xlane.f32.xlu0 %v3454
        %v3456 = vpop.xlane.xlu0 %3455
        %v3457 = vsel %vm1848, %v3422, 0.0
        %3458 = vadd.xlane.f32.xlu0 %v3457
        %v3459 = vpop.xlane.xlu0 %3458
        %v3460 = vsel %vm1848, %v3424, 0.0
        %3461 = vadd.xlane.f32.xlu0 %v3460
        %v3462 = vpop.xlane.xlu0 %3461
        %v3463 = vsel %vm1848, %v3426, 0.0
        %3464 = vadd.xlane.f32.xlu0 %v3463
        %v3465 = vpop.xlane.xlu0 %3464
        %v3466 = vsel %vm1848, %v3428, 0.0
        %3467 = vadd.xlane.f32.xlu0 %v3466
        %v3468 = vpop.xlane.xlu0 %3467
        %v3469 = vsel %vm1848, %v3430, 0.0
        %3470 = vadd.xlane.f32.xlu0 %v3469
        %v3471 = vpop.xlane.xlu0 %3470
        %v3472 = vsel %vm1848, %v3432, 0.0
        %3473 = vadd.xlane.f32.xlu0 %v3472
        %v3474 = vpop.xlane.xlu0 %3473
        %v3475 = vsel %vm1848, %v3434, 0.0
        %3476 = vadd.xlane.f32.xlu0 %v3475
        %v3477 = vpop.xlane.xlu0 %3476
        %v3478 = vsel %vm1848, %v3436, 0.0
        %3479 = vadd.xlane.f32.xlu0 %v3478
        %v3480 = vpop.xlane.xlu0 %3479
        %v3481 = vsel %vm1848, %v3438, 0.0
        %3482 = vadd.xlane.f32.xlu0 %v3481
        %v3483 = vpop.xlane.xlu0 %3482
        %v3484 = vsel %vm1848, %v3440, 0.0
        %3485 = vadd.xlane.f32.xlu0 %v3484
        %v3486 = vpop.xlane.xlu0 %3485
        %v3487 = vsel %vm1848, %v3442, 0.0
        %3488 = vadd.xlane.f32.xlu0 %v3487
        %v3489 = vpop.xlane.xlu0 %3488
        %v3490 = vsel %vm1848, %v3444, 0.0
        %3491 = vadd.xlane.f32.xlu0 %v3490
        %v3492 = vpop.xlane.xlu0 %3491
        %v3493 = vrcp.pop %v3447
        %v3494 = vmul.f32 %v3414, %v3493
        %v3495 = vrcp.pop %v3450
        %v3496 = vmul.f32 %v3416, %v3495
        %v3497 = vrcp.pop %v3453
        %v3498 = vmul.f32 %v3418, %v3497
        %v3499 = vrcp.pop %v3456
        %v3500 = vmul.f32 %v3420, %v3499
        %v3501 = vrcp.pop %v3459
        %v3502 = vmul.f32 %v3422, %v3501
        %v3503 = vrcp.pop %v3462
        %v3504 = vmul.f32 %v3424, %v3503
        %v3505 = vrcp.pop %v3465
        %v3506 = vmul.f32 %v3426, %v3505
        %v3507 = vrcp.pop %v3468
        %v3508 = vmul.f32 %v3428, %v3507
        %v3509 = vrcp.pop %v3471
        %v3510 = vmul.f32 %v3430, %v3509
        %v3511 = vrcp.pop %v3474
        %v3512 = vmul.f32 %v3432, %v3511
        %v3513 = vrcp.pop %v3477
        %v3514 = vmul.f32 %v3434, %v3513
        %v3515 = vrcp.pop %v3480
        %v3516 = vmul.f32 %v3436, %v3515
        %v3517 = vrcp.pop %v3483
        %v3518 = vmul.f32 %v3438, %v3517
        %v3519 = vrcp.pop %v3486
        %v3520 = vmul.f32 %v3440, %v3519
        %v3521 = vrcp.pop %v3489
        %v3522 = vmul.f32 %v3442, %v3521
        %v3523 = vrcp.pop %v3492
        %v3524 = vmul.f32 %v3444, %v3523
        %3529 = vrot.lane.b32.xlu0 %v1770, 96
        %v3530 = vpop.permute.xlu0 %3529
        %3531 = vrot.lane.b32.xlu0 %v1775, 96
        %v3532 = vpop.permute.xlu0 %3531
        %3533 = vrot.lane.b32.xlu0 %v1780, 96
        %v3534 = vpop.permute.xlu0 %3533
        %3535 = vrot.lane.b32.xlu0 %v1785, 96
        %v3536 = vpop.permute.xlu0 %3535
        %v3542 = vsel %vm1848, %v3494, 0
        %v3545 = vsel %vm1848, %v3496, 0
        %v3548 = vsel %vm1848, %v3498, 0
        %v3551 = vsel %vm1848, %v3500, 0
        %3553 = vmatprep.subr.mxu0 0.0
        %3554 = vmatpush1.msra.mxu0 0.0
        %3555 = vmatprep.subr.mxu0 0.0
        %3556 = vmatpush1.msra.mxu0 0.0
        %3557 = vmatprep.subr.mxu0 0.0
        %3558 = vmatpush1.msra.mxu0 0.0
        %3559 = vmatprep.subr.mxu0 0.0
        %3560 = vmatpush1.msra.mxu0 0.0
        %3561 = vmatprep.subr.mxu0 0.0
        %3562 = vmatpush1.msra.mxu0 0.0
        %3563 = vmatprep.subr.mxu0 0.0
        %3564 = vmatpush1.msra.mxu0 0.0
        %3565 = vmatprep.subr.mxu0 0.0
        %3566 = vmatpush1.msra.mxu0 0.0
        %3567 = vmatprep.subr.mxu0 0.0
        %3568 = vmatpush1.msra.mxu0 0.0
        %3569 = vmatprep.subr.mxu0 0.0
        %3570 = vmatpush1.msra.mxu0 0.0
        %3571 = vmatprep.subr.mxu0 0.0
        %3572 = vmatpush1.msra.mxu0 0.0
        %3573 = vmatprep.subr.mxu0 0.0
        %3574 = vmatpush1.msra.mxu0 0.0
        %3575 = vmatprep.subr.mxu0 0.0
        %3576 = vmatpush1.msra.mxu0 0.0
        %3577 = vmatprep.subr.mxu0 0.0
        %3578 = vmatpush1.msra.mxu0 %v3536
        %3579 = vmatprep.subr.mxu0 0.0
        %3580 = vmatpush1.msra.mxu0 %v3534
        %3581 = vmatprep.subr.mxu0 0.0
        %3582 = vmatpush1.msra.mxu0 %v3532
        %3583 = vmatprep.subr.mxu0 0.0
        %3584 = vmatpush1.msra.mxu0 %v3530
        %3585 = vmatprep.subr.mxu0 0.0
        %3586 = vmatpush2.msra.mxu0 0.0
        %3587 = vmatprep.subr.mxu0 0.0
        %3588 = vmatpush2.msra.mxu0 0.0
        %3589 = vmatprep.subr.mxu0 0.0
        %3590 = vmatpush2.msra.mxu0 0.0
        %3591 = vmatprep.subr.mxu0 0.0
        %3592 = vmatpush2.msra.mxu0 0.0
        %3593 = vmatprep.subr.mxu0 0.0
        %3594 = vmatpush2.msra.mxu0 0.0
        %3595 = vmatprep.subr.mxu0 0.0
        %3596 = vmatpush2.msra.mxu0 0.0
        %3597 = vmatprep.subr.mxu0 0.0
        %3598 = vmatpush2.msra.mxu0 0.0
        %3599 = vmatprep.subr.mxu0 0.0
        %3600 = vmatpush2.msra.mxu0 0.0
        %3601 = vmatprep.subr.mxu0 0.0
        %3602 = vmatpush2.msra.mxu0 0.0
        %3603 = vmatprep.subr.mxu0 0.0
        %3604 = vmatpush2.msra.mxu0 0.0
        %3605 = vmatprep.subr.mxu0 0.0
        %3606 = vmatpush2.msra.mxu0 0.0
        %3607 = vmatprep.subr.mxu0 0.0
        %3608 = vmatpush2.msra.mxu0 0.0
        %3609 = vmatprep.subr.mxu0 0.0
        %3610 = vmatpush2.msra.mxu0 0.0
        %3611 = vmatprep.subr.mxu0 0.0
        %3612 = vmatpush2.msra.mxu0 0.0
        %3613 = vmatprep.subr.mxu0 0.0
        %3614 = vmatpush2.msra.mxu0 0.0
        %3615 = vmatprep.subr.mxu0 0.0
        %3616 = vmatpush2.msra.mxu0 0.0
        %3617 = vmatprep.mubr.f32.mxu0 0.0
        %3618 = vmatmul.mubr.f32.gmra.mxu0 %v3542
        %v3619 = vpop.f32.mrf.mxu0
        %v3620 = vadd.f32 0.0, %v3619
        %v3621 = vpop.f32.mrf.mxu0
        %3622 = vmatprep.mubr.f32.mxu0 0.0
        %3623 = vmatmul.mubr.f32.gmra.mxu0 %v3545
        %v3624 = vpop.f32.mrf.mxu0
        %v3625 = vadd.f32 0.0, %v3624
        %v3626 = vpop.f32.mrf.mxu0
        %3627 = vmatprep.mubr.f32.mxu0 0.0
        %3628 = vmatmul.mubr.f32.gmra.mxu0 %v3548
        %v3629 = vpop.f32.mrf.mxu0
        %v3630 = vadd.f32 0.0, %v3629
        %v3631 = vpop.f32.mrf.mxu0
        %3632 = vmatprep.mubr.f32.mxu0 0.0
        %3633 = vmatmul.mubr.f32.gmra.mxu0 %v3551
        %v3634 = vpop.f32.mrf.mxu0
        %v3635 = vadd.f32 0.0, %v3634
        %v3636 = vpop.f32.mrf.mxu0
        %3637 = vdwg.mxu0
        %3642 = vrot.lane.b32.xlu0 %v1790, 96
        %v3643 = vpop.permute.xlu0 %3642
        %3644 = vrot.lane.b32.xlu0 %v1795, 96
        %v3645 = vpop.permute.xlu0 %3644
        %3646 = vrot.lane.b32.xlu0 %v1800, 96
        %v3647 = vpop.permute.xlu0 %3646
        %3648 = vrot.lane.b32.xlu0 %v1805, 96
        %v3649 = vpop.permute.xlu0 %3648
        %v3655 = vsel %vm1848, %v3502, 0
        %v3658 = vsel %vm1848, %v3504, 0
        %v3661 = vsel %vm1848, %v3506, 0
        %v3664 = vsel %vm1848, %v3508, 0
        %3666 = vmatprep.subr.mxu0 0.0
        %3667 = vmatpush1.msra.mxu0 0.0
        %3668 = vmatprep.subr.mxu0 0.0
        %3669 = vmatpush1.msra.mxu0 0.0
        %3670 = vmatprep.subr.mxu0 0.0
        %3671 = vmatpush1.msra.mxu0 0.0
        %3672 = vmatprep.subr.mxu0 0.0
        %3673 = vmatpush1.msra.mxu0 0.0
        %3674 = vmatprep.subr.mxu0 0.0
        %3675 = vmatpush1.msra.mxu0 0.0
        %3676 = vmatprep.subr.mxu0 0.0
        %3677 = vmatpush1.msra.mxu0 0.0
        %3678 = vmatprep.subr.mxu0 0.0
        %3679 = vmatpush1.msra.mxu0 0.0
        %3680 = vmatprep.subr.mxu0 0.0
        %3681 = vmatpush1.msra.mxu0 0.0
        %3682 = vmatprep.subr.mxu0 0.0
        %3683 = vmatpush1.msra.mxu0 0.0
        %3684 = vmatprep.subr.mxu0 0.0
        %3685 = vmatpush1.msra.mxu0 0.0
        %3686 = vmatprep.subr.mxu0 0.0
        %3687 = vmatpush1.msra.mxu0 0.0
        %3688 = vmatprep.subr.mxu0 0.0
        %3689 = vmatpush1.msra.mxu0 0.0
        %3690 = vmatprep.subr.mxu0 0.0
        %3691 = vmatpush1.msra.mxu0 %v3649
        %3692 = vmatprep.subr.mxu0 0.0
        %3693 = vmatpush1.msra.mxu0 %v3647
        %3694 = vmatprep.subr.mxu0 0.0
        %3695 = vmatpush1.msra.mxu0 %v3645
        %3696 = vmatprep.subr.mxu0 0.0
        %3697 = vmatpush1.msra.mxu0 %v3643
        %3698 = vmatprep.subr.mxu0 0.0
        %3699 = vmatpush2.msra.mxu0 0.0
        %3700 = vmatprep.subr.mxu0 0.0
        %3701 = vmatpush2.msra.mxu0 0.0
        %3702 = vmatprep.subr.mxu0 0.0
        %3703 = vmatpush2.msra.mxu0 0.0
        %3704 = vmatprep.subr.mxu0 0.0
        %3705 = vmatpush2.msra.mxu0 0.0
        %3706 = vmatprep.subr.mxu0 0.0
        %3707 = vmatpush2.msra.mxu0 0.0
        %3708 = vmatprep.subr.mxu0 0.0
        %3709 = vmatpush2.msra.mxu0 0.0
        %3710 = vmatprep.subr.mxu0 0.0
        %3711 = vmatpush2.msra.mxu0 0.0
        %3712 = vmatprep.subr.mxu0 0.0
        %3713 = vmatpush2.msra.mxu0 0.0
        %3714 = vmatprep.subr.mxu0 0.0
        %3715 = vmatpush2.msra.mxu0 0.0
        %3716 = vmatprep.subr.mxu0 0.0
        %3717 = vmatpush2.msra.mxu0 0.0
        %3718 = vmatprep.subr.mxu0 0.0
        %3719 = vmatpush2.msra.mxu0 0.0
        %3720 = vmatprep.subr.mxu0 0.0
        %3721 = vmatpush2.msra.mxu0 0.0
        %3722 = vmatprep.subr.mxu0 0.0
        %3723 = vmatpush2.msra.mxu0 0.0
        %3724 = vmatprep.subr.mxu0 0.0
        %3725 = vmatpush2.msra.mxu0 0.0
        %3726 = vmatprep.subr.mxu0 0.0
        %3727 = vmatpush2.msra.mxu0 0.0
        %3728 = vmatprep.subr.mxu0 0.0
        %3729 = vmatpush2.msra.mxu0 0.0
        %3730 = vmatprep.mubr.f32.mxu0 0.0
        %3731 = vmatmul.mubr.f32.gmra.mxu0 %v3655
        %v3732 = vpop.f32.mrf.mxu0
        %v3733 = vadd.f32 0.0, %v3732
        %v3734 = vpop.f32.mrf.mxu0
        %3735 = vmatprep.mubr.f32.mxu0 0.0
        %3736 = vmatmul.mubr.f32.gmra.mxu0 %v3658
        %v3737 = vpop.f32.mrf.mxu0
        %v3738 = vadd.f32 0.0, %v3737
        %v3739 = vpop.f32.mrf.mxu0
        %3740 = vmatprep.mubr.f32.mxu0 0.0
        %3741 = vmatmul.mubr.f32.gmra.mxu0 %v3661
        %v3742 = vpop.f32.mrf.mxu0
        %v3743 = vadd.f32 0.0, %v3742
        %v3744 = vpop.f32.mrf.mxu0
        %3745 = vmatprep.mubr.f32.mxu0 0.0
        %3746 = vmatmul.mubr.f32.gmra.mxu0 %v3664
        %v3747 = vpop.f32.mrf.mxu0
        %v3748 = vadd.f32 0.0, %v3747
        %v3749 = vpop.f32.mrf.mxu0
        %3750 = vdwg.mxu0
        %3755 = vrot.lane.b32.xlu0 %v1810, 96
        %v3756 = vpop.permute.xlu0 %3755
        %3757 = vrot.lane.b32.xlu0 %v1815, 96
        %v3758 = vpop.permute.xlu0 %3757
        %3759 = vrot.lane.b32.xlu0 %v1820, 96
        %v3760 = vpop.permute.xlu0 %3759
        %3761 = vrot.lane.b32.xlu0 %v1825, 96
        %v3762 = vpop.permute.xlu0 %3761
        %v3768 = vsel %vm1848, %v3510, 0
        %v3771 = vsel %vm1848, %v3512, 0
        %v3774 = vsel %vm1848, %v3514, 0
        %v3777 = vsel %vm1848, %v3516, 0
        %3779 = vmatprep.subr.mxu0 0.0
        %3780 = vmatpush1.msra.mxu0 0.0
        %3781 = vmatprep.subr.mxu0 0.0
        %3782 = vmatpush1.msra.mxu0 0.0
        %3783 = vmatprep.subr.mxu0 0.0
        %3784 = vmatpush1.msra.mxu0 0.0
        %3785 = vmatprep.subr.mxu0 0.0
        %3786 = vmatpush1.msra.mxu0 0.0
        %3787 = vmatprep.subr.mxu0 0.0
        %3788 = vmatpush1.msra.mxu0 0.0
        %3789 = vmatprep.subr.mxu0 0.0
        %3790 = vmatpush1.msra.mxu0 0.0
        %3791 = vmatprep.subr.mxu0 0.0
        %3792 = vmatpush1.msra.mxu0 0.0
        %3793 = vmatprep.subr.mxu0 0.0
        %3794 = vmatpush1.msra.mxu0 0.0
        %3795 = vmatprep.subr.mxu0 0.0
        %3796 = vmatpush1.msra.mxu0 0.0
        %3797 = vmatprep.subr.mxu0 0.0
        %3798 = vmatpush1.msra.mxu0 0.0
        %3799 = vmatprep.subr.mxu0 0.0
        %3800 = vmatpush1.msra.mxu0 0.0
        %3801 = vmatprep.subr.mxu0 0.0
        %3802 = vmatpush1.msra.mxu0 0.0
        %3803 = vmatprep.subr.mxu0 0.0
        %3804 = vmatpush1.msra.mxu0 %v3762
        %3805 = vmatprep.subr.mxu0 0.0
        %3806 = vmatpush1.msra.mxu0 %v3760
        %3807 = vmatprep.subr.mxu0 0.0
        %3808 = vmatpush1.msra.mxu0 %v3758
        %3809 = vmatprep.subr.mxu0 0.0
        %3810 = vmatpush1.msra.mxu0 %v3756
        %3811 = vmatprep.subr.mxu0 0.0
        %3812 = vmatpush2.msra.mxu0 0.0
        %3813 = vmatprep.subr.mxu0 0.0
        %3814 = vmatpush2.msra.mxu0 0.0
        %3815 = vmatprep.subr.mxu0 0.0
        %3816 = vmatpush2.msra.mxu0 0.0
        %3817 = vmatprep.subr.mxu0 0.0
        %3818 = vmatpush2.msra.mxu0 0.0
        %3819 = vmatprep.subr.mxu0 0.0
        %3820 = vmatpush2.msra.mxu0 0.0
        %3821 = vmatprep.subr.mxu0 0.0
        %3822 = vmatpush2.msra.mxu0 0.0
        %3823 = vmatprep.subr.mxu0 0.0
        %3824 = vmatpush2.msra.mxu0 0.0
        %3825 = vmatprep.subr.mxu0 0.0
        %3826 = vmatpush2.msra.mxu0 0.0
        %3827 = vmatprep.subr.mxu0 0.0
        %3828 = vmatpush2.msra.mxu0 0.0
        %3829 = vmatprep.subr.mxu0 0.0
        %3830 = vmatpush2.msra.mxu0 0.0
        %3831 = vmatprep.subr.mxu0 0.0
        %3832 = vmatpush2.msra.mxu0 0.0
        %3833 = vmatprep.subr.mxu0 0.0
        %3834 = vmatpush2.msra.mxu0 0.0
        %3835 = vmatprep.subr.mxu0 0.0
        %3836 = vmatpush2.msra.mxu0 0.0
        %3837 = vmatprep.subr.mxu0 0.0
        %3838 = vmatpush2.msra.mxu0 0.0
        %3839 = vmatprep.subr.mxu0 0.0
        %3840 = vmatpush2.msra.mxu0 0.0
        %3841 = vmatprep.subr.mxu0 0.0
        %3842 = vmatpush2.msra.mxu0 0.0
        %3843 = vmatprep.mubr.f32.mxu0 0.0
        %3844 = vmatmul.mubr.f32.gmra.mxu0 %v3768
        %v3845 = vpop.f32.mrf.mxu0
        %v3846 = vadd.f32 0.0, %v3845
        %v3847 = vpop.f32.mrf.mxu0
        %3848 = vmatprep.mubr.f32.mxu0 0.0
        %3849 = vmatmul.mubr.f32.gmra.mxu0 %v3771
        %v3850 = vpop.f32.mrf.mxu0
        %v3851 = vadd.f32 0.0, %v3850
        %v3852 = vpop.f32.mrf.mxu0
        %3853 = vmatprep.mubr.f32.mxu0 0.0
        %3854 = vmatmul.mubr.f32.gmra.mxu0 %v3774
        %v3855 = vpop.f32.mrf.mxu0
        %v3856 = vadd.f32 0.0, %v3855
        %v3857 = vpop.f32.mrf.mxu0
        %3858 = vmatprep.mubr.f32.mxu0 0.0
        %3859 = vmatmul.mubr.f32.gmra.mxu0 %v3777
        %v3860 = vpop.f32.mrf.mxu0
        %v3861 = vadd.f32 0.0, %v3860
        %v3862 = vpop.f32.mrf.mxu0
        %3863 = vdwg.mxu0
        %3868 = vrot.lane.b32.xlu0 %v1830, 96
        %v3869 = vpop.permute.xlu0 %3868
        %3870 = vrot.lane.b32.xlu0 %v1835, 96
        %v3871 = vpop.permute.xlu0 %3870
        %3872 = vrot.lane.b32.xlu0 %v1840, 96
        %v3873 = vpop.permute.xlu0 %3872
        %3874 = vrot.lane.b32.xlu0 %v1845, 96
        %v3875 = vpop.permute.xlu0 %3874
        %v3881 = vsel %vm1848, %v3518, 0
        %v3884 = vsel %vm1848, %v3520, 0
        %v3887 = vsel %vm1848, %v3522, 0
        %v3890 = vsel %vm1848, %v3524, 0
        %3892 = vmatprep.subr.mxu0 0.0
        %3893 = vmatpush1.msra.mxu0 0.0
        %3894 = vmatprep.subr.mxu0 0.0
        %3895 = vmatpush1.msra.mxu0 0.0
        %3896 = vmatprep.subr.mxu0 0.0
        %3897 = vmatpush1.msra.mxu0 0.0
        %3898 = vmatprep.subr.mxu0 0.0
        %3899 = vmatpush1.msra.mxu0 0.0
        %3900 = vmatprep.subr.mxu0 0.0
        %3901 = vmatpush1.msra.mxu0 0.0
        %3902 = vmatprep.subr.mxu0 0.0
        %3903 = vmatpush1.msra.mxu0 0.0
        %3904 = vmatprep.subr.mxu0 0.0
        %3905 = vmatpush1.msra.mxu0 0.0
        %3906 = vmatprep.subr.mxu0 0.0
        %3907 = vmatpush1.msra.mxu0 0.0
        %3908 = vmatprep.subr.mxu0 0.0
        %3909 = vmatpush1.msra.mxu0 0.0
        %3910 = vmatprep.subr.mxu0 0.0
        %3911 = vmatpush1.msra.mxu0 0.0
        %3912 = vmatprep.subr.mxu0 0.0
        %3913 = vmatpush1.msra.mxu0 0.0
        %3914 = vmatprep.subr.mxu0 0.0
        %3915 = vmatpush1.msra.mxu0 0.0
        %3916 = vmatprep.subr.mxu0 0.0
        %3917 = vmatpush1.msra.mxu0 %v3875
        %3918 = vmatprep.subr.mxu0 0.0
        %3919 = vmatpush1.msra.mxu0 %v3873
        %3920 = vmatprep.subr.mxu0 0.0
        %3921 = vmatpush1.msra.mxu0 %v3871
        %3922 = vmatprep.subr.mxu0 0.0
        %3923 = vmatpush1.msra.mxu0 %v3869
        %3924 = vmatprep.subr.mxu0 0.0
        %3925 = vmatpush2.msra.mxu0 0.0
        %3926 = vmatprep.subr.mxu0 0.0
        %3927 = vmatpush2.msra.mxu0 0.0
        %3928 = vmatprep.subr.mxu0 0.0
        %3929 = vmatpush2.msra.mxu0 0.0
        %3930 = vmatprep.subr.mxu0 0.0
        %3931 = vmatpush2.msra.mxu0 0.0
        %3932 = vmatprep.subr.mxu0 0.0
        %3933 = vmatpush2.msra.mxu0 0.0
        %3934 = vmatprep.subr.mxu0 0.0
        %3935 = vmatpush2.msra.mxu0 0.0
        %3936 = vmatprep.subr.mxu0 0.0
        %3937 = vmatpush2.msra.mxu0 0.0
        %3938 = vmatprep.subr.mxu0 0.0
        %3939 = vmatpush2.msra.mxu0 0.0
        %3940 = vmatprep.subr.mxu0 0.0
        %3941 = vmatpush2.msra.mxu0 0.0
        %3942 = vmatprep.subr.mxu0 0.0
        %3943 = vmatpush2.msra.mxu0 0.0
        %3944 = vmatprep.subr.mxu0 0.0
        %3945 = vmatpush2.msra.mxu0 0.0
        %3946 = vmatprep.subr.mxu0 0.0
        %3947 = vmatpush2.msra.mxu0 0.0
        %3948 = vmatprep.subr.mxu0 0.0
        %3949 = vmatpush2.msra.mxu0 0.0
        %3950 = vmatprep.subr.mxu0 0.0
        %3951 = vmatpush2.msra.mxu0 0.0
        %3952 = vmatprep.subr.mxu0 0.0
        %3953 = vmatpush2.msra.mxu0 0.0
        %3954 = vmatprep.subr.mxu0 0.0
        %3955 = vmatpush2.msra.mxu0 0.0
        %3956 = vmatprep.mubr.f32.mxu0 0.0
        %3957 = vmatmul.mubr.f32.gmra.mxu0 %v3881
        %v3958 = vpop.f32.mrf.mxu0
        %v3959 = vadd.f32 0.0, %v3958
        %v3960 = vpop.f32.mrf.mxu0
        %3961 = vmatprep.mubr.f32.mxu0 0.0
        %3962 = vmatmul.mubr.f32.gmra.mxu0 %v3884
        %v3963 = vpop.f32.mrf.mxu0
        %v3964 = vadd.f32 0.0, %v3963
        %v3965 = vpop.f32.mrf.mxu0
        %3966 = vmatprep.mubr.f32.mxu0 0.0
        %3967 = vmatmul.mubr.f32.gmra.mxu0 %v3887
        %v3968 = vpop.f32.mrf.mxu0
        %v3969 = vadd.f32 0.0, %v3968
        %v3970 = vpop.f32.mrf.mxu0
        %3971 = vmatprep.mubr.f32.mxu0 0.0
        %3972 = vmatmul.mubr.f32.gmra.mxu0 %v3890
        %v3973 = vpop.f32.mrf.mxu0
        %v3974 = vadd.f32 0.0, %v3973
        %v3975 = vpop.f32.mrf.mxu0
        %3976 = vdwg.mxu0
        %3977 = vrot.lane.b32.xlu0 %v1609, 64
        %v3978 = vpop.permute.xlu0 %3977
        %3979 = vrot.lane.b32.xlu0 %v1615, 64
        %v3980 = vpop.permute.xlu0 %3979
        %3981 = vrot.lane.b32.xlu0 %v1621, 64
        %v3982 = vpop.permute.xlu0 %3981
        %3983 = vrot.lane.b32.xlu0 %v1627, 64
        %v3984 = vpop.permute.xlu0 %3983
        %3985 = vrot.lane.b32.xlu0 %v1611, 64
        %v3986 = vpop.permute.xlu0 %3985
        %3987 = vrot.lane.b32.xlu0 %v1617, 64
        %v3988 = vpop.permute.xlu0 %3987
        %3989 = vrot.lane.b32.xlu0 %v1623, 64
        %v3990 = vpop.permute.xlu0 %3989
        %3991 = vrot.lane.b32.xlu0 %v1629, 64
        %v3992 = vpop.permute.xlu0 %3991
        %v3993 = vsel %vm1848, %v3978, 0
        %v3995 = vsel %vm1848, %v3980, 0
        %v3997 = vsel %vm1848, %v3982, 0
        %v3999 = vsel %vm1848, %v3984, 0
        %v4001 = vsel %vm1848, %v3986, 0
        %v4003 = vsel %vm1848, %v3988, 0
        %v4005 = vsel %vm1848, %v3990, 0
        %v4007 = vsel %vm1848, %v3992, 0
        %4009 = vmatprep.subr.mxu0 0.0
        %4010 = vmatpush1.xpose.msra.mxu0 0.0
        %4011 = vmatprep.subr.mxu0 0.0
        %4012 = vmatpush1.xpose.msra.mxu0 0.0
        %4013 = vmatprep.subr.mxu0 0.0
        %4014 = vmatpush1.xpose.msra.mxu0 0.0
        %4015 = vmatprep.subr.mxu0 0.0
        %4016 = vmatpush1.xpose.msra.mxu0 0.0
        %4017 = vmatprep.subr.mxu0 0.0
        %4018 = vmatpush1.xpose.msra.mxu0 0.0
        %4019 = vmatprep.subr.mxu0 0.0
        %4020 = vmatpush1.xpose.msra.mxu0 0.0
        %4021 = vmatprep.subr.mxu0 0.0
        %4022 = vmatpush1.xpose.msra.mxu0 0.0
        %4023 = vmatprep.subr.mxu0 0.0
        %4024 = vmatpush1.xpose.msra.mxu0 0.0
        %4025 = vmatprep.subr.mxu0 0.0
        %4026 = vmatpush1.xpose.msra.mxu0 0.0
        %4027 = vmatprep.subr.mxu0 0.0
        %4028 = vmatpush1.xpose.msra.mxu0 0.0
        %4029 = vmatprep.subr.mxu0 0.0
        %4030 = vmatpush1.xpose.msra.mxu0 0.0
        %4031 = vmatprep.subr.mxu0 0.0
        %4032 = vmatpush1.xpose.msra.mxu0 0.0
        %4033 = vmatprep.subr.mxu0 0.0
        %4034 = vmatpush1.xpose.msra.mxu0 %v4007
        %4035 = vmatprep.subr.mxu0 0.0
        %4036 = vmatpush1.xpose.msra.mxu0 %v4005
        %4037 = vmatprep.subr.mxu0 0.0
        %4038 = vmatpush1.xpose.msra.mxu0 %v4003
        %4039 = vmatprep.subr.mxu0 0.0
        %4040 = vmatpush1.xpose.msra.mxu0 %v4001
        %4041 = vmatprep.subr.mxu0 0.0
        %4042 = vmatpush2.xpose.msra.mxu0 0.0
        %4043 = vmatprep.subr.mxu0 0.0
        %4044 = vmatpush2.xpose.msra.mxu0 0.0
        %4045 = vmatprep.subr.mxu0 0.0
        %4046 = vmatpush2.xpose.msra.mxu0 0.0
        %4047 = vmatprep.subr.mxu0 0.0
        %4048 = vmatpush2.xpose.msra.mxu0 0.0
        %4049 = vmatprep.subr.mxu0 0.0
        %4050 = vmatpush2.xpose.msra.mxu0 0.0
        %4051 = vmatprep.subr.mxu0 0.0
        %4052 = vmatpush2.xpose.msra.mxu0 0.0
        %4053 = vmatprep.subr.mxu0 0.0
        %4054 = vmatpush2.xpose.msra.mxu0 0.0
        %4055 = vmatprep.subr.mxu0 0.0
        %4056 = vmatpush2.xpose.msra.mxu0 0.0
        %4057 = vmatprep.subr.mxu0 0.0
        %4058 = vmatpush2.xpose.msra.mxu0 0.0
        %4059 = vmatprep.subr.mxu0 0.0
        %4060 = vmatpush2.xpose.msra.mxu0 0.0
        %4061 = vmatprep.subr.mxu0 0.0
        %4062 = vmatpush2.xpose.msra.mxu0 0.0
        %4063 = vmatprep.subr.mxu0 0.0
        %4064 = vmatpush2.xpose.msra.mxu0 0.0
        %4065 = vmatprep.subr.mxu0 0.0
        %4066 = vmatpush2.xpose.msra.mxu0 0.0
        %4067 = vmatprep.subr.mxu0 0.0
        %4068 = vmatpush2.xpose.msra.mxu0 0.0
        %4069 = vmatprep.subr.mxu0 0.0
        %4070 = vmatpush2.xpose.msra.mxu0 0.0
        %4071 = vmatprep.subr.mxu0 0.0
        %4072 = vmatpush2.xpose.msra.mxu0 0.0
        %4073 = vmatprep.mubr.f32.mxu0 0.0
        %4074 = vmatmul.mubr.f32.gmra.mxu0 %v3993
        %v4075 = vpop.f32.mrf.mxu0
        %v4076 = vadd.f32 0.0, %v4075
        %v4077 = vpop.f32.mrf.mxu0
        %4078 = vmatprep.mubr.f32.mxu0 0.0
        %4079 = vmatmul.mubr.f32.gmra.mxu0 %v3995
        %v4080 = vpop.f32.mrf.mxu0
        %v4081 = vadd.f32 0.0, %v4080
        %v4082 = vpop.f32.mrf.mxu0
        %4083 = vmatprep.mubr.f32.mxu0 0.0
        %4084 = vmatmul.mubr.f32.gmra.mxu0 %v3997
        %v4085 = vpop.f32.mrf.mxu0
        %v4086 = vadd.f32 0.0, %v4085
        %v4087 = vpop.f32.mrf.mxu0
        %4088 = vmatprep.mubr.f32.mxu0 0.0
        %4089 = vmatmul.mubr.f32.gmra.mxu0 %v3999
        %v4090 = vpop.f32.mrf.mxu0
        %v4091 = vadd.f32 0.0, %v4090
        %v4092 = vpop.f32.mrf.mxu0
        %4093 = vdwg.mxu0
        %4094 = vrot.lane.b32.xlu0 %v1633, 64
        %v4095 = vpop.permute.xlu0 %4094
        %4096 = vrot.lane.b32.xlu0 %v1639, 64
        %v4097 = vpop.permute.xlu0 %4096
        %4098 = vrot.lane.b32.xlu0 %v1645, 64
        %v4099 = vpop.permute.xlu0 %4098
        %4100 = vrot.lane.b32.xlu0 %v1651, 64
        %v4101 = vpop.permute.xlu0 %4100
        %4102 = vrot.lane.b32.xlu0 %v1635, 64
        %v4103 = vpop.permute.xlu0 %4102
        %4104 = vrot.lane.b32.xlu0 %v1641, 64
        %v4105 = vpop.permute.xlu0 %4104
        %4106 = vrot.lane.b32.xlu0 %v1647, 64
        %v4107 = vpop.permute.xlu0 %4106
        %4108 = vrot.lane.b32.xlu0 %v1653, 64
        %v4109 = vpop.permute.xlu0 %4108
        %v4110 = vsel %vm1848, %v4095, 0
        %v4112 = vsel %vm1848, %v4097, 0
        %v4114 = vsel %vm1848, %v4099, 0
        %v4116 = vsel %vm1848, %v4101, 0
        %v4118 = vsel %vm1848, %v4103, 0
        %v4120 = vsel %vm1848, %v4105, 0
        %v4122 = vsel %vm1848, %v4107, 0
        %v4124 = vsel %vm1848, %v4109, 0
        %4126 = vmatprep.subr.mxu0 0.0
        %4127 = vmatpush1.xpose.msra.mxu0 0.0
        %4128 = vmatprep.subr.mxu0 0.0
        %4129 = vmatpush1.xpose.msra.mxu0 0.0
        %4130 = vmatprep.subr.mxu0 0.0
        %4131 = vmatpush1.xpose.msra.mxu0 0.0
        %4132 = vmatprep.subr.mxu0 0.0
        %4133 = vmatpush1.xpose.msra.mxu0 0.0
        %4134 = vmatprep.subr.mxu0 0.0
        %4135 = vmatpush1.xpose.msra.mxu0 0.0
        %4136 = vmatprep.subr.mxu0 0.0
        %4137 = vmatpush1.xpose.msra.mxu0 0.0
        %4138 = vmatprep.subr.mxu0 0.0
        %4139 = vmatpush1.xpose.msra.mxu0 0.0
        %4140 = vmatprep.subr.mxu0 0.0
        %4141 = vmatpush1.xpose.msra.mxu0 0.0
        %4142 = vmatprep.subr.mxu0 0.0
        %4143 = vmatpush1.xpose.msra.mxu0 0.0
        %4144 = vmatprep.subr.mxu0 0.0
        %4145 = vmatpush1.xpose.msra.mxu0 0.0
        %4146 = vmatprep.subr.mxu0 0.0
        %4147 = vmatpush1.xpose.msra.mxu0 0.0
        %4148 = vmatprep.subr.mxu0 0.0
        %4149 = vmatpush1.xpose.msra.mxu0 0.0
        %4150 = vmatprep.subr.mxu0 0.0
        %4151 = vmatpush1.xpose.msra.mxu0 %v4124
        %4152 = vmatprep.subr.mxu0 0.0
        %4153 = vmatpush1.xpose.msra.mxu0 %v4122
        %4154 = vmatprep.subr.mxu0 0.0
        %4155 = vmatpush1.xpose.msra.mxu0 %v4120
        %4156 = vmatprep.subr.mxu0 0.0
        %4157 = vmatpush1.xpose.msra.mxu0 %v4118
        %4158 = vmatprep.subr.mxu0 0.0
        %4159 = vmatpush2.xpose.msra.mxu0 0.0
        %4160 = vmatprep.subr.mxu0 0.0
        %4161 = vmatpush2.xpose.msra.mxu0 0.0
        %4162 = vmatprep.subr.mxu0 0.0
        %4163 = vmatpush2.xpose.msra.mxu0 0.0
        %4164 = vmatprep.subr.mxu0 0.0
        %4165 = vmatpush2.xpose.msra.mxu0 0.0
        %4166 = vmatprep.subr.mxu0 0.0
        %4167 = vmatpush2.xpose.msra.mxu0 0.0
        %4168 = vmatprep.subr.mxu0 0.0
        %4169 = vmatpush2.xpose.msra.mxu0 0.0
        %4170 = vmatprep.subr.mxu0 0.0
        %4171 = vmatpush2.xpose.msra.mxu0 0.0
        %4172 = vmatprep.subr.mxu0 0.0
        %4173 = vmatpush2.xpose.msra.mxu0 0.0
        %4174 = vmatprep.subr.mxu0 0.0
        %4175 = vmatpush2.xpose.msra.mxu0 0.0
        %4176 = vmatprep.subr.mxu0 0.0
        %4177 = vmatpush2.xpose.msra.mxu0 0.0
        %4178 = vmatprep.subr.mxu0 0.0
        %4179 = vmatpush2.xpose.msra.mxu0 0.0
        %4180 = vmatprep.subr.mxu0 0.0
        %4181 = vmatpush2.xpose.msra.mxu0 0.0
        %4182 = vmatprep.subr.mxu0 0.0
        %4183 = vmatpush2.xpose.msra.mxu0 0.0
        %4184 = vmatprep.subr.mxu0 0.0
        %4185 = vmatpush2.xpose.msra.mxu0 0.0
        %4186 = vmatprep.subr.mxu0 0.0
        %4187 = vmatpush2.xpose.msra.mxu0 0.0
        %4188 = vmatprep.subr.mxu0 0.0
        %4189 = vmatpush2.xpose.msra.mxu0 0.0
        %4190 = vmatprep.mubr.f32.mxu0 0.0
        %4191 = vmatmul.mubr.f32.gmra.mxu0 %v4110
        %v4192 = vpop.f32.mrf.mxu0
        %v4193 = vadd.f32 0.0, %v4192
        %v4194 = vpop.f32.mrf.mxu0
        %4195 = vmatprep.mubr.f32.mxu0 0.0
        %4196 = vmatmul.mubr.f32.gmra.mxu0 %v4112
        %v4197 = vpop.f32.mrf.mxu0
        %v4198 = vadd.f32 0.0, %v4197
        %v4199 = vpop.f32.mrf.mxu0
        %4200 = vmatprep.mubr.f32.mxu0 0.0
        %4201 = vmatmul.mubr.f32.gmra.mxu0 %v4114
        %v4202 = vpop.f32.mrf.mxu0
        %v4203 = vadd.f32 0.0, %v4202
        %v4204 = vpop.f32.mrf.mxu0
        %4205 = vmatprep.mubr.f32.mxu0 0.0
        %4206 = vmatmul.mubr.f32.gmra.mxu0 %v4116
        %v4207 = vpop.f32.mrf.mxu0
        %v4208 = vadd.f32 0.0, %v4207
        %v4209 = vpop.f32.mrf.mxu0
        %4210 = vdwg.mxu0
        %4211 = vrot.lane.b32.xlu0 %v1657, 64
        %v4212 = vpop.permute.xlu0 %4211
        %4213 = vrot.lane.b32.xlu0 %v1663, 64
        %v4214 = vpop.permute.xlu0 %4213
        %4215 = vrot.lane.b32.xlu0 %v1669, 64
        %v4216 = vpop.permute.xlu0 %4215
        %4217 = vrot.lane.b32.xlu0 %v1675, 64
        %v4218 = vpop.permute.xlu0 %4217
        %4219 = vrot.lane.b32.xlu0 %v1659, 64
        %v4220 = vpop.permute.xlu0 %4219
        %4221 = vrot.lane.b32.xlu0 %v1665, 64
        %v4222 = vpop.permute.xlu0 %4221
        %4223 = vrot.lane.b32.xlu0 %v1671, 64
        %v4224 = vpop.permute.xlu0 %4223
        %4225 = vrot.lane.b32.xlu0 %v1677, 64
        %v4226 = vpop.permute.xlu0 %4225
        %v4227 = vsel %vm1848, %v4212, 0
        %v4229 = vsel %vm1848, %v4214, 0
        %v4231 = vsel %vm1848, %v4216, 0
        %v4233 = vsel %vm1848, %v4218, 0
        %v4235 = vsel %vm1848, %v4220, 0
        %v4237 = vsel %vm1848, %v4222, 0
        %v4239 = vsel %vm1848, %v4224, 0
        %v4241 = vsel %vm1848, %v4226, 0
        %4243 = vmatprep.subr.mxu0 0.0
        %4244 = vmatpush1.xpose.msra.mxu0 0.0
        %4245 = vmatprep.subr.mxu0 0.0
        %4246 = vmatpush1.xpose.msra.mxu0 0.0
        %4247 = vmatprep.subr.mxu0 0.0
        %4248 = vmatpush1.xpose.msra.mxu0 0.0
        %4249 = vmatprep.subr.mxu0 0.0
        %4250 = vmatpush1.xpose.msra.mxu0 0.0
        %4251 = vmatprep.subr.mxu0 0.0
        %4252 = vmatpush1.xpose.msra.mxu0 0.0
        %4253 = vmatprep.subr.mxu0 0.0
        %4254 = vmatpush1.xpose.msra.mxu0 0.0
        %4255 = vmatprep.subr.mxu0 0.0
        %4256 = vmatpush1.xpose.msra.mxu0 0.0
        %4257 = vmatprep.subr.mxu0 0.0
        %4258 = vmatpush1.xpose.msra.mxu0 0.0
        %4259 = vmatprep.subr.mxu0 0.0
        %4260 = vmatpush1.xpose.msra.mxu0 0.0
        %4261 = vmatprep.subr.mxu0 0.0
        %4262 = vmatpush1.xpose.msra.mxu0 0.0
        %4263 = vmatprep.subr.mxu0 0.0
        %4264 = vmatpush1.xpose.msra.mxu0 0.0
        %4265 = vmatprep.subr.mxu0 0.0
        %4266 = vmatpush1.xpose.msra.mxu0 0.0
        %4267 = vmatprep.subr.mxu0 0.0
        %4268 = vmatpush1.xpose.msra.mxu0 %v4241
        %4269 = vmatprep.subr.mxu0 0.0
        %4270 = vmatpush1.xpose.msra.mxu0 %v4239
        %4271 = vmatprep.subr.mxu0 0.0
        %4272 = vmatpush1.xpose.msra.mxu0 %v4237
        %4273 = vmatprep.subr.mxu0 0.0
        %4274 = vmatpush1.xpose.msra.mxu0 %v4235
        %4275 = vmatprep.subr.mxu0 0.0
        %4276 = vmatpush2.xpose.msra.mxu0 0.0
        %4277 = vmatprep.subr.mxu0 0.0
        %4278 = vmatpush2.xpose.msra.mxu0 0.0
        %4279 = vmatprep.subr.mxu0 0.0
        %4280 = vmatpush2.xpose.msra.mxu0 0.0
        %4281 = vmatprep.subr.mxu0 0.0
        %4282 = vmatpush2.xpose.msra.mxu0 0.0
        %4283 = vmatprep.subr.mxu0 0.0
        %4284 = vmatpush2.xpose.msra.mxu0 0.0
        %4285 = vmatprep.subr.mxu0 0.0
        %4286 = vmatpush2.xpose.msra.mxu0 0.0
        %4287 = vmatprep.subr.mxu0 0.0
        %4288 = vmatpush2.xpose.msra.mxu0 0.0
        %4289 = vmatprep.subr.mxu0 0.0
        %4290 = vmatpush2.xpose.msra.mxu0 0.0
        %4291 = vmatprep.subr.mxu0 0.0
        %4292 = vmatpush2.xpose.msra.mxu0 0.0
        %4293 = vmatprep.subr.mxu0 0.0
        %4294 = vmatpush2.xpose.msra.mxu0 0.0
        %4295 = vmatprep.subr.mxu0 0.0
        %4296 = vmatpush2.xpose.msra.mxu0 0.0
        %4297 = vmatprep.subr.mxu0 0.0
        %4298 = vmatpush2.xpose.msra.mxu0 0.0
        %4299 = vmatprep.subr.mxu0 0.0
        %4300 = vmatpush2.xpose.msra.mxu0 0.0
        %4301 = vmatprep.subr.mxu0 0.0
        %4302 = vmatpush2.xpose.msra.mxu0 0.0
        %4303 = vmatprep.subr.mxu0 0.0
        %4304 = vmatpush2.xpose.msra.mxu0 0.0
        %4305 = vmatprep.subr.mxu0 0.0
        %4306 = vmatpush2.xpose.msra.mxu0 0.0
        %4307 = vmatprep.mubr.f32.mxu0 0.0
        %4308 = vmatmul.mubr.f32.gmra.mxu0 %v4227
        %v4309 = vpop.f32.mrf.mxu0
        %v4310 = vadd.f32 0.0, %v4309
        %v4311 = vpop.f32.mrf.mxu0
        %4312 = vmatprep.mubr.f32.mxu0 0.0
        %4313 = vmatmul.mubr.f32.gmra.mxu0 %v4229
        %v4314 = vpop.f32.mrf.mxu0
        %v4315 = vadd.f32 0.0, %v4314
        %v4316 = vpop.f32.mrf.mxu0
        %4317 = vmatprep.mubr.f32.mxu0 0.0
        %4318 = vmatmul.mubr.f32.gmra.mxu0 %v4231
        %v4319 = vpop.f32.mrf.mxu0
        %v4320 = vadd.f32 0.0, %v4319
        %v4321 = vpop.f32.mrf.mxu0
        %4322 = vmatprep.mubr.f32.mxu0 0.0
        %4323 = vmatmul.mubr.f32.gmra.mxu0 %v4233
        %v4324 = vpop.f32.mrf.mxu0
        %v4325 = vadd.f32 0.0, %v4324
        %v4326 = vpop.f32.mrf.mxu0
        %4327 = vdwg.mxu0
        %4328 = vrot.lane.b32.xlu0 %v1681, 64
        %v4329 = vpop.permute.xlu0 %4328
        %4330 = vrot.lane.b32.xlu0 %v1687, 64
        %v4331 = vpop.permute.xlu0 %4330
        %4332 = vrot.lane.b32.xlu0 %v1693, 64
        %v4333 = vpop.permute.xlu0 %4332
        %4334 = vrot.lane.b32.xlu0 %v1699, 64
        %v4335 = vpop.permute.xlu0 %4334
        %4336 = vrot.lane.b32.xlu0 %v1683, 64
        %v4337 = vpop.permute.xlu0 %4336
        %4338 = vrot.lane.b32.xlu0 %v1689, 64
        %v4339 = vpop.permute.xlu0 %4338
        %4340 = vrot.lane.b32.xlu0 %v1695, 64
        %v4341 = vpop.permute.xlu0 %4340
        %4342 = vrot.lane.b32.xlu0 %v1701, 64
        %v4343 = vpop.permute.xlu0 %4342
        %v4344 = vsel %vm1848, %v4329, 0
        %v4346 = vsel %vm1848, %v4331, 0
        %v4348 = vsel %vm1848, %v4333, 0
        %v4350 = vsel %vm1848, %v4335, 0
        %v4352 = vsel %vm1848, %v4337, 0
        %v4354 = vsel %vm1848, %v4339, 0
        %v4356 = vsel %vm1848, %v4341, 0
        %v4358 = vsel %vm1848, %v4343, 0
        %4360 = vmatprep.subr.mxu0 0.0
        %4361 = vmatpush1.xpose.msra.mxu0 0.0
        %4362 = vmatprep.subr.mxu0 0.0
        %4363 = vmatpush1.xpose.msra.mxu0 0.0
        %4364 = vmatprep.subr.mxu0 0.0
        %4365 = vmatpush1.xpose.msra.mxu0 0.0
        %4366 = vmatprep.subr.mxu0 0.0
        %4367 = vmatpush1.xpose.msra.mxu0 0.0
        %4368 = vmatprep.subr.mxu0 0.0
        %4369 = vmatpush1.xpose.msra.mxu0 0.0
        %4370 = vmatprep.subr.mxu0 0.0
        %4371 = vmatpush1.xpose.msra.mxu0 0.0
        %4372 = vmatprep.subr.mxu0 0.0
        %4373 = vmatpush1.xpose.msra.mxu0 0.0
        %4374 = vmatprep.subr.mxu0 0.0
        %4375 = vmatpush1.xpose.msra.mxu0 0.0
        %4376 = vmatprep.subr.mxu0 0.0
        %4377 = vmatpush1.xpose.msra.mxu0 0.0
        %4378 = vmatprep.subr.mxu0 0.0
        %4379 = vmatpush1.xpose.msra.mxu0 0.0
        %4380 = vmatprep.subr.mxu0 0.0
        %4381 = vmatpush1.xpose.msra.mxu0 0.0
        %4382 = vmatprep.subr.mxu0 0.0
        %4383 = vmatpush1.xpose.msra.mxu0 0.0
        %4384 = vmatprep.subr.mxu0 0.0
        %4385 = vmatpush1.xpose.msra.mxu0 %v4358
        %4386 = vmatprep.subr.mxu0 0.0
        %4387 = vmatpush1.xpose.msra.mxu0 %v4356
        %4388 = vmatprep.subr.mxu0 0.0
        %4389 = vmatpush1.xpose.msra.mxu0 %v4354
        %4390 = vmatprep.subr.mxu0 0.0
        %4391 = vmatpush1.xpose.msra.mxu0 %v4352
        %4392 = vmatprep.subr.mxu0 0.0
        %4393 = vmatpush2.xpose.msra.mxu0 0.0
        %4394 = vmatprep.subr.mxu0 0.0
        %4395 = vmatpush2.xpose.msra.mxu0 0.0
        %4396 = vmatprep.subr.mxu0 0.0
        %4397 = vmatpush2.xpose.msra.mxu0 0.0
        %4398 = vmatprep.subr.mxu0 0.0
        %4399 = vmatpush2.xpose.msra.mxu0 0.0
        %4400 = vmatprep.subr.mxu0 0.0
        %4401 = vmatpush2.xpose.msra.mxu0 0.0
        %4402 = vmatprep.subr.mxu0 0.0
        %4403 = vmatpush2.xpose.msra.mxu0 0.0
        %4404 = vmatprep.subr.mxu0 0.0
        %4405 = vmatpush2.xpose.msra.mxu0 0.0
        %4406 = vmatprep.subr.mxu0 0.0
        %4407 = vmatpush2.xpose.msra.mxu0 0.0
        %4408 = vmatprep.subr.mxu0 0.0
        %4409 = vmatpush2.xpose.msra.mxu0 0.0
        %4410 = vmatprep.subr.mxu0 0.0
        %4411 = vmatpush2.xpose.msra.mxu0 0.0
        %4412 = vmatprep.subr.mxu0 0.0
        %4413 = vmatpush2.xpose.msra.mxu0 0.0
        %4414 = vmatprep.subr.mxu0 0.0
        %4415 = vmatpush2.xpose.msra.mxu0 0.0
        %4416 = vmatprep.subr.mxu0 0.0
        %4417 = vmatpush2.xpose.msra.mxu0 0.0
        %4418 = vmatprep.subr.mxu0 0.0
        %4419 = vmatpush2.xpose.msra.mxu0 0.0
        %4420 = vmatprep.subr.mxu0 0.0
        %4421 = vmatpush2.xpose.msra.mxu0 0.0
        %4422 = vmatprep.subr.mxu0 0.0
        %4423 = vmatpush2.xpose.msra.mxu0 0.0
        %4424 = vmatprep.mubr.f32.mxu0 0.0
        %4425 = vmatmul.mubr.f32.gmra.mxu0 %v4344
        %v4426 = vpop.f32.mrf.mxu0
        %v4427 = vadd.f32 0.0, %v4426
        %v4428 = vpop.f32.mrf.mxu0
        %4429 = vmatprep.mubr.f32.mxu0 0.0
        %4430 = vmatmul.mubr.f32.gmra.mxu0 %v4346
        %v4431 = vpop.f32.mrf.mxu0
        %v4432 = vadd.f32 0.0, %v4431
        %v4433 = vpop.f32.mrf.mxu0
        %4434 = vmatprep.mubr.f32.mxu0 0.0
        %4435 = vmatmul.mubr.f32.gmra.mxu0 %v4348
        %v4436 = vpop.f32.mrf.mxu0
        %v4437 = vadd.f32 0.0, %v4436
        %v4438 = vpop.f32.mrf.mxu0
        %4439 = vmatprep.mubr.f32.mxu0 0.0
        %4440 = vmatmul.mubr.f32.gmra.mxu0 %v4350
        %v4441 = vpop.f32.mrf.mxu0
        %v4442 = vadd.f32 0.0, %v4441
        %v4443 = vpop.f32.mrf.mxu0
        %4444 = vdwg.mxu0
        %v4445 = vmul.f32 %v4076, 0.17677669
        %v4446 = vmul.f32 %v4081, 0.17677669
        %v4447 = vmul.f32 %v4086, 0.17677669
        %v4448 = vmul.f32 %v4091, 0.17677669
        %v4449 = vmul.f32 %v4193, 0.17677669
        %v4450 = vmul.f32 %v4198, 0.17677669
        %v4451 = vmul.f32 %v4203, 0.17677669
        %v4452 = vmul.f32 %v4208, 0.17677669
        %v4453 = vmul.f32 %v4310, 0.17677669
        %v4454 = vmul.f32 %v4315, 0.17677669
        %v4455 = vmul.f32 %v4320, 0.17677669
        %v4456 = vmul.f32 %v4325, 0.17677669
        %v4457 = vmul.f32 %v4427, 0.17677669
        %v4458 = vmul.f32 %v4432, 0.17677669
        %v4459 = vmul.f32 %v4437, 0.17677669
        %v4460 = vmul.f32 %v4442, 0.17677669
        %v4461 = vsel %vm1848, %v4445, -inf
        %4462 = vmax.xlane.f32.xlu0 %v4461
        %v4463 = vpop.xlane.xlu0 %4462
        %v4464 = vsel %vm1848, %v4446, -inf
        %4465 = vmax.xlane.f32.xlu0 %v4464
        %v4466 = vpop.xlane.xlu0 %4465
        %v4467 = vsel %vm1848, %v4447, -inf
        %4468 = vmax.xlane.f32.xlu0 %v4467
        %v4469 = vpop.xlane.xlu0 %4468
        %v4470 = vsel %vm1848, %v4448, -inf
        %4471 = vmax.xlane.f32.xlu0 %v4470
        %v4472 = vpop.xlane.xlu0 %4471
        %v4473 = vsel %vm1848, %v4449, -inf
        %4474 = vmax.xlane.f32.xlu0 %v4473
        %v4475 = vpop.xlane.xlu0 %4474
        %v4476 = vsel %vm1848, %v4450, -inf
        %4477 = vmax.xlane.f32.xlu0 %v4476
        %v4478 = vpop.xlane.xlu0 %4477
        %v4479 = vsel %vm1848, %v4451, -inf
        %4480 = vmax.xlane.f32.xlu0 %v4479
        %v4481 = vpop.xlane.xlu0 %4480
        %v4482 = vsel %vm1848, %v4452, -inf
        %4483 = vmax.xlane.f32.xlu0 %v4482
        %v4484 = vpop.xlane.xlu0 %4483
        %v4485 = vsel %vm1848, %v4453, -inf
        %4486 = vmax.xlane.f32.xlu0 %v4485
        %v4487 = vpop.xlane.xlu0 %4486
        %v4488 = vsel %vm1848, %v4454, -inf
        %4489 = vmax.xlane.f32.xlu0 %v4488
        %v4490 = vpop.xlane.xlu0 %4489
        %v4491 = vsel %vm1848, %v4455, -inf
        %4492 = vmax.xlane.f32.xlu0 %v4491
        %v4493 = vpop.xlane.xlu0 %4492
        %v4494 = vsel %vm1848, %v4456, -inf
        %4495 = vmax.xlane.f32.xlu0 %v4494
        %v4496 = vpop.xlane.xlu0 %4495
        %v4497 = vsel %vm1848, %v4457, -inf
        %4498 = vmax.xlane.f32.xlu0 %v4497
        %v4499 = vpop.xlane.xlu0 %4498
        %v4500 = vsel %vm1848, %v4458, -inf
        %4501 = vmax.xlane.f32.xlu0 %v4500
        %v4502 = vpop.xlane.xlu0 %4501
        %v4503 = vsel %vm1848, %v4459, -inf
        %4504 = vmax.xlane.f32.xlu0 %v4503
        %v4505 = vpop.xlane.xlu0 %4504
        %v4506 = vsel %vm1848, %v4460, -inf
        %4507 = vmax.xlane.f32.xlu0 %v4506
        %v4508 = vpop.xlane.xlu0 %4507
        %v4509 = vsub.f32 %v4445, %v4463
        %v4510 = vsub.f32 %v4446, %v4466
        %v4511 = vsub.f32 %v4447, %v4469
        %v4512 = vsub.f32 %v4448, %v4472
        %v4513 = vsub.f32 %v4449, %v4475
        %v4514 = vsub.f32 %v4450, %v4478
        %v4515 = vsub.f32 %v4451, %v4481
        %v4516 = vsub.f32 %v4452, %v4484
        %v4517 = vsub.f32 %v4453, %v4487
        %v4518 = vsub.f32 %v4454, %v4490
        %v4519 = vsub.f32 %v4455, %v4493
        %v4520 = vsub.f32 %v4456, %v4496
        %v4521 = vsub.f32 %v4457, %v4499
        %v4522 = vsub.f32 %v4458, %v4502
        %v4523 = vsub.f32 %v4459, %v4505
        %v4524 = vsub.f32 %v4460, %v4508
        %v4525 = vmul.f32 %v4509, 1.442695
        %v4526 = vpow.pop %v4525
        %v4527 = vmul.f32 %v4510, 1.442695
        %v4528 = vpow.pop %v4527
        %v4529 = vmul.f32 %v4511, 1.442695
        %v4530 = vpow.pop %v4529
        %v4531 = vmul.f32 %v4512, 1.442695
        %v4532 = vpow.pop %v4531
        %v4533 = vmul.f32 %v4513, 1.442695
        %v4534 = vpow.pop %v4533
        %v4535 = vmul.f32 %v4514, 1.442695
        %v4536 = vpow.pop %v4535
        %v4537 = vmul.f32 %v4515, 1.442695
        %v4538 = vpow.pop %v4537
        %v4539 = vmul.f32 %v4516, 1.442695
        %v4540 = vpow.pop %v4539
        %v4541 = vmul.f32 %v4517, 1.442695
        %v4542 = vpow.pop %v4541
        %v4543 = vmul.f32 %v4518, 1.442695
        %v4544 = vpow.pop %v4543
        %v4545 = vmul.f32 %v4519, 1.442695
        %v4546 = vpow.pop %v4545
        %v4547 = vmul.f32 %v4520, 1.442695
        %v4548 = vpow.pop %v4547
        %v4549 = vmul.f32 %v4521, 1.442695
        %v4550 = vpow.pop %v4549
        %v4551 = vmul.f32 %v4522, 1.442695
        %v4552 = vpow.pop %v4551
        %v4553 = vmul.f32 %v4523, 1.442695
        %v4554 = vpow.pop %v4553
        %v4555 = vmul.f32 %v4524, 1.442695
        %v4556 = vpow.pop %v4555
        %v4557 = vsel %vm1848, %v4526, 0.0
        %4558 = vadd.xlane.f32.xlu0 %v4557
        %v4559 = vpop.xlane.xlu0 %4558
        %v4560 = vsel %vm1848, %v4528, 0.0
        %4561 = vadd.xlane.f32.xlu0 %v4560
        %v4562 = vpop.xlane.xlu0 %4561
        %v4563 = vsel %vm1848, %v4530, 0.0
        %4564 = vadd.xlane.f32.xlu0 %v4563
        %v4565 = vpop.xlane.xlu0 %4564
        %v4566 = vsel %vm1848, %v4532, 0.0
        %4567 = vadd.xlane.f32.xlu0 %v4566
        %v4568 = vpop.xlane.xlu0 %4567
        %v4569 = vsel %vm1848, %v4534, 0.0
        %4570 = vadd.xlane.f32.xlu0 %v4569
        %v4571 = vpop.xlane.xlu0 %4570
        %v4572 = vsel %vm1848, %v4536, 0.0
        %4573 = vadd.xlane.f32.xlu0 %v4572
        %v4574 = vpop.xlane.xlu0 %4573
        %v4575 = vsel %vm1848, %v4538, 0.0
        %4576 = vadd.xlane.f32.xlu0 %v4575
        %v4577 = vpop.xlane.xlu0 %4576
        %v4578 = vsel %vm1848, %v4540, 0.0
        %4579 = vadd.xlane.f32.xlu0 %v4578
        %v4580 = vpop.xlane.xlu0 %4579
        %v4581 = vsel %vm1848, %v4542, 0.0
        %4582 = vadd.xlane.f32.xlu0 %v4581
        %v4583 = vpop.xlane.xlu0 %4582
        %v4584 = vsel %vm1848, %v4544, 0.0
        %4585 = vadd.xlane.f32.xlu0 %v4584
        %v4586 = vpop.xlane.xlu0 %4585
        %v4587 = vsel %vm1848, %v4546, 0.0
        %4588 = vadd.xlane.f32.xlu0 %v4587
        %v4589 = vpop.xlane.xlu0 %4588
        %v4590 = vsel %vm1848, %v4548, 0.0
        %4591 = vadd.xlane.f32.xlu0 %v4590
        %v4592 = vpop.xlane.xlu0 %4591
        %v4593 = vsel %vm1848, %v4550, 0.0
        %4594 = vadd.xlane.f32.xlu0 %v4593
        %v4595 = vpop.xlane.xlu0 %4594
        %v4596 = vsel %vm1848, %v4552, 0.0
        %4597 = vadd.xlane.f32.xlu0 %v4596
        %v4598 = vpop.xlane.xlu0 %4597
        %v4599 = vsel %vm1848, %v4554, 0.0
        %4600 = vadd.xlane.f32.xlu0 %v4599
        %v4601 = vpop.xlane.xlu0 %4600
        %v4602 = vsel %vm1848, %v4556, 0.0
        %4603 = vadd.xlane.f32.xlu0 %v4602
        %v4604 = vpop.xlane.xlu0 %4603
        %v4605 = vrcp.pop %v4559
        %v4606 = vmul.f32 %v4526, %v4605
        %v4607 = vrcp.pop %v4562
        %v4608 = vmul.f32 %v4528, %v4607
        %v4609 = vrcp.pop %v4565
        %v4610 = vmul.f32 %v4530, %v4609
        %v4611 = vrcp.pop %v4568
        %v4612 = vmul.f32 %v4532, %v4611
        %v4613 = vrcp.pop %v4571
        %v4614 = vmul.f32 %v4534, %v4613
        %v4615 = vrcp.pop %v4574
        %v4616 = vmul.f32 %v4536, %v4615
        %v4617 = vrcp.pop %v4577
        %v4618 = vmul.f32 %v4538, %v4617
        %v4619 = vrcp.pop %v4580
        %v4620 = vmul.f32 %v4540, %v4619
        %v4621 = vrcp.pop %v4583
        %v4622 = vmul.f32 %v4542, %v4621
        %v4623 = vrcp.pop %v4586
        %v4624 = vmul.f32 %v4544, %v4623
        %v4625 = vrcp.pop %v4589
        %v4626 = vmul.f32 %v4546, %v4625
        %v4627 = vrcp.pop %v4592
        %v4628 = vmul.f32 %v4548, %v4627
        %v4629 = vrcp.pop %v4595
        %v4630 = vmul.f32 %v4550, %v4629
        %v4631 = vrcp.pop %v4598
        %v4632 = vmul.f32 %v4552, %v4631
        %v4633 = vrcp.pop %v4601
        %v4634 = vmul.f32 %v4554, %v4633
        %v4635 = vrcp.pop %v4604
        %v4636 = vmul.f32 %v4556, %v4635
        %4637 = vrot.lane.b32.xlu0 %v1770, 64
        %v4638 = vpop.permute.xlu0 %4637
        %4639 = vrot.lane.b32.xlu0 %v1775, 64
        %v4640 = vpop.permute.xlu0 %4639
        %4641 = vrot.lane.b32.xlu0 %v1780, 64
        %v4642 = vpop.permute.xlu0 %4641
        %4643 = vrot.lane.b32.xlu0 %v1785, 64
        %v4644 = vpop.permute.xlu0 %4643
        %v4650 = vsel %vm1848, %v4606, 0
        %v4653 = vsel %vm1848, %v4608, 0
        %v4656 = vsel %vm1848, %v4610, 0
        %v4659 = vsel %vm1848, %v4612, 0
        %4661 = vmatprep.subr.mxu0 0.0
        %4662 = vmatpush1.msra.mxu0 0.0
        %4663 = vmatprep.subr.mxu0 0.0
        %4664 = vmatpush1.msra.mxu0 0.0
        %4665 = vmatprep.subr.mxu0 0.0
        %4666 = vmatpush1.msra.mxu0 0.0
        %4667 = vmatprep.subr.mxu0 0.0
        %4668 = vmatpush1.msra.mxu0 0.0
        %4669 = vmatprep.subr.mxu0 0.0
        %4670 = vmatpush1.msra.mxu0 0.0
        %4671 = vmatprep.subr.mxu0 0.0
        %4672 = vmatpush1.msra.mxu0 0.0
        %4673 = vmatprep.subr.mxu0 0.0
        %4674 = vmatpush1.msra.mxu0 0.0
        %4675 = vmatprep.subr.mxu0 0.0
        %4676 = vmatpush1.msra.mxu0 0.0
        %4677 = vmatprep.subr.mxu0 0.0
        %4678 = vmatpush1.msra.mxu0 0.0
        %4679 = vmatprep.subr.mxu0 0.0
        %4680 = vmatpush1.msra.mxu0 0.0
        %4681 = vmatprep.subr.mxu0 0.0
        %4682 = vmatpush1.msra.mxu0 0.0
        %4683 = vmatprep.subr.mxu0 0.0
        %4684 = vmatpush1.msra.mxu0 0.0
        %4685 = vmatprep.subr.mxu0 0.0
        %4686 = vmatpush1.msra.mxu0 %v4644
        %4687 = vmatprep.subr.mxu0 0.0
        %4688 = vmatpush1.msra.mxu0 %v4642
        %4689 = vmatprep.subr.mxu0 0.0
        %4690 = vmatpush1.msra.mxu0 %v4640
        %4691 = vmatprep.subr.mxu0 0.0
        %4692 = vmatpush1.msra.mxu0 %v4638
        %4693 = vmatprep.subr.mxu0 0.0
        %4694 = vmatpush2.msra.mxu0 0.0
        %4695 = vmatprep.subr.mxu0 0.0
        %4696 = vmatpush2.msra.mxu0 0.0
        %4697 = vmatprep.subr.mxu0 0.0
        %4698 = vmatpush2.msra.mxu0 0.0
        %4699 = vmatprep.subr.mxu0 0.0
        %4700 = vmatpush2.msra.mxu0 0.0
        %4701 = vmatprep.subr.mxu0 0.0
        %4702 = vmatpush2.msra.mxu0 0.0
        %4703 = vmatprep.subr.mxu0 0.0
        %4704 = vmatpush2.msra.mxu0 0.0
        %4705 = vmatprep.subr.mxu0 0.0
        %4706 = vmatpush2.msra.mxu0 0.0
        %4707 = vmatprep.subr.mxu0 0.0
        %4708 = vmatpush2.msra.mxu0 0.0
        %4709 = vmatprep.subr.mxu0 0.0
        %4710 = vmatpush2.msra.mxu0 0.0
        %4711 = vmatprep.subr.mxu0 0.0
        %4712 = vmatpush2.msra.mxu0 0.0
        %4713 = vmatprep.subr.mxu0 0.0
        %4714 = vmatpush2.msra.mxu0 0.0
        %4715 = vmatprep.subr.mxu0 0.0
        %4716 = vmatpush2.msra.mxu0 0.0
        %4717 = vmatprep.subr.mxu0 0.0
        %4718 = vmatpush2.msra.mxu0 0.0
        %4719 = vmatprep.subr.mxu0 0.0
        %4720 = vmatpush2.msra.mxu0 0.0
        %4721 = vmatprep.subr.mxu0 0.0
        %4722 = vmatpush2.msra.mxu0 0.0
        %4723 = vmatprep.subr.mxu0 0.0
        %4724 = vmatpush2.msra.mxu0 0.0
        %4725 = vmatprep.mubr.f32.mxu0 0.0
        %4726 = vmatmul.mubr.f32.gmra.mxu0 %v4650
        %v4727 = vpop.f32.mrf.mxu0
        %v4728 = vadd.f32 0.0, %v4727
        %v4729 = vpop.f32.mrf.mxu0
        %4730 = vmatprep.mubr.f32.mxu0 0.0
        %4731 = vmatmul.mubr.f32.gmra.mxu0 %v4653
        %v4732 = vpop.f32.mrf.mxu0
        %v4733 = vadd.f32 0.0, %v4732
        %v4734 = vpop.f32.mrf.mxu0
        %4735 = vmatprep.mubr.f32.mxu0 0.0
        %4736 = vmatmul.mubr.f32.gmra.mxu0 %v4656
        %v4737 = vpop.f32.mrf.mxu0
        %v4738 = vadd.f32 0.0, %v4737
        %v4739 = vpop.f32.mrf.mxu0
        %4740 = vmatprep.mubr.f32.mxu0 0.0
        %4741 = vmatmul.mubr.f32.gmra.mxu0 %v4659
        %v4742 = vpop.f32.mrf.mxu0
        %v4743 = vadd.f32 0.0, %v4742
        %v4744 = vpop.f32.mrf.mxu0
        %4745 = vdwg.mxu0
        %4746 = vrot.lane.b32.xlu0 %v1790, 64
        %v4747 = vpop.permute.xlu0 %4746
        %4748 = vrot.lane.b32.xlu0 %v1795, 64
        %v4749 = vpop.permute.xlu0 %4748
        %4750 = vrot.lane.b32.xlu0 %v1800, 64
        %v4751 = vpop.permute.xlu0 %4750
        %4752 = vrot.lane.b32.xlu0 %v1805, 64
        %v4753 = vpop.permute.xlu0 %4752
        %v4759 = vsel %vm1848, %v4614, 0
        %v4762 = vsel %vm1848, %v4616, 0
        %v4765 = vsel %vm1848, %v4618, 0
        %v4768 = vsel %vm1848, %v4620, 0
        %4770 = vmatprep.subr.mxu0 0.0
        %4771 = vmatpush1.msra.mxu0 0.0
        %4772 = vmatprep.subr.mxu0 0.0
        %4773 = vmatpush1.msra.mxu0 0.0
        %4774 = vmatprep.subr.mxu0 0.0
        %4775 = vmatpush1.msra.mxu0 0.0
        %4776 = vmatprep.subr.mxu0 0.0
        %4777 = vmatpush1.msra.mxu0 0.0
        %4778 = vmatprep.subr.mxu0 0.0
        %4779 = vmatpush1.msra.mxu0 0.0
        %4780 = vmatprep.subr.mxu0 0.0
        %4781 = vmatpush1.msra.mxu0 0.0
        %4782 = vmatprep.subr.mxu0 0.0
        %4783 = vmatpush1.msra.mxu0 0.0
        %4784 = vmatprep.subr.mxu0 0.0
        %4785 = vmatpush1.msra.mxu0 0.0
        %4786 = vmatprep.subr.mxu0 0.0
        %4787 = vmatpush1.msra.mxu0 0.0
        %4788 = vmatprep.subr.mxu0 0.0
        %4789 = vmatpush1.msra.mxu0 0.0
        %4790 = vmatprep.subr.mxu0 0.0
        %4791 = vmatpush1.msra.mxu0 0.0
        %4792 = vmatprep.subr.mxu0 0.0
        %4793 = vmatpush1.msra.mxu0 0.0
        %4794 = vmatprep.subr.mxu0 0.0
        %4795 = vmatpush1.msra.mxu0 %v4753
        %4796 = vmatprep.subr.mxu0 0.0
        %4797 = vmatpush1.msra.mxu0 %v4751
        %4798 = vmatprep.subr.mxu0 0.0
        %4799 = vmatpush1.msra.mxu0 %v4749
        %4800 = vmatprep.subr.mxu0 0.0
        %4801 = vmatpush1.msra.mxu0 %v4747
        %4802 = vmatprep.subr.mxu0 0.0
        %4803 = vmatpush2.msra.mxu0 0.0
        %4804 = vmatprep.subr.mxu0 0.0
        %4805 = vmatpush2.msra.mxu0 0.0
        %4806 = vmatprep.subr.mxu0 0.0
        %4807 = vmatpush2.msra.mxu0 0.0
        %4808 = vmatprep.subr.mxu0 0.0
        %4809 = vmatpush2.msra.mxu0 0.0
        %4810 = vmatprep.subr.mxu0 0.0
        %4811 = vmatpush2.msra.mxu0 0.0
        %4812 = vmatprep.subr.mxu0 0.0
        %4813 = vmatpush2.msra.mxu0 0.0
        %4814 = vmatprep.subr.mxu0 0.0
        %4815 = vmatpush2.msra.mxu0 0.0
        %4816 = vmatprep.subr.mxu0 0.0
        %4817 = vmatpush2.msra.mxu0 0.0
        %4818 = vmatprep.subr.mxu0 0.0
        %4819 = vmatpush2.msra.mxu0 0.0
        %4820 = vmatprep.subr.mxu0 0.0
        %4821 = vmatpush2.msra.mxu0 0.0
        %4822 = vmatprep.subr.mxu0 0.0
        %4823 = vmatpush2.msra.mxu0 0.0
        %4824 = vmatprep.subr.mxu0 0.0
        %4825 = vmatpush2.msra.mxu0 0.0
        %4826 = vmatprep.subr.mxu0 0.0
        %4827 = vmatpush2.msra.mxu0 0.0
        %4828 = vmatprep.subr.mxu0 0.0
        %4829 = vmatpush2.msra.mxu0 0.0
        %4830 = vmatprep.subr.mxu0 0.0
        %4831 = vmatpush2.msra.mxu0 0.0
        %4832 = vmatprep.subr.mxu0 0.0
        %4833 = vmatpush2.msra.mxu0 0.0
        %4834 = vmatprep.mubr.f32.mxu0 0.0
        %4835 = vmatmul.mubr.f32.gmra.mxu0 %v4759
        %v4836 = vpop.f32.mrf.mxu0
        %v4837 = vadd.f32 0.0, %v4836
        %v4838 = vpop.f32.mrf.mxu0
        %4839 = vmatprep.mubr.f32.mxu0 0.0
        %4840 = vmatmul.mubr.f32.gmra.mxu0 %v4762
        %v4841 = vpop.f32.mrf.mxu0
        %v4842 = vadd.f32 0.0, %v4841
        %v4843 = vpop.f32.mrf.mxu0
        %4844 = vmatprep.mubr.f32.mxu0 0.0
        %4845 = vmatmul.mubr.f32.gmra.mxu0 %v4765
        %v4846 = vpop.f32.mrf.mxu0
        %v4847 = vadd.f32 0.0, %v4846
        %v4848 = vpop.f32.mrf.mxu0
        %4849 = vmatprep.mubr.f32.mxu0 0.0
        %4850 = vmatmul.mubr.f32.gmra.mxu0 %v4768
        %v4851 = vpop.f32.mrf.mxu0
        %v4852 = vadd.f32 0.0, %v4851
        %v4853 = vpop.f32.mrf.mxu0
        %4854 = vdwg.mxu0
        %4855 = vrot.lane.b32.xlu0 %v1810, 64
        %v4856 = vpop.permute.xlu0 %4855
        %4857 = vrot.lane.b32.xlu0 %v1815, 64
        %v4858 = vpop.permute.xlu0 %4857
        %4859 = vrot.lane.b32.xlu0 %v1820, 64
        %v4860 = vpop.permute.xlu0 %4859
        %4861 = vrot.lane.b32.xlu0 %v1825, 64
        %v4862 = vpop.permute.xlu0 %4861
        %v4868 = vsel %vm1848, %v4622, 0
        %v4871 = vsel %vm1848, %v4624, 0
        %v4874 = vsel %vm1848, %v4626, 0
        %v4877 = vsel %vm1848, %v4628, 0
        %4879 = vmatprep.subr.mxu0 0.0
        %4880 = vmatpush1.msra.mxu0 0.0
        %4881 = vmatprep.subr.mxu0 0.0
        %4882 = vmatpush1.msra.mxu0 0.0
        %4883 = vmatprep.subr.mxu0 0.0
        %4884 = vmatpush1.msra.mxu0 0.0
        %4885 = vmatprep.subr.mxu0 0.0
        %4886 = vmatpush1.msra.mxu0 0.0
        %4887 = vmatprep.subr.mxu0 0.0
        %4888 = vmatpush1.msra.mxu0 0.0
        %4889 = vmatprep.subr.mxu0 0.0
        %4890 = vmatpush1.msra.mxu0 0.0
        %4891 = vmatprep.subr.mxu0 0.0
        %4892 = vmatpush1.msra.mxu0 0.0
        %4893 = vmatprep.subr.mxu0 0.0
        %4894 = vmatpush1.msra.mxu0 0.0
        %4895 = vmatprep.subr.mxu0 0.0
        %4896 = vmatpush1.msra.mxu0 0.0
        %4897 = vmatprep.subr.mxu0 0.0
        %4898 = vmatpush1.msra.mxu0 0.0
        %4899 = vmatprep.subr.mxu0 0.0
        %4900 = vmatpush1.msra.mxu0 0.0
        %4901 = vmatprep.subr.mxu0 0.0
        %4902 = vmatpush1.msra.mxu0 0.0
        %4903 = vmatprep.subr.mxu0 0.0
        %4904 = vmatpush1.msra.mxu0 %v4862
        %4905 = vmatprep.subr.mxu0 0.0
        %4906 = vmatpush1.msra.mxu0 %v4860
        %4907 = vmatprep.subr.mxu0 0.0
        %4908 = vmatpush1.msra.mxu0 %v4858
        %4909 = vmatprep.subr.mxu0 0.0
        %4910 = vmatpush1.msra.mxu0 %v4856
        %4911 = vmatprep.subr.mxu0 0.0
        %4912 = vmatpush2.msra.mxu0 0.0
        %4913 = vmatprep.subr.mxu0 0.0
        %4914 = vmatpush2.msra.mxu0 0.0
        %4915 = vmatprep.subr.mxu0 0.0
        %4916 = vmatpush2.msra.mxu0 0.0
        %4917 = vmatprep.subr.mxu0 0.0
        %4918 = vmatpush2.msra.mxu0 0.0
        %4919 = vmatprep.subr.mxu0 0.0
        %4920 = vmatpush2.msra.mxu0 0.0
        %4921 = vmatprep.subr.mxu0 0.0
        %4922 = vmatpush2.msra.mxu0 0.0
        %4923 = vmatprep.subr.mxu0 0.0
        %4924 = vmatpush2.msra.mxu0 0.0
        %4925 = vmatprep.subr.mxu0 0.0
        %4926 = vmatpush2.msra.mxu0 0.0
        %4927 = vmatprep.subr.mxu0 0.0
        %4928 = vmatpush2.msra.mxu0 0.0
        %4929 = vmatprep.subr.mxu0 0.0
        %4930 = vmatpush2.msra.mxu0 0.0
        %4931 = vmatprep.subr.mxu0 0.0
        %4932 = vmatpush2.msra.mxu0 0.0
        %4933 = vmatprep.subr.mxu0 0.0
        %4934 = vmatpush2.msra.mxu0 0.0
        %4935 = vmatprep.subr.mxu0 0.0
        %4936 = vmatpush2.msra.mxu0 0.0
        %4937 = vmatprep.subr.mxu0 0.0
        %4938 = vmatpush2.msra.mxu0 0.0
        %4939 = vmatprep.subr.mxu0 0.0
        %4940 = vmatpush2.msra.mxu0 0.0
        %4941 = vmatprep.subr.mxu0 0.0
        %4942 = vmatpush2.msra.mxu0 0.0
        %4943 = vmatprep.mubr.f32.mxu0 0.0
        %4944 = vmatmul.mubr.f32.gmra.mxu0 %v4868
        %v4945 = vpop.f32.mrf.mxu0
        %v4946 = vadd.f32 0.0, %v4945
        %v4947 = vpop.f32.mrf.mxu0
        %4948 = vmatprep.mubr.f32.mxu0 0.0
        %4949 = vmatmul.mubr.f32.gmra.mxu0 %v4871
        %v4950 = vpop.f32.mrf.mxu0
        %v4951 = vadd.f32 0.0, %v4950
        %v4952 = vpop.f32.mrf.mxu0
        %4953 = vmatprep.mubr.f32.mxu0 0.0
        %4954 = vmatmul.mubr.f32.gmra.mxu0 %v4874
        %v4955 = vpop.f32.mrf.mxu0
        %v4956 = vadd.f32 0.0, %v4955
        %v4957 = vpop.f32.mrf.mxu0
        %4958 = vmatprep.mubr.f32.mxu0 0.0
        %4959 = vmatmul.mubr.f32.gmra.mxu0 %v4877
        %v4960 = vpop.f32.mrf.mxu0
        %v4961 = vadd.f32 0.0, %v4960
        %v4962 = vpop.f32.mrf.mxu0
        %4963 = vdwg.mxu0
        %4964 = vrot.lane.b32.xlu0 %v1830, 64
        %v4965 = vpop.permute.xlu0 %4964
        %4966 = vrot.lane.b32.xlu0 %v1835, 64
        %v4967 = vpop.permute.xlu0 %4966
        %4968 = vrot.lane.b32.xlu0 %v1840, 64
        %v4969 = vpop.permute.xlu0 %4968
        %4970 = vrot.lane.b32.xlu0 %v1845, 64
        %v4971 = vpop.permute.xlu0 %4970
        %v4977 = vsel %vm1848, %v4630, 0
        %v4980 = vsel %vm1848, %v4632, 0
        %v4983 = vsel %vm1848, %v4634, 0
        %v4986 = vsel %vm1848, %v4636, 0
        %4988 = vmatprep.subr.mxu0 0.0
        %4989 = vmatpush1.msra.mxu0 0.0
        %4990 = vmatprep.subr.mxu0 0.0
        %4991 = vmatpush1.msra.mxu0 0.0
        %4992 = vmatprep.subr.mxu0 0.0
        %4993 = vmatpush1.msra.mxu0 0.0
        %4994 = vmatprep.subr.mxu0 0.0
        %4995 = vmatpush1.msra.mxu0 0.0
        %4996 = vmatprep.subr.mxu0 0.0
        %4997 = vmatpush1.msra.mxu0 0.0
        %4998 = vmatprep.subr.mxu0 0.0
        %4999 = vmatpush1.msra.mxu0 0.0
        %5000 = vmatprep.subr.mxu0 0.0
        %5001 = vmatpush1.msra.mxu0 0.0
        %5002 = vmatprep.subr.mxu0 0.0
        %5003 = vmatpush1.msra.mxu0 0.0
        %5004 = vmatprep.subr.mxu0 0.0
        %5005 = vmatpush1.msra.mxu0 0.0
        %5006 = vmatprep.subr.mxu0 0.0
        %5007 = vmatpush1.msra.mxu0 0.0
        %5008 = vmatprep.subr.mxu0 0.0
        %5009 = vmatpush1.msra.mxu0 0.0
        %5010 = vmatprep.subr.mxu0 0.0
        %5011 = vmatpush1.msra.mxu0 0.0
        %5012 = vmatprep.subr.mxu0 0.0
        %5013 = vmatpush1.msra.mxu0 %v4971
        %5014 = vmatprep.subr.mxu0 0.0
        %5015 = vmatpush1.msra.mxu0 %v4969
        %5016 = vmatprep.subr.mxu0 0.0
        %5017 = vmatpush1.msra.mxu0 %v4967
        %5018 = vmatprep.subr.mxu0 0.0
        %5019 = vmatpush1.msra.mxu0 %v4965
        %5020 = vmatprep.subr.mxu0 0.0
        %5021 = vmatpush2.msra.mxu0 0.0
        %5022 = vmatprep.subr.mxu0 0.0
        %5023 = vmatpush2.msra.mxu0 0.0
        %5024 = vmatprep.subr.mxu0 0.0
        %5025 = vmatpush2.msra.mxu0 0.0
        %5026 = vmatprep.subr.mxu0 0.0
        %5027 = vmatpush2.msra.mxu0 0.0
        %5028 = vmatprep.subr.mxu0 0.0
        %5029 = vmatpush2.msra.mxu0 0.0
        %5030 = vmatprep.subr.mxu0 0.0
        %5031 = vmatpush2.msra.mxu0 0.0
        %5032 = vmatprep.subr.mxu0 0.0
        %5033 = vmatpush2.msra.mxu0 0.0
        %5034 = vmatprep.subr.mxu0 0.0
        %5035 = vmatpush2.msra.mxu0 0.0
        %5036 = vmatprep.subr.mxu0 0.0
        %5037 = vmatpush2.msra.mxu0 0.0
        %5038 = vmatprep.subr.mxu0 0.0
        %5039 = vmatpush2.msra.mxu0 0.0
        %5040 = vmatprep.subr.mxu0 0.0
        %5041 = vmatpush2.msra.mxu0 0.0
        %5042 = vmatprep.subr.mxu0 0.0
        %5043 = vmatpush2.msra.mxu0 0.0
        %5044 = vmatprep.subr.mxu0 0.0
        %5045 = vmatpush2.msra.mxu0 0.0
        %5046 = vmatprep.subr.mxu0 0.0
        %5047 = vmatpush2.msra.mxu0 0.0
        %5048 = vmatprep.subr.mxu0 0.0
        %5049 = vmatpush2.msra.mxu0 0.0
        %5050 = vmatprep.subr.mxu0 0.0
        %5051 = vmatpush2.msra.mxu0 0.0
        %5052 = vmatprep.mubr.f32.mxu0 0.0
        %5053 = vmatmul.mubr.f32.gmra.mxu0 %v4977
        %v5054 = vpop.f32.mrf.mxu0
        %v5055 = vadd.f32 0.0, %v5054
        %v5056 = vpop.f32.mrf.mxu0
        %5057 = vmatprep.mubr.f32.mxu0 0.0
        %5058 = vmatmul.mubr.f32.gmra.mxu0 %v4980
        %v5059 = vpop.f32.mrf.mxu0
        %v5060 = vadd.f32 0.0, %v5059
        %v5061 = vpop.f32.mrf.mxu0
        %5062 = vmatprep.mubr.f32.mxu0 0.0
        %5063 = vmatmul.mubr.f32.gmra.mxu0 %v4983
        %v5064 = vpop.f32.mrf.mxu0
        %v5065 = vadd.f32 0.0, %v5064
        %v5066 = vpop.f32.mrf.mxu0
        %5067 = vmatprep.mubr.f32.mxu0 0.0
        %5068 = vmatmul.mubr.f32.gmra.mxu0 %v4986
        %v5069 = vpop.f32.mrf.mxu0
        %v5070 = vadd.f32 0.0, %v5069
        %v5071 = vpop.f32.mrf.mxu0
        %5072 = vdwg.mxu0
        %5073 = vrot.lane.b32.xlu0 %v1609, 32
        %v5074 = vpop.permute.xlu0 %5073
        %5075 = vrot.lane.b32.xlu0 %v1615, 32
        %v5076 = vpop.permute.xlu0 %5075
        %5077 = vrot.lane.b32.xlu0 %v1621, 32
        %v5078 = vpop.permute.xlu0 %5077
        %5079 = vrot.lane.b32.xlu0 %v1627, 32
        %v5080 = vpop.permute.xlu0 %5079
        %5081 = vrot.lane.b32.xlu0 %v1611, 32
        %v5082 = vpop.permute.xlu0 %5081
        %5083 = vrot.lane.b32.xlu0 %v1617, 32
        %v5084 = vpop.permute.xlu0 %5083
        %5085 = vrot.lane.b32.xlu0 %v1623, 32
        %v5086 = vpop.permute.xlu0 %5085
        %5087 = vrot.lane.b32.xlu0 %v1629, 32
        %v5088 = vpop.permute.xlu0 %5087
        %v5089 = vsel %vm1848, %v5074, 0
        %v5091 = vsel %vm1848, %v5076, 0
        %v5093 = vsel %vm1848, %v5078, 0
        %v5095 = vsel %vm1848, %v5080, 0
        %v5097 = vsel %vm1848, %v5082, 0
        %v5099 = vsel %vm1848, %v5084, 0
        %v5101 = vsel %vm1848, %v5086, 0
        %v5103 = vsel %vm1848, %v5088, 0
        %5105 = vmatprep.subr.mxu0 0.0
        %5106 = vmatpush1.xpose.msra.mxu0 0.0
        %5107 = vmatprep.subr.mxu0 0.0
        %5108 = vmatpush1.xpose.msra.mxu0 0.0
        %5109 = vmatprep.subr.mxu0 0.0
        %5110 = vmatpush1.xpose.msra.mxu0 0.0
        %5111 = vmatprep.subr.mxu0 0.0
        %5112 = vmatpush1.xpose.msra.mxu0 0.0
        %5113 = vmatprep.subr.mxu0 0.0
        %5114 = vmatpush1.xpose.msra.mxu0 0.0
        %5115 = vmatprep.subr.mxu0 0.0
        %5116 = vmatpush1.xpose.msra.mxu0 0.0
        %5117 = vmatprep.subr.mxu0 0.0
        %5118 = vmatpush1.xpose.msra.mxu0 0.0
        %5119 = vmatprep.subr.mxu0 0.0
        %5120 = vmatpush1.xpose.msra.mxu0 0.0
        %5121 = vmatprep.subr.mxu0 0.0
        %5122 = vmatpush1.xpose.msra.mxu0 0.0
        %5123 = vmatprep.subr.mxu0 0.0
        %5124 = vmatpush1.xpose.msra.mxu0 0.0
        %5125 = vmatprep.subr.mxu0 0.0
        %5126 = vmatpush1.xpose.msra.mxu0 0.0
        %5127 = vmatprep.subr.mxu0 0.0
        %5128 = vmatpush1.xpose.msra.mxu0 0.0
        %5129 = vmatprep.subr.mxu0 0.0
        %5130 = vmatpush1.xpose.msra.mxu0 %v5103
        %5131 = vmatprep.subr.mxu0 0.0
        %5132 = vmatpush1.xpose.msra.mxu0 %v5101
        %5133 = vmatprep.subr.mxu0 0.0
        %5134 = vmatpush1.xpose.msra.mxu0 %v5099
        %5135 = vmatprep.subr.mxu0 0.0
        %5136 = vmatpush1.xpose.msra.mxu0 %v5097
        %5137 = vmatprep.subr.mxu0 0.0
        %5138 = vmatpush2.xpose.msra.mxu0 0.0
        %5139 = vmatprep.subr.mxu0 0.0
        %5140 = vmatpush2.xpose.msra.mxu0 0.0
        %5141 = vmatprep.subr.mxu0 0.0
        %5142 = vmatpush2.xpose.msra.mxu0 0.0
        %5143 = vmatprep.subr.mxu0 0.0
        %5144 = vmatpush2.xpose.msra.mxu0 0.0
        %5145 = vmatprep.subr.mxu0 0.0
        %5146 = vmatpush2.xpose.msra.mxu0 0.0
        %5147 = vmatprep.subr.mxu0 0.0
        %5148 = vmatpush2.xpose.msra.mxu0 0.0
        %5149 = vmatprep.subr.mxu0 0.0
        %5150 = vmatpush2.xpose.msra.mxu0 0.0
        %5151 = vmatprep.subr.mxu0 0.0
        %5152 = vmatpush2.xpose.msra.mxu0 0.0
        %5153 = vmatprep.subr.mxu0 0.0
        %5154 = vmatpush2.xpose.msra.mxu0 0.0
        %5155 = vmatprep.subr.mxu0 0.0
        %5156 = vmatpush2.xpose.msra.mxu0 0.0
        %5157 = vmatprep.subr.mxu0 0.0
        %5158 = vmatpush2.xpose.msra.mxu0 0.0
        %5159 = vmatprep.subr.mxu0 0.0
        %5160 = vmatpush2.xpose.msra.mxu0 0.0
        %5161 = vmatprep.subr.mxu0 0.0
        %5162 = vmatpush2.xpose.msra.mxu0 0.0
        %5163 = vmatprep.subr.mxu0 0.0
        %5164 = vmatpush2.xpose.msra.mxu0 0.0
        %5165 = vmatprep.subr.mxu0 0.0
        %5166 = vmatpush2.xpose.msra.mxu0 0.0
        %5167 = vmatprep.subr.mxu0 0.0
        %5168 = vmatpush2.xpose.msra.mxu0 0.0
        %5169 = vmatprep.mubr.f32.mxu0 0.0
        %5170 = vmatmul.mubr.f32.gmra.mxu0 %v5089
        %v5171 = vpop.f32.mrf.mxu0
        %v5172 = vadd.f32 0.0, %v5171
        %v5173 = vpop.f32.mrf.mxu0
        %5174 = vmatprep.mubr.f32.mxu0 0.0
        %5175 = vmatmul.mubr.f32.gmra.mxu0 %v5091
        %v5176 = vpop.f32.mrf.mxu0
        %v5177 = vadd.f32 0.0, %v5176
        %v5178 = vpop.f32.mrf.mxu0
        %5179 = vmatprep.mubr.f32.mxu0 0.0
        %5180 = vmatmul.mubr.f32.gmra.mxu0 %v5093
        %v5181 = vpop.f32.mrf.mxu0
        %v5182 = vadd.f32 0.0, %v5181
        %v5183 = vpop.f32.mrf.mxu0
        %5184 = vmatprep.mubr.f32.mxu0 0.0
        %5185 = vmatmul.mubr.f32.gmra.mxu0 %v5095
        %v5186 = vpop.f32.mrf.mxu0
        %v5187 = vadd.f32 0.0, %v5186
        %v5188 = vpop.f32.mrf.mxu0
        %5189 = vdwg.mxu0
        %5190 = vrot.lane.b32.xlu0 %v1633, 32
        %v5191 = vpop.permute.xlu0 %5190
        %5192 = vrot.lane.b32.xlu0 %v1639, 32
        %v5193 = vpop.permute.xlu0 %5192
        %5194 = vrot.lane.b32.xlu0 %v1645, 32
        %v5195 = vpop.permute.xlu0 %5194
        %5196 = vrot.lane.b32.xlu0 %v1651, 32
        %v5197 = vpop.permute.xlu0 %5196
        %5198 = vrot.lane.b32.xlu0 %v1635, 32
        %v5199 = vpop.permute.xlu0 %5198
        %5200 = vrot.lane.b32.xlu0 %v1641, 32
        %v5201 = vpop.permute.xlu0 %5200
        %5202 = vrot.lane.b32.xlu0 %v1647, 32
        %v5203 = vpop.permute.xlu0 %5202
        %5204 = vrot.lane.b32.xlu0 %v1653, 32
        %v5205 = vpop.permute.xlu0 %5204
        %v5206 = vsel %vm1848, %v5191, 0
        %v5208 = vsel %vm1848, %v5193, 0
        %v5210 = vsel %vm1848, %v5195, 0
        %v5212 = vsel %vm1848, %v5197, 0
        %v5214 = vsel %vm1848, %v5199, 0
        %v5216 = vsel %vm1848, %v5201, 0
        %v5218 = vsel %vm1848, %v5203, 0
        %v5220 = vsel %vm1848, %v5205, 0
        %5222 = vmatprep.subr.mxu0 0.0
        %5223 = vmatpush1.xpose.msra.mxu0 0.0
        %5224 = vmatprep.subr.mxu0 0.0
        %5225 = vmatpush1.xpose.msra.mxu0 0.0
        %5226 = vmatprep.subr.mxu0 0.0
        %5227 = vmatpush1.xpose.msra.mxu0 0.0
        %5228 = vmatprep.subr.mxu0 0.0
        %5229 = vmatpush1.xpose.msra.mxu0 0.0
        %5230 = vmatprep.subr.mxu0 0.0
        %5231 = vmatpush1.xpose.msra.mxu0 0.0
        %5232 = vmatprep.subr.mxu0 0.0
        %5233 = vmatpush1.xpose.msra.mxu0 0.0
        %5234 = vmatprep.subr.mxu0 0.0
        %5235 = vmatpush1.xpose.msra.mxu0 0.0
        %5236 = vmatprep.subr.mxu0 0.0
        %5237 = vmatpush1.xpose.msra.mxu0 0.0
        %5238 = vmatprep.subr.mxu0 0.0
        %5239 = vmatpush1.xpose.msra.mxu0 0.0
        %5240 = vmatprep.subr.mxu0 0.0
        %5241 = vmatpush1.xpose.msra.mxu0 0.0
        %5242 = vmatprep.subr.mxu0 0.0
        %5243 = vmatpush1.xpose.msra.mxu0 0.0
        %5244 = vmatprep.subr.mxu0 0.0
        %5245 = vmatpush1.xpose.msra.mxu0 0.0
        %5246 = vmatprep.subr.mxu0 0.0
        %5247 = vmatpush1.xpose.msra.mxu0 %v5220
        %5248 = vmatprep.subr.mxu0 0.0
        %5249 = vmatpush1.xpose.msra.mxu0 %v5218
        %5250 = vmatprep.subr.mxu0 0.0
        %5251 = vmatpush1.xpose.msra.mxu0 %v5216
        %5252 = vmatprep.subr.mxu0 0.0
        %5253 = vmatpush1.xpose.msra.mxu0 %v5214
        %5254 = vmatprep.subr.mxu0 0.0
        %5255 = vmatpush2.xpose.msra.mxu0 0.0
        %5256 = vmatprep.subr.mxu0 0.0
        %5257 = vmatpush2.xpose.msra.mxu0 0.0
        %5258 = vmatprep.subr.mxu0 0.0
        %5259 = vmatpush2.xpose.msra.mxu0 0.0
        %5260 = vmatprep.subr.mxu0 0.0
        %5261 = vmatpush2.xpose.msra.mxu0 0.0
        %5262 = vmatprep.subr.mxu0 0.0
        %5263 = vmatpush2.xpose.msra.mxu0 0.0
        %5264 = vmatprep.subr.mxu0 0.0
        %5265 = vmatpush2.xpose.msra.mxu0 0.0
        %5266 = vmatprep.subr.mxu0 0.0
        %5267 = vmatpush2.xpose.msra.mxu0 0.0
        %5268 = vmatprep.subr.mxu0 0.0
        %5269 = vmatpush2.xpose.msra.mxu0 0.0
        %5270 = vmatprep.subr.mxu0 0.0
        %5271 = vmatpush2.xpose.msra.mxu0 0.0
        %5272 = vmatprep.subr.mxu0 0.0
        %5273 = vmatpush2.xpose.msra.mxu0 0.0
        %5274 = vmatprep.subr.mxu0 0.0
        %5275 = vmatpush2.xpose.msra.mxu0 0.0
        %5276 = vmatprep.subr.mxu0 0.0
        %5277 = vmatpush2.xpose.msra.mxu0 0.0
        %5278 = vmatprep.subr.mxu0 0.0
        %5279 = vmatpush2.xpose.msra.mxu0 0.0
        %5280 = vmatprep.subr.mxu0 0.0
        %5281 = vmatpush2.xpose.msra.mxu0 0.0
        %5282 = vmatprep.subr.mxu0 0.0
        %5283 = vmatpush2.xpose.msra.mxu0 0.0
        %5284 = vmatprep.subr.mxu0 0.0
        %5285 = vmatpush2.xpose.msra.mxu0 0.0
        %5286 = vmatprep.mubr.f32.mxu0 0.0
        %5287 = vmatmul.mubr.f32.gmra.mxu0 %v5206
        %v5288 = vpop.f32.mrf.mxu0
        %v5289 = vadd.f32 0.0, %v5288
        %v5290 = vpop.f32.mrf.mxu0
        %5291 = vmatprep.mubr.f32.mxu0 0.0
        %5292 = vmatmul.mubr.f32.gmra.mxu0 %v5208
        %v5293 = vpop.f32.mrf.mxu0
        %v5294 = vadd.f32 0.0, %v5293
        %v5295 = vpop.f32.mrf.mxu0
        %5296 = vmatprep.mubr.f32.mxu0 0.0
        %5297 = vmatmul.mubr.f32.gmra.mxu0 %v5210
        %v5298 = vpop.f32.mrf.mxu0
        %v5299 = vadd.f32 0.0, %v5298
        %v5300 = vpop.f32.mrf.mxu0
        %5301 = vmatprep.mubr.f32.mxu0 0.0
        %5302 = vmatmul.mubr.f32.gmra.mxu0 %v5212
        %v5303 = vpop.f32.mrf.mxu0
        %v5304 = vadd.f32 0.0, %v5303
        %v5305 = vpop.f32.mrf.mxu0
        %5306 = vdwg.mxu0
        %5307 = vrot.lane.b32.xlu0 %v1657, 32
        %v5308 = vpop.permute.xlu0 %5307
        %5309 = vrot.lane.b32.xlu0 %v1663, 32
        %v5310 = vpop.permute.xlu0 %5309
        %5311 = vrot.lane.b32.xlu0 %v1669, 32
        %v5312 = vpop.permute.xlu0 %5311
        %5313 = vrot.lane.b32.xlu0 %v1675, 32
        %v5314 = vpop.permute.xlu0 %5313
        %5315 = vrot.lane.b32.xlu0 %v1659, 32
        %v5316 = vpop.permute.xlu0 %5315
        %5317 = vrot.lane.b32.xlu0 %v1665, 32
        %v5318 = vpop.permute.xlu0 %5317
        %5319 = vrot.lane.b32.xlu0 %v1671, 32
        %v5320 = vpop.permute.xlu0 %5319
        %5321 = vrot.lane.b32.xlu0 %v1677, 32
        %v5322 = vpop.permute.xlu0 %5321
        %v5323 = vsel %vm1848, %v5308, 0
        %v5325 = vsel %vm1848, %v5310, 0
        %v5327 = vsel %vm1848, %v5312, 0
        %v5329 = vsel %vm1848, %v5314, 0
        %v5331 = vsel %vm1848, %v5316, 0
        %v5333 = vsel %vm1848, %v5318, 0
        %v5335 = vsel %vm1848, %v5320, 0
        %v5337 = vsel %vm1848, %v5322, 0
        %5339 = vmatprep.subr.mxu0 0.0
        %5340 = vmatpush1.xpose.msra.mxu0 0.0
        %5341 = vmatprep.subr.mxu0 0.0
        %5342 = vmatpush1.xpose.msra.mxu0 0.0
        %5343 = vmatprep.subr.mxu0 0.0
        %5344 = vmatpush1.xpose.msra.mxu0 0.0
        %5345 = vmatprep.subr.mxu0 0.0
        %5346 = vmatpush1.xpose.msra.mxu0 0.0
        %5347 = vmatprep.subr.mxu0 0.0
        %5348 = vmatpush1.xpose.msra.mxu0 0.0
        %5349 = vmatprep.subr.mxu0 0.0
        %5350 = vmatpush1.xpose.msra.mxu0 0.0
        %5351 = vmatprep.subr.mxu0 0.0
        %5352 = vmatpush1.xpose.msra.mxu0 0.0
        %5353 = vmatprep.subr.mxu0 0.0
        %5354 = vmatpush1.xpose.msra.mxu0 0.0
        %5355 = vmatprep.subr.mxu0 0.0
        %5356 = vmatpush1.xpose.msra.mxu0 0.0
        %5357 = vmatprep.subr.mxu0 0.0
        %5358 = vmatpush1.xpose.msra.mxu0 0.0
        %5359 = vmatprep.subr.mxu0 0.0
        %5360 = vmatpush1.xpose.msra.mxu0 0.0
        %5361 = vmatprep.subr.mxu0 0.0
        %5362 = vmatpush1.xpose.msra.mxu0 0.0
        %5363 = vmatprep.subr.mxu0 0.0
        %5364 = vmatpush1.xpose.msra.mxu0 %v5337
        %5365 = vmatprep.subr.mxu0 0.0
        %5366 = vmatpush1.xpose.msra.mxu0 %v5335
        %5367 = vmatprep.subr.mxu0 0.0
        %5368 = vmatpush1.xpose.msra.mxu0 %v5333
        %5369 = vmatprep.subr.mxu0 0.0
        %5370 = vmatpush1.xpose.msra.mxu0 %v5331
        %5371 = vmatprep.subr.mxu0 0.0
        %5372 = vmatpush2.xpose.msra.mxu0 0.0
        %5373 = vmatprep.subr.mxu0 0.0
        %5374 = vmatpush2.xpose.msra.mxu0 0.0
        %5375 = vmatprep.subr.mxu0 0.0
        %5376 = vmatpush2.xpose.msra.mxu0 0.0
        %5377 = vmatprep.subr.mxu0 0.0
        %5378 = vmatpush2.xpose.msra.mxu0 0.0
        %5379 = vmatprep.subr.mxu0 0.0
        %5380 = vmatpush2.xpose.msra.mxu0 0.0
        %5381 = vmatprep.subr.mxu0 0.0
        %5382 = vmatpush2.xpose.msra.mxu0 0.0
        %5383 = vmatprep.subr.mxu0 0.0
        %5384 = vmatpush2.xpose.msra.mxu0 0.0
        %5385 = vmatprep.subr.mxu0 0.0
        %5386 = vmatpush2.xpose.msra.mxu0 0.0
        %5387 = vmatprep.subr.mxu0 0.0
        %5388 = vmatpush2.xpose.msra.mxu0 0.0
        %5389 = vmatprep.subr.mxu0 0.0
        %5390 = vmatpush2.xpose.msra.mxu0 0.0
        %5391 = vmatprep.subr.mxu0 0.0
        %5392 = vmatpush2.xpose.msra.mxu0 0.0
        %5393 = vmatprep.subr.mxu0 0.0
        %5394 = vmatpush2.xpose.msra.mxu0 0.0
        %5395 = vmatprep.subr.mxu0 0.0
        %5396 = vmatpush2.xpose.msra.mxu0 0.0
        %5397 = vmatprep.subr.mxu0 0.0
        %5398 = vmatpush2.xpose.msra.mxu0 0.0
        %5399 = vmatprep.subr.mxu0 0.0
        %5400 = vmatpush2.xpose.msra.mxu0 0.0
        %5401 = vmatprep.subr.mxu0 0.0
        %5402 = vmatpush2.xpose.msra.mxu0 0.0
        %5403 = vmatprep.mubr.f32.mxu0 0.0
        %5404 = vmatmul.mubr.f32.gmra.mxu0 %v5323
        %v5405 = vpop.f32.mrf.mxu0
        %v5406 = vadd.f32 0.0, %v5405
        %v5407 = vpop.f32.mrf.mxu0
        %5408 = vmatprep.mubr.f32.mxu0 0.0
        %5409 = vmatmul.mubr.f32.gmra.mxu0 %v5325
        %v5410 = vpop.f32.mrf.mxu0
        %v5411 = vadd.f32 0.0, %v5410
        %v5412 = vpop.f32.mrf.mxu0
        %5413 = vmatprep.mubr.f32.mxu0 0.0
        %5414 = vmatmul.mubr.f32.gmra.mxu0 %v5327
        %v5415 = vpop.f32.mrf.mxu0
        %v5416 = vadd.f32 0.0, %v5415
        %v5417 = vpop.f32.mrf.mxu0
        %5418 = vmatprep.mubr.f32.mxu0 0.0
        %5419 = vmatmul.mubr.f32.gmra.mxu0 %v5329
        %v5420 = vpop.f32.mrf.mxu0
        %v5421 = vadd.f32 0.0, %v5420
        %v5422 = vpop.f32.mrf.mxu0
        %5423 = vdwg.mxu0
        %5424 = vrot.lane.b32.xlu0 %v1681, 32
        %v5425 = vpop.permute.xlu0 %5424
        %5426 = vrot.lane.b32.xlu0 %v1687, 32
        %v5427 = vpop.permute.xlu0 %5426
        %5428 = vrot.lane.b32.xlu0 %v1693, 32
        %v5429 = vpop.permute.xlu0 %5428
        %5430 = vrot.lane.b32.xlu0 %v1699, 32
        %v5431 = vpop.permute.xlu0 %5430
        %5432 = vrot.lane.b32.xlu0 %v1683, 32
        %v5433 = vpop.permute.xlu0 %5432
        %5434 = vrot.lane.b32.xlu0 %v1689, 32
        %v5435 = vpop.permute.xlu0 %5434
        %5436 = vrot.lane.b32.xlu0 %v1695, 32
        %v5437 = vpop.permute.xlu0 %5436
        %5438 = vrot.lane.b32.xlu0 %v1701, 32
        %v5439 = vpop.permute.xlu0 %5438
        %v5440 = vsel %vm1848, %v5425, 0
        %v5442 = vsel %vm1848, %v5427, 0
        %v5444 = vsel %vm1848, %v5429, 0
        %v5446 = vsel %vm1848, %v5431, 0
        %v5448 = vsel %vm1848, %v5433, 0
        %v5450 = vsel %vm1848, %v5435, 0
        %v5452 = vsel %vm1848, %v5437, 0
        %v5454 = vsel %vm1848, %v5439, 0
        %5456 = vmatprep.subr.mxu0 0.0
        %5457 = vmatpush1.xpose.msra.mxu0 0.0
        %5458 = vmatprep.subr.mxu0 0.0
        %5459 = vmatpush1.xpose.msra.mxu0 0.0
        %5460 = vmatprep.subr.mxu0 0.0
        %5461 = vmatpush1.xpose.msra.mxu0 0.0
        %5462 = vmatprep.subr.mxu0 0.0
        %5463 = vmatpush1.xpose.msra.mxu0 0.0
        %5464 = vmatprep.subr.mxu0 0.0
        %5465 = vmatpush1.xpose.msra.mxu0 0.0
        %5466 = vmatprep.subr.mxu0 0.0
        %5467 = vmatpush1.xpose.msra.mxu0 0.0
        %5468 = vmatprep.subr.mxu0 0.0
        %5469 = vmatpush1.xpose.msra.mxu0 0.0
        %5470 = vmatprep.subr.mxu0 0.0
        %5471 = vmatpush1.xpose.msra.mxu0 0.0
        %5472 = vmatprep.subr.mxu0 0.0
        %5473 = vmatpush1.xpose.msra.mxu0 0.0
        %5474 = vmatprep.subr.mxu0 0.0
        %5475 = vmatpush1.xpose.msra.mxu0 0.0
        %5476 = vmatprep.subr.mxu0 0.0
        %5477 = vmatpush1.xpose.msra.mxu0 0.0
        %5478 = vmatprep.subr.mxu0 0.0
        %5479 = vmatpush1.xpose.msra.mxu0 0.0
        %5480 = vmatprep.subr.mxu0 0.0
        %5481 = vmatpush1.xpose.msra.mxu0 %v5454
        %5482 = vmatprep.subr.mxu0 0.0
        %5483 = vmatpush1.xpose.msra.mxu0 %v5452
        %5484 = vmatprep.subr.mxu0 0.0
        %5485 = vmatpush1.xpose.msra.mxu0 %v5450
        %5486 = vmatprep.subr.mxu0 0.0
        %5487 = vmatpush1.xpose.msra.mxu0 %v5448
        %5488 = vmatprep.subr.mxu0 0.0
        %5489 = vmatpush2.xpose.msra.mxu0 0.0
        %5490 = vmatprep.subr.mxu0 0.0
        %5491 = vmatpush2.xpose.msra.mxu0 0.0
        %5492 = vmatprep.subr.mxu0 0.0
        %5493 = vmatpush2.xpose.msra.mxu0 0.0
        %5494 = vmatprep.subr.mxu0 0.0
        %5495 = vmatpush2.xpose.msra.mxu0 0.0
        %5496 = vmatprep.subr.mxu0 0.0
        %5497 = vmatpush2.xpose.msra.mxu0 0.0
        %5498 = vmatprep.subr.mxu0 0.0
        %5499 = vmatpush2.xpose.msra.mxu0 0.0
        %5500 = vmatprep.subr.mxu0 0.0
        %5501 = vmatpush2.xpose.msra.mxu0 0.0
        %5502 = vmatprep.subr.mxu0 0.0
        %5503 = vmatpush2.xpose.msra.mxu0 0.0
        %5504 = vmatprep.subr.mxu0 0.0
        %5505 = vmatpush2.xpose.msra.mxu0 0.0
        %5506 = vmatprep.subr.mxu0 0.0
        %5507 = vmatpush2.xpose.msra.mxu0 0.0
        %5508 = vmatprep.subr.mxu0 0.0
        %5509 = vmatpush2.xpose.msra.mxu0 0.0
        %5510 = vmatprep.subr.mxu0 0.0
        %5511 = vmatpush2.xpose.msra.mxu0 0.0
        %5512 = vmatprep.subr.mxu0 0.0
        %5513 = vmatpush2.xpose.msra.mxu0 0.0
        %5514 = vmatprep.subr.mxu0 0.0
        %5515 = vmatpush2.xpose.msra.mxu0 0.0
        %5516 = vmatprep.subr.mxu0 0.0
        %5517 = vmatpush2.xpose.msra.mxu0 0.0
        %5518 = vmatprep.subr.mxu0 0.0
        %5519 = vmatpush2.xpose.msra.mxu0 0.0
        %5520 = vmatprep.mubr.f32.mxu0 0.0
        %5521 = vmatmul.mubr.f32.gmra.mxu0 %v5440
        %v5522 = vpop.f32.mrf.mxu0
        %v5523 = vadd.f32 0.0, %v5522
        %v5524 = vpop.f32.mrf.mxu0
        %5525 = vmatprep.mubr.f32.mxu0 0.0
        %5526 = vmatmul.mubr.f32.gmra.mxu0 %v5442
        %v5527 = vpop.f32.mrf.mxu0
        %v5528 = vadd.f32 0.0, %v5527
        %v5529 = vpop.f32.mrf.mxu0
        %5530 = vmatprep.mubr.f32.mxu0 0.0
        %5531 = vmatmul.mubr.f32.gmra.mxu0 %v5444
        %v5532 = vpop.f32.mrf.mxu0
        %v5533 = vadd.f32 0.0, %v5532
        %v5534 = vpop.f32.mrf.mxu0
        %5535 = vmatprep.mubr.f32.mxu0 0.0
        %5536 = vmatmul.mubr.f32.gmra.mxu0 %v5446
        %v5537 = vpop.f32.mrf.mxu0
        %v5538 = vadd.f32 0.0, %v5537
        %v5539 = vpop.f32.mrf.mxu0
        %5540 = vdwg.mxu0
        %v5541 = vmul.f32 %v5172, 0.17677669
        %v5542 = vmul.f32 %v5177, 0.17677669
        %v5543 = vmul.f32 %v5182, 0.17677669
        %v5544 = vmul.f32 %v5187, 0.17677669
        %v5545 = vmul.f32 %v5289, 0.17677669
        %v5546 = vmul.f32 %v5294, 0.17677669
        %v5547 = vmul.f32 %v5299, 0.17677669
        %v5548 = vmul.f32 %v5304, 0.17677669
        %v5549 = vmul.f32 %v5406, 0.17677669
        %v5550 = vmul.f32 %v5411, 0.17677669
        %v5551 = vmul.f32 %v5416, 0.17677669
        %v5552 = vmul.f32 %v5421, 0.17677669
        %v5553 = vmul.f32 %v5523, 0.17677669
        %v5554 = vmul.f32 %v5528, 0.17677669
        %v5555 = vmul.f32 %v5533, 0.17677669
        %v5556 = vmul.f32 %v5538, 0.17677669
        %v5557 = vsel %vm1848, %v5541, -inf
        %5558 = vmax.xlane.f32.xlu0 %v5557
        %v5559 = vpop.xlane.xlu0 %5558
        %v5560 = vsel %vm1848, %v5542, -inf
        %5561 = vmax.xlane.f32.xlu0 %v5560
        %v5562 = vpop.xlane.xlu0 %5561
        %v5563 = vsel %vm1848, %v5543, -inf
        %5564 = vmax.xlane.f32.xlu0 %v5563
        %v5565 = vpop.xlane.xlu0 %5564
        %v5566 = vsel %vm1848, %v5544, -inf
        %5567 = vmax.xlane.f32.xlu0 %v5566
        %v5568 = vpop.xlane.xlu0 %5567
        %v5569 = vsel %vm1848, %v5545, -inf
        %5570 = vmax.xlane.f32.xlu0 %v5569
        %v5571 = vpop.xlane.xlu0 %5570
        %v5572 = vsel %vm1848, %v5546, -inf
        %5573 = vmax.xlane.f32.xlu0 %v5572
        %v5574 = vpop.xlane.xlu0 %5573
        %v5575 = vsel %vm1848, %v5547, -inf
        %5576 = vmax.xlane.f32.xlu0 %v5575
        %v5577 = vpop.xlane.xlu0 %5576
        %v5578 = vsel %vm1848, %v5548, -inf
        %5579 = vmax.xlane.f32.xlu0 %v5578
        %v5580 = vpop.xlane.xlu0 %5579
        %v5581 = vsel %vm1848, %v5549, -inf
        %5582 = vmax.xlane.f32.xlu0 %v5581
        %v5583 = vpop.xlane.xlu0 %5582
        %v5584 = vsel %vm1848, %v5550, -inf
        %5585 = vmax.xlane.f32.xlu0 %v5584
        %v5586 = vpop.xlane.xlu0 %5585
        %v5587 = vsel %vm1848, %v5551, -inf
        %5588 = vmax.xlane.f32.xlu0 %v5587
        %v5589 = vpop.xlane.xlu0 %5588
        %v5590 = vsel %vm1848, %v5552, -inf
        %5591 = vmax.xlane.f32.xlu0 %v5590
        %v5592 = vpop.xlane.xlu0 %5591
        %v5593 = vsel %vm1848, %v5553, -inf
        %5594 = vmax.xlane.f32.xlu0 %v5593
        %v5595 = vpop.xlane.xlu0 %5594
        %v5596 = vsel %vm1848, %v5554, -inf
        %5597 = vmax.xlane.f32.xlu0 %v5596
        %v5598 = vpop.xlane.xlu0 %5597
        %v5599 = vsel %vm1848, %v5555, -inf
        %5600 = vmax.xlane.f32.xlu0 %v5599
        %v5601 = vpop.xlane.xlu0 %5600
        %v5602 = vsel %vm1848, %v5556, -inf
        %5603 = vmax.xlane.f32.xlu0 %v5602
        %v5604 = vpop.xlane.xlu0 %5603
        %v5605 = vsub.f32 %v5541, %v5559
        %v5606 = vsub.f32 %v5542, %v5562
        %v5607 = vsub.f32 %v5543, %v5565
        %v5608 = vsub.f32 %v5544, %v5568
        %v5609 = vsub.f32 %v5545, %v5571
        %v5610 = vsub.f32 %v5546, %v5574
        %v5611 = vsub.f32 %v5547, %v5577
        %v5612 = vsub.f32 %v5548, %v5580
        %v5613 = vsub.f32 %v5549, %v5583
        %v5614 = vsub.f32 %v5550, %v5586
        %v5615 = vsub.f32 %v5551, %v5589
        %v5616 = vsub.f32 %v5552, %v5592
        %v5617 = vsub.f32 %v5553, %v5595
        %v5618 = vsub.f32 %v5554, %v5598
        %v5619 = vsub.f32 %v5555, %v5601
        %v5620 = vsub.f32 %v5556, %v5604
        %v5621 = vmul.f32 %v5605, 1.442695
        %v5622 = vpow.pop %v5621
        %v5623 = vmul.f32 %v5606, 1.442695
        %v5624 = vpow.pop %v5623
        %v5625 = vmul.f32 %v5607, 1.442695
        %v5626 = vpow.pop %v5625
        %v5627 = vmul.f32 %v5608, 1.442695
        %v5628 = vpow.pop %v5627
        %v5629 = vmul.f32 %v5609, 1.442695
        %v5630 = vpow.pop %v5629
        %v5631 = vmul.f32 %v5610, 1.442695
        %v5632 = vpow.pop %v5631
        %v5633 = vmul.f32 %v5611, 1.442695
        %v5634 = vpow.pop %v5633
        %v5635 = vmul.f32 %v5612, 1.442695
        %v5636 = vpow.pop %v5635
        %v5637 = vmul.f32 %v5613, 1.442695
        %v5638 = vpow.pop %v5637
        %v5639 = vmul.f32 %v5614, 1.442695
        %v5640 = vpow.pop %v5639
        %v5641 = vmul.f32 %v5615, 1.442695
        %v5642 = vpow.pop %v5641
        %v5643 = vmul.f32 %v5616, 1.442695
        %v5644 = vpow.pop %v5643
        %v5645 = vmul.f32 %v5617, 1.442695
        %v5646 = vpow.pop %v5645
        %v5647 = vmul.f32 %v5618, 1.442695
        %v5648 = vpow.pop %v5647
        %v5649 = vmul.f32 %v5619, 1.442695
        %v5650 = vpow.pop %v5649
        %v5651 = vmul.f32 %v5620, 1.442695
        %v5652 = vpow.pop %v5651
        %v5653 = vsel %vm1848, %v5622, 0.0
        %5654 = vadd.xlane.f32.xlu0 %v5653
        %v5655 = vpop.xlane.xlu0 %5654
        %v5656 = vsel %vm1848, %v5624, 0.0
        %5657 = vadd.xlane.f32.xlu0 %v5656
        %v5658 = vpop.xlane.xlu0 %5657
        %v5659 = vsel %vm1848, %v5626, 0.0
        %5660 = vadd.xlane.f32.xlu0 %v5659
        %v5661 = vpop.xlane.xlu0 %5660
        %v5662 = vsel %vm1848, %v5628, 0.0
        %5663 = vadd.xlane.f32.xlu0 %v5662
        %v5664 = vpop.xlane.xlu0 %5663
        %v5665 = vsel %vm1848, %v5630, 0.0
        %5666 = vadd.xlane.f32.xlu0 %v5665
        %v5667 = vpop.xlane.xlu0 %5666
        %v5668 = vsel %vm1848, %v5632, 0.0
        %5669 = vadd.xlane.f32.xlu0 %v5668
        %v5670 = vpop.xlane.xlu0 %5669
        %v5671 = vsel %vm1848, %v5634, 0.0
        %5672 = vadd.xlane.f32.xlu0 %v5671
        %v5673 = vpop.xlane.xlu0 %5672
        %v5674 = vsel %vm1848, %v5636, 0.0
        %5675 = vadd.xlane.f32.xlu0 %v5674
        %v5676 = vpop.xlane.xlu0 %5675
        %v5677 = vsel %vm1848, %v5638, 0.0
        %5678 = vadd.xlane.f32.xlu0 %v5677
        %v5679 = vpop.xlane.xlu0 %5678
        %v5680 = vsel %vm1848, %v5640, 0.0
        %5681 = vadd.xlane.f32.xlu0 %v5680
        %v5682 = vpop.xlane.xlu0 %5681
        %v5683 = vsel %vm1848, %v5642, 0.0
        %5684 = vadd.xlane.f32.xlu0 %v5683
        %v5685 = vpop.xlane.xlu0 %5684
        %v5686 = vsel %vm1848, %v5644, 0.0
        %5687 = vadd.xlane.f32.xlu0 %v5686
        %v5688 = vpop.xlane.xlu0 %5687
        %v5689 = vsel %vm1848, %v5646, 0.0
        %5690 = vadd.xlane.f32.xlu0 %v5689
        %v5691 = vpop.xlane.xlu0 %5690
        %v5692 = vsel %vm1848, %v5648, 0.0
        %5693 = vadd.xlane.f32.xlu0 %v5692
        %v5694 = vpop.xlane.xlu0 %5693
        %v5695 = vsel %vm1848, %v5650, 0.0
        %5696 = vadd.xlane.f32.xlu0 %v5695
        %v5697 = vpop.xlane.xlu0 %5696
        %v5698 = vsel %vm1848, %v5652, 0.0
        %5699 = vadd.xlane.f32.xlu0 %v5698
        %v5700 = vpop.xlane.xlu0 %5699
        %v5701 = vrcp.pop %v5655
        %v5702 = vmul.f32 %v5622, %v5701
        %v5703 = vrcp.pop %v5658
        %v5704 = vmul.f32 %v5624, %v5703
        %v5705 = vrcp.pop %v5661
        %v5706 = vmul.f32 %v5626, %v5705
        %v5707 = vrcp.pop %v5664
        %v5708 = vmul.f32 %v5628, %v5707
        %v5709 = vrcp.pop %v5667
        %v5710 = vmul.f32 %v5630, %v5709
        %v5711 = vrcp.pop %v5670
        %v5712 = vmul.f32 %v5632, %v5711
        %v5713 = vrcp.pop %v5673
        %v5714 = vmul.f32 %v5634, %v5713
        %v5715 = vrcp.pop %v5676
        %v5716 = vmul.f32 %v5636, %v5715
        %v5717 = vrcp.pop %v5679
        %v5718 = vmul.f32 %v5638, %v5717
        %v5719 = vrcp.pop %v5682
        %v5720 = vmul.f32 %v5640, %v5719
        %v5721 = vrcp.pop %v5685
        %v5722 = vmul.f32 %v5642, %v5721
        %v5723 = vrcp.pop %v5688
        %v5724 = vmul.f32 %v5644, %v5723
        %v5725 = vrcp.pop %v5691
        %v5726 = vmul.f32 %v5646, %v5725
        %v5727 = vrcp.pop %v5694
        %v5728 = vmul.f32 %v5648, %v5727
        %v5729 = vrcp.pop %v5697
        %v5730 = vmul.f32 %v5650, %v5729
        %v5731 = vrcp.pop %v5700
        %v5732 = vmul.f32 %v5652, %v5731
        %5733 = vrot.lane.b32.xlu0 %v1770, 32
        %v5734 = vpop.permute.xlu0 %5733
        %5735 = vrot.lane.b32.xlu0 %v1775, 32
        %v5736 = vpop.permute.xlu0 %5735
        %5737 = vrot.lane.b32.xlu0 %v1780, 32
        %v5738 = vpop.permute.xlu0 %5737
        %5739 = vrot.lane.b32.xlu0 %v1785, 32
        %v5740 = vpop.permute.xlu0 %5739
        %v5746 = vsel %vm1848, %v5702, 0
        %v5749 = vsel %vm1848, %v5704, 0
        %v5752 = vsel %vm1848, %v5706, 0
        %v5755 = vsel %vm1848, %v5708, 0
        %5757 = vmatprep.subr.mxu0 0.0
        %5758 = vmatpush1.msra.mxu0 0.0
        %5759 = vmatprep.subr.mxu0 0.0
        %5760 = vmatpush1.msra.mxu0 0.0
        %5761 = vmatprep.subr.mxu0 0.0
        %5762 = vmatpush1.msra.mxu0 0.0
        %5763 = vmatprep.subr.mxu0 0.0
        %5764 = vmatpush1.msra.mxu0 0.0
        %5765 = vmatprep.subr.mxu0 0.0
        %5766 = vmatpush1.msra.mxu0 0.0
        %5767 = vmatprep.subr.mxu0 0.0
        %5768 = vmatpush1.msra.mxu0 0.0
        %5769 = vmatprep.subr.mxu0 0.0
        %5770 = vmatpush1.msra.mxu0 0.0
        %5771 = vmatprep.subr.mxu0 0.0
        %5772 = vmatpush1.msra.mxu0 0.0
        %5773 = vmatprep.subr.mxu0 0.0
        %5774 = vmatpush1.msra.mxu0 0.0
        %5775 = vmatprep.subr.mxu0 0.0
        %5776 = vmatpush1.msra.mxu0 0.0
        %5777 = vmatprep.subr.mxu0 0.0
        %5778 = vmatpush1.msra.mxu0 0.0
        %5779 = vmatprep.subr.mxu0 0.0
        %5780 = vmatpush1.msra.mxu0 0.0
        %5781 = vmatprep.subr.mxu0 0.0
        %5782 = vmatpush1.msra.mxu0 %v5740
        %5783 = vmatprep.subr.mxu0 0.0
        %5784 = vmatpush1.msra.mxu0 %v5738
        %5785 = vmatprep.subr.mxu0 0.0
        %5786 = vmatpush1.msra.mxu0 %v5736
        %5787 = vmatprep.subr.mxu0 0.0
        %5788 = vmatpush1.msra.mxu0 %v5734
        %5789 = vmatprep.subr.mxu0 0.0
        %5790 = vmatpush2.msra.mxu0 0.0
        %5791 = vmatprep.subr.mxu0 0.0
        %5792 = vmatpush2.msra.mxu0 0.0
        %5793 = vmatprep.subr.mxu0 0.0
        %5794 = vmatpush2.msra.mxu0 0.0
        %5795 = vmatprep.subr.mxu0 0.0
        %5796 = vmatpush2.msra.mxu0 0.0
        %5797 = vmatprep.subr.mxu0 0.0
        %5798 = vmatpush2.msra.mxu0 0.0
        %5799 = vmatprep.subr.mxu0 0.0
        %5800 = vmatpush2.msra.mxu0 0.0
        %5801 = vmatprep.subr.mxu0 0.0
        %5802 = vmatpush2.msra.mxu0 0.0
        %5803 = vmatprep.subr.mxu0 0.0
        %5804 = vmatpush2.msra.mxu0 0.0
        %5805 = vmatprep.subr.mxu0 0.0
        %5806 = vmatpush2.msra.mxu0 0.0
        %5807 = vmatprep.subr.mxu0 0.0
        %5808 = vmatpush2.msra.mxu0 0.0
        %5809 = vmatprep.subr.mxu0 0.0
        %5810 = vmatpush2.msra.mxu0 0.0
        %5811 = vmatprep.subr.mxu0 0.0
        %5812 = vmatpush2.msra.mxu0 0.0
        %5813 = vmatprep.subr.mxu0 0.0
        %5814 = vmatpush2.msra.mxu0 0.0
        %5815 = vmatprep.subr.mxu0 0.0
        %5816 = vmatpush2.msra.mxu0 0.0
        %5817 = vmatprep.subr.mxu0 0.0
        %5818 = vmatpush2.msra.mxu0 0.0
        %5819 = vmatprep.subr.mxu0 0.0
        %5820 = vmatpush2.msra.mxu0 0.0
        %5821 = vmatprep.mubr.f32.mxu0 0.0
        %5822 = vmatmul.mubr.f32.gmra.mxu0 %v5746
        %v5823 = vpop.f32.mrf.mxu0
        %v5824 = vadd.f32 0.0, %v5823
        %v5825 = vpop.f32.mrf.mxu0
        %5826 = vmatprep.mubr.f32.mxu0 0.0
        %5827 = vmatmul.mubr.f32.gmra.mxu0 %v5749
        %v5828 = vpop.f32.mrf.mxu0
        %v5829 = vadd.f32 0.0, %v5828
        %v5830 = vpop.f32.mrf.mxu0
        %5831 = vmatprep.mubr.f32.mxu0 0.0
        %5832 = vmatmul.mubr.f32.gmra.mxu0 %v5752
        %v5833 = vpop.f32.mrf.mxu0
        %v5834 = vadd.f32 0.0, %v5833
        %v5835 = vpop.f32.mrf.mxu0
        %5836 = vmatprep.mubr.f32.mxu0 0.0
        %5837 = vmatmul.mubr.f32.gmra.mxu0 %v5755
        %v5838 = vpop.f32.mrf.mxu0
        %v5839 = vadd.f32 0.0, %v5838
        %v5840 = vpop.f32.mrf.mxu0
        %5841 = vdwg.mxu0
        %5842 = vrot.lane.b32.xlu0 %v1790, 32
        %v5843 = vpop.permute.xlu0 %5842
        %5844 = vrot.lane.b32.xlu0 %v1795, 32
        %v5845 = vpop.permute.xlu0 %5844
        %5846 = vrot.lane.b32.xlu0 %v1800, 32
        %v5847 = vpop.permute.xlu0 %5846
        %5848 = vrot.lane.b32.xlu0 %v1805, 32
        %v5849 = vpop.permute.xlu0 %5848
        %v5855 = vsel %vm1848, %v5710, 0
        %v5858 = vsel %vm1848, %v5712, 0
        %v5861 = vsel %vm1848, %v5714, 0
        %v5864 = vsel %vm1848, %v5716, 0
        %5866 = vmatprep.subr.mxu0 0.0
        %5867 = vmatpush1.msra.mxu0 0.0
        %5868 = vmatprep.subr.mxu0 0.0
        %5869 = vmatpush1.msra.mxu0 0.0
        %5870 = vmatprep.subr.mxu0 0.0
        %5871 = vmatpush1.msra.mxu0 0.0
        %5872 = vmatprep.subr.mxu0 0.0
        %5873 = vmatpush1.msra.mxu0 0.0
        %5874 = vmatprep.subr.mxu0 0.0
        %5875 = vmatpush1.msra.mxu0 0.0
        %5876 = vmatprep.subr.mxu0 0.0
        %5877 = vmatpush1.msra.mxu0 0.0
        %5878 = vmatprep.subr.mxu0 0.0
        %5879 = vmatpush1.msra.mxu0 0.0
        %5880 = vmatprep.subr.mxu0 0.0
        %5881 = vmatpush1.msra.mxu0 0.0
        %5882 = vmatprep.subr.mxu0 0.0
        %5883 = vmatpush1.msra.mxu0 0.0
        %5884 = vmatprep.subr.mxu0 0.0
        %5885 = vmatpush1.msra.mxu0 0.0
        %5886 = vmatprep.subr.mxu0 0.0
        %5887 = vmatpush1.msra.mxu0 0.0
        %5888 = vmatprep.subr.mxu0 0.0
        %5889 = vmatpush1.msra.mxu0 0.0
        %5890 = vmatprep.subr.mxu0 0.0
        %5891 = vmatpush1.msra.mxu0 %v5849
        %5892 = vmatprep.subr.mxu0 0.0
        %5893 = vmatpush1.msra.mxu0 %v5847
        %5894 = vmatprep.subr.mxu0 0.0
        %5895 = vmatpush1.msra.mxu0 %v5845
        %5896 = vmatprep.subr.mxu0 0.0
        %5897 = vmatpush1.msra.mxu0 %v5843
        %5898 = vmatprep.subr.mxu0 0.0
        %5899 = vmatpush2.msra.mxu0 0.0
        %5900 = vmatprep.subr.mxu0 0.0
        %5901 = vmatpush2.msra.mxu0 0.0
        %5902 = vmatprep.subr.mxu0 0.0
        %5903 = vmatpush2.msra.mxu0 0.0
        %5904 = vmatprep.subr.mxu0 0.0
        %5905 = vmatpush2.msra.mxu0 0.0
        %5906 = vmatprep.subr.mxu0 0.0
        %5907 = vmatpush2.msra.mxu0 0.0
        %5908 = vmatprep.subr.mxu0 0.0
        %5909 = vmatpush2.msra.mxu0 0.0
        %5910 = vmatprep.subr.mxu0 0.0
        %5911 = vmatpush2.msra.mxu0 0.0
        %5912 = vmatprep.subr.mxu0 0.0
        %5913 = vmatpush2.msra.mxu0 0.0
        %5914 = vmatprep.subr.mxu0 0.0
        %5915 = vmatpush2.msra.mxu0 0.0
        %5916 = vmatprep.subr.mxu0 0.0
        %5917 = vmatpush2.msra.mxu0 0.0
        %5918 = vmatprep.subr.mxu0 0.0
        %5919 = vmatpush2.msra.mxu0 0.0
        %5920 = vmatprep.subr.mxu0 0.0
        %5921 = vmatpush2.msra.mxu0 0.0
        %5922 = vmatprep.subr.mxu0 0.0
        %5923 = vmatpush2.msra.mxu0 0.0
        %5924 = vmatprep.subr.mxu0 0.0
        %5925 = vmatpush2.msra.mxu0 0.0
        %5926 = vmatprep.subr.mxu0 0.0
        %5927 = vmatpush2.msra.mxu0 0.0
        %5928 = vmatprep.subr.mxu0 0.0
        %5929 = vmatpush2.msra.mxu0 0.0
        %5930 = vmatprep.mubr.f32.mxu0 0.0
        %5931 = vmatmul.mubr.f32.gmra.mxu0 %v5855
        %v5932 = vpop.f32.mrf.mxu0
        %v5933 = vadd.f32 0.0, %v5932
        %v5934 = vpop.f32.mrf.mxu0
        %5935 = vmatprep.mubr.f32.mxu0 0.0
        %5936 = vmatmul.mubr.f32.gmra.mxu0 %v5858
        %v5937 = vpop.f32.mrf.mxu0
        %v5938 = vadd.f32 0.0, %v5937
        %v5939 = vpop.f32.mrf.mxu0
        %5940 = vmatprep.mubr.f32.mxu0 0.0
        %5941 = vmatmul.mubr.f32.gmra.mxu0 %v5861
        %v5942 = vpop.f32.mrf.mxu0
        %v5943 = vadd.f32 0.0, %v5942
        %v5944 = vpop.f32.mrf.mxu0
        %5945 = vmatprep.mubr.f32.mxu0 0.0
        %5946 = vmatmul.mubr.f32.gmra.mxu0 %v5864
        %v5947 = vpop.f32.mrf.mxu0
        %v5948 = vadd.f32 0.0, %v5947
        %v5949 = vpop.f32.mrf.mxu0
        %5950 = vdwg.mxu0
        %5951 = vrot.lane.b32.xlu0 %v1810, 32
        %v5952 = vpop.permute.xlu0 %5951
        %5953 = vrot.lane.b32.xlu0 %v1815, 32
        %v5954 = vpop.permute.xlu0 %5953
        %5955 = vrot.lane.b32.xlu0 %v1820, 32
        %v5956 = vpop.permute.xlu0 %5955
        %5957 = vrot.lane.b32.xlu0 %v1825, 32
        %v5958 = vpop.permute.xlu0 %5957
        %v5964 = vsel %vm1848, %v5718, 0
        %v5967 = vsel %vm1848, %v5720, 0
        %v5970 = vsel %vm1848, %v5722, 0
        %v5973 = vsel %vm1848, %v5724, 0
        %5975 = vmatprep.subr.mxu0 0.0
        %5976 = vmatpush1.msra.mxu0 0.0
        %5977 = vmatprep.subr.mxu0 0.0
        %5978 = vmatpush1.msra.mxu0 0.0
        %5979 = vmatprep.subr.mxu0 0.0
        %5980 = vmatpush1.msra.mxu0 0.0
        %5981 = vmatprep.subr.mxu0 0.0
        %5982 = vmatpush1.msra.mxu0 0.0
        %5983 = vmatprep.subr.mxu0 0.0
        %5984 = vmatpush1.msra.mxu0 0.0
        %5985 = vmatprep.subr.mxu0 0.0
        %5986 = vmatpush1.msra.mxu0 0.0
        %5987 = vmatprep.subr.mxu0 0.0
        %5988 = vmatpush1.msra.mxu0 0.0
        %5989 = vmatprep.subr.mxu0 0.0
        %5990 = vmatpush1.msra.mxu0 0.0
        %5991 = vmatprep.subr.mxu0 0.0
        %5992 = vmatpush1.msra.mxu0 0.0
        %5993 = vmatprep.subr.mxu0 0.0
        %5994 = vmatpush1.msra.mxu0 0.0
        %5995 = vmatprep.subr.mxu0 0.0
        %5996 = vmatpush1.msra.mxu0 0.0
        %5997 = vmatprep.subr.mxu0 0.0
        %5998 = vmatpush1.msra.mxu0 0.0
        %5999 = vmatprep.subr.mxu0 0.0
        %6000 = vmatpush1.msra.mxu0 %v5958
        %6001 = vmatprep.subr.mxu0 0.0
        %6002 = vmatpush1.msra.mxu0 %v5956
        %6003 = vmatprep.subr.mxu0 0.0
        %6004 = vmatpush1.msra.mxu0 %v5954
        %6005 = vmatprep.subr.mxu0 0.0
        %6006 = vmatpush1.msra.mxu0 %v5952
        %6007 = vmatprep.subr.mxu0 0.0
        %6008 = vmatpush2.msra.mxu0 0.0
        %6009 = vmatprep.subr.mxu0 0.0
        %6010 = vmatpush2.msra.mxu0 0.0
        %6011 = vmatprep.subr.mxu0 0.0
        %6012 = vmatpush2.msra.mxu0 0.0
        %6013 = vmatprep.subr.mxu0 0.0
        %6014 = vmatpush2.msra.mxu0 0.0
        %6015 = vmatprep.subr.mxu0 0.0
        %6016 = vmatpush2.msra.mxu0 0.0
        %6017 = vmatprep.subr.mxu0 0.0
        %6018 = vmatpush2.msra.mxu0 0.0
        %6019 = vmatprep.subr.mxu0 0.0
        %6020 = vmatpush2.msra.mxu0 0.0
        %6021 = vmatprep.subr.mxu0 0.0
        %6022 = vmatpush2.msra.mxu0 0.0
        %6023 = vmatprep.subr.mxu0 0.0
        %6024 = vmatpush2.msra.mxu0 0.0
        %6025 = vmatprep.subr.mxu0 0.0
        %6026 = vmatpush2.msra.mxu0 0.0
        %6027 = vmatprep.subr.mxu0 0.0
        %6028 = vmatpush2.msra.mxu0 0.0
        %6029 = vmatprep.subr.mxu0 0.0
        %6030 = vmatpush2.msra.mxu0 0.0
        %6031 = vmatprep.subr.mxu0 0.0
        %6032 = vmatpush2.msra.mxu0 0.0
        %6033 = vmatprep.subr.mxu0 0.0
        %6034 = vmatpush2.msra.mxu0 0.0
        %6035 = vmatprep.subr.mxu0 0.0
        %6036 = vmatpush2.msra.mxu0 0.0
        %6037 = vmatprep.subr.mxu0 0.0
        %6038 = vmatpush2.msra.mxu0 0.0
        %6039 = vmatprep.mubr.f32.mxu0 0.0
        %6040 = vmatmul.mubr.f32.gmra.mxu0 %v5964
        %v6041 = vpop.f32.mrf.mxu0
        %v6042 = vadd.f32 0.0, %v6041
        %v6043 = vpop.f32.mrf.mxu0
        %6044 = vmatprep.mubr.f32.mxu0 0.0
        %6045 = vmatmul.mubr.f32.gmra.mxu0 %v5967
        %v6046 = vpop.f32.mrf.mxu0
        %v6047 = vadd.f32 0.0, %v6046
        %v6048 = vpop.f32.mrf.mxu0
        %6049 = vmatprep.mubr.f32.mxu0 0.0
        %6050 = vmatmul.mubr.f32.gmra.mxu0 %v5970
        %v6051 = vpop.f32.mrf.mxu0
        %v6052 = vadd.f32 0.0, %v6051
        %v6053 = vpop.f32.mrf.mxu0
        %6054 = vmatprep.mubr.f32.mxu0 0.0
        %6055 = vmatmul.mubr.f32.gmra.mxu0 %v5973
        %v6056 = vpop.f32.mrf.mxu0
        %v6057 = vadd.f32 0.0, %v6056
        %v6058 = vpop.f32.mrf.mxu0
        %6059 = vdwg.mxu0
        %6060 = vrot.lane.b32.xlu0 %v1830, 32
        %v6061 = vpop.permute.xlu0 %6060
        %6062 = vrot.lane.b32.xlu0 %v1835, 32
        %v6063 = vpop.permute.xlu0 %6062
        %6064 = vrot.lane.b32.xlu0 %v1840, 32
        %v6065 = vpop.permute.xlu0 %6064
        %6066 = vrot.lane.b32.xlu0 %v1845, 32
        %v6067 = vpop.permute.xlu0 %6066
        %v6073 = vsel %vm1848, %v5726, 0
        %v6076 = vsel %vm1848, %v5728, 0
        %v6079 = vsel %vm1848, %v5730, 0
        %v6082 = vsel %vm1848, %v5732, 0
        %6084 = vmatprep.subr.mxu0 0.0
        %6085 = vmatpush1.msra.mxu0 0.0
        %6086 = vmatprep.subr.mxu0 0.0
        %6087 = vmatpush1.msra.mxu0 0.0
        %6088 = vmatprep.subr.mxu0 0.0
        %6089 = vmatpush1.msra.mxu0 0.0
        %6090 = vmatprep.subr.mxu0 0.0
        %6091 = vmatpush1.msra.mxu0 0.0
        %6092 = vmatprep.subr.mxu0 0.0
        %6093 = vmatpush1.msra.mxu0 0.0
        %6094 = vmatprep.subr.mxu0 0.0
        %6095 = vmatpush1.msra.mxu0 0.0
        %6096 = vmatprep.subr.mxu0 0.0
        %6097 = vmatpush1.msra.mxu0 0.0
        %6098 = vmatprep.subr.mxu0 0.0
        %6099 = vmatpush1.msra.mxu0 0.0
        %6100 = vmatprep.subr.mxu0 0.0
        %6101 = vmatpush1.msra.mxu0 0.0
        %6102 = vmatprep.subr.mxu0 0.0
        %6103 = vmatpush1.msra.mxu0 0.0
        %6104 = vmatprep.subr.mxu0 0.0
        %6105 = vmatpush1.msra.mxu0 0.0
        %6106 = vmatprep.subr.mxu0 0.0
        %6107 = vmatpush1.msra.mxu0 0.0
        %6108 = vmatprep.subr.mxu0 0.0
        %6109 = vmatpush1.msra.mxu0 %v6067
        %6110 = vmatprep.subr.mxu0 0.0
        %6111 = vmatpush1.msra.mxu0 %v6065
        %6112 = vmatprep.subr.mxu0 0.0
        %6113 = vmatpush1.msra.mxu0 %v6063
        %6114 = vmatprep.subr.mxu0 0.0
        %6115 = vmatpush1.msra.mxu0 %v6061
        %6116 = vmatprep.subr.mxu0 0.0
        %6117 = vmatpush2.msra.mxu0 0.0
        %6118 = vmatprep.subr.mxu0 0.0
        %6119 = vmatpush2.msra.mxu0 0.0
        %6120 = vmatprep.subr.mxu0 0.0
        %6121 = vmatpush2.msra.mxu0 0.0
        %6122 = vmatprep.subr.mxu0 0.0
        %6123 = vmatpush2.msra.mxu0 0.0
        %6124 = vmatprep.subr.mxu0 0.0
        %6125 = vmatpush2.msra.mxu0 0.0
        %6126 = vmatprep.subr.mxu0 0.0
        %6127 = vmatpush2.msra.mxu0 0.0
        %6128 = vmatprep.subr.mxu0 0.0
        %6129 = vmatpush2.msra.mxu0 0.0
        %6130 = vmatprep.subr.mxu0 0.0
        %6131 = vmatpush2.msra.mxu0 0.0
        %6132 = vmatprep.subr.mxu0 0.0
        %6133 = vmatpush2.msra.mxu0 0.0
        %6134 = vmatprep.subr.mxu0 0.0
        %6135 = vmatpush2.msra.mxu0 0.0
        %6136 = vmatprep.subr.mxu0 0.0
        %6137 = vmatpush2.msra.mxu0 0.0
        %6138 = vmatprep.subr.mxu0 0.0
        %6139 = vmatpush2.msra.mxu0 0.0
        %6140 = vmatprep.subr.mxu0 0.0
        %6141 = vmatpush2.msra.mxu0 0.0
        %6142 = vmatprep.subr.mxu0 0.0
        %6143 = vmatpush2.msra.mxu0 0.0
        %6144 = vmatprep.subr.mxu0 0.0
        %6145 = vmatpush2.msra.mxu0 0.0
        %6146 = vmatprep.subr.mxu0 0.0
        %6147 = vmatpush2.msra.mxu0 0.0
        %6148 = vmatprep.mubr.f32.mxu0 0.0
        %6149 = vmatmul.mubr.f32.gmra.mxu0 %v6073
        %v6150 = vpop.f32.mrf.mxu0
        %v6151 = vadd.f32 0.0, %v6150
        %v6152 = vpop.f32.mrf.mxu0
        %6153 = vmatprep.mubr.f32.mxu0 0.0
        %6154 = vmatmul.mubr.f32.gmra.mxu0 %v6076
        %v6155 = vpop.f32.mrf.mxu0
        %v6156 = vadd.f32 0.0, %v6155
        %v6157 = vpop.f32.mrf.mxu0
        %6158 = vmatprep.mubr.f32.mxu0 0.0
        %6159 = vmatmul.mubr.f32.gmra.mxu0 %v6079
        %v6160 = vpop.f32.mrf.mxu0
        %v6161 = vadd.f32 0.0, %v6160
        %v6162 = vpop.f32.mrf.mxu0
        %6163 = vmatprep.mubr.f32.mxu0 0.0
        %6164 = vmatmul.mubr.f32.gmra.mxu0 %v6082
        %v6165 = vpop.f32.mrf.mxu0
        %v6166 = vadd.f32 0.0, %v6165
        %v6167 = vpop.f32.mrf.mxu0
        %6168 = vdwg.mxu0
        %6185 = vrot.lane.b32.xlu0 %v3620, 32
        %v6186 = vpop.permute.xlu0 %6185
        %6187 = vrot.lane.b32.xlu0 %v3625, 32
        %v6188 = vpop.permute.xlu0 %6187
        %6189 = vrot.lane.b32.xlu0 %v3630, 32
        %v6190 = vpop.permute.xlu0 %6189
        %6191 = vrot.lane.b32.xlu0 %v3635, 32
        %v6192 = vpop.permute.xlu0 %6191
        %6193 = vrot.lane.b32.xlu0 %v3733, 32
        %v6194 = vpop.permute.xlu0 %6193
        %6195 = vrot.lane.b32.xlu0 %v3738, 32
        %v6196 = vpop.permute.xlu0 %6195
        %6197 = vrot.lane.b32.xlu0 %v3743, 32
        %v6198 = vpop.permute.xlu0 %6197
        %6199 = vrot.lane.b32.xlu0 %v3748, 32
        %v6200 = vpop.permute.xlu0 %6199
        %6201 = vrot.lane.b32.xlu0 %v3846, 32
        %v6202 = vpop.permute.xlu0 %6201
        %6203 = vrot.lane.b32.xlu0 %v3851, 32
        %v6204 = vpop.permute.xlu0 %6203
        %6205 = vrot.lane.b32.xlu0 %v3856, 32
        %v6206 = vpop.permute.xlu0 %6205
        %6207 = vrot.lane.b32.xlu0 %v3861, 32
        %v6208 = vpop.permute.xlu0 %6207
        %6209 = vrot.lane.b32.xlu0 %v3959, 32
        %v6210 = vpop.permute.xlu0 %6209
        %6211 = vrot.lane.b32.xlu0 %v3964, 32
        %v6212 = vpop.permute.xlu0 %6211
        %6213 = vrot.lane.b32.xlu0 %v3969, 32
        %v6214 = vpop.permute.xlu0 %6213
        %6215 = vrot.lane.b32.xlu0 %v3974, 32
        %v6216 = vpop.permute.xlu0 %6215
        %6249 = vrot.lane.b32.xlu0 %v4728, 64
        %v6250 = vpop.permute.xlu0 %6249
        %6251 = vrot.lane.b32.xlu0 %v4733, 64
        %v6252 = vpop.permute.xlu0 %6251
        %6253 = vrot.lane.b32.xlu0 %v4738, 64
        %v6254 = vpop.permute.xlu0 %6253
        %6255 = vrot.lane.b32.xlu0 %v4743, 64
        %v6256 = vpop.permute.xlu0 %6255
        %6257 = vrot.lane.b32.xlu0 %v4837, 64
        %v6258 = vpop.permute.xlu0 %6257
        %6259 = vrot.lane.b32.xlu0 %v4842, 64
        %v6260 = vpop.permute.xlu0 %6259
        %6261 = vrot.lane.b32.xlu0 %v4847, 64
        %v6262 = vpop.permute.xlu0 %6261
        %6263 = vrot.lane.b32.xlu0 %v4852, 64
        %v6264 = vpop.permute.xlu0 %6263
        %6265 = vrot.lane.b32.xlu0 %v4946, 64
        %v6266 = vpop.permute.xlu0 %6265
        %6267 = vrot.lane.b32.xlu0 %v4951, 64
        %v6268 = vpop.permute.xlu0 %6267
        %6269 = vrot.lane.b32.xlu0 %v4956, 64
        %v6270 = vpop.permute.xlu0 %6269
        %6271 = vrot.lane.b32.xlu0 %v4961, 64
        %v6272 = vpop.permute.xlu0 %6271
        %6273 = vrot.lane.b32.xlu0 %v5055, 64
        %v6274 = vpop.permute.xlu0 %6273
        %6275 = vrot.lane.b32.xlu0 %v5060, 64
        %v6276 = vpop.permute.xlu0 %6275
        %6277 = vrot.lane.b32.xlu0 %v5065, 64
        %v6278 = vpop.permute.xlu0 %6277
        %6279 = vrot.lane.b32.xlu0 %v5070, 64
        %v6280 = vpop.permute.xlu0 %6279
        %6313 = vrot.lane.b32.xlu0 %v5824, 96
        %v6314 = vpop.permute.xlu0 %6313
        %6315 = vrot.lane.b32.xlu0 %v5829, 96
        %v6316 = vpop.permute.xlu0 %6315
        %6317 = vrot.lane.b32.xlu0 %v5834, 96
        %v6318 = vpop.permute.xlu0 %6317
        %6319 = vrot.lane.b32.xlu0 %v5839, 96
        %v6320 = vpop.permute.xlu0 %6319
        %6321 = vrot.lane.b32.xlu0 %v5933, 96
        %v6322 = vpop.permute.xlu0 %6321
        %6323 = vrot.lane.b32.xlu0 %v5938, 96
        %v6324 = vpop.permute.xlu0 %6323
        %6325 = vrot.lane.b32.xlu0 %v5943, 96
        %v6326 = vpop.permute.xlu0 %6325
        %6327 = vrot.lane.b32.xlu0 %v5948, 96
        %v6328 = vpop.permute.xlu0 %6327
        %6329 = vrot.lane.b32.xlu0 %v6042, 96
        %v6330 = vpop.permute.xlu0 %6329
        %6331 = vrot.lane.b32.xlu0 %v6047, 96
        %v6332 = vpop.permute.xlu0 %6331
        %6333 = vrot.lane.b32.xlu0 %v6052, 96
        %v6334 = vpop.permute.xlu0 %6333
        %6335 = vrot.lane.b32.xlu0 %v6057, 96
        %v6336 = vpop.permute.xlu0 %6335
        %6337 = vrot.lane.b32.xlu0 %v6151, 96
        %v6338 = vpop.permute.xlu0 %6337
        %6339 = vrot.lane.b32.xlu0 %v6156, 96
        %v6340 = vpop.permute.xlu0 %6339
        %6341 = vrot.lane.b32.xlu0 %v6161, 96
        %v6342 = vpop.permute.xlu0 %6341
        %6343 = vrot.lane.b32.xlu0 %v6166, 96
        %v6344 = vpop.permute.xlu0 %6343
        %v6361 = vsel %vm1848, %v2556, %v6186
        %v6362 = vsel %vm1848, %v2561, %v6188
        %v6363 = vsel %vm1848, %v2566, %v6190
        %v6364 = vsel %vm1848, %v2571, %v6192
        %v6365 = vsel %vm1848, %v2653, %v6194
        %v6366 = vsel %vm1848, %v2658, %v6196
        %v6367 = vsel %vm1848, %v2663, %v6198
        %v6368 = vsel %vm1848, %v2668, %v6200
        %v6369 = vsel %vm1848, %v2750, %v6202
        %v6370 = vsel %vm1848, %v2755, %v6204
        %v6371 = vsel %vm1848, %v2760, %v6206
        %v6372 = vsel %vm1848, %v2765, %v6208
        %v6373 = vsel %vm1848, %v2847, %v6210
        %v6374 = vsel %vm1848, %v2852, %v6212
        %v6375 = vsel %vm1848, %v2857, %v6214
        %v6376 = vsel %vm1848, %v2862, %v6216
        %vm6377 = vcmask 523264
        %v6378 = vsel %vm6377, %v6361, %v6250
        %v6379 = vsel %vm6377, %v6362, %v6252
        %v6380 = vsel %vm6377, %v6363, %v6254
        %v6381 = vsel %vm6377, %v6364, %v6256
        %v6382 = vsel %vm6377, %v6365, %v6258
        %v6383 = vsel %vm6377, %v6366, %v6260
        %v6384 = vsel %vm6377, %v6367, %v6262
        %v6385 = vsel %vm6377, %v6368, %v6264
        %v6386 = vsel %vm6377, %v6369, %v6266
        %v6387 = vsel %vm6377, %v6370, %v6268
        %v6388 = vsel %vm6377, %v6371, %v6270
        %v6389 = vsel %vm6377, %v6372, %v6272
        %v6390 = vsel %vm6377, %v6373, %v6274
        %v6391 = vsel %vm6377, %v6374, %v6276
        %v6392 = vsel %vm6377, %v6375, %v6278
        %v6393 = vsel %vm6377, %v6376, %v6280
        %vm6394 = vcmask 785408
        %v6395 = vsel %vm6394, %v6378, %v6314
        %v6396 = vsel %vm6394, %v6379, %v6316
        %v6397 = vsel %vm6394, %v6380, %v6318
        %v6398 = vsel %vm6394, %v6381, %v6320
        %v6399 = vsel %vm6394, %v6382, %v6322
        %v6400 = vsel %vm6394, %v6383, %v6324
        %v6401 = vsel %vm6394, %v6384, %v6326
        %v6402 = vsel %vm6394, %v6385, %v6328
        %v6403 = vsel %vm6394, %v6386, %v6330
        %v6404 = vsel %vm6394, %v6387, %v6332
        %v6405 = vsel %vm6394, %v6388, %v6334
        %v6406 = vsel %vm6394, %v6389, %v6336
        %v6407 = vsel %vm6394, %v6390, %v6338
        %v6408 = vsel %vm6394, %v6391, %v6340
        %v6409 = vsel %vm6394, %v6392, %v6342
        %v6410 = vsel %vm6394, %v6393, %v6344
        %v6411 = vld [vmem:[%s837] sm:$0xff]
        %v6412 = vld [vmem:[%s837 + $0x8] sm:$0xff]
        %v6413 = vld [vmem:[%s837 + $0x10] sm:$0xff]
        %v6414 = vld [vmem:[%s837 + $0x18] sm:$0xff]
        %v6415 = vld [vmem:[%s837 + $0x20] sm:$0xff]
        %v6416 = vld [vmem:[%s837 + $0x28] sm:$0xff]
        %v6417 = vld [vmem:[%s837 + $0x30] sm:$0xff]
        %v6418 = vld [vmem:[%s837 + $0x38] sm:$0xff]
        %v6419 = vld [vmem:[%s837 + $0x40] sm:$0xff]
        %v6420 = vld [vmem:[%s837 + $0x48] sm:$0xff]
        %v6421 = vld [vmem:[%s837 + $0x50] sm:$0xff]
        %v6422 = vld [vmem:[%s837 + $0x58] sm:$0xff]
        %v6423 = vld [vmem:[%s837 + $0x60] sm:$0xff]
        %v6424 = vld [vmem:[%s837 + $0x68] sm:$0xff]
        %v6425 = vld [vmem:[%s837 + $0x70] sm:$0xff]
        %v6426 = vld [vmem:[%s837 + $0x78] sm:$0xff]
        %6427 = vmatprep.subr.mxu0 0.0
        %6428 = vmatpush1.msra.mxu0 %v6426
        %6429 = vmatprep.subr.mxu0 0.0
        %6430 = vmatpush1.msra.mxu0 %v6425
        %6431 = vmatprep.subr.mxu0 0.0
        %6432 = vmatpush1.msra.mxu0 %v6424
        %6433 = vmatprep.subr.mxu0 0.0
        %6434 = vmatpush1.msra.mxu0 %v6423
        %6435 = vmatprep.subr.mxu0 0.0
        %6436 = vmatpush1.msra.mxu0 %v6422
        %6437 = vmatprep.subr.mxu0 0.0
        %6438 = vmatpush1.msra.mxu0 %v6421
        %6439 = vmatprep.subr.mxu0 0.0
        %6440 = vmatpush1.msra.mxu0 %v6420
        %6441 = vmatprep.subr.mxu0 0.0
        %6442 = vmatpush1.msra.mxu0 %v6419
        %6443 = vmatprep.subr.mxu0 0.0
        %6444 = vmatpush1.msra.mxu0 %v6418
        %6445 = vmatprep.subr.mxu0 0.0
        %6446 = vmatpush1.msra.mxu0 %v6417
        %6447 = vmatprep.subr.mxu0 0.0
        %6448 = vmatpush1.msra.mxu0 %v6416
        %6449 = vmatprep.subr.mxu0 0.0
        %6450 = vmatpush1.msra.mxu0 %v6415
        %6451 = vmatprep.subr.mxu0 0.0
        %6452 = vmatpush1.msra.mxu0 %v6414
        %6453 = vmatprep.subr.mxu0 0.0
        %6454 = vmatpush1.msra.mxu0 %v6413
        %6455 = vmatprep.subr.mxu0 0.0
        %6456 = vmatpush1.msra.mxu0 %v6412
        %6457 = vmatprep.subr.mxu0 0.0
        %6458 = vmatpush1.msra.mxu0 %v6411
        %6459 = vmatprep.subr.mxu0 0.0
        %6460 = vmatpush2.msra.mxu0 0.0
        %6461 = vmatprep.subr.mxu0 0.0
        %6462 = vmatpush2.msra.mxu0 0.0
        %6463 = vmatprep.subr.mxu0 0.0
        %6464 = vmatpush2.msra.mxu0 0.0
        %6465 = vmatprep.subr.mxu0 0.0
        %6466 = vmatpush2.msra.mxu0 0.0
        %6467 = vmatprep.subr.mxu0 0.0
        %6468 = vmatpush2.msra.mxu0 0.0
        %6469 = vmatprep.subr.mxu0 0.0
        %6470 = vmatpush2.msra.mxu0 0.0
        %6471 = vmatprep.subr.mxu0 0.0
        %6472 = vmatpush2.msra.mxu0 0.0
        %6473 = vmatprep.subr.mxu0 0.0
        %6474 = vmatpush2.msra.mxu0 0.0
        %6475 = vmatprep.subr.mxu0 0.0
        %6476 = vmatpush2.msra.mxu0 0.0
        %6477 = vmatprep.subr.mxu0 0.0
        %6478 = vmatpush2.msra.mxu0 0.0
        %6479 = vmatprep.subr.mxu0 0.0
        %6480 = vmatpush2.msra.mxu0 0.0
        %6481 = vmatprep.subr.mxu0 0.0
        %6482 = vmatpush2.msra.mxu0 0.0
        %6483 = vmatprep.subr.mxu0 0.0
        %6484 = vmatpush2.msra.mxu0 0.0
        %6485 = vmatprep.subr.mxu0 0.0
        %6486 = vmatpush2.msra.mxu0 0.0
        %6487 = vmatprep.subr.mxu0 0.0
        %6488 = vmatpush2.msra.mxu0 0.0
        %6489 = vmatprep.subr.mxu0 0.0
        %6490 = vmatpush2.msra.mxu0 0.0
        %6491 = vmatprep.mubr.f32.mxu0 0.0
        %6492 = vmatmul.mubr.f32.gmra.mxu0 %v6395
        %v6493 = vpop.f32.mrf.mxu0
        %v6494 = vadd.f32 0.0, %v6493
        %v6495 = vpop.f32.mrf.mxu0
        %6496 = vmatprep.mubr.f32.mxu0 0.0
        %6497 = vmatmul.mubr.f32.gmra.mxu0 %v6396
        %v6498 = vpop.f32.mrf.mxu0
        %v6499 = vadd.f32 0.0, %v6498
        %v6500 = vpop.f32.mrf.mxu0
        %6501 = vmatprep.mubr.f32.mxu0 0.0
        %6502 = vmatmul.mubr.f32.gmra.mxu0 %v6397
        %v6503 = vpop.f32.mrf.mxu0
        %v6504 = vadd.f32 0.0, %v6503
        %v6505 = vpop.f32.mrf.mxu0
        %6506 = vmatprep.mubr.f32.mxu0 0.0
        %6507 = vmatmul.mubr.f32.gmra.mxu0 %v6398
        %v6508 = vpop.f32.mrf.mxu0
        %v6509 = vadd.f32 0.0, %v6508
        %v6510 = vpop.f32.mrf.mxu0
        %6511 = vmatprep.mubr.f32.mxu0 0.0
        %6512 = vmatmul.mubr.f32.gmra.mxu0 %v6399
        %v6513 = vpop.f32.mrf.mxu0
        %v6514 = vadd.f32 0.0, %v6513
        %v6515 = vpop.f32.mrf.mxu0
        %6516 = vmatprep.mubr.f32.mxu0 0.0
        %6517 = vmatmul.mubr.f32.gmra.mxu0 %v6400
        %v6518 = vpop.f32.mrf.mxu0
        %v6519 = vadd.f32 0.0, %v6518
        %v6520 = vpop.f32.mrf.mxu0
        %6521 = vmatprep.mubr.f32.mxu0 0.0
        %6522 = vmatmul.mubr.f32.gmra.mxu0 %v6401
        %v6523 = vpop.f32.mrf.mxu0
        %v6524 = vadd.f32 0.0, %v6523
        %v6525 = vpop.f32.mrf.mxu0
        %6526 = vmatprep.mubr.f32.mxu0 0.0
        %6527 = vmatmul.mubr.f32.gmra.mxu0 %v6402
        %v6528 = vpop.f32.mrf.mxu0
        %v6529 = vadd.f32 0.0, %v6528
        %v6530 = vpop.f32.mrf.mxu0
        %6531 = vmatprep.mubr.f32.mxu0 0.0
        %6532 = vmatmul.mubr.f32.gmra.mxu0 %v6403
        %v6533 = vpop.f32.mrf.mxu0
        %v6534 = vadd.f32 0.0, %v6533
        %v6535 = vpop.f32.mrf.mxu0
        %6536 = vmatprep.mubr.f32.mxu0 0.0
        %6537 = vmatmul.mubr.f32.gmra.mxu0 %v6404
        %v6538 = vpop.f32.mrf.mxu0
        %v6539 = vadd.f32 0.0, %v6538
        %v6540 = vpop.f32.mrf.mxu0
        %6541 = vmatprep.mubr.f32.mxu0 0.0
        %6542 = vmatmul.mubr.f32.gmra.mxu0 %v6405
        %v6543 = vpop.f32.mrf.mxu0
        %v6544 = vadd.f32 0.0, %v6543
        %v6545 = vpop.f32.mrf.mxu0
        %6546 = vmatprep.mubr.f32.mxu0 0.0
        %6547 = vmatmul.mubr.f32.gmra.mxu0 %v6406
        %v6548 = vpop.f32.mrf.mxu0
        %v6549 = vadd.f32 0.0, %v6548
        %v6550 = vpop.f32.mrf.mxu0
        %6551 = vmatprep.mubr.f32.mxu0 0.0
        %6552 = vmatmul.mubr.f32.gmra.mxu0 %v6407
        %v6553 = vpop.f32.mrf.mxu0
        %v6554 = vadd.f32 0.0, %v6553
        %v6555 = vpop.f32.mrf.mxu0
        %6556 = vmatprep.mubr.f32.mxu0 0.0
        %6557 = vmatmul.mubr.f32.gmra.mxu0 %v6408
        %v6558 = vpop.f32.mrf.mxu0
        %v6559 = vadd.f32 0.0, %v6558
        %v6560 = vpop.f32.mrf.mxu0
        %6561 = vmatprep.mubr.f32.mxu0 0.0
        %6562 = vmatmul.mubr.f32.gmra.mxu0 %v6409
        %v6563 = vpop.f32.mrf.mxu0
        %v6564 = vadd.f32 0.0, %v6563
        %v6565 = vpop.f32.mrf.mxu0
        %6566 = vmatprep.mubr.f32.mxu0 0.0
        %6567 = vmatmul.mubr.f32.gmra.mxu0 %v6410
        %v6568 = vpop.f32.mrf.mxu0
        %v6569 = vadd.f32 0.0, %v6568
        %v6570 = vpop.f32.mrf.mxu0
        %6571 = vdwg.mxu0
        %v6572 = vadd.f32 %v1238, %v6494
        %v6573 = vadd.f32 %v1239, %v6499
        %v6574 = vadd.f32 %v1240, %v6504
        %v6575 = vadd.f32 %v1241, %v6509
        %v6576 = vadd.f32 %v1242, %v6514
        %v6577 = vadd.f32 %v1243, %v6519
        %v6578 = vadd.f32 %v1244, %v6524
        %v6579 = vadd.f32 %v1245, %v6529
        %v6580 = vadd.f32 %v1246, %v6534
        %v6581 = vadd.f32 %v1247, %v6539
        %v6582 = vadd.f32 %v1248, %v6544
        %v6583 = vadd.f32 %v1249, %v6549
        %v6584 = vadd.f32 %v1250, %v6554
        %v6585 = vadd.f32 %v1251, %v6559
        %v6586 = vadd.f32 %v1252, %v6564
        %v6587 = vadd.f32 %v1253, %v6569
        %v6588 = vld [vmem:[%s963] sm:$0x1]
        %v6590 = vlaneseq
        %v6591 = vshrl.u32 %v6590, 7
        %v6592 = vsub.s32 0, %v6591
        %v6593 = vrot.slane %v6588, %v6592
        %v6595 = vadd.f32 %v6572, %v6593
        %v6596 = vadd.f32 %v6573, %v6593
        %v6597 = vadd.f32 %v6574, %v6593
        %v6598 = vadd.f32 %v6575, %v6593
        %v6599 = vadd.f32 %v6576, %v6593
        %v6600 = vadd.f32 %v6577, %v6593
        %v6601 = vadd.f32 %v6578, %v6593
        %v6602 = vadd.f32 %v6579, %v6593
        %v6603 = vadd.f32 %v6580, %v6593
        %v6604 = vadd.f32 %v6581, %v6593
        %v6605 = vadd.f32 %v6582, %v6593
        %v6606 = vadd.f32 %v6583, %v6593
        %v6607 = vadd.f32 %v6584, %v6593
        %v6608 = vadd.f32 %v6585, %v6593
        %v6609 = vadd.f32 %v6586, %v6593
        %v6610 = vadd.f32 %v6587, %v6593
        %v6611 = vld [vmem:[%s966] sm:$0x1]
        %v6612 = vld [vmem:[%s969] sm:$0x1]
        %6613 = vadd.xlane.f32.xlu0 %v6595
        %v6614 = vpop.xlane.xlu0 %6613
        %6615 = vadd.xlane.f32.xlu0 %v6596
        %v6616 = vpop.xlane.xlu0 %6615
        %6617 = vadd.xlane.f32.xlu0 %v6597
        %v6618 = vpop.xlane.xlu0 %6617
        %6619 = vadd.xlane.f32.xlu0 %v6598
        %v6620 = vpop.xlane.xlu0 %6619
        %6621 = vadd.xlane.f32.xlu0 %v6599
        %v6622 = vpop.xlane.xlu0 %6621
        %6623 = vadd.xlane.f32.xlu0 %v6600
        %v6624 = vpop.xlane.xlu0 %6623
        %6625 = vadd.xlane.f32.xlu0 %v6601
        %v6626 = vpop.xlane.xlu0 %6625
        %6627 = vadd.xlane.f32.xlu0 %v6602
        %v6628 = vpop.xlane.xlu0 %6627
        %6629 = vadd.xlane.f32.xlu0 %v6603
        %v6630 = vpop.xlane.xlu0 %6629
        %6631 = vadd.xlane.f32.xlu0 %v6604
        %v6632 = vpop.xlane.xlu0 %6631
        %6633 = vadd.xlane.f32.xlu0 %v6605
        %v6634 = vpop.xlane.xlu0 %6633
        %6635 = vadd.xlane.f32.xlu0 %v6606
        %v6636 = vpop.xlane.xlu0 %6635
        %6637 = vadd.xlane.f32.xlu0 %v6607
        %v6638 = vpop.xlane.xlu0 %6637
        %6639 = vadd.xlane.f32.xlu0 %v6608
        %v6640 = vpop.xlane.xlu0 %6639
        %6641 = vadd.xlane.f32.xlu0 %v6609
        %v6642 = vpop.xlane.xlu0 %6641
        %6643 = vadd.xlane.f32.xlu0 %v6610
        %v6644 = vpop.xlane.xlu0 %6643
        %v6645 = vmul.f32 %v6614, %v1288
        %v6646 = vmul.f32 %v6616, %v1288
        %v6647 = vmul.f32 %v6618, %v1288
        %v6648 = vmul.f32 %v6620, %v1288
        %v6649 = vmul.f32 %v6622, %v1288
        %v6650 = vmul.f32 %v6624, %v1288
        %v6651 = vmul.f32 %v6626, %v1288
        %v6652 = vmul.f32 %v6628, %v1288
        %v6653 = vmul.f32 %v6630, %v1288
        %v6654 = vmul.f32 %v6632, %v1288
        %v6655 = vmul.f32 %v6634, %v1288
        %v6656 = vmul.f32 %v6636, %v1288
        %v6657 = vmul.f32 %v6638, %v1288
        %v6658 = vmul.f32 %v6640, %v1288
        %v6659 = vmul.f32 %v6642, %v1288
        %v6660 = vmul.f32 %v6644, %v1288
        %v6661 = vsub.f32 %v6595, %v6645
        %v6662 = vsub.f32 %v6596, %v6646
        %v6663 = vsub.f32 %v6597, %v6647
        %v6664 = vsub.f32 %v6598, %v6648
        %v6665 = vsub.f32 %v6599, %v6649
        %v6666 = vsub.f32 %v6600, %v6650
        %v6667 = vsub.f32 %v6601, %v6651
        %v6668 = vsub.f32 %v6602, %v6652
        %v6669 = vsub.f32 %v6603, %v6653
        %v6670 = vsub.f32 %v6604, %v6654
        %v6671 = vsub.f32 %v6605, %v6655
        %v6672 = vsub.f32 %v6606, %v6656
        %v6673 = vsub.f32 %v6607, %v6657
        %v6674 = vsub.f32 %v6608, %v6658
        %v6675 = vsub.f32 %v6609, %v6659
        %v6676 = vsub.f32 %v6610, %v6660
        %v6677 = vmul.f32 %v6661, %v6661
        %v6678 = vmul.f32 %v6662, %v6662
        %v6679 = vmul.f32 %v6663, %v6663
        %v6680 = vmul.f32 %v6664, %v6664
        %v6681 = vmul.f32 %v6665, %v6665
        %v6682 = vmul.f32 %v6666, %v6666
        %v6683 = vmul.f32 %v6667, %v6667
        %v6684 = vmul.f32 %v6668, %v6668
        %v6685 = vmul.f32 %v6669, %v6669
        %v6686 = vmul.f32 %v6670, %v6670
        %v6687 = vmul.f32 %v6671, %v6671
        %v6688 = vmul.f32 %v6672, %v6672
        %v6689 = vmul.f32 %v6673, %v6673
        %v6690 = vmul.f32 %v6674, %v6674
        %v6691 = vmul.f32 %v6675, %v6675
        %v6692 = vmul.f32 %v6676, %v6676
        %6693 = vadd.xlane.f32.xlu0 %v6677
        %v6694 = vpop.xlane.xlu0 %6693
        %6695 = vadd.xlane.f32.xlu0 %v6678
        %v6696 = vpop.xlane.xlu0 %6695
        %6697 = vadd.xlane.f32.xlu0 %v6679
        %v6698 = vpop.xlane.xlu0 %6697
        %6699 = vadd.xlane.f32.xlu0 %v6680
        %v6700 = vpop.xlane.xlu0 %6699
        %6701 = vadd.xlane.f32.xlu0 %v6681
        %v6702 = vpop.xlane.xlu0 %6701
        %6703 = vadd.xlane.f32.xlu0 %v6682
        %v6704 = vpop.xlane.xlu0 %6703
        %6705 = vadd.xlane.f32.xlu0 %v6683
        %v6706 = vpop.xlane.xlu0 %6705
        %6707 = vadd.xlane.f32.xlu0 %v6684
        %v6708 = vpop.xlane.xlu0 %6707
        %6709 = vadd.xlane.f32.xlu0 %v6685
        %v6710 = vpop.xlane.xlu0 %6709
        %6711 = vadd.xlane.f32.xlu0 %v6686
        %v6712 = vpop.xlane.xlu0 %6711
        %6713 = vadd.xlane.f32.xlu0 %v6687
        %v6714 = vpop.xlane.xlu0 %6713
        %6715 = vadd.xlane.f32.xlu0 %v6688
        %v6716 = vpop.xlane.xlu0 %6715
        %6717 = vadd.xlane.f32.xlu0 %v6689
        %v6718 = vpop.xlane.xlu0 %6717
        %6719 = vadd.xlane.f32.xlu0 %v6690
        %v6720 = vpop.xlane.xlu0 %6719
        %6721 = vadd.xlane.f32.xlu0 %v6691
        %v6722 = vpop.xlane.xlu0 %6721
        %6723 = vadd.xlane.f32.xlu0 %v6692
        %v6724 = vpop.xlane.xlu0 %6723
        %v6725 = vmul.f32 %v6694, %v1288
        %v6726 = vmul.f32 %v6696, %v1288
        %v6727 = vmul.f32 %v6698, %v1288
        %v6728 = vmul.f32 %v6700, %v1288
        %v6729 = vmul.f32 %v6702, %v1288
        %v6730 = vmul.f32 %v6704, %v1288
        %v6731 = vmul.f32 %v6706, %v1288
        %v6732 = vmul.f32 %v6708, %v1288
        %v6733 = vmul.f32 %v6710, %v1288
        %v6734 = vmul.f32 %v6712, %v1288
        %v6735 = vmul.f32 %v6714, %v1288
        %v6736 = vmul.f32 %v6716, %v1288
        %v6737 = vmul.f32 %v6718, %v1288
        %v6738 = vmul.f32 %v6720, %v1288
        %v6739 = vmul.f32 %v6722, %v1288
        %v6740 = vmul.f32 %v6724, %v1288
        %v6741 = vadd.f32 %v6725, 1e-05
        %v6742 = vadd.f32 %v6726, 1e-05
        %v6743 = vadd.f32 %v6727, 1e-05
        %v6744 = vadd.f32 %v6728, 1e-05
        %v6745 = vadd.f32 %v6729, 1e-05
        %v6746 = vadd.f32 %v6730, 1e-05
        %v6747 = vadd.f32 %v6731, 1e-05
        %v6748 = vadd.f32 %v6732, 1e-05
        %v6749 = vadd.f32 %v6733, 1e-05
        %v6750 = vadd.f32 %v6734, 1e-05
        %v6751 = vadd.f32 %v6735, 1e-05
        %v6752 = vadd.f32 %v6736, 1e-05
        %v6753 = vadd.f32 %v6737, 1e-05
        %v6754 = vadd.f32 %v6738, 1e-05
        %v6755 = vadd.f32 %v6739, 1e-05
        %v6756 = vadd.f32 %v6740, 1e-05
        %v6757 = vrsqrt.pop %v6741
        %v6758 = vrsqrt.pop %v6742
        %v6759 = vrsqrt.pop %v6743
        %v6760 = vrsqrt.pop %v6744
        %v6761 = vrsqrt.pop %v6745
        %v6762 = vrsqrt.pop %v6746
        %v6763 = vrsqrt.pop %v6747
        %v6764 = vrsqrt.pop %v6748
        %v6765 = vrsqrt.pop %v6749
        %v6766 = vrsqrt.pop %v6750
        %v6767 = vrsqrt.pop %v6751
        %v6768 = vrsqrt.pop %v6752
        %v6769 = vrsqrt.pop %v6753
        %v6770 = vrsqrt.pop %v6754
        %v6771 = vrsqrt.pop %v6755
        %v6772 = vrsqrt.pop %v6756
        %v6773 = vmul.f32 %v6661, %v6757
        %v6774 = vmul.f32 %v6662, %v6758
        %v6775 = vmul.f32 %v6663, %v6759
        %v6776 = vmul.f32 %v6664, %v6760
        %v6777 = vmul.f32 %v6665, %v6761
        %v6778 = vmul.f32 %v6666, %v6762
        %v6779 = vmul.f32 %v6667, %v6763
        %v6780 = vmul.f32 %v6668, %v6764
        %v6781 = vmul.f32 %v6669, %v6765
        %v6782 = vmul.f32 %v6670, %v6766
        %v6783 = vmul.f32 %v6671, %v6767
        %v6784 = vmul.f32 %v6672, %v6768
        %v6785 = vmul.f32 %v6673, %v6769
        %v6786 = vmul.f32 %v6674, %v6770
        %v6787 = vmul.f32 %v6675, %v6771
        %v6788 = vmul.f32 %v6676, %v6772
        %v6790 = vlaneseq
        %v6791 = vshrl.u32 %v6790, 7
        %v6792 = vsub.s32 0, %v6791
        %v6793 = vrot.slane %v6611, %v6792
        %v6795 = vmul.f32 %v6773, %v6793
        %v6796 = vmul.f32 %v6774, %v6793
        %v6797 = vmul.f32 %v6775, %v6793
        %v6798 = vmul.f32 %v6776, %v6793
        %v6799 = vmul.f32 %v6777, %v6793
        %v6800 = vmul.f32 %v6778, %v6793
        %v6801 = vmul.f32 %v6779, %v6793
        %v6802 = vmul.f32 %v6780, %v6793
        %v6803 = vmul.f32 %v6781, %v6793
        %v6804 = vmul.f32 %v6782, %v6793
        %v6805 = vmul.f32 %v6783, %v6793
        %v6806 = vmul.f32 %v6784, %v6793
        %v6807 = vmul.f32 %v6785, %v6793
        %v6808 = vmul.f32 %v6786, %v6793
        %v6809 = vmul.f32 %v6787, %v6793
        %v6810 = vmul.f32 %v6788, %v6793
        %v6812 = vlaneseq
        %v6813 = vshrl.u32 %v6812, 7
        %v6814 = vsub.s32 0, %v6813
        %v6815 = vrot.slane %v6612, %v6814
        %v6817 = vadd.f32 %v6795, %v6815
        %v6818 = vadd.f32 %v6796, %v6815
        %v6819 = vadd.f32 %v6797, %v6815
        %v6820 = vadd.f32 %v6798, %v6815
        %v6821 = vadd.f32 %v6799, %v6815
        %v6822 = vadd.f32 %v6800, %v6815
        %v6823 = vadd.f32 %v6801, %v6815
        %v6824 = vadd.f32 %v6802, %v6815
        %v6825 = vadd.f32 %v6803, %v6815
        %v6826 = vadd.f32 %v6804, %v6815
        %v6827 = vadd.f32 %v6805, %v6815
        %v6828 = vadd.f32 %v6806, %v6815
        %v6829 = vadd.f32 %v6807, %v6815
        %v6830 = vadd.f32 %v6808, %v6815
        %v6831 = vadd.f32 %v6809, %v6815
        %v6832 = vadd.f32 %v6810, %v6815
        %v6833 = vld [vmem:[%s846] sm:$0xff]
        %v6834 = vld [vmem:[%s846 + $0x8] sm:$0xff]
        %v6835 = vld [vmem:[%s846 + $0x10] sm:$0xff]
        %v6836 = vld [vmem:[%s846 + $0x18] sm:$0xff]
        %v6837 = vld [vmem:[%s846 + $0x20] sm:$0xff]
        %v6838 = vld [vmem:[%s846 + $0x28] sm:$0xff]
        %v6839 = vld [vmem:[%s846 + $0x30] sm:$0xff]
        %v6840 = vld [vmem:[%s846 + $0x38] sm:$0xff]
        %v6841 = vld [vmem:[%s846 + $0x40] sm:$0xff]
        %v6842 = vld [vmem:[%s846 + $0x48] sm:$0xff]
        %v6843 = vld [vmem:[%s846 + $0x50] sm:$0xff]
        %v6844 = vld [vmem:[%s846 + $0x58] sm:$0xff]
        %v6845 = vld [vmem:[%s846 + $0x60] sm:$0xff]
        %v6846 = vld [vmem:[%s846 + $0x68] sm:$0xff]
        %v6847 = vld [vmem:[%s846 + $0x70] sm:$0xff]
        %v6848 = vld [vmem:[%s846 + $0x78] sm:$0xff]
        %v6849 = vld [vmem:[%s846 + $0x80] sm:$0xff]
        %v6850 = vld [vmem:[%s846 + $0x88] sm:$0xff]
        %v6851 = vld [vmem:[%s846 + $0x90] sm:$0xff]
        %v6852 = vld [vmem:[%s846 + $0x98] sm:$0xff]
        %v6853 = vld [vmem:[%s846 + $0xa0] sm:$0xff]
        %v6854 = vld [vmem:[%s846 + $0xa8] sm:$0xff]
        %v6855 = vld [vmem:[%s846 + $0xb0] sm:$0xff]
        %v6856 = vld [vmem:[%s846 + $0xb8] sm:$0xff]
        %v6857 = vld [vmem:[%s846 + $0xc0] sm:$0xff]
        %v6858 = vld [vmem:[%s846 + $0xc8] sm:$0xff]
        %v6859 = vld [vmem:[%s846 + $0xd0] sm:$0xff]
        %v6860 = vld [vmem:[%s846 + $0xd8] sm:$0xff]
        %v6861 = vld [vmem:[%s846 + $0xe0] sm:$0xff]
        %v6862 = vld [vmem:[%s846 + $0xe8] sm:$0xff]
        %v6863 = vld [vmem:[%s846 + $0xf0] sm:$0xff]
        %v6864 = vld [vmem:[%s846 + $0xf8] sm:$0xff]
        %v6865 = vld [vmem:[%s973] sm:$0x3]
        %v6867 = vlaneseq
        %v6868 = vshrl.u32 %v6867, 7
        %v6869 = vsub.s32 0, %v6868
        %v6870 = vrot.slane %v6865, %v6869
        %v6871 = vlaneseq
        %v6872 = vshrl.u32 %v6871, 7
        %v6873 = vsub.s32 1, %v6872
        %v6874 = vrot.slane %v6865, %v6873
        %6877 = vmatprep.subr.mxu0 %v6864
        %6878 = vmatpush1.msra.mxu0 %v6863
        %6879 = vmatprep.subr.mxu0 %v6862
        %6880 = vmatpush1.msra.mxu0 %v6861
        %6881 = vmatprep.subr.mxu0 %v6860
        %6882 = vmatpush1.msra.mxu0 %v6859
        %6883 = vmatprep.subr.mxu0 %v6858
        %6884 = vmatpush1.msra.mxu0 %v6857
        %6885 = vmatprep.subr.mxu0 %v6856
        %6886 = vmatpush1.msra.mxu0 %v6855
        %6887 = vmatprep.subr.mxu0 %v6854
        %6888 = vmatpush1.msra.mxu0 %v6853
        %6889 = vmatprep.subr.mxu0 %v6852
        %6890 = vmatpush1.msra.mxu0 %v6851
        %6891 = vmatprep.subr.mxu0 %v6850
        %6892 = vmatpush1.msra.mxu0 %v6849
        %6893 = vmatprep.subr.mxu0 %v6848
        %6894 = vmatpush1.msra.mxu0 %v6847
        %6895 = vmatprep.subr.mxu0 %v6846
        %6896 = vmatpush1.msra.mxu0 %v6845
        %6897 = vmatprep.subr.mxu0 %v6844
        %6898 = vmatpush1.msra.mxu0 %v6843
        %6899 = vmatprep.subr.mxu0 %v6842
        %6900 = vmatpush1.msra.mxu0 %v6841
        %6901 = vmatprep.subr.mxu0 %v6840
        %6902 = vmatpush1.msra.mxu0 %v6839
        %6903 = vmatprep.subr.mxu0 %v6838
        %6904 = vmatpush1.msra.mxu0 %v6837
        %6905 = vmatprep.subr.mxu0 %v6836
        %6906 = vmatpush1.msra.mxu0 %v6835
        %6907 = vmatprep.subr.mxu0 %v6834
        %6908 = vmatpush1.msra.mxu0 %v6833
        %6909 = vmatprep.subr.mxu0 0.0
        %6910 = vmatpush2.msra.mxu0 0.0
        %6911 = vmatprep.subr.mxu0 0.0
        %6912 = vmatpush2.msra.mxu0 0.0
        %6913 = vmatprep.subr.mxu0 0.0
        %6914 = vmatpush2.msra.mxu0 0.0
        %6915 = vmatprep.subr.mxu0 0.0
        %6916 = vmatpush2.msra.mxu0 0.0
        %6917 = vmatprep.subr.mxu0 0.0
        %6918 = vmatpush2.msra.mxu0 0.0
        %6919 = vmatprep.subr.mxu0 0.0
        %6920 = vmatpush2.msra.mxu0 0.0
        %6921 = vmatprep.subr.mxu0 0.0
        %6922 = vmatpush2.msra.mxu0 0.0
        %6923 = vmatprep.subr.mxu0 0.0
        %6924 = vmatpush2.msra.mxu0 0.0
        %6925 = vmatprep.subr.mxu0 0.0
        %6926 = vmatpush2.msra.mxu0 0.0
        %6927 = vmatprep.subr.mxu0 0.0
        %6928 = vmatpush2.msra.mxu0 0.0
        %6929 = vmatprep.subr.mxu0 0.0
        %6930 = vmatpush2.msra.mxu0 0.0
        %6931 = vmatprep.subr.mxu0 0.0
        %6932 = vmatpush2.msra.mxu0 0.0
        %6933 = vmatprep.subr.mxu0 0.0
        %6934 = vmatpush2.msra.mxu0 0.0
        %6935 = vmatprep.subr.mxu0 0.0
        %6936 = vmatpush2.msra.mxu0 0.0
        %6937 = vmatprep.subr.mxu0 0.0
        %6938 = vmatpush2.msra.mxu0 0.0
        %6939 = vmatprep.subr.mxu0 0.0
        %6940 = vmatpush2.msra.mxu0 0.0
        %6941 = vmatprep.mubr.f32.mxu0 0.0
        %6942 = vmatmul.mubr.f32.gmra.mxu0 %v6817
        %v6943 = vpop.f32.mrf.mxu0
        %v6944 = vadd.f32 %v6870, %v6943
        %v6945 = vpop.f32.mrf.mxu0
        %v6946 = vadd.f32 %v6874, %v6945
        %6947 = vmatprep.mubr.f32.mxu0 0.0
        %6948 = vmatmul.mubr.f32.gmra.mxu0 %v6818
        %v6949 = vpop.f32.mrf.mxu0
        %v6950 = vadd.f32 %v6870, %v6949
        %v6951 = vpop.f32.mrf.mxu0
        %v6952 = vadd.f32 %v6874, %v6951
        %6953 = vmatprep.mubr.f32.mxu0 0.0
        %6954 = vmatmul.mubr.f32.gmra.mxu0 %v6819
        %v6955 = vpop.f32.mrf.mxu0
        %v6956 = vadd.f32 %v6870, %v6955
        %v6957 = vpop.f32.mrf.mxu0
        %v6958 = vadd.f32 %v6874, %v6957
        %6959 = vmatprep.mubr.f32.mxu0 0.0
        %6960 = vmatmul.mubr.f32.gmra.mxu0 %v6820
        %v6961 = vpop.f32.mrf.mxu0
        %v6962 = vadd.f32 %v6870, %v6961
        %v6963 = vpop.f32.mrf.mxu0
        %v6964 = vadd.f32 %v6874, %v6963
        %6965 = vmatprep.mubr.f32.mxu0 0.0
        %6966 = vmatmul.mubr.f32.gmra.mxu0 %v6821
        %v6967 = vpop.f32.mrf.mxu0
        %v6968 = vadd.f32 %v6870, %v6967
        %v6969 = vpop.f32.mrf.mxu0
        %v6970 = vadd.f32 %v6874, %v6969
        %6971 = vmatprep.mubr.f32.mxu0 0.0
        %6972 = vmatmul.mubr.f32.gmra.mxu0 %v6822
        %v6973 = vpop.f32.mrf.mxu0
        %v6974 = vadd.f32 %v6870, %v6973
        %v6975 = vpop.f32.mrf.mxu0
        %v6976 = vadd.f32 %v6874, %v6975
        %6977 = vmatprep.mubr.f32.mxu0 0.0
        %6978 = vmatmul.mubr.f32.gmra.mxu0 %v6823
        %v6979 = vpop.f32.mrf.mxu0
        %v6980 = vadd.f32 %v6870, %v6979
        %v6981 = vpop.f32.mrf.mxu0
        %v6982 = vadd.f32 %v6874, %v6981
        %6983 = vmatprep.mubr.f32.mxu0 0.0
        %6984 = vmatmul.mubr.f32.gmra.mxu0 %v6824
        %v6985 = vpop.f32.mrf.mxu0
        %v6986 = vadd.f32 %v6870, %v6985
        %v6987 = vpop.f32.mrf.mxu0
        %v6988 = vadd.f32 %v6874, %v6987
        %6989 = vmatprep.mubr.f32.mxu0 0.0
        %6990 = vmatmul.mubr.f32.gmra.mxu0 %v6825
        %v6991 = vpop.f32.mrf.mxu0
        %v6992 = vadd.f32 %v6870, %v6991
        %v6993 = vpop.f32.mrf.mxu0
        %v6994 = vadd.f32 %v6874, %v6993
        %6995 = vmatprep.mubr.f32.mxu0 0.0
        %6996 = vmatmul.mubr.f32.gmra.mxu0 %v6826
        %v6997 = vpop.f32.mrf.mxu0
        %v6998 = vadd.f32 %v6870, %v6997
        %v6999 = vpop.f32.mrf.mxu0
        %v7000 = vadd.f32 %v6874, %v6999
        %7001 = vmatprep.mubr.f32.mxu0 0.0
        %7002 = vmatmul.mubr.f32.gmra.mxu0 %v6827
        %v7003 = vpop.f32.mrf.mxu0
        %v7004 = vadd.f32 %v6870, %v7003
        %v7005 = vpop.f32.mrf.mxu0
        %v7006 = vadd.f32 %v6874, %v7005
        %7007 = vmatprep.mubr.f32.mxu0 0.0
        %7008 = vmatmul.mubr.f32.gmra.mxu0 %v6828
        %v7009 = vpop.f32.mrf.mxu0
        %v7010 = vadd.f32 %v6870, %v7009
        %v7011 = vpop.f32.mrf.mxu0
        %v7012 = vadd.f32 %v6874, %v7011
        %7013 = vmatprep.mubr.f32.mxu0 0.0
        %7014 = vmatmul.mubr.f32.gmra.mxu0 %v6829
        %v7015 = vpop.f32.mrf.mxu0
        %v7016 = vadd.f32 %v6870, %v7015
        %v7017 = vpop.f32.mrf.mxu0
        %v7018 = vadd.f32 %v6874, %v7017
        %7019 = vmatprep.mubr.f32.mxu0 0.0
        %7020 = vmatmul.mubr.f32.gmra.mxu0 %v6830
        %v7021 = vpop.f32.mrf.mxu0
        %v7022 = vadd.f32 %v6870, %v7021
        %v7023 = vpop.f32.mrf.mxu0
        %v7024 = vadd.f32 %v6874, %v7023
        %7025 = vmatprep.mubr.f32.mxu0 0.0
        %7026 = vmatmul.mubr.f32.gmra.mxu0 %v6831
        %v7027 = vpop.f32.mrf.mxu0
        %v7028 = vadd.f32 %v6870, %v7027
        %v7029 = vpop.f32.mrf.mxu0
        %v7030 = vadd.f32 %v6874, %v7029
        %7031 = vmatprep.mubr.f32.mxu0 0.0
        %7032 = vmatmul.mubr.f32.gmra.mxu0 %v6832
        %v7033 = vpop.f32.mrf.mxu0
        %v7034 = vadd.f32 %v6870, %v7033
        %v7035 = vpop.f32.mrf.mxu0
        %v7036 = vadd.f32 %v6874, %v7035
        %7037 = vdwg.mxu0
        %v7038 = vmax.f32 %v6944, 0.0
        %v7039 = vmax.f32 %v6946, 0.0
        %v7040 = vmax.f32 %v6950, 0.0
        %v7041 = vmax.f32 %v6952, 0.0
        %v7042 = vmax.f32 %v6956, 0.0
        %v7043 = vmax.f32 %v6958, 0.0
        %v7044 = vmax.f32 %v6962, 0.0
        %v7045 = vmax.f32 %v6964, 0.0
        %v7046 = vmax.f32 %v6968, 0.0
        %v7047 = vmax.f32 %v6970, 0.0
        %v7048 = vmax.f32 %v6974, 0.0
        %v7049 = vmax.f32 %v6976, 0.0
        %v7050 = vmax.f32 %v6980, 0.0
        %v7051 = vmax.f32 %v6982, 0.0
        %v7052 = vmax.f32 %v6986, 0.0
        %v7053 = vmax.f32 %v6988, 0.0
        %v7054 = vmax.f32 %v6992, 0.0
        %v7055 = vmax.f32 %v6994, 0.0
        %v7056 = vmax.f32 %v6998, 0.0
        %v7057 = vmax.f32 %v7000, 0.0
        %v7058 = vmax.f32 %v7004, 0.0
        %v7059 = vmax.f32 %v7006, 0.0
        %v7060 = vmax.f32 %v7010, 0.0
        %v7061 = vmax.f32 %v7012, 0.0
        %v7062 = vmax.f32 %v7016, 0.0
        %v7063 = vmax.f32 %v7018, 0.0
        %v7064 = vmax.f32 %v7022, 0.0
        %v7065 = vmax.f32 %v7024, 0.0
        %v7066 = vmax.f32 %v7028, 0.0
        %v7067 = vmax.f32 %v7030, 0.0
        %v7068 = vmax.f32 %v7034, 0.0
        %v7069 = vmax.f32 %v7036, 0.0
        %v7070 = vld [vmem:[%s855] sm:$0xff]
        %v7071 = vld [vmem:[%s855 + $0x8] sm:$0xff]
        %v7072 = vld [vmem:[%s855 + $0x10] sm:$0xff]
        %v7073 = vld [vmem:[%s855 + $0x18] sm:$0xff]
        %v7074 = vld [vmem:[%s855 + $0x20] sm:$0xff]
        %v7075 = vld [vmem:[%s855 + $0x28] sm:$0xff]
        %v7076 = vld [vmem:[%s855 + $0x30] sm:$0xff]
        %v7077 = vld [vmem:[%s855 + $0x38] sm:$0xff]
        %v7078 = vld [vmem:[%s855 + $0x40] sm:$0xff]
        %v7079 = vld [vmem:[%s855 + $0x48] sm:$0xff]
        %v7080 = vld [vmem:[%s855 + $0x50] sm:$0xff]
        %v7081 = vld [vmem:[%s855 + $0x58] sm:$0xff]
        %v7082 = vld [vmem:[%s855 + $0x60] sm:$0xff]
        %v7083 = vld [vmem:[%s855 + $0x68] sm:$0xff]
        %v7084 = vld [vmem:[%s855 + $0x70] sm:$0xff]
        %v7085 = vld [vmem:[%s855 + $0x78] sm:$0xff]
        %v7086 = vld [vmem:[%s855 + $0x80] sm:$0xff]
        %v7087 = vld [vmem:[%s855 + $0x88] sm:$0xff]
        %v7088 = vld [vmem:[%s855 + $0x90] sm:$0xff]
        %v7089 = vld [vmem:[%s855 + $0x98] sm:$0xff]
        %v7090 = vld [vmem:[%s855 + $0xa0] sm:$0xff]
        %v7091 = vld [vmem:[%s855 + $0xa8] sm:$0xff]
        %v7092 = vld [vmem:[%s855 + $0xb0] sm:$0xff]
        %v7093 = vld [vmem:[%s855 + $0xb8] sm:$0xff]
        %v7094 = vld [vmem:[%s855 + $0xc0] sm:$0xff]
        %v7095 = vld [vmem:[%s855 + $0xc8] sm:$0xff]
        %v7096 = vld [vmem:[%s855 + $0xd0] sm:$0xff]
        %v7097 = vld [vmem:[%s855 + $0xd8] sm:$0xff]
        %v7098 = vld [vmem:[%s855 + $0xe0] sm:$0xff]
        %v7099 = vld [vmem:[%s855 + $0xe8] sm:$0xff]
        %v7100 = vld [vmem:[%s855 + $0xf0] sm:$0xff]
        %v7101 = vld [vmem:[%s855 + $0xf8] sm:$0xff]
        %7102 = vmatprep.subr.mxu0 0.0
        %7103 = vmatpush1.msra.mxu0 %v7085
        %7104 = vmatprep.subr.mxu0 0.0
        %7105 = vmatpush1.msra.mxu0 %v7084
        %7106 = vmatprep.subr.mxu0 0.0
        %7107 = vmatpush1.msra.mxu0 %v7083
        %7108 = vmatprep.subr.mxu0 0.0
        %7109 = vmatpush1.msra.mxu0 %v7082
        %7110 = vmatprep.subr.mxu0 0.0
        %7111 = vmatpush1.msra.mxu0 %v7081
        %7112 = vmatprep.subr.mxu0 0.0
        %7113 = vmatpush1.msra.mxu0 %v7080
        %7114 = vmatprep.subr.mxu0 0.0
        %7115 = vmatpush1.msra.mxu0 %v7079
        %7116 = vmatprep.subr.mxu0 0.0
        %7117 = vmatpush1.msra.mxu0 %v7078
        %7118 = vmatprep.subr.mxu0 0.0
        %7119 = vmatpush1.msra.mxu0 %v7077
        %7120 = vmatprep.subr.mxu0 0.0
        %7121 = vmatpush1.msra.mxu0 %v7076
        %7122 = vmatprep.subr.mxu0 0.0
        %7123 = vmatpush1.msra.mxu0 %v7075
        %7124 = vmatprep.subr.mxu0 0.0
        %7125 = vmatpush1.msra.mxu0 %v7074
        %7126 = vmatprep.subr.mxu0 0.0
        %7127 = vmatpush1.msra.mxu0 %v7073
        %7128 = vmatprep.subr.mxu0 0.0
        %7129 = vmatpush1.msra.mxu0 %v7072
        %7130 = vmatprep.subr.mxu0 0.0
        %7131 = vmatpush1.msra.mxu0 %v7071
        %7132 = vmatprep.subr.mxu0 0.0
        %7133 = vmatpush1.msra.mxu0 %v7070
        %7134 = vmatprep.subr.mxu0 0.0
        %7135 = vmatpush2.msra.mxu0 %v7101
        %7136 = vmatprep.subr.mxu0 0.0
        %7137 = vmatpush2.msra.mxu0 %v7100
        %7138 = vmatprep.subr.mxu0 0.0
        %7139 = vmatpush2.msra.mxu0 %v7099
        %7140 = vmatprep.subr.mxu0 0.0
        %7141 = vmatpush2.msra.mxu0 %v7098
        %7142 = vmatprep.subr.mxu0 0.0
        %7143 = vmatpush2.msra.mxu0 %v7097
        %7144 = vmatprep.subr.mxu0 0.0
        %7145 = vmatpush2.msra.mxu0 %v7096
        %7146 = vmatprep.subr.mxu0 0.0
        %7147 = vmatpush2.msra.mxu0 %v7095
        %7148 = vmatprep.subr.mxu0 0.0
        %7149 = vmatpush2.msra.mxu0 %v7094
        %7150 = vmatprep.subr.mxu0 0.0
        %7151 = vmatpush2.msra.mxu0 %v7093
        %7152 = vmatprep.subr.mxu0 0.0
        %7153 = vmatpush2.msra.mxu0 %v7092
        %7154 = vmatprep.subr.mxu0 0.0
        %7155 = vmatpush2.msra.mxu0 %v7091
        %7156 = vmatprep.subr.mxu0 0.0
        %7157 = vmatpush2.msra.mxu0 %v7090
        %7158 = vmatprep.subr.mxu0 0.0
        %7159 = vmatpush2.msra.mxu0 %v7089
        %7160 = vmatprep.subr.mxu0 0.0
        %7161 = vmatpush2.msra.mxu0 %v7088
        %7162 = vmatprep.subr.mxu0 0.0
        %7163 = vmatpush2.msra.mxu0 %v7087
        %7164 = vmatprep.subr.mxu0 0.0
        %7165 = vmatpush2.msra.mxu0 %v7086
        %7166 = vmatprep.mubr.f32.mxu0 %v7039
        %7167 = vmatmul.mubr.f32.gmra.mxu0 %v7038
        %v7168 = vpop.f32.mrf.mxu0
        %v7169 = vadd.f32 0.0, %v7168
        %v7170 = vpop.f32.mrf.mxu0
        %7171 = vmatprep.mubr.f32.mxu0 %v7041
        %7172 = vmatmul.mubr.f32.gmra.mxu0 %v7040
        %v7173 = vpop.f32.mrf.mxu0
        %v7174 = vadd.f32 0.0, %v7173
        %v7175 = vpop.f32.mrf.mxu0
        %7176 = vmatprep.mubr.f32.mxu0 %v7043
        %7177 = vmatmul.mubr.f32.gmra.mxu0 %v7042
        %v7178 = vpop.f32.mrf.mxu0
        %v7179 = vadd.f32 0.0, %v7178
        %v7180 = vpop.f32.mrf.mxu0
        %7181 = vmatprep.mubr.f32.mxu0 %v7045
        %7182 = vmatmul.mubr.f32.gmra.mxu0 %v7044
        %v7183 = vpop.f32.mrf.mxu0
        %v7184 = vadd.f32 0.0, %v7183
        %v7185 = vpop.f32.mrf.mxu0
        %7186 = vmatprep.mubr.f32.mxu0 %v7047
        %7187 = vmatmul.mubr.f32.gmra.mxu0 %v7046
        %v7188 = vpop.f32.mrf.mxu0
        %v7189 = vadd.f32 0.0, %v7188
        %v7190 = vpop.f32.mrf.mxu0
        %7191 = vmatprep.mubr.f32.mxu0 %v7049
        %7192 = vmatmul.mubr.f32.gmra.mxu0 %v7048
        %v7193 = vpop.f32.mrf.mxu0
        %v7194 = vadd.f32 0.0, %v7193
        %v7195 = vpop.f32.mrf.mxu0
        %7196 = vmatprep.mubr.f32.mxu0 %v7051
        %7197 = vmatmul.mubr.f32.gmra.mxu0 %v7050
        %v7198 = vpop.f32.mrf.mxu0
        %v7199 = vadd.f32 0.0, %v7198
        %v7200 = vpop.f32.mrf.mxu0
        %7201 = vmatprep.mubr.f32.mxu0 %v7053
        %7202 = vmatmul.mubr.f32.gmra.mxu0 %v7052
        %v7203 = vpop.f32.mrf.mxu0
        %v7204 = vadd.f32 0.0, %v7203
        %v7205 = vpop.f32.mrf.mxu0
        %7206 = vmatprep.mubr.f32.mxu0 %v7055
        %7207 = vmatmul.mubr.f32.gmra.mxu0 %v7054
        %v7208 = vpop.f32.mrf.mxu0
        %v7209 = vadd.f32 0.0, %v7208
        %v7210 = vpop.f32.mrf.mxu0
        %7211 = vmatprep.mubr.f32.mxu0 %v7057
        %7212 = vmatmul.mubr.f32.gmra.mxu0 %v7056
        %v7213 = vpop.f32.mrf.mxu0
        %v7214 = vadd.f32 0.0, %v7213
        %v7215 = vpop.f32.mrf.mxu0
        %7216 = vmatprep.mubr.f32.mxu0 %v7059
        %7217 = vmatmul.mubr.f32.gmra.mxu0 %v7058
        %v7218 = vpop.f32.mrf.mxu0
        %v7219 = vadd.f32 0.0, %v7218
        %v7220 = vpop.f32.mrf.mxu0
        %7221 = vmatprep.mubr.f32.mxu0 %v7061
        %7222 = vmatmul.mubr.f32.gmra.mxu0 %v7060
        %v7223 = vpop.f32.mrf.mxu0
        %v7224 = vadd.f32 0.0, %v7223
        %v7225 = vpop.f32.mrf.mxu0
        %7226 = vmatprep.mubr.f32.mxu0 %v7063
        %7227 = vmatmul.mubr.f32.gmra.mxu0 %v7062
        %v7228 = vpop.f32.mrf.mxu0
        %v7229 = vadd.f32 0.0, %v7228
        %v7230 = vpop.f32.mrf.mxu0
        %7231 = vmatprep.mubr.f32.mxu0 %v7065
        %7232 = vmatmul.mubr.f32.gmra.mxu0 %v7064
        %v7233 = vpop.f32.mrf.mxu0
        %v7234 = vadd.f32 0.0, %v7233
        %v7235 = vpop.f32.mrf.mxu0
        %7236 = vmatprep.mubr.f32.mxu0 %v7067
        %7237 = vmatmul.mubr.f32.gmra.mxu0 %v7066
        %v7238 = vpop.f32.mrf.mxu0
        %v7239 = vadd.f32 0.0, %v7238
        %v7240 = vpop.f32.mrf.mxu0
        %7241 = vmatprep.mubr.f32.mxu0 %v7069
        %7242 = vmatmul.mubr.f32.gmra.mxu0 %v7068
        %v7243 = vpop.f32.mrf.mxu0
        %v7244 = vadd.f32 0.0, %v7243
        %v7245 = vpop.f32.mrf.mxu0
        %7246 = vdwg.mxu0
        %v7247 = vadd.f32 %v6595, %v7169
        %v7248 = vadd.f32 %v6596, %v7174
        %v7249 = vadd.f32 %v6597, %v7179
        %v7250 = vadd.f32 %v6598, %v7184
        %v7251 = vadd.f32 %v6599, %v7189
        %v7252 = vadd.f32 %v6600, %v7194
        %v7253 = vadd.f32 %v6601, %v7199
        %v7254 = vadd.f32 %v6602, %v7204
        %v7255 = vadd.f32 %v6603, %v7209
        %v7256 = vadd.f32 %v6604, %v7214
        %v7257 = vadd.f32 %v6605, %v7219
        %v7258 = vadd.f32 %v6606, %v7224
        %v7259 = vadd.f32 %v6607, %v7229
        %v7260 = vadd.f32 %v6608, %v7234
        %v7261 = vadd.f32 %v6609, %v7239
        %v7262 = vadd.f32 %v6610, %v7244
        %v7263 = vld [vmem:[%s976] sm:$0x1]
        %v7265 = vlaneseq
        %v7266 = vshrl.u32 %v7265, 7
        %v7267 = vsub.s32 0, %v7266
        %v7268 = vrot.slane %v7263, %v7267
        %v7270 = vadd.f32 %v7247, %v7268
        %v7271 = vadd.f32 %v7248, %v7268
        %v7272 = vadd.f32 %v7249, %v7268
        %v7273 = vadd.f32 %v7250, %v7268
        %v7274 = vadd.f32 %v7251, %v7268
        %v7275 = vadd.f32 %v7252, %v7268
        %v7276 = vadd.f32 %v7253, %v7268
        %v7277 = vadd.f32 %v7254, %v7268
        %v7278 = vadd.f32 %v7255, %v7268
        %v7279 = vadd.f32 %v7256, %v7268
        %v7280 = vadd.f32 %v7257, %v7268
        %v7281 = vadd.f32 %v7258, %v7268
        %v7282 = vadd.f32 %v7259, %v7268
        %v7283 = vadd.f32 %v7260, %v7268
        %v7284 = vadd.f32 %v7261, %v7268
        %v7285 = vadd.f32 %v7262, %v7268
        %7286 = vst [vmem:[#allocation2] sm:$0xff] %v7270
        %7287 = vst [vmem:[#allocation2 + $0x8] sm:$0xff] %v7271
        %7288 = vst [vmem:[#allocation2 + $0x10] sm:$0xff] %v7272
        %7289 = vst [vmem:[#allocation2 + $0x18] sm:$0xff] %v7273
        %7290 = vst [vmem:[#allocation2 + $0x20] sm:$0xff] %v7274
        %7291 = vst [vmem:[#allocation2 + $0x28] sm:$0xff] %v7275
        %7292 = vst [vmem:[#allocation2 + $0x30] sm:$0xff] %v7276
        %7293 = vst [vmem:[#allocation2 + $0x38] sm:$0xff] %v7277
        %7294 = vst [vmem:[#allocation2 + $0x40] sm:$0xff] %v7278
        %7295 = vst [vmem:[#allocation2 + $0x48] sm:$0xff] %v7279
        %7296 = vst [vmem:[#allocation2 + $0x50] sm:$0xff] %v7280
        %7297 = vst [vmem:[#allocation2 + $0x58] sm:$0xff] %v7281
        %7298 = vst [vmem:[#allocation2 + $0x60] sm:$0xff] %v7282
        %7299 = vst [vmem:[#allocation2 + $0x68] sm:$0xff] %v7283
        %7300 = vst [vmem:[#allocation2 + $0x70] sm:$0xff] %v7284
        %7301 = vst [vmem:[#allocation2 + $0x78] sm:$0xff] %v7285
        %p7302 = scmp.eq.s32.totalorder %s40, 1
        // Predicated region
        $region145: #{tpu_custom_call.1} parent=99 // pred_check
          %p7303 = pneg %p7302
        $region146: #{tpu_custom_call.1} parent=99 // pred_check_branch
          %7305 = sbr.rel (%p7303) target = $region148
        $region147: #{tpu_custom_call.1} parent=99 // pred_region
          %v7306 = vadd.f32 %v7270, %v7271
          %v7307 = vadd.f32 %v7306, %v7272
          %v7308 = vadd.f32 %v7307, %v7273
          %v7309 = vrot.slane %v7308, 4
          %v7310 = vadd.f32 %v7308, %v7309
          %v7311 = vrot.slane %v7310, 2
          %v7312 = vadd.f32 %v7310, %v7311
          %v7313 = vrot.slane %v7312, 1
          %v7314 = vadd.f32 %v7312, %v7313
          %v7315 = vadd.f32 %v7274, %v7275
          %v7316 = vadd.f32 %v7315, %v7276
          %v7317 = vadd.f32 %v7316, %v7277
          %v7318 = vrot.slane %v7317, 4
          %v7319 = vadd.f32 %v7317, %v7318
          %v7320 = vrot.slane %v7319, 2
          %v7321 = vadd.f32 %v7319, %v7320
          %v7322 = vrot.slane %v7321, 1
          %v7323 = vadd.f32 %v7321, %v7322
          %v7324 = vadd.f32 %v7278, %v7279
          %v7325 = vadd.f32 %v7324, %v7280
          %v7326 = vadd.f32 %v7325, %v7281
          %v7327 = vrot.slane %v7326, 4
          %v7328 = vadd.f32 %v7326, %v7327
          %v7329 = vrot.slane %v7328, 2
          %v7330 = vadd.f32 %v7328, %v7329
          %v7331 = vrot.slane %v7330, 1
          %v7332 = vadd.f32 %v7330, %v7331
          %v7333 = vadd.f32 %v7282, %v7283
          %v7334 = vadd.f32 %v7333, %v7284
          %v7335 = vadd.f32 %v7334, %v7285
          %v7336 = vrot.slane %v7335, 4
          %v7337 = vadd.f32 %v7335, %v7336
          %v7338 = vrot.slane %v7337, 2
          %v7339 = vadd.f32 %v7337, %v7338
          %v7340 = vrot.slane %v7339, 1
          %v7341 = vadd.f32 %v7339, %v7340
          %v7342 = vrcp.pop 32.0
          %v7343 = vmul.f32 %v7314, %v7342
          %v7344 = vmul.f32 %v7323, %v7342
          %v7345 = vmul.f32 %v7332, %v7342
          %v7346 = vmul.f32 %v7341, %v7342
          %v7347 = vld [vmem:[%s16] sm:$0x1]
          %v7348 = vld [vmem:[%s17] sm:$0x1]
          %vm7353 = vcmask 1041409
          %v7354 = vsel %vm7353, %v7344, %v7343
          %vm7355 = vcmask 1042434
          %v7356 = vsel %vm7355, %v7345, %v7354
          %vm7357 = vcmask 1043459
          %v7358 = vsel %vm7357, %v7346, %v7356
          %vm7360 = vcmask 1043456
          %v7361 = vsel %vm7360, %v7358, 0.0
          %7362 = vadd.xlane.f32.xlu0 %v7361
          %v7363 = vpop.xlane.xlu0 %7362
          %v7364 = vmul.f32 %v7363, %v1288
          %v7366 = vrot.slane %v7364, 1
          %v7367 = vrot.slane %v7364, 2
          %v7368 = vrot.slane %v7364, 3
          %v7373 = vsub.f32 %v7343, %v7364
          %v7374 = vsub.f32 %v7344, %v7366
          %v7375 = vsub.f32 %v7345, %v7367
          %v7376 = vsub.f32 %v7346, %v7368
          %v7377 = vmul.f32 %v7373, %v7373
          %v7378 = vmul.f32 %v7374, %v7374
          %v7379 = vmul.f32 %v7375, %v7375
          %v7380 = vmul.f32 %v7376, %v7376
          %v7385 = vrot.slane %v7378, 7
          %v7386 = vsel %vm7353, %v7385, %v7377
          %v7387 = vrot.slane %v7379, 6
          %v7388 = vsel %vm7355, %v7387, %v7386
          %v7389 = vrot.slane %v7380, 5
          %v7390 = vsel %vm7357, %v7389, %v7388
          %v7392 = vsel %vm7360, %v7390, 0.0
          %7393 = vadd.xlane.f32.xlu0 %v7392
          %v7394 = vpop.xlane.xlu0 %7393
          %v7395 = vmul.f32 %v7394, %v1288
          %v7396 = vadd.f32 %v7395, 1e-05
          %v7397 = vrsqrt.pop %v7396
          %v7399 = vrot.slane %v7397, 1
          %v7400 = vrot.slane %v7397, 2
          %v7401 = vrot.slane %v7397, 3
          %v7406 = vmul.f32 %v7373, %v7397
          %v7407 = vmul.f32 %v7374, %v7399
          %v7408 = vmul.f32 %v7375, %v7400
          %v7409 = vmul.f32 %v7376, %v7401
          %v7411 = vlaneseq
          %v7412 = vshrl.u32 %v7411, 7
          %v7413 = vsub.s32 0, %v7412
          %v7414 = vrot.slane %v7347, %v7413
          %v7416 = vmul.f32 %v7406, %v7414
          %v7417 = vmul.f32 %v7407, %v7414
          %v7418 = vmul.f32 %v7408, %v7414
          %v7419 = vmul.f32 %v7409, %v7414
          %v7421 = vlaneseq
          %v7422 = vshrl.u32 %v7421, 7
          %v7423 = vsub.s32 0, %v7422
          %v7424 = vrot.slane %v7348, %v7423
          %v7426 = vadd.f32 %v7416, %v7424
          %v7427 = vadd.f32 %v7417, %v7424
          %v7428 = vadd.f32 %v7418, %v7424
          %v7429 = vadd.f32 %v7419, %v7424
          %v7430 = vld [vmem:[#allocation16] sm:$0xff]
          %v7431 = vld [vmem:[#allocation16 + $0x8] sm:$0xff]
          %v7432 = vld [vmem:[#allocation16 + $0x10] sm:$0xff]
          %v7433 = vld [vmem:[#allocation16 + $0x18] sm:$0xff]
          %v7434 = vld [vmem:[#allocation16 + $0x20] sm:$0xff]
          %v7435 = vld [vmem:[#allocation16 + $0x28] sm:$0xff]
          %v7436 = vld [vmem:[#allocation16 + $0x30] sm:$0xff]
          %v7437 = vld [vmem:[#allocation16 + $0x38] sm:$0xff]
          %v7438 = vld [vmem:[#allocation16 + $0x40] sm:$0xff]
          %v7439 = vld [vmem:[#allocation16 + $0x48] sm:$0xff]
          %v7440 = vld [vmem:[#allocation16 + $0x50] sm:$0xff]
          %v7441 = vld [vmem:[#allocation16 + $0x58] sm:$0xff]
          %v7442 = vld [vmem:[#allocation16 + $0x60] sm:$0xff]
          %v7443 = vld [vmem:[#allocation16 + $0x68] sm:$0xff]
          %v7444 = vld [vmem:[#allocation16 + $0x70] sm:$0xff]
          %v7445 = vld [vmem:[#allocation16 + $0x78] sm:$0xff]
          %v7446 = vld [vmem:[%s19] sm:$0x1]
          %v7448 = vlaneseq
          %v7449 = vshrl.u32 %v7448, 7
          %v7450 = vsub.s32 0, %v7449
          %v7451 = vrot.slane %v7446, %v7450
          %v7457 = vrot.slane %v7427, 7
          %v7458 = vsel %vm7353, %v7457, %v7426
          %v7459 = vrot.slane %v7428, 6
          %v7460 = vsel %vm7355, %v7459, %v7458
          %v7461 = vrot.slane %v7429, 5
          %v7462 = vsel %vm7357, %v7461, %v7460
          %7464 = vmatprep.subr.mxu0 0.0
          %7465 = vmatpush1.msra.mxu0 %v7445
          %7466 = vmatprep.subr.mxu0 0.0
          %7467 = vmatpush1.msra.mxu0 %v7444
          %7468 = vmatprep.subr.mxu0 0.0
          %7469 = vmatpush1.msra.mxu0 %v7443
          %7470 = vmatprep.subr.mxu0 0.0
          %7471 = vmatpush1.msra.mxu0 %v7442
          %7472 = vmatprep.subr.mxu0 0.0
          %7473 = vmatpush1.msra.mxu0 %v7441
          %7474 = vmatprep.subr.mxu0 0.0
          %7475 = vmatpush1.msra.mxu0 %v7440
          %7476 = vmatprep.subr.mxu0 0.0
          %7477 = vmatpush1.msra.mxu0 %v7439
          %7478 = vmatprep.subr.mxu0 0.0
          %7479 = vmatpush1.msra.mxu0 %v7438
          %7480 = vmatprep.subr.mxu0 0.0
          %7481 = vmatpush1.msra.mxu0 %v7437
          %7482 = vmatprep.subr.mxu0 0.0
          %7483 = vmatpush1.msra.mxu0 %v7436
          %7484 = vmatprep.subr.mxu0 0.0
          %7485 = vmatpush1.msra.mxu0 %v7435
          %7486 = vmatprep.subr.mxu0 0.0
          %7487 = vmatpush1.msra.mxu0 %v7434
          %7488 = vmatprep.subr.mxu0 0.0
          %7489 = vmatpush1.msra.mxu0 %v7433
          %7490 = vmatprep.subr.mxu0 0.0
          %7491 = vmatpush1.msra.mxu0 %v7432
          %7492 = vmatprep.subr.mxu0 0.0
          %7493 = vmatpush1.msra.mxu0 %v7431
          %7494 = vmatprep.subr.mxu0 0.0
          %7495 = vmatpush1.msra.mxu0 %v7430
          %7496 = vmatprep.subr.mxu0 0.0
          %7497 = vmatpush2.msra.mxu0 0.0
          %7498 = vmatprep.subr.mxu0 0.0
          %7499 = vmatpush2.msra.mxu0 0.0
          %7500 = vmatprep.subr.mxu0 0.0
          %7501 = vmatpush2.msra.mxu0 0.0
          %7502 = vmatprep.subr.mxu0 0.0
          %7503 = vmatpush2.msra.mxu0 0.0
          %7504 = vmatprep.subr.mxu0 0.0
          %7505 = vmatpush2.msra.mxu0 0.0
          %7506 = vmatprep.subr.mxu0 0.0
          %7507 = vmatpush2.msra.mxu0 0.0
          %7508 = vmatprep.subr.mxu0 0.0
          %7509 = vmatpush2.msra.mxu0 0.0
          %7510 = vmatprep.subr.mxu0 0.0
          %7511 = vmatpush2.msra.mxu0 0.0
          %7512 = vmatprep.subr.mxu0 0.0
          %7513 = vmatpush2.msra.mxu0 0.0
          %7514 = vmatprep.subr.mxu0 0.0
          %7515 = vmatpush2.msra.mxu0 0.0
          %7516 = vmatprep.subr.mxu0 0.0
          %7517 = vmatpush2.msra.mxu0 0.0
          %7518 = vmatprep.subr.mxu0 0.0
          %7519 = vmatpush2.msra.mxu0 0.0
          %7520 = vmatprep.subr.mxu0 0.0
          %7521 = vmatpush2.msra.mxu0 0.0
          %7522 = vmatprep.subr.mxu0 0.0
          %7523 = vmatpush2.msra.mxu0 0.0
          %7524 = vmatprep.subr.mxu0 0.0
          %7525 = vmatpush2.msra.mxu0 0.0
          %7526 = vmatprep.subr.mxu0 0.0
          %7527 = vmatpush2.msra.mxu0 0.0
          %7528 = vmatprep.mubr.f32.mxu0 0.0
          %7529 = vmatmul.mubr.f32.gmra.mxu0 %v7462
          %v7530 = vpop.f32.mrf.mxu0
          %v7531 = vadd.f32 %v7451, %v7530
          %v7532 = vpop.f32.mrf.mxu0
          %7533 = vdwg.mxu0
          %7534 = vst [vmem:[#allocation17] sm:$0xf] %v7531
        $region148: #{tpu_custom_call.1} parent=99 // pred_fallthru
          _
        // Predicated region
        $region149: #{tpu_custom_call.1} parent=99 // pred_check
          %p7535 = pneg %p550
        $region150: #{tpu_custom_call.1} parent=99 // pred_check_branch
          %7537 = sbr.rel (%p7535) target = $region152
        $region151: #{tpu_custom_call.1} parent=99 // pred_region
          %s7539 = ssub.s32 64, 64
          %7540 = vsyncadd [#allocation5], %s7539
          %s7541 = smul.addr %s39, 64
          %s7542 = scalar_lea.hbm %s20, %s7541
          %s7544 = sshll.u32 [#allocation17], 4
          %s7545 = int_to_ptr.vmem [resolvable:$true] %s7544
          %7547 = dma.vmem_to_hbm [thread:$0]  %s7545, 64, %s7542, [#allocation5]
        $region152: #{tpu_custom_call.1} parent=99 // pred_fallthru
          _
        // Predicated region
        $region153: #{tpu_custom_call.1} parent=99 // pred_check
          %p7548 = pneg %p550
        $region154: #{tpu_custom_call.1} parent=99 // pred_check_branch
          %7550 = sbr.rel (%p7548) target = $region156
        $region155: #{tpu_custom_call.1} parent=99 // pred_region
          %7551 = dma.done [#allocation5], 64
        $region156: #{tpu_custom_call.1} parent=99 // pred_fallthru
          _
      $region100: #{tpu_custom_call.1} parent=5 // pred_fallthru
        _
      %p7552 = scmp.le.s32.totalorder 2, %s30
      // Predicated region
      $region157: #{tpu_custom_call.1} parent=5 // pred_check
        %p7553 = pneg %p7552
      $region158: #{tpu_custom_call.1} parent=5 // pred_check_branch
        %7555 = sbr.rel (%p7553) target = $region160
      $region159: #{tpu_custom_call.1} parent=5 // pred_region
        %s7556 = ssub.s32 %s30, 2
      $region160: #{tpu_custom_call.1} parent=5 // pred_fallthru
        _
    $region6: #{tpu_custom_call.1} parent=1 // loop_footer
      %s34 = sadd.s32 1, %s30
    $region7: #{tpu_custom_call.1} parent=1 // loop_footer_branch
      %29 = sbr.rel target = $region3
    $region8: #{tpu_custom_call.1} parent=1 // loop_exit
      _
    %7557 = vsyncpa [#allocation4], 1
    %s7558 = scalar_lea.sflag [#allocation4], 1
    %7559 = vsyncpa %s7558, 1
    %7560 = vsyncpa [#allocation7], 1
    %7561 = vsyncpa [#allocation10], 1
    %7562 = vsyncpa [#allocation5], 1
    %s7563 = scalar_lea.sflag [#allocation5], 1
    %7564 = vsyncpa %s7563, 1

</llo_original>
